<compile_context>
chip_gen: v6e
topology: v6e:2x2x1
jax: 0.10.0
libtpu: 0.0.40
codegen_flags: <defaults>
</compile_context>

<pallas_src>
import jax
import jax.numpy as jnp
from jax.experimental import pallas as pl
from jax.experimental.pallas import tpu as pltpu

EPS = 1e-5


def basic_block_kernel(x_ref, w1_ref, g1_ref, b1_ref, w2_ref, g2_ref, b2_ref,
                       o_ref, pad_ref):
    # x_ref:   (N, H, W, C) f32 block input (also the residual)
    # w*_ref:  (9*C, C) bf16 im2col weights, row index = (ky*3 + kx)*C + cin
    # g*/b*:   (1, C) f32 BN affine
    # pad_ref: (N, H+2, W+2, C) f32 padded VMEM scratch, shared by both convs
    N, Hp, Wp, C = pad_ref.shape
    H, W = Hp - 2, Wp - 2
    NHW = N * H * W
    inv_nhw = jnp.float32(1.0 / NHW)

    def conv3x3(w_ref):
        # im2col: one (NHW, 9C) x (9C, C) MXU matmul, bf16 operands, f32 acc.
        cols = [pad_ref[:, ky:ky + H, kx:kx + W, :]
                .reshape(NHW, C).astype(w_ref.dtype)
                for ky in range(3) for kx in range(3)]
        patches = jnp.concatenate(cols, axis=-1)
        return jnp.dot(patches, w_ref[...], preferred_element_type=jnp.float32)

    def bn(acc, g, b):
        # Training-mode BN over the flattened (N*H*W, C) activations, f32 math,
        # folded into a single fused multiply-add on the accumulator.
        mean = jnp.sum(acc, axis=0, keepdims=True) * inv_nhw
        var = jnp.sum((acc - mean) ** 2, axis=0, keepdims=True) * inv_nhw
        scale = g * jax.lax.rsqrt(var + EPS)
        return acc * scale + (b - mean * scale)

    x = x_ref[...]  # load once: feeds the conv1 halo fill AND the residual add

    # ---- conv1: build the zero halo purely in VMEM (no HBM pad, no DMA) -----
    pad_ref[...] = jnp.zeros(pad_ref.shape, pad_ref.dtype)
    pad_ref[:, 1:1 + H, 1:1 + W, :] = x

    y1 = jnp.maximum(bn(conv3x3(w1_ref), g1_ref[...], b1_ref[...]), 0.0)

    # ---- conv2: reuse the same padded scratch; borders are still zero -------
    pad_ref[:, 1:1 + H, 1:1 + W, :] = y1.reshape(N, H, W, C)

    y2 = bn(conv3x3(w2_ref), g2_ref[...], b2_ref[...])

    # residual add (original block input, exact f32) + final ReLU
    out = jnp.maximum(y2 + x.reshape(NHW, C), 0.0)
    o_ref[...] = out.reshape(N, H, W, C)


def _vmem_spec():
    return pl.BlockSpec(memory_space=pltpu.MemorySpace.VMEM)


@jax.jit
def basic_block_forward(x_nhwc, w1, g1, b1, w2, g2, b2):
    """BasicBlock forward (stride=1, shortcut=None). NHWC activations, HWIO weights."""
    N, H, W, C = x_nhwc.shape
    Cout = w1.shape[-1]
    assert w1.shape == (3, 3, C, Cout) and w2.shape == (3, 3, Cout, Cout)
    assert Cout == C, "stride=1 / shortcut=None BasicBlock needs in_planes == planes"

    # im2col weight layout (matches the in-kernel patch concat order); bf16 for MXU.
    w1_mat = w1.reshape(9 * C, Cout).astype(jnp.bfloat16)
    w2_mat = w2.reshape(9 * Cout, Cout).astype(jnp.bfloat16)

    return pl.pallas_call(
        basic_block_kernel,
        out_shape=jax.ShapeDtypeStruct((N, H, W, Cout), jnp.float32),
        in_specs=[_vmem_spec()] * 7,
        out_specs=_vmem_spec(),
        scratch_shapes=[
            pltpu.VMEM((N, H + 2, W + 2, C), jnp.float32),  # shared padded scratch
        ],
        compiler_params=pltpu.CompilerParams(vmem_limit_bytes=32 * 1024 * 1024),
    )(x_nhwc, w1_mat, g1.reshape(1, Cout), b1.reshape(1, Cout),
      w2_mat, g2.reshape(1, Cout), b2.reshape(1, Cout))


def reference_forward(x_nhwc, w1, g1, b1, w2, g2, b2):
    """Pure-JAX f32 reference mirroring the PyTorch module (training-mode BN)."""
    def conv(x, w):
        return jax.lax.conv_general_dilated(
            x, w, window_strides=(1, 1), padding="SAME",
            dimension_numbers=("NHWC", "HWIO", "NHWC"),
            precision=jax.lax.Precision.HIGHEST)

    def bn(x, g, b):
        m = jnp.mean(x, axis=(0, 1, 2), keepdims=True)
        v = jnp.mean((x - m) ** 2, axis=(0, 1, 2), keepdims=True)
        return (x - m) * jax.lax.rsqrt(v + EPS) * g + b

    y = jax.nn.relu(bn(conv(x_nhwc, w1), g1, b1))
    y = bn(conv(y, w2), g2, b2)
    return jax.nn.relu(y + x_nhwc)


if __name__ == "__main__":
    # Shapes consistent with BasicBlock(in_planes=planes, stride=1, shortcut=None)
    N, C, H, W = 2, 32, 16, 16
    key = jax.random.PRNGKey(0)
    ks = jax.random.split(key, 7)

    x_nchw = jax.random.normal(ks[0], (N, C, H, W), jnp.float32)    # PyTorch-style input
    w1 = 0.1 * jax.random.normal(ks[1], (3, 3, C, C), jnp.float32)  # HWIO
    w2 = 0.1 * jax.random.normal(ks[2], (3, 3, C, C), jnp.float32)  # HWIO
    g1 = 1.0 + 0.1 * jax.random.normal(ks[3], (C,), jnp.float32)
    b1 = 0.1 * jax.random.normal(ks[4], (C,), jnp.float32)
    g2 = 1.0 + 0.1 * jax.random.normal(ks[5], (C,), jnp.float32)
    b2 = 0.1 * jax.random.normal(ks[6], (C,), jnp.float32)

    x_nhwc = jnp.transpose(x_nchw, (0, 2, 3, 1))  # NCHW -> NHWC for the kernel

    out = basic_block_forward(x_nhwc, w1, g1, b1, w2, g2, b2)
    out = jax.block_until_ready(out)

    ref = reference_forward(x_nhwc, w1, g1, b1, w2, g2, b2)
    assert out.shape == (N, H, W, C)
    # Tolerance accounts for bf16 MXU operands (f32 accumulation + f32 BN)
    # compared against an all-f32 reference.
    assert jnp.allclose(out, ref, atol=2e-2, rtol=2e-2), (
        f"max abs diff {jnp.max(jnp.abs(out - ref))}")

    print("KERNEL_OK")
</pallas_src>

<mosaic_0001>
module attributes {stable_mosaic.version = 11 : i64} {
  func.func @basic_block_kernel(%arg0: memref<2x16x16x32xf32, #tpu.memory_space<vmem>>, %arg1: memref<288x32xbf16, #tpu.memory_space<vmem>>, %arg2: memref<1x32xf32, #tpu.memory_space<vmem>>, %arg3: memref<1x32xf32, #tpu.memory_space<vmem>>, %arg4: memref<288x32xbf16, #tpu.memory_space<vmem>>, %arg5: memref<1x32xf32, #tpu.memory_space<vmem>>, %arg6: memref<1x32xf32, #tpu.memory_space<vmem>>, %arg7: memref<2x16x16x32xf32, #tpu.memory_space<vmem>>, %arg8: memref<2x18x18x32xf32, #tpu.memory_space<vmem>>) attributes {dimension_semantics = [], scalar_prefetch = 0 : i64, scratch_operands = 1 : i64, tpu.core_type = #tpu.core_type<tc>} {
    %c0 = arith.constant 0 : index
    %c0_0 = arith.constant 0 : index
    %c0_1 = arith.constant 0 : index
    %c0_2 = arith.constant 0 : index
    %0 = vector.load %arg0[%c0, %c0_0, %c0_1, %c0_2] : memref<2x16x16x32xf32, #tpu.memory_space<vmem>>, vector<2x16x16x32xf32>
    %cst = arith.constant 0.000000e+00 : f32
    %1 = vector.broadcast %cst : f32 to vector<2x18x18x32xf32>
    %c0_3 = arith.constant 0 : index
    %c0_4 = arith.constant 0 : index
    %c0_5 = arith.constant 0 : index
    %c0_6 = arith.constant 0 : index
    %2 = vector.load %arg8[%c0_3, %c0_4, %c0_5, %c0_6] : memref<2x18x18x32xf32, #tpu.memory_space<vmem>>, vector<2x18x18x32xf32>
    tpu.vector_store %arg8[%c0_3, %c0_4, %c0_5, %c0_6], %1 {strides = array<i32>} : memref<2x18x18x32xf32, #tpu.memory_space<vmem>>, vector<2x18x18x32xf32>,
    %c0_7 = arith.constant 0 : index
    %c1 = arith.constant 1 : index
    %c1_8 = arith.constant 1 : index
    %c0_9 = arith.constant 0 : index
    %3 = vector.load %arg8[%c0_7, %c1, %c1_8, %c0_9] : memref<2x18x18x32xf32, #tpu.memory_space<vmem>>, vector<2x16x16x32xf32>
    tpu.vector_store %arg8[%c0_7, %c1, %c1_8, %c0_9], %0 {strides = array<i32>} : memref<2x18x18x32xf32, #tpu.memory_space<vmem>>, vector<2x16x16x32xf32>,
    %c0_10 = arith.constant 0 : index
    %c0_11 = arith.constant 0 : index
    %c0_12 = arith.constant 0 : index
    %c0_13 = arith.constant 0 : index
    %4 = vector.load %arg8[%c0_10, %c0_11, %c0_12, %c0_13] : memref<2x18x18x32xf32, #tpu.memory_space<vmem>>, vector<2x16x16x32xf32>
    %5 = vector.shape_cast %4 : vector<2x16x16x32xf32> to vector<512x32xf32>
    %6 = arith.truncf %5 : vector<512x32xf32> to vector<512x32xbf16>
    %c0_14 = arith.constant 0 : index
    %c0_15 = arith.constant 0 : index
    %c1_16 = arith.constant 1 : index
    %c0_17 = arith.constant 0 : index
    %7 = vector.load %arg8[%c0_14, %c0_15, %c1_16, %c0_17] : memref<2x18x18x32xf32, #tpu.memory_space<vmem>>, vector<2x16x16x32xf32>
    %8 = vector.shape_cast %7 : vector<2x16x16x32xf32> to vector<512x32xf32>
    %9 = arith.truncf %8 : vector<512x32xf32> to vector<512x32xbf16>
    %c0_18 = arith.constant 0 : index
    %c0_19 = arith.constant 0 : index
    %c2 = arith.constant 2 : index
    %c0_20 = arith.constant 0 : index
    %10 = vector.load %arg8[%c0_18, %c0_19, %c2, %c0_20] : memref<2x18x18x32xf32, #tpu.memory_space<vmem>>, vector<2x16x16x32xf32>
    %11 = vector.shape_cast %10 : vector<2x16x16x32xf32> to vector<512x32xf32>
    %12 = arith.truncf %11 : vector<512x32xf32> to vector<512x32xbf16>
    %c0_21 = arith.constant 0 : index
    %c1_22 = arith.constant 1 : index
    %c0_23 = arith.constant 0 : index
    %c0_24 = arith.constant 0 : index
    %13 = vector.load %arg8[%c0_21, %c1_22, %c0_23, %c0_24] : memref<2x18x18x32xf32, #tpu.memory_space<vmem>>, vector<2x16x16x32xf32>
    %14 = vector.shape_cast %13 : vector<2x16x16x32xf32> to vector<512x32xf32>
    %15 = arith.truncf %14 : vector<512x32xf32> to vector<512x32xbf16>
    %c0_25 = arith.constant 0 : index
    %c1_26 = arith.constant 1 : index
    %c1_27 = arith.constant 1 : index
    %c0_28 = arith.constant 0 : index
    %16 = vector.load %arg8[%c0_25, %c1_26, %c1_27, %c0_28] : memref<2x18x18x32xf32, #tpu.memory_space<vmem>>, vector<2x16x16x32xf32>
    %17 = vector.shape_cast %16 : vector<2x16x16x32xf32> to vector<512x32xf32>
    %18 = arith.truncf %17 : vector<512x32xf32> to vector<512x32xbf16>
    %c0_29 = arith.constant 0 : index
    %c1_30 = arith.constant 1 : index
    %c2_31 = arith.constant 2 : index
    %c0_32 = arith.constant 0 : index
    %19 = vector.load %arg8[%c0_29, %c1_30, %c2_31, %c0_32] : memref<2x18x18x32xf32, #tpu.memory_space<vmem>>, vector<2x16x16x32xf32>
    %20 = vector.shape_cast %19 : vector<2x16x16x32xf32> to vector<512x32xf32>
    %21 = arith.truncf %20 : vector<512x32xf32> to vector<512x32xbf16>
    %c0_33 = arith.constant 0 : index
    %c2_34 = arith.constant 2 : index
    %c0_35 = arith.constant 0 : index
    %c0_36 = arith.constant 0 : index
    %22 = vector.load %arg8[%c0_33, %c2_34, %c0_35, %c0_36] : memref<2x18x18x32xf32, #tpu.memory_space<vmem>>, vector<2x16x16x32xf32>
    %23 = vector.shape_cast %22 : vector<2x16x16x32xf32> to vector<512x32xf32>
    %24 = arith.truncf %23 : vector<512x32xf32> to vector<512x32xbf16>
    %c0_37 = arith.constant 0 : index
    %c2_38 = arith.constant 2 : index
    %c1_39 = arith.constant 1 : index
    %c0_40 = arith.constant 0 : index
    %25 = vector.load %arg8[%c0_37, %c2_38, %c1_39, %c0_40] : memref<2x18x18x32xf32, #tpu.memory_space<vmem>>, vector<2x16x16x32xf32>
    %26 = vector.shape_cast %25 : vector<2x16x16x32xf32> to vector<512x32xf32>
    %27 = arith.truncf %26 : vector<512x32xf32> to vector<512x32xbf16>
    %c0_41 = arith.constant 0 : index
    %c2_42 = arith.constant 2 : index
    %c2_43 = arith.constant 2 : index
    %c0_44 = arith.constant 0 : index
    %28 = vector.load %arg8[%c0_41, %c2_42, %c2_43, %c0_44] : memref<2x18x18x32xf32, #tpu.memory_space<vmem>>, vector<2x16x16x32xf32>
    %29 = vector.shape_cast %28 : vector<2x16x16x32xf32> to vector<512x32xf32>
    %30 = arith.truncf %29 : vector<512x32xf32> to vector<512x32xbf16>
    %31 = tpu.concatenate %6, %9, %12, %15, %18, %21, %24, %27, %30 in 1 : vector<512x32xbf16>, vector<512x32xbf16>, vector<512x32xbf16>, vector<512x32xbf16>, vector<512x32xbf16>, vector<512x32xbf16>, vector<512x32xbf16>, vector<512x32xbf16>, vector<512x32xbf16> -> vector<512x288xbf16>
    %c0_45 = arith.constant 0 : index
    %c0_46 = arith.constant 0 : index
    %32 = vector.load %arg1[%c0_45, %c0_46] : memref<288x32xbf16, #tpu.memory_space<vmem>>, vector<288x32xbf16>
    %cst_47 = arith.constant dense<0.000000e+00> : vector<512x32xf32>
    %33 = tpu.matmul %31, %32, %cst_47 {dimension_numbers = #tpu.dot_dimension_numbers<[1], [0], [0], [1], [0, 0, 1, 1], [], []>} : vector<512x288xbf16>, vector<288x32xbf16>, vector<512x32xf32> -> vector<512x32xf32>
    %c0_48 = arith.constant 0 : index
    %c0_49 = arith.constant 0 : index
    %34 = vector.load %arg2[%c0_48, %c0_49] : memref<1x32xf32, #tpu.memory_space<vmem>>, vector<1x32xf32>
    %c0_50 = arith.constant 0 : index
    %c0_51 = arith.constant 0 : index
    %35 = vector.load %arg3[%c0_50, %c0_51] : memref<1x32xf32, #tpu.memory_space<vmem>>, vector<1x32xf32>
    %cst_52 = arith.constant dense<0.000000e+00> : vector<32xf32>
    %36 = vector.multi_reduction <add>, %33, %cst_52 [0] : vector<512x32xf32> to vector<32xf32>
    %37 = vector.shape_cast %36 : vector<32xf32> to vector<1x32xf32>
    %cst_53 = arith.constant 0.001953125 : f32
    %38 = vector.broadcast %cst_53 : f32 to vector<1x32xf32>
    %39 = arith.mulf %37, %38 : vector<1x32xf32>
    %40 = vector.broadcast %39 : vector<1x32xf32> to vector<512x32xf32>
    %41 = arith.subf %33, %40 : vector<512x32xf32>
    %42 = arith.mulf %41, %41 : vector<512x32xf32>
    %cst_54 = arith.constant dense<0.000000e+00> : vector<32xf32>
    %43 = vector.multi_reduction <add>, %42, %cst_54 [0] : vector<512x32xf32> to vector<32xf32>
    %44 = vector.shape_cast %43 : vector<32xf32> to vector<1x32xf32>
    %cst_55 = arith.constant 0.001953125 : f32
    %45 = vector.broadcast %cst_55 : f32 to vector<1x32xf32>
    %46 = arith.mulf %44, %45 : vector<1x32xf32>
    %cst_56 = arith.constant 9.99999974E-6 : f32
    %47 = vector.broadcast %cst_56 : f32 to vector<1x32xf32>
    %48 = arith.addf %46, %47 : vector<1x32xf32>
    %49 = math.rsqrt %48 : vector<1x32xf32>
    %50 = arith.mulf %34, %49 : vector<1x32xf32>
    %51 = vector.broadcast %50 : vector<1x32xf32> to vector<512x32xf32>
    %52 = arith.mulf %33, %51 : vector<512x32xf32>
    %53 = arith.mulf %39, %50 : vector<1x32xf32>
    %54 = arith.subf %35, %53 : vector<1x32xf32>
    %55 = vector.broadcast %54 : vector<1x32xf32> to vector<512x32xf32>
    %56 = arith.addf %52, %55 : vector<512x32xf32>
    %cst_57 = arith.constant 0.000000e+00 : f32
    %57 = vector.broadcast %cst_57 : f32 to vector<512x32xf32>
    %58 = arith.maximumf %56, %57 : vector<512x32xf32>
    %59 = vector.shape_cast %58 : vector<512x32xf32> to vector<2x16x16x32xf32>
    %c0_58 = arith.constant 0 : index
    %c1_59 = arith.constant 1 : index
    %c1_60 = arith.constant 1 : index
    %c0_61 = arith.constant 0 : index
    %60 = vector.load %arg8[%c0_58, %c1_59, %c1_60, %c0_61] : memref<2x18x18x32xf32, #tpu.memory_space<vmem>>, vector<2x16x16x32xf32>
    tpu.vector_store %arg8[%c0_58, %c1_59, %c1_60, %c0_61], %59 {strides = array<i32>} : memref<2x18x18x32xf32, #tpu.memory_space<vmem>>, vector<2x16x16x32xf32>,
    %c0_62 = arith.constant 0 : index
    %c0_63 = arith.constant 0 : index
    %c0_64 = arith.constant 0 : index
    %c0_65 = arith.constant 0 : index
    %61 = vector.load %arg8[%c0_62, %c0_63, %c0_64, %c0_65] : memref<2x18x18x32xf32, #tpu.memory_space<vmem>>, vector<2x16x16x32xf32>
    %62 = vector.shape_cast %61 : vector<2x16x16x32xf32> to vector<512x32xf32>
    %63 = arith.truncf %62 : vector<512x32xf32> to vector<512x32xbf16>
    %c0_66 = arith.constant 0 : index
    %c0_67 = arith.constant 0 : index
    %c1_68 = arith.constant 1 : index
    %c0_69 = arith.constant 0 : index
    %64 = vector.load %arg8[%c0_66, %c0_67, %c1_68, %c0_69] : memref<2x18x18x32xf32, #tpu.memory_space<vmem>>, vector<2x16x16x32xf32>
    %65 = vector.shape_cast %64 : vector<2x16x16x32xf32> to vector<512x32xf32>
    %66 = arith.truncf %65 : vector<512x32xf32> to vector<512x32xbf16>
    %c0_70 = arith.constant 0 : index
    %c0_71 = arith.constant 0 : index
    %c2_72 = arith.constant 2 : index
    %c0_73 = arith.constant 0 : index
    %67 = vector.load %arg8[%c0_70, %c0_71, %c2_72, %c0_73] : memref<2x18x18x32xf32, #tpu.memory_space<vmem>>, vector<2x16x16x32xf32>
    %68 = vector.shape_cast %67 : vector<2x16x16x32xf32> to vector<512x32xf32>
    %69 = arith.truncf %68 : vector<512x32xf32> to vector<512x32xbf16>
    %c0_74 = arith.constant 0 : index
    %c1_75 = arith.constant 1 : index
    %c0_76 = arith.constant 0 : index
    %c0_77 = arith.constant 0 : index
    %70 = vector.load %arg8[%c0_74, %c1_75, %c0_76, %c0_77] : memref<2x18x18x32xf32, #tpu.memory_space<vmem>>, vector<2x16x16x32xf32>
    %71 = vector.shape_cast %70 : vector<2x16x16x32xf32> to vector<512x32xf32>
    %72 = arith.truncf %71 : vector<512x32xf32> to vector<512x32xbf16>
    %c0_78 = arith.constant 0 : index
    %c1_79 = arith.constant 1 : index
    %c1_80 = arith.constant 1 : index
    %c0_81 = arith.constant 0 : index
    %73 = vector.load %arg8[%c0_78, %c1_79, %c1_80, %c0_81] : memref<2x18x18x32xf32, #tpu.memory_space<vmem>>, vector<2x16x16x32xf32>
    %74 = vector.shape_cast %73 : vector<2x16x16x32xf32> to vector<512x32xf32>
    %75 = arith.truncf %74 : vector<512x32xf32> to vector<512x32xbf16>
    %c0_82 = arith.constant 0 : index
    %c1_83 = arith.constant 1 : index
    %c2_84 = arith.constant 2 : index
    %c0_85 = arith.constant 0 : index
    %76 = vector.load %arg8[%c0_82, %c1_83, %c2_84, %c0_85] : memref<2x18x18x32xf32, #tpu.memory_space<vmem>>, vector<2x16x16x32xf32>
    %77 = vector.shape_cast %76 : vector<2x16x16x32xf32> to vector<512x32xf32>
    %78 = arith.truncf %77 : vector<512x32xf32> to vector<512x32xbf16>
    %c0_86 = arith.constant 0 : index
    %c2_87 = arith.constant 2 : index
    %c0_88 = arith.constant 0 : index
    %c0_89 = arith.constant 0 : index
    %79 = vector.load %arg8[%c0_86, %c2_87, %c0_88, %c0_89] : memref<2x18x18x32xf32, #tpu.memory_space<vmem>>, vector<2x16x16x32xf32>
    %80 = vector.shape_cast %79 : vector<2x16x16x32xf32> to vector<512x32xf32>
    %81 = arith.truncf %80 : vector<512x32xf32> to vector<512x32xbf16>
    %c0_90 = arith.constant 0 : index
    %c2_91 = arith.constant 2 : index
    %c1_92 = arith.constant 1 : index
    %c0_93 = arith.constant 0 : index
    %82 = vector.load %arg8[%c0_90, %c2_91, %c1_92, %c0_93] : memref<2x18x18x32xf32, #tpu.memory_space<vmem>>, vector<2x16x16x32xf32>
    %83 = vector.shape_cast %82 : vector<2x16x16x32xf32> to vector<512x32xf32>
    %84 = arith.truncf %83 : vector<512x32xf32> to vector<512x32xbf16>
    %c0_94 = arith.constant 0 : index
    %c2_95 = arith.constant 2 : index
    %c2_96 = arith.constant 2 : index
    %c0_97 = arith.constant 0 : index
    %85 = vector.load %arg8[%c0_94, %c2_95, %c2_96, %c0_97] : memref<2x18x18x32xf32, #tpu.memory_space<vmem>>, vector<2x16x16x32xf32>
    %86 = vector.shape_cast %85 : vector<2x16x16x32xf32> to vector<512x32xf32>
    %87 = arith.truncf %86 : vector<512x32xf32> to vector<512x32xbf16>
    %88 = tpu.concatenate %63, %66, %69, %72, %75, %78, %81, %84, %87 in 1 : vector<512x32xbf16>, vector<512x32xbf16>, vector<512x32xbf16>, vector<512x32xbf16>, vector<512x32xbf16>, vector<512x32xbf16>, vector<512x32xbf16>, vector<512x32xbf16>, vector<512x32xbf16> -> vector<512x288xbf16>
    %c0_98 = arith.constant 0 : index
    %c0_99 = arith.constant 0 : index
    %89 = vector.load %arg4[%c0_98, %c0_99] : memref<288x32xbf16, #tpu.memory_space<vmem>>, vector<288x32xbf16>
    %cst_100 = arith.constant dense<0.000000e+00> : vector<512x32xf32>
    %90 = tpu.matmul %88, %89, %cst_100 {dimension_numbers = #tpu.dot_dimension_numbers<[1], [0], [0], [1], [0, 0, 1, 1], [], []>} : vector<512x288xbf16>, vector<288x32xbf16>, vector<512x32xf32> -> vector<512x32xf32>
    %c0_101 = arith.constant 0 : index
    %c0_102 = arith.constant 0 : index
    %91 = vector.load %arg5[%c0_101, %c0_102] : memref<1x32xf32, #tpu.memory_space<vmem>>, vector<1x32xf32>
    %c0_103 = arith.constant 0 : index
    %c0_104 = arith.constant 0 : index
    %92 = vector.load %arg6[%c0_103, %c0_104] : memref<1x32xf32, #tpu.memory_space<vmem>>, vector<1x32xf32>
    %cst_105 = arith.constant dense<0.000000e+00> : vector<32xf32>
    %93 = vector.multi_reduction <add>, %90, %cst_105 [0] : vector<512x32xf32> to vector<32xf32>
    %94 = vector.shape_cast %93 : vector<32xf32> to vector<1x32xf32>
    %cst_106 = arith.constant 0.001953125 : f32
    %95 = vector.broadcast %cst_106 : f32 to vector<1x32xf32>
    %96 = arith.mulf %94, %95 : vector<1x32xf32>
    %97 = vector.broadcast %96 : vector<1x32xf32> to vector<512x32xf32>
    %98 = arith.subf %90, %97 : vector<512x32xf32>
    %99 = arith.mulf %98, %98 : vector<512x32xf32>
    %cst_107 = arith.constant dense<0.000000e+00> : vector<32xf32>
    %100 = vector.multi_reduction <add>, %99, %cst_107 [0] : vector<512x32xf32> to vector<32xf32>
    %101 = vector.shape_cast %100 : vector<32xf32> to vector<1x32xf32>
    %cst_108 = arith.constant 0.001953125 : f32
    %102 = vector.broadcast %cst_108 : f32 to vector<1x32xf32>
    %103 = arith.mulf %101, %102 : vector<1x32xf32>
    %cst_109 = arith.constant 9.99999974E-6 : f32
    %104 = vector.broadcast %cst_109 : f32 to vector<1x32xf32>
    %105 = arith.addf %103, %104 : vector<1x32xf32>
    %106 = math.rsqrt %105 : vector<1x32xf32>
    %107 = arith.mulf %91, %106 : vector<1x32xf32>
    %108 = vector.broadcast %107 : vector<1x32xf32> to vector<512x32xf32>
    %109 = arith.mulf %90, %108 : vector<512x32xf32>
    %110 = arith.mulf %96, %107 : vector<1x32xf32>
    %111 = arith.subf %92, %110 : vector<1x32xf32>
    %112 = vector.broadcast %111 : vector<1x32xf32> to vector<512x32xf32>
    %113 = arith.addf %109, %112 : vector<512x32xf32>
    %114 = vector.shape_cast %0 : vector<2x16x16x32xf32> to vector<512x32xf32>
    %115 = arith.addf %113, %114 : vector<512x32xf32>
    %cst_110 = arith.constant 0.000000e+00 : f32
    %116 = vector.broadcast %cst_110 : f32 to vector<512x32xf32>
    %117 = arith.maximumf %115, %116 : vector<512x32xf32>
    %118 = vector.shape_cast %117 : vector<512x32xf32> to vector<2x16x16x32xf32>
    %c0_111 = arith.constant 0 : index
    %c0_112 = arith.constant 0 : index
    %c0_113 = arith.constant 0 : index
    %c0_114 = arith.constant 0 : index
    %119 = vector.load %arg7[%c0_111, %c0_112, %c0_113, %c0_114] : memref<2x16x16x32xf32, #tpu.memory_space<vmem>>, vector<2x16x16x32xf32>
    tpu.vector_store %arg7[%c0_111, %c0_112, %c0_113, %c0_114], %118 {strides = array<i32>} : memref<2x16x16x32xf32, #tpu.memory_space<vmem>>, vector<2x16x16x32xf32>,
    return
  }
}

</mosaic_0001>

<llo_original>
// kernel: basic_block_forward.1
$region0: #{basic_block_forward.1}
  #allocation0 [shape = 'u32[]', space=smem, size = 0x4, offset = 0x4, fixed_abs, tag = 'smem constant byte address 0x4 - core index']
  #allocation1 [shape = 'u32[144,128]{1,0:T(1,128)}', space=vmem, size = 0x12000, scoped, tag = 'internal scratch']
  #allocation2 [shape = 'f32[2,18,18,32]{3,2,1,0:T(8,128)}', space=vmem, size = 0x6c000, scoped, tag = 'scratch operand']
  %s0 = inlined_call_operand.vmem [shape: f32[2,16,16,32], index: 0, kind: input, shape index: {}]
  %s1 = inlined_call_operand.vmem [shape: bf16[288,32], index: 1, kind: input, shape index: {}]
  %s2 = inlined_call_operand.vmem [shape: f32[1,32], index: 2, kind: input, shape index: {}]
  %s3 = inlined_call_operand.vmem [shape: f32[1,32], index: 3, kind: input, shape index: {}]
  %s4 = inlined_call_operand.vmem [shape: bf16[288,32], index: 4, kind: input, shape index: {}]
  %s5 = inlined_call_operand.vmem [shape: f32[1,32], index: 5, kind: input, shape index: {}]
  %s6 = inlined_call_operand.vmem [shape: f32[1,32], index: 6, kind: input, shape index: {}]
  %s7 = inlined_call_operand.hbm [shape: f32[2,16,16,32], index: 7, kind: output, shape index: {}]
  %s8 = sld [smem:[#allocation0]]
  $region38: #{basic_block_forward.1} parent=0
    _
  %s10 = ssub.s32 1, %s8
  %s11 = scalar_select 0, %s10, %s8
  $region1: #{basic_block_forward.1} parent=0
    #allocation3 [shape = 'u8[262144]{0}', space=vmem, size = 0x40000, scoped, tag = 'output window, operand 0, single buffered']
    #allocation4 [shape = 's32[1]{0}', space=sflag, size = 0x4, scoped, tag = 'scoped memory for basic_block_forward.1']
    %12 = vsyncpa [#allocation4], 0
    // Predicated region
    $region2: #{basic_block_forward.1} parent=1 // pred_check
      _
    $region3: #{basic_block_forward.1} parent=1 // pred_check_branch
      %14 = sbr.rel (0) target = $region5
    $region4: #{basic_block_forward.1} parent=1 // pred_region
      _
    $region5: #{basic_block_forward.1} parent=1 // pred_fallthru
      _
    // Predicated region
    $region6: #{basic_block_forward.1} parent=1 // pred_check
      _
    $region7: #{basic_block_forward.1} parent=1 // pred_check_branch
      %16 = sbr.rel (0) target = $region9
    $region8: #{basic_block_forward.1} parent=1 // pred_region
      _
    $region9: #{basic_block_forward.1} parent=1 // pred_fallthru
      _
    // Predicated region
    $region10: #{basic_block_forward.1} parent=1 // pred_check
      _
    $region11: #{basic_block_forward.1} parent=1 // pred_check_branch
      %18 = sbr.rel (0) target = $region13
    $region12: #{basic_block_forward.1} parent=1 // pred_region
      _
    $region13: #{basic_block_forward.1} parent=1 // pred_fallthru
      _
    // Predicated region
    $region14: #{basic_block_forward.1} parent=1 // pred_check
      _
    $region15: #{basic_block_forward.1} parent=1 // pred_check_branch
      %20 = sbr.rel (0) target = $region17
    $region16: #{basic_block_forward.1} parent=1 // pred_region
      _
    $region17: #{basic_block_forward.1} parent=1 // pred_fallthru
      _
    // Predicated region
    $region18: #{basic_block_forward.1} parent=1 // pred_check
      _
    $region19: #{basic_block_forward.1} parent=1 // pred_check_branch
      %22 = sbr.rel (0) target = $region21
    $region20: #{basic_block_forward.1} parent=1 // pred_region
      _
    $region21: #{basic_block_forward.1} parent=1 // pred_fallthru
      _
    // Predicated region
    $region22: #{basic_block_forward.1} parent=1 // pred_check
      _
    $region23: #{basic_block_forward.1} parent=1 // pred_check_branch
      %24 = sbr.rel (0) target = $region25
    $region24: #{basic_block_forward.1} parent=1 // pred_region
      _
    $region25: #{basic_block_forward.1} parent=1 // pred_fallthru
      _
    // Predicated region
    $region26: #{basic_block_forward.1} parent=1 // pred_check
      _
    $region27: #{basic_block_forward.1} parent=1 // pred_check_branch
      %26 = sbr.rel (0) target = $region29
    $region28: #{basic_block_forward.1} parent=1 // pred_region
      _
    $region29: #{basic_block_forward.1} parent=1 // pred_fallthru
      _
    %v28 = vld [vmem:[%s0] sm:$0xff]
    %v29 = vld [vmem:[%s0 + $0x8] sm:$0xff]
    %v30 = vld [vmem:[%s0 + $0x10] sm:$0xff]
    %v31 = vld [vmem:[%s0 + $0x18] sm:$0xff]
    %v32 = vld [vmem:[%s0 + $0x20] sm:$0xff]
    %v33 = vld [vmem:[%s0 + $0x28] sm:$0xff]
    %v34 = vld [vmem:[%s0 + $0x30] sm:$0xff]
    %v35 = vld [vmem:[%s0 + $0x38] sm:$0xff]
    %v36 = vld [vmem:[%s0 + $0x40] sm:$0xff]
    %v37 = vld [vmem:[%s0 + $0x48] sm:$0xff]
    %v38 = vld [vmem:[%s0 + $0x50] sm:$0xff]
    %v39 = vld [vmem:[%s0 + $0x58] sm:$0xff]
    %v40 = vld [vmem:[%s0 + $0x60] sm:$0xff]
    %v41 = vld [vmem:[%s0 + $0x68] sm:$0xff]
    %v42 = vld [vmem:[%s0 + $0x70] sm:$0xff]
    %v43 = vld [vmem:[%s0 + $0x78] sm:$0xff]
    %v44 = vld [vmem:[%s0 + $0x80] sm:$0xff]
    %v45 = vld [vmem:[%s0 + $0x88] sm:$0xff]
    %v46 = vld [vmem:[%s0 + $0x90] sm:$0xff]
    %v47 = vld [vmem:[%s0 + $0x98] sm:$0xff]
    %v48 = vld [vmem:[%s0 + $0xa0] sm:$0xff]
    %v49 = vld [vmem:[%s0 + $0xa8] sm:$0xff]
    %v50 = vld [vmem:[%s0 + $0xb0] sm:$0xff]
    %v51 = vld [vmem:[%s0 + $0xb8] sm:$0xff]
    %v52 = vld [vmem:[%s0 + $0xc0] sm:$0xff]
    %v53 = vld [vmem:[%s0 + $0xc8] sm:$0xff]
    %v54 = vld [vmem:[%s0 + $0xd0] sm:$0xff]
    %v55 = vld [vmem:[%s0 + $0xd8] sm:$0xff]
    %v56 = vld [vmem:[%s0 + $0xe0] sm:$0xff]
    %v57 = vld [vmem:[%s0 + $0xe8] sm:$0xff]
    %v58 = vld [vmem:[%s0 + $0xf0] sm:$0xff]
    %v59 = vld [vmem:[%s0 + $0xf8] sm:$0xff]
    %v60 = vld [vmem:[%s0 + $0x100] sm:$0xff]
    %v61 = vld [vmem:[%s0 + $0x108] sm:$0xff]
    %v62 = vld [vmem:[%s0 + $0x110] sm:$0xff]
    %v63 = vld [vmem:[%s0 + $0x118] sm:$0xff]
    %v64 = vld [vmem:[%s0 + $0x120] sm:$0xff]
    %v65 = vld [vmem:[%s0 + $0x128] sm:$0xff]
    %v66 = vld [vmem:[%s0 + $0x130] sm:$0xff]
    %v67 = vld [vmem:[%s0 + $0x138] sm:$0xff]
    %v68 = vld [vmem:[%s0 + $0x140] sm:$0xff]
    %v69 = vld [vmem:[%s0 + $0x148] sm:$0xff]
    %v70 = vld [vmem:[%s0 + $0x150] sm:$0xff]
    %v71 = vld [vmem:[%s0 + $0x158] sm:$0xff]
    %v72 = vld [vmem:[%s0 + $0x160] sm:$0xff]
    %v73 = vld [vmem:[%s0 + $0x168] sm:$0xff]
    %v74 = vld [vmem:[%s0 + $0x170] sm:$0xff]
    %v75 = vld [vmem:[%s0 + $0x178] sm:$0xff]
    %v76 = vld [vmem:[%s0 + $0x180] sm:$0xff]
    %v77 = vld [vmem:[%s0 + $0x188] sm:$0xff]
    %v78 = vld [vmem:[%s0 + $0x190] sm:$0xff]
    %v79 = vld [vmem:[%s0 + $0x198] sm:$0xff]
    %v80 = vld [vmem:[%s0 + $0x1a0] sm:$0xff]
    %v81 = vld [vmem:[%s0 + $0x1a8] sm:$0xff]
    %v82 = vld [vmem:[%s0 + $0x1b0] sm:$0xff]
    %v83 = vld [vmem:[%s0 + $0x1b8] sm:$0xff]
    %v84 = vld [vmem:[%s0 + $0x1c0] sm:$0xff]
    %v85 = vld [vmem:[%s0 + $0x1c8] sm:$0xff]
    %v86 = vld [vmem:[%s0 + $0x1d0] sm:$0xff]
    %v87 = vld [vmem:[%s0 + $0x1d8] sm:$0xff]
    %v88 = vld [vmem:[%s0 + $0x1e0] sm:$0xff]
    %v89 = vld [vmem:[%s0 + $0x1e8] sm:$0xff]
    %v90 = vld [vmem:[%s0 + $0x1f0] sm:$0xff]
    %v91 = vld [vmem:[%s0 + $0x1f8] sm:$0xff]
    %vm92 = vcmask 261120
    %93 = vst.msk [vmem:[#allocation2] sm:$0xff] %vm92, 0.0
    %94 = vst.msk [vmem:[#allocation2 + $0x8] sm:$0xff] %vm92, 0.0
    %vm95 = vcmask 254976
    %96 = vst.msk [vmem:[#allocation2 + $0x10] sm:$0x3] %vm95, 0.0
    %97 = vst.msk [vmem:[#allocation2 + $0x18] sm:$0xff] %vm92, 0.0
    %98 = vst.msk [vmem:[#allocation2 + $0x20] sm:$0xff] %vm92, 0.0
    %99 = vst.msk [vmem:[#allocation2 + $0x28] sm:$0x3] %vm95, 0.0
    %100 = vst.msk [vmem:[#allocation2 + $0x30] sm:$0xff] %vm92, 0.0
    %101 = vst.msk [vmem:[#allocation2 + $0x38] sm:$0xff] %vm92, 0.0
    %102 = vst.msk [vmem:[#allocation2 + $0x40] sm:$0x3] %vm95, 0.0
    %103 = vst.msk [vmem:[#allocation2 + $0x48] sm:$0xff] %vm92, 0.0
    %104 = vst.msk [vmem:[#allocation2 + $0x50] sm:$0xff] %vm92, 0.0
    %105 = vst.msk [vmem:[#allocation2 + $0x58] sm:$0x3] %vm95, 0.0
    %106 = vst.msk [vmem:[#allocation2 + $0x60] sm:$0xff] %vm92, 0.0
    %107 = vst.msk [vmem:[#allocation2 + $0x68] sm:$0xff] %vm92, 0.0
    %108 = vst.msk [vmem:[#allocation2 + $0x70] sm:$0x3] %vm95, 0.0
    %109 = vst.msk [vmem:[#allocation2 + $0x78] sm:$0xff] %vm92, 0.0
    %110 = vst.msk [vmem:[#allocation2 + $0x80] sm:$0xff] %vm92, 0.0
    %111 = vst.msk [vmem:[#allocation2 + $0x88] sm:$0x3] %vm95, 0.0
    %112 = vst.msk [vmem:[#allocation2 + $0x90] sm:$0xff] %vm92, 0.0
    %113 = vst.msk [vmem:[#allocation2 + $0x98] sm:$0xff] %vm92, 0.0
    %114 = vst.msk [vmem:[#allocation2 + $0xa0] sm:$0x3] %vm95, 0.0
    %115 = vst.msk [vmem:[#allocation2 + $0xa8] sm:$0xff] %vm92, 0.0
    %116 = vst.msk [vmem:[#allocation2 + $0xb0] sm:$0xff] %vm92, 0.0
    %117 = vst.msk [vmem:[#allocation2 + $0xb8] sm:$0x3] %vm95, 0.0
    %118 = vst.msk [vmem:[#allocation2 + $0xc0] sm:$0xff] %vm92, 0.0
    %119 = vst.msk [vmem:[#allocation2 + $0xc8] sm:$0xff] %vm92, 0.0
    %120 = vst.msk [vmem:[#allocation2 + $0xd0] sm:$0x3] %vm95, 0.0
    %121 = vst.msk [vmem:[#allocation2 + $0xd8] sm:$0xff] %vm92, 0.0
    %122 = vst.msk [vmem:[#allocation2 + $0xe0] sm:$0xff] %vm92, 0.0
    %123 = vst.msk [vmem:[#allocation2 + $0xe8] sm:$0x3] %vm95, 0.0
    %124 = vst.msk [vmem:[#allocation2 + $0xf0] sm:$0xff] %vm92, 0.0
    %125 = vst.msk [vmem:[#allocation2 + $0xf8] sm:$0xff] %vm92, 0.0
    %126 = vst.msk [vmem:[#allocation2 + $0x100] sm:$0x3] %vm95, 0.0
    %127 = vst.msk [vmem:[#allocation2 + $0x108] sm:$0xff] %vm92, 0.0
    %128 = vst.msk [vmem:[#allocation2 + $0x110] sm:$0xff] %vm92, 0.0
    %129 = vst.msk [vmem:[#allocation2 + $0x118] sm:$0x3] %vm95, 0.0
    %130 = vst.msk [vmem:[#allocation2 + $0x120] sm:$0xff] %vm92, 0.0
    %131 = vst.msk [vmem:[#allocation2 + $0x128] sm:$0xff] %vm92, 0.0
    %132 = vst.msk [vmem:[#allocation2 + $0x130] sm:$0x3] %vm95, 0.0
    %133 = vst.msk [vmem:[#allocation2 + $0x138] sm:$0xff] %vm92, 0.0
    %134 = vst.msk [vmem:[#allocation2 + $0x140] sm:$0xff] %vm92, 0.0
    %135 = vst.msk [vmem:[#allocation2 + $0x148] sm:$0x3] %vm95, 0.0
    %136 = vst.msk [vmem:[#allocation2 + $0x150] sm:$0xff] %vm92, 0.0
    %137 = vst.msk [vmem:[#allocation2 + $0x158] sm:$0xff] %vm92, 0.0
    %138 = vst.msk [vmem:[#allocation2 + $0x160] sm:$0x3] %vm95, 0.0
    %139 = vst.msk [vmem:[#allocation2 + $0x168] sm:$0xff] %vm92, 0.0
    %140 = vst.msk [vmem:[#allocation2 + $0x170] sm:$0xff] %vm92, 0.0
    %141 = vst.msk [vmem:[#allocation2 + $0x178] sm:$0x3] %vm95, 0.0
    %142 = vst.msk [vmem:[#allocation2 + $0x180] sm:$0xff] %vm92, 0.0
    %143 = vst.msk [vmem:[#allocation2 + $0x188] sm:$0xff] %vm92, 0.0
    %144 = vst.msk [vmem:[#allocation2 + $0x190] sm:$0x3] %vm95, 0.0
    %145 = vst.msk [vmem:[#allocation2 + $0x198] sm:$0xff] %vm92, 0.0
    %146 = vst.msk [vmem:[#allocation2 + $0x1a0] sm:$0xff] %vm92, 0.0
    %147 = vst.msk [vmem:[#allocation2 + $0x1a8] sm:$0x3] %vm95, 0.0
    %148 = vst.msk [vmem:[#allocation2 + $0x1b0] sm:$0xff] %vm92, 0.0
    %149 = vst.msk [vmem:[#allocation2 + $0x1b8] sm:$0xff] %vm92, 0.0
    %150 = vst.msk [vmem:[#allocation2 + $0x1c0] sm:$0x3] %vm95, 0.0
    %151 = vst.msk [vmem:[#allocation2 + $0x1c8] sm:$0xff] %vm92, 0.0
    %152 = vst.msk [vmem:[#allocation2 + $0x1d0] sm:$0xff] %vm92, 0.0
    %153 = vst.msk [vmem:[#allocation2 + $0x1d8] sm:$0x3] %vm95, 0.0
    %154 = vst.msk [vmem:[#allocation2 + $0x1e0] sm:$0xff] %vm92, 0.0
    %155 = vst.msk [vmem:[#allocation2 + $0x1e8] sm:$0xff] %vm92, 0.0
    %156 = vst.msk [vmem:[#allocation2 + $0x1f0] sm:$0x3] %vm95, 0.0
    %157 = vst.msk [vmem:[#allocation2 + $0x1f8] sm:$0xff] %vm92, 0.0
    %158 = vst.msk [vmem:[#allocation2 + $0x200] sm:$0xff] %vm92, 0.0
    %159 = vst.msk [vmem:[#allocation2 + $0x208] sm:$0x3] %vm95, 0.0
    %160 = vst.msk [vmem:[#allocation2 + $0x210] sm:$0xff] %vm92, 0.0
    %161 = vst.msk [vmem:[#allocation2 + $0x218] sm:$0xff] %vm92, 0.0
    %162 = vst.msk [vmem:[#allocation2 + $0x220] sm:$0x3] %vm95, 0.0
    %163 = vst.msk [vmem:[#allocation2 + $0x228] sm:$0xff] %vm92, 0.0
    %164 = vst.msk [vmem:[#allocation2 + $0x230] sm:$0xff] %vm92, 0.0
    %165 = vst.msk [vmem:[#allocation2 + $0x238] sm:$0x3] %vm95, 0.0
    %166 = vst.msk [vmem:[#allocation2 + $0x240] sm:$0xff] %vm92, 0.0
    %167 = vst.msk [vmem:[#allocation2 + $0x248] sm:$0xff] %vm92, 0.0
    %168 = vst.msk [vmem:[#allocation2 + $0x250] sm:$0x3] %vm95, 0.0
    %169 = vst.msk [vmem:[#allocation2 + $0x258] sm:$0xff] %vm92, 0.0
    %170 = vst.msk [vmem:[#allocation2 + $0x260] sm:$0xff] %vm92, 0.0
    %171 = vst.msk [vmem:[#allocation2 + $0x268] sm:$0x3] %vm95, 0.0
    %172 = vst.msk [vmem:[#allocation2 + $0x270] sm:$0xff] %vm92, 0.0
    %173 = vst.msk [vmem:[#allocation2 + $0x278] sm:$0xff] %vm92, 0.0
    %174 = vst.msk [vmem:[#allocation2 + $0x280] sm:$0x3] %vm95, 0.0
    %175 = vst.msk [vmem:[#allocation2 + $0x288] sm:$0xff] %vm92, 0.0
    %176 = vst.msk [vmem:[#allocation2 + $0x290] sm:$0xff] %vm92, 0.0
    %177 = vst.msk [vmem:[#allocation2 + $0x298] sm:$0x3] %vm95, 0.0
    %178 = vst.msk [vmem:[#allocation2 + $0x2a0] sm:$0xff] %vm92, 0.0
    %179 = vst.msk [vmem:[#allocation2 + $0x2a8] sm:$0xff] %vm92, 0.0
    %180 = vst.msk [vmem:[#allocation2 + $0x2b0] sm:$0x3] %vm95, 0.0
    %181 = vst.msk [vmem:[#allocation2 + $0x2b8] sm:$0xff] %vm92, 0.0
    %182 = vst.msk [vmem:[#allocation2 + $0x2c0] sm:$0xff] %vm92, 0.0
    %183 = vst.msk [vmem:[#allocation2 + $0x2c8] sm:$0x3] %vm95, 0.0
    %184 = vst.msk [vmem:[#allocation2 + $0x2d0] sm:$0xff] %vm92, 0.0
    %185 = vst.msk [vmem:[#allocation2 + $0x2d8] sm:$0xff] %vm92, 0.0
    %186 = vst.msk [vmem:[#allocation2 + $0x2e0] sm:$0x3] %vm95, 0.0
    %187 = vst.msk [vmem:[#allocation2 + $0x2e8] sm:$0xff] %vm92, 0.0
    %188 = vst.msk [vmem:[#allocation2 + $0x2f0] sm:$0xff] %vm92, 0.0
    %189 = vst.msk [vmem:[#allocation2 + $0x2f8] sm:$0x3] %vm95, 0.0
    %190 = vst.msk [vmem:[#allocation2 + $0x300] sm:$0xff] %vm92, 0.0
    %191 = vst.msk [vmem:[#allocation2 + $0x308] sm:$0xff] %vm92, 0.0
    %192 = vst.msk [vmem:[#allocation2 + $0x310] sm:$0x3] %vm95, 0.0
    %193 = vst.msk [vmem:[#allocation2 + $0x318] sm:$0xff] %vm92, 0.0
    %194 = vst.msk [vmem:[#allocation2 + $0x320] sm:$0xff] %vm92, 0.0
    %195 = vst.msk [vmem:[#allocation2 + $0x328] sm:$0x3] %vm95, 0.0
    %196 = vst.msk [vmem:[#allocation2 + $0x330] sm:$0xff] %vm92, 0.0
    %197 = vst.msk [vmem:[#allocation2 + $0x338] sm:$0xff] %vm92, 0.0
    %198 = vst.msk [vmem:[#allocation2 + $0x340] sm:$0x3] %vm95, 0.0
    %199 = vst.msk [vmem:[#allocation2 + $0x348] sm:$0xff] %vm92, 0.0
    %200 = vst.msk [vmem:[#allocation2 + $0x350] sm:$0xff] %vm92, 0.0
    %201 = vst.msk [vmem:[#allocation2 + $0x358] sm:$0x3] %vm95, 0.0
    %s202 = scalar_lea.vmem [#allocation2], 24
    %203 = vst.msk [vmem:[%s202 + $0x1] sm:$0xff] %vm92, %v28
    %204 = vst.msk [vmem:[%s202 + $0x9] sm:$0xff] %vm92, %v29
    %205 = vst.msk [vmem:[%s202 + $0x19] sm:$0xff] %vm92, %v30
    %206 = vst.msk [vmem:[%s202 + $0x21] sm:$0xff] %vm92, %v31
    %207 = vst.msk [vmem:[%s202 + $0x31] sm:$0xff] %vm92, %v32
    %208 = vst.msk [vmem:[%s202 + $0x39] sm:$0xff] %vm92, %v33
    %209 = vst.msk [vmem:[%s202 + $0x49] sm:$0xff] %vm92, %v34
    %210 = vst.msk [vmem:[%s202 + $0x51] sm:$0xff] %vm92, %v35
    %211 = vst.msk [vmem:[%s202 + $0x61] sm:$0xff] %vm92, %v36
    %212 = vst.msk [vmem:[%s202 + $0x69] sm:$0xff] %vm92, %v37
    %213 = vst.msk [vmem:[%s202 + $0x79] sm:$0xff] %vm92, %v38
    %214 = vst.msk [vmem:[%s202 + $0x81] sm:$0xff] %vm92, %v39
    %215 = vst.msk [vmem:[%s202 + $0x91] sm:$0xff] %vm92, %v40
    %216 = vst.msk [vmem:[%s202 + $0x99] sm:$0xff] %vm92, %v41
    %217 = vst.msk [vmem:[%s202 + $0xa9] sm:$0xff] %vm92, %v42
    %218 = vst.msk [vmem:[%s202 + $0xb1] sm:$0xff] %vm92, %v43
    %219 = vst.msk [vmem:[%s202 + $0xc1] sm:$0xff] %vm92, %v44
    %220 = vst.msk [vmem:[%s202 + $0xc9] sm:$0xff] %vm92, %v45
    %221 = vst.msk [vmem:[%s202 + $0xd9] sm:$0xff] %vm92, %v46
    %222 = vst.msk [vmem:[%s202 + $0xe1] sm:$0xff] %vm92, %v47
    %223 = vst.msk [vmem:[%s202 + $0xf1] sm:$0xff] %vm92, %v48
    %224 = vst.msk [vmem:[%s202 + $0xf9] sm:$0xff] %vm92, %v49
    %225 = vst.msk [vmem:[%s202 + $0x109] sm:$0xff] %vm92, %v50
    %226 = vst.msk [vmem:[%s202 + $0x111] sm:$0xff] %vm92, %v51
    %227 = vst.msk [vmem:[%s202 + $0x121] sm:$0xff] %vm92, %v52
    %228 = vst.msk [vmem:[%s202 + $0x129] sm:$0xff] %vm92, %v53
    %229 = vst.msk [vmem:[%s202 + $0x139] sm:$0xff] %vm92, %v54
    %230 = vst.msk [vmem:[%s202 + $0x141] sm:$0xff] %vm92, %v55
    %231 = vst.msk [vmem:[%s202 + $0x151] sm:$0xff] %vm92, %v56
    %232 = vst.msk [vmem:[%s202 + $0x159] sm:$0xff] %vm92, %v57
    %233 = vst.msk [vmem:[%s202 + $0x169] sm:$0xff] %vm92, %v58
    %234 = vst.msk [vmem:[%s202 + $0x171] sm:$0xff] %vm92, %v59
    %235 = vst.msk [vmem:[%s202 + $0x1b1] sm:$0xff] %vm92, %v60
    %236 = vst.msk [vmem:[%s202 + $0x1b9] sm:$0xff] %vm92, %v61
    %237 = vst.msk [vmem:[%s202 + $0x1c9] sm:$0xff] %vm92, %v62
    %238 = vst.msk [vmem:[%s202 + $0x1d1] sm:$0xff] %vm92, %v63
    %239 = vst.msk [vmem:[%s202 + $0x1e1] sm:$0xff] %vm92, %v64
    %240 = vst.msk [vmem:[%s202 + $0x1e9] sm:$0xff] %vm92, %v65
    %241 = vst.msk [vmem:[%s202 + $0x1f9] sm:$0xff] %vm92, %v66
    %242 = vst.msk [vmem:[%s202 + $0x201] sm:$0xff] %vm92, %v67
    %243 = vst.msk [vmem:[%s202 + $0x211] sm:$0xff] %vm92, %v68
    %244 = vst.msk [vmem:[%s202 + $0x219] sm:$0xff] %vm92, %v69
    %245 = vst.msk [vmem:[%s202 + $0x229] sm:$0xff] %vm92, %v70
    %246 = vst.msk [vmem:[%s202 + $0x231] sm:$0xff] %vm92, %v71
    %247 = vst.msk [vmem:[%s202 + $0x241] sm:$0xff] %vm92, %v72
    %248 = vst.msk [vmem:[%s202 + $0x249] sm:$0xff] %vm92, %v73
    %249 = vst.msk [vmem:[%s202 + $0x259] sm:$0xff] %vm92, %v74
    %250 = vst.msk [vmem:[%s202 + $0x261] sm:$0xff] %vm92, %v75
    %251 = vst.msk [vmem:[%s202 + $0x271] sm:$0xff] %vm92, %v76
    %252 = vst.msk [vmem:[%s202 + $0x279] sm:$0xff] %vm92, %v77
    %253 = vst.msk [vmem:[%s202 + $0x289] sm:$0xff] %vm92, %v78
    %254 = vst.msk [vmem:[%s202 + $0x291] sm:$0xff] %vm92, %v79
    %255 = vst.msk [vmem:[%s202 + $0x2a1] sm:$0xff] %vm92, %v80
    %256 = vst.msk [vmem:[%s202 + $0x2a9] sm:$0xff] %vm92, %v81
    %257 = vst.msk [vmem:[%s202 + $0x2b9] sm:$0xff] %vm92, %v82
    %258 = vst.msk [vmem:[%s202 + $0x2c1] sm:$0xff] %vm92, %v83
    %259 = vst.msk [vmem:[%s202 + $0x2d1] sm:$0xff] %vm92, %v84
    %260 = vst.msk [vmem:[%s202 + $0x2d9] sm:$0xff] %vm92, %v85
    %261 = vst.msk [vmem:[%s202 + $0x2e9] sm:$0xff] %vm92, %v86
    %262 = vst.msk [vmem:[%s202 + $0x2f1] sm:$0xff] %vm92, %v87
    %263 = vst.msk [vmem:[%s202 + $0x301] sm:$0xff] %vm92, %v88
    %264 = vst.msk [vmem:[%s202 + $0x309] sm:$0xff] %vm92, %v89
    %265 = vst.msk [vmem:[%s202 + $0x319] sm:$0xff] %vm92, %v90
    %266 = vst.msk [vmem:[%s202 + $0x321] sm:$0xff] %vm92, %v91
    %v267 = vld [vmem:[#allocation2] sm:$0xff]
    %v268 = vld [vmem:[#allocation2 + $0x8] sm:$0xff]
    %v269 = vld [vmem:[#allocation2 + $0x18] sm:$0xff]
    %v270 = vld [vmem:[#allocation2 + $0x20] sm:$0xff]
    %v271 = vld [vmem:[#allocation2 + $0x30] sm:$0xff]
    %v272 = vld [vmem:[#allocation2 + $0x38] sm:$0xff]
    %v273 = vld [vmem:[#allocation2 + $0x48] sm:$0xff]
    %v274 = vld [vmem:[#allocation2 + $0x50] sm:$0xff]
    %v275 = vld [vmem:[#allocation2 + $0x60] sm:$0xff]
    %v276 = vld [vmem:[#allocation2 + $0x68] sm:$0xff]
    %v277 = vld [vmem:[#allocation2 + $0x78] sm:$0xff]
    %v278 = vld [vmem:[#allocation2 + $0x80] sm:$0xff]
    %v279 = vld [vmem:[#allocation2 + $0x90] sm:$0xff]
    %v280 = vld [vmem:[#allocation2 + $0x98] sm:$0xff]
    %v281 = vld [vmem:[#allocation2 + $0xa8] sm:$0xff]
    %v282 = vld [vmem:[#allocation2 + $0xb0] sm:$0xff]
    %v283 = vld [vmem:[#allocation2 + $0xc0] sm:$0xff]
    %v284 = vld [vmem:[#allocation2 + $0xc8] sm:$0xff]
    %v285 = vld [vmem:[#allocation2 + $0xd8] sm:$0xff]
    %v286 = vld [vmem:[#allocation2 + $0xe0] sm:$0xff]
    %v287 = vld [vmem:[#allocation2 + $0xf0] sm:$0xff]
    %v288 = vld [vmem:[#allocation2 + $0xf8] sm:$0xff]
    %v289 = vld [vmem:[#allocation2 + $0x108] sm:$0xff]
    %v290 = vld [vmem:[#allocation2 + $0x110] sm:$0xff]
    %v291 = vld [vmem:[#allocation2 + $0x120] sm:$0xff]
    %v292 = vld [vmem:[#allocation2 + $0x128] sm:$0xff]
    %v293 = vld [vmem:[#allocation2 + $0x138] sm:$0xff]
    %v294 = vld [vmem:[#allocation2 + $0x140] sm:$0xff]
    %v295 = vld [vmem:[#allocation2 + $0x150] sm:$0xff]
    %v296 = vld [vmem:[#allocation2 + $0x158] sm:$0xff]
    %v297 = vld [vmem:[#allocation2 + $0x168] sm:$0xff]
    %v298 = vld [vmem:[#allocation2 + $0x170] sm:$0xff]
    %v299 = vld [vmem:[#allocation2 + $0x1b0] sm:$0xff]
    %v300 = vld [vmem:[#allocation2 + $0x1b8] sm:$0xff]
    %v301 = vld [vmem:[#allocation2 + $0x1c8] sm:$0xff]
    %v302 = vld [vmem:[#allocation2 + $0x1d0] sm:$0xff]
    %v303 = vld [vmem:[#allocation2 + $0x1e0] sm:$0xff]
    %v304 = vld [vmem:[#allocation2 + $0x1e8] sm:$0xff]
    %v305 = vld [vmem:[#allocation2 + $0x1f8] sm:$0xff]
    %v306 = vld [vmem:[#allocation2 + $0x200] sm:$0xff]
    %v307 = vld [vmem:[#allocation2 + $0x210] sm:$0xff]
    %v308 = vld [vmem:[#allocation2 + $0x218] sm:$0xff]
    %v309 = vld [vmem:[#allocation2 + $0x228] sm:$0xff]
    %v310 = vld [vmem:[#allocation2 + $0x230] sm:$0xff]
    %v311 = vld [vmem:[#allocation2 + $0x240] sm:$0xff]
    %v312 = vld [vmem:[#allocation2 + $0x248] sm:$0xff]
    %v313 = vld [vmem:[#allocation2 + $0x258] sm:$0xff]
    %v314 = vld [vmem:[#allocation2 + $0x260] sm:$0xff]
    %v315 = vld [vmem:[#allocation2 + $0x270] sm:$0xff]
    %v316 = vld [vmem:[#allocation2 + $0x278] sm:$0xff]
    %v317 = vld [vmem:[#allocation2 + $0x288] sm:$0xff]
    %v318 = vld [vmem:[#allocation2 + $0x290] sm:$0xff]
    %v319 = vld [vmem:[#allocation2 + $0x2a0] sm:$0xff]
    %v320 = vld [vmem:[#allocation2 + $0x2a8] sm:$0xff]
    %v321 = vld [vmem:[#allocation2 + $0x2b8] sm:$0xff]
    %v322 = vld [vmem:[#allocation2 + $0x2c0] sm:$0xff]
    %v323 = vld [vmem:[#allocation2 + $0x2d0] sm:$0xff]
    %v324 = vld [vmem:[#allocation2 + $0x2d8] sm:$0xff]
    %v325 = vld [vmem:[#allocation2 + $0x2e8] sm:$0xff]
    %v326 = vld [vmem:[#allocation2 + $0x2f0] sm:$0xff]
    %v327 = vld [vmem:[#allocation2 + $0x300] sm:$0xff]
    %v328 = vld [vmem:[#allocation2 + $0x308] sm:$0xff]
    %v329 = vld [vmem:[#allocation2 + $0x318] sm:$0xff]
    %v330 = vld [vmem:[#allocation2 + $0x320] sm:$0xff]
    %v331 = vpack.c.bf16 %v268, %v267
    %v332 = vpack.c.bf16 %v270, %v269
    %v333 = vpack.c.bf16 %v272, %v271
    %v334 = vpack.c.bf16 %v274, %v273
    %v335 = vpack.c.bf16 %v276, %v275
    %v336 = vpack.c.bf16 %v278, %v277
    %v337 = vpack.c.bf16 %v280, %v279
    %v338 = vpack.c.bf16 %v282, %v281
    %v339 = vpack.c.bf16 %v284, %v283
    %v340 = vpack.c.bf16 %v286, %v285
    %v341 = vpack.c.bf16 %v288, %v287
    %v342 = vpack.c.bf16 %v290, %v289
    %v343 = vpack.c.bf16 %v292, %v291
    %v344 = vpack.c.bf16 %v294, %v293
    %v345 = vpack.c.bf16 %v296, %v295
    %v346 = vpack.c.bf16 %v298, %v297
    %v347 = vpack.c.bf16 %v300, %v299
    %v348 = vpack.c.bf16 %v302, %v301
    %v349 = vpack.c.bf16 %v304, %v303
    %v350 = vpack.c.bf16 %v306, %v305
    %v351 = vpack.c.bf16 %v308, %v307
    %v352 = vpack.c.bf16 %v310, %v309
    %v353 = vpack.c.bf16 %v312, %v311
    %v354 = vpack.c.bf16 %v314, %v313
    %v355 = vpack.c.bf16 %v316, %v315
    %v356 = vpack.c.bf16 %v318, %v317
    %v357 = vpack.c.bf16 %v320, %v319
    %v358 = vpack.c.bf16 %v322, %v321
    %v359 = vpack.c.bf16 %v324, %v323
    %v360 = vpack.c.bf16 %v326, %v325
    %v361 = vpack.c.bf16 %v328, %v327
    %v362 = vpack.c.bf16 %v330, %v329
    %v363 = vld [vmem:[#allocation2 + $0x1] sm:$0xff]
    %v364 = vld [vmem:[#allocation2 + $0x9] sm:$0xff]
    %v365 = vld [vmem:[#allocation2 + $0x19] sm:$0xff]
    %v366 = vld [vmem:[#allocation2 + $0x21] sm:$0xff]
    %v367 = vld [vmem:[#allocation2 + $0x31] sm:$0xff]
    %v368 = vld [vmem:[#allocation2 + $0x39] sm:$0xff]
    %v369 = vld [vmem:[#allocation2 + $0x49] sm:$0xff]
    %v370 = vld [vmem:[#allocation2 + $0x51] sm:$0xff]
    %v371 = vld [vmem:[#allocation2 + $0x61] sm:$0xff]
    %v372 = vld [vmem:[#allocation2 + $0x69] sm:$0xff]
    %v373 = vld [vmem:[#allocation2 + $0x79] sm:$0xff]
    %v374 = vld [vmem:[#allocation2 + $0x81] sm:$0xff]
    %v375 = vld [vmem:[#allocation2 + $0x91] sm:$0xff]
    %v376 = vld [vmem:[#allocation2 + $0x99] sm:$0xff]
    %v377 = vld [vmem:[#allocation2 + $0xa9] sm:$0xff]
    %v378 = vld [vmem:[#allocation2 + $0xb1] sm:$0xff]
    %v379 = vld [vmem:[#allocation2 + $0xc1] sm:$0xff]
    %v380 = vld [vmem:[#allocation2 + $0xc9] sm:$0xff]
    %v381 = vld [vmem:[#allocation2 + $0xd9] sm:$0xff]
    %v382 = vld [vmem:[#allocation2 + $0xe1] sm:$0xff]
    %v383 = vld [vmem:[#allocation2 + $0xf1] sm:$0xff]
    %v384 = vld [vmem:[#allocation2 + $0xf9] sm:$0xff]
    %v385 = vld [vmem:[#allocation2 + $0x109] sm:$0xff]
    %v386 = vld [vmem:[#allocation2 + $0x111] sm:$0xff]
    %v387 = vld [vmem:[#allocation2 + $0x121] sm:$0xff]
    %v388 = vld [vmem:[#allocation2 + $0x129] sm:$0xff]
    %v389 = vld [vmem:[#allocation2 + $0x139] sm:$0xff]
    %v390 = vld [vmem:[#allocation2 + $0x141] sm:$0xff]
    %v391 = vld [vmem:[#allocation2 + $0x151] sm:$0xff]
    %v392 = vld [vmem:[#allocation2 + $0x159] sm:$0xff]
    %v393 = vld [vmem:[#allocation2 + $0x169] sm:$0xff]
    %v394 = vld [vmem:[#allocation2 + $0x171] sm:$0xff]
    %v395 = vld [vmem:[#allocation2 + $0x1b1] sm:$0xff]
    %v396 = vld [vmem:[#allocation2 + $0x1b9] sm:$0xff]
    %v397 = vld [vmem:[#allocation2 + $0x1c9] sm:$0xff]
    %v398 = vld [vmem:[#allocation2 + $0x1d1] sm:$0xff]
    %v399 = vld [vmem:[#allocation2 + $0x1e1] sm:$0xff]
    %v400 = vld [vmem:[#allocation2 + $0x1e9] sm:$0xff]
    %v401 = vld [vmem:[#allocation2 + $0x1f9] sm:$0xff]
    %v402 = vld [vmem:[#allocation2 + $0x201] sm:$0xff]
    %v403 = vld [vmem:[#allocation2 + $0x211] sm:$0xff]
    %v404 = vld [vmem:[#allocation2 + $0x219] sm:$0xff]
    %v405 = vld [vmem:[#allocation2 + $0x229] sm:$0xff]
    %v406 = vld [vmem:[#allocation2 + $0x231] sm:$0xff]
    %v407 = vld [vmem:[#allocation2 + $0x241] sm:$0xff]
    %v408 = vld [vmem:[#allocation2 + $0x249] sm:$0xff]
    %v409 = vld [vmem:[#allocation2 + $0x259] sm:$0xff]
    %v410 = vld [vmem:[#allocation2 + $0x261] sm:$0xff]
    %v411 = vld [vmem:[#allocation2 + $0x271] sm:$0xff]
    %v412 = vld [vmem:[#allocation2 + $0x279] sm:$0xff]
    %v413 = vld [vmem:[#allocation2 + $0x289] sm:$0xff]
    %v414 = vld [vmem:[#allocation2 + $0x291] sm:$0xff]
    %v415 = vld [vmem:[#allocation2 + $0x2a1] sm:$0xff]
    %v416 = vld [vmem:[#allocation2 + $0x2a9] sm:$0xff]
    %v417 = vld [vmem:[#allocation2 + $0x2b9] sm:$0xff]
    %v418 = vld [vmem:[#allocation2 + $0x2c1] sm:$0xff]
    %v419 = vld [vmem:[#allocation2 + $0x2d1] sm:$0xff]
    %v420 = vld [vmem:[#allocation2 + $0x2d9] sm:$0xff]
    %v421 = vld [vmem:[#allocation2 + $0x2e9] sm:$0xff]
    %v422 = vld [vmem:[#allocation2 + $0x2f1] sm:$0xff]
    %v423 = vld [vmem:[#allocation2 + $0x301] sm:$0xff]
    %v424 = vld [vmem:[#allocation2 + $0x309] sm:$0xff]
    %v425 = vld [vmem:[#allocation2 + $0x319] sm:$0xff]
    %v426 = vld [vmem:[#allocation2 + $0x321] sm:$0xff]
    %v427 = vpack.c.bf16 %v364, %v363
    %v428 = vpack.c.bf16 %v366, %v365
    %v429 = vpack.c.bf16 %v368, %v367
    %v430 = vpack.c.bf16 %v370, %v369
    %v431 = vpack.c.bf16 %v372, %v371
    %v432 = vpack.c.bf16 %v374, %v373
    %v433 = vpack.c.bf16 %v376, %v375
    %v434 = vpack.c.bf16 %v378, %v377
    %v435 = vpack.c.bf16 %v380, %v379
    %v436 = vpack.c.bf16 %v382, %v381
    %v437 = vpack.c.bf16 %v384, %v383
    %v438 = vpack.c.bf16 %v386, %v385
    %v439 = vpack.c.bf16 %v388, %v387
    %v440 = vpack.c.bf16 %v390, %v389
    %v441 = vpack.c.bf16 %v392, %v391
    %v442 = vpack.c.bf16 %v394, %v393
    %v443 = vpack.c.bf16 %v396, %v395
    %v444 = vpack.c.bf16 %v398, %v397
    %v445 = vpack.c.bf16 %v400, %v399
    %v446 = vpack.c.bf16 %v402, %v401
    %v447 = vpack.c.bf16 %v404, %v403
    %v448 = vpack.c.bf16 %v406, %v405
    %v449 = vpack.c.bf16 %v408, %v407
    %v450 = vpack.c.bf16 %v410, %v409
    %v451 = vpack.c.bf16 %v412, %v411
    %v452 = vpack.c.bf16 %v414, %v413
    %v453 = vpack.c.bf16 %v416, %v415
    %v454 = vpack.c.bf16 %v418, %v417
    %v455 = vpack.c.bf16 %v420, %v419
    %v456 = vpack.c.bf16 %v422, %v421
    %v457 = vpack.c.bf16 %v424, %v423
    %v458 = vpack.c.bf16 %v426, %v425
    %v459 = vld [vmem:[#allocation2 + $0x2] sm:$0xff]
    %v460 = vld [vmem:[#allocation2 + $0xa] sm:$0xff]
    %v461 = vld [vmem:[#allocation2 + $0x1a] sm:$0xff]
    %v462 = vld [vmem:[#allocation2 + $0x22] sm:$0xff]
    %v463 = vld [vmem:[#allocation2 + $0x32] sm:$0xff]
    %v464 = vld [vmem:[#allocation2 + $0x3a] sm:$0xff]
    %v465 = vld [vmem:[#allocation2 + $0x4a] sm:$0xff]
    %v466 = vld [vmem:[#allocation2 + $0x52] sm:$0xff]
    %v467 = vld [vmem:[#allocation2 + $0x62] sm:$0xff]
    %v468 = vld [vmem:[#allocation2 + $0x6a] sm:$0xff]
    %v469 = vld [vmem:[#allocation2 + $0x7a] sm:$0xff]
    %v470 = vld [vmem:[#allocation2 + $0x82] sm:$0xff]
    %v471 = vld [vmem:[#allocation2 + $0x92] sm:$0xff]
    %v472 = vld [vmem:[#allocation2 + $0x9a] sm:$0xff]
    %v473 = vld [vmem:[#allocation2 + $0xaa] sm:$0xff]
    %v474 = vld [vmem:[#allocation2 + $0xb2] sm:$0xff]
    %v475 = vld [vmem:[#allocation2 + $0xc2] sm:$0xff]
    %v476 = vld [vmem:[#allocation2 + $0xca] sm:$0xff]
    %v477 = vld [vmem:[#allocation2 + $0xda] sm:$0xff]
    %v478 = vld [vmem:[#allocation2 + $0xe2] sm:$0xff]
    %v479 = vld [vmem:[#allocation2 + $0xf2] sm:$0xff]
    %v480 = vld [vmem:[#allocation2 + $0xfa] sm:$0xff]
    %v481 = vld [vmem:[#allocation2 + $0x10a] sm:$0xff]
    %v482 = vld [vmem:[#allocation2 + $0x112] sm:$0xff]
    %v483 = vld [vmem:[#allocation2 + $0x122] sm:$0xff]
    %v484 = vld [vmem:[#allocation2 + $0x12a] sm:$0xff]
    %v485 = vld [vmem:[#allocation2 + $0x13a] sm:$0xff]
    %v486 = vld [vmem:[#allocation2 + $0x142] sm:$0xff]
    %v487 = vld [vmem:[#allocation2 + $0x152] sm:$0xff]
    %v488 = vld [vmem:[#allocation2 + $0x15a] sm:$0xff]
    %v489 = vld [vmem:[#allocation2 + $0x16a] sm:$0xff]
    %v490 = vld [vmem:[#allocation2 + $0x172] sm:$0xff]
    %v491 = vld [vmem:[#allocation2 + $0x1b2] sm:$0xff]
    %v492 = vld [vmem:[#allocation2 + $0x1ba] sm:$0xff]
    %v493 = vld [vmem:[#allocation2 + $0x1ca] sm:$0xff]
    %v494 = vld [vmem:[#allocation2 + $0x1d2] sm:$0xff]
    %v495 = vld [vmem:[#allocation2 + $0x1e2] sm:$0xff]
    %v496 = vld [vmem:[#allocation2 + $0x1ea] sm:$0xff]
    %v497 = vld [vmem:[#allocation2 + $0x1fa] sm:$0xff]
    %v498 = vld [vmem:[#allocation2 + $0x202] sm:$0xff]
    %v499 = vld [vmem:[#allocation2 + $0x212] sm:$0xff]
    %v500 = vld [vmem:[#allocation2 + $0x21a] sm:$0xff]
    %v501 = vld [vmem:[#allocation2 + $0x22a] sm:$0xff]
    %v502 = vld [vmem:[#allocation2 + $0x232] sm:$0xff]
    %v503 = vld [vmem:[#allocation2 + $0x242] sm:$0xff]
    %v504 = vld [vmem:[#allocation2 + $0x24a] sm:$0xff]
    %v505 = vld [vmem:[#allocation2 + $0x25a] sm:$0xff]
    %v506 = vld [vmem:[#allocation2 + $0x262] sm:$0xff]
    %v507 = vld [vmem:[#allocation2 + $0x272] sm:$0xff]
    %v508 = vld [vmem:[#allocation2 + $0x27a] sm:$0xff]
    %v509 = vld [vmem:[#allocation2 + $0x28a] sm:$0xff]
    %v510 = vld [vmem:[#allocation2 + $0x292] sm:$0xff]
    %v511 = vld [vmem:[#allocation2 + $0x2a2] sm:$0xff]
    %v512 = vld [vmem:[#allocation2 + $0x2aa] sm:$0xff]
    %v513 = vld [vmem:[#allocation2 + $0x2ba] sm:$0xff]
    %v514 = vld [vmem:[#allocation2 + $0x2c2] sm:$0xff]
    %v515 = vld [vmem:[#allocation2 + $0x2d2] sm:$0xff]
    %v516 = vld [vmem:[#allocation2 + $0x2da] sm:$0xff]
    %v517 = vld [vmem:[#allocation2 + $0x2ea] sm:$0xff]
    %v518 = vld [vmem:[#allocation2 + $0x2f2] sm:$0xff]
    %v519 = vld [vmem:[#allocation2 + $0x302] sm:$0xff]
    %v520 = vld [vmem:[#allocation2 + $0x30a] sm:$0xff]
    %v521 = vld [vmem:[#allocation2 + $0x31a] sm:$0xff]
    %v522 = vld [vmem:[#allocation2 + $0x322] sm:$0xff]
    %v523 = vpack.c.bf16 %v460, %v459
    %v524 = vpack.c.bf16 %v462, %v461
    %v525 = vpack.c.bf16 %v464, %v463
    %v526 = vpack.c.bf16 %v466, %v465
    %v527 = vpack.c.bf16 %v468, %v467
    %v528 = vpack.c.bf16 %v470, %v469
    %v529 = vpack.c.bf16 %v472, %v471
    %v530 = vpack.c.bf16 %v474, %v473
    %v531 = vpack.c.bf16 %v476, %v475
    %v532 = vpack.c.bf16 %v478, %v477
    %v533 = vpack.c.bf16 %v480, %v479
    %v534 = vpack.c.bf16 %v482, %v481
    %v535 = vpack.c.bf16 %v484, %v483
    %v536 = vpack.c.bf16 %v486, %v485
    %v537 = vpack.c.bf16 %v488, %v487
    %v538 = vpack.c.bf16 %v490, %v489
    %v539 = vpack.c.bf16 %v492, %v491
    %v540 = vpack.c.bf16 %v494, %v493
    %v541 = vpack.c.bf16 %v496, %v495
    %v542 = vpack.c.bf16 %v498, %v497
    %v543 = vpack.c.bf16 %v500, %v499
    %v544 = vpack.c.bf16 %v502, %v501
    %v545 = vpack.c.bf16 %v504, %v503
    %v546 = vpack.c.bf16 %v506, %v505
    %v547 = vpack.c.bf16 %v508, %v507
    %v548 = vpack.c.bf16 %v510, %v509
    %v549 = vpack.c.bf16 %v512, %v511
    %v550 = vpack.c.bf16 %v514, %v513
    %v551 = vpack.c.bf16 %v516, %v515
    %v552 = vpack.c.bf16 %v518, %v517
    %v553 = vpack.c.bf16 %v520, %v519
    %v554 = vpack.c.bf16 %v522, %v521
    %v555 = vld [vmem:[%s202] sm:$0xff]
    %v556 = vld [vmem:[%s202 + $0x8] sm:$0xff]
    %v557 = vld [vmem:[%s202 + $0x18] sm:$0xff]
    %v558 = vld [vmem:[%s202 + $0x20] sm:$0xff]
    %v559 = vld [vmem:[%s202 + $0x30] sm:$0xff]
    %v560 = vld [vmem:[%s202 + $0x38] sm:$0xff]
    %v561 = vld [vmem:[%s202 + $0x48] sm:$0xff]
    %v562 = vld [vmem:[%s202 + $0x50] sm:$0xff]
    %v563 = vld [vmem:[%s202 + $0x60] sm:$0xff]
    %v564 = vld [vmem:[%s202 + $0x68] sm:$0xff]
    %v565 = vld [vmem:[%s202 + $0x78] sm:$0xff]
    %v566 = vld [vmem:[%s202 + $0x80] sm:$0xff]
    %v567 = vld [vmem:[%s202 + $0x90] sm:$0xff]
    %v568 = vld [vmem:[%s202 + $0x98] sm:$0xff]
    %v569 = vld [vmem:[%s202 + $0xa8] sm:$0xff]
    %v570 = vld [vmem:[%s202 + $0xb0] sm:$0xff]
    %v571 = vld [vmem:[%s202 + $0xc0] sm:$0xff]
    %v572 = vld [vmem:[%s202 + $0xc8] sm:$0xff]
    %v573 = vld [vmem:[%s202 + $0xd8] sm:$0xff]
    %v574 = vld [vmem:[%s202 + $0xe0] sm:$0xff]
    %v575 = vld [vmem:[%s202 + $0xf0] sm:$0xff]
    %v576 = vld [vmem:[%s202 + $0xf8] sm:$0xff]
    %v577 = vld [vmem:[%s202 + $0x108] sm:$0xff]
    %v578 = vld [vmem:[%s202 + $0x110] sm:$0xff]
    %v579 = vld [vmem:[%s202 + $0x120] sm:$0xff]
    %v580 = vld [vmem:[%s202 + $0x128] sm:$0xff]
    %v581 = vld [vmem:[%s202 + $0x138] sm:$0xff]
    %v582 = vld [vmem:[%s202 + $0x140] sm:$0xff]
    %v583 = vld [vmem:[%s202 + $0x150] sm:$0xff]
    %v584 = vld [vmem:[%s202 + $0x158] sm:$0xff]
    %v585 = vld [vmem:[%s202 + $0x168] sm:$0xff]
    %v586 = vld [vmem:[%s202 + $0x170] sm:$0xff]
    %v587 = vld [vmem:[%s202 + $0x1b0] sm:$0xff]
    %v588 = vld [vmem:[%s202 + $0x1b8] sm:$0xff]
    %v589 = vld [vmem:[%s202 + $0x1c8] sm:$0xff]
    %v590 = vld [vmem:[%s202 + $0x1d0] sm:$0xff]
    %v591 = vld [vmem:[%s202 + $0x1e0] sm:$0xff]
    %v592 = vld [vmem:[%s202 + $0x1e8] sm:$0xff]
    %v593 = vld [vmem:[%s202 + $0x1f8] sm:$0xff]
    %v594 = vld [vmem:[%s202 + $0x200] sm:$0xff]
    %v595 = vld [vmem:[%s202 + $0x210] sm:$0xff]
    %v596 = vld [vmem:[%s202 + $0x218] sm:$0xff]
    %v597 = vld [vmem:[%s202 + $0x228] sm:$0xff]
    %v598 = vld [vmem:[%s202 + $0x230] sm:$0xff]
    %v599 = vld [vmem:[%s202 + $0x240] sm:$0xff]
    %v600 = vld [vmem:[%s202 + $0x248] sm:$0xff]
    %v601 = vld [vmem:[%s202 + $0x258] sm:$0xff]
    %v602 = vld [vmem:[%s202 + $0x260] sm:$0xff]
    %v603 = vld [vmem:[%s202 + $0x270] sm:$0xff]
    %v604 = vld [vmem:[%s202 + $0x278] sm:$0xff]
    %v605 = vld [vmem:[%s202 + $0x288] sm:$0xff]
    %v606 = vld [vmem:[%s202 + $0x290] sm:$0xff]
    %v607 = vld [vmem:[%s202 + $0x2a0] sm:$0xff]
    %v608 = vld [vmem:[%s202 + $0x2a8] sm:$0xff]
    %v609 = vld [vmem:[%s202 + $0x2b8] sm:$0xff]
    %v610 = vld [vmem:[%s202 + $0x2c0] sm:$0xff]
    %v611 = vld [vmem:[%s202 + $0x2d0] sm:$0xff]
    %v612 = vld [vmem:[%s202 + $0x2d8] sm:$0xff]
    %v613 = vld [vmem:[%s202 + $0x2e8] sm:$0xff]
    %v614 = vld [vmem:[%s202 + $0x2f0] sm:$0xff]
    %v615 = vld [vmem:[%s202 + $0x300] sm:$0xff]
    %v616 = vld [vmem:[%s202 + $0x308] sm:$0xff]
    %v617 = vld [vmem:[%s202 + $0x318] sm:$0xff]
    %v618 = vld [vmem:[%s202 + $0x320] sm:$0xff]
    %v619 = vpack.c.bf16 %v556, %v555
    %v620 = vpack.c.bf16 %v558, %v557
    %v621 = vpack.c.bf16 %v560, %v559
    %v622 = vpack.c.bf16 %v562, %v561
    %v623 = vpack.c.bf16 %v564, %v563
    %v624 = vpack.c.bf16 %v566, %v565
    %v625 = vpack.c.bf16 %v568, %v567
    %v626 = vpack.c.bf16 %v570, %v569
    %v627 = vpack.c.bf16 %v572, %v571
    %v628 = vpack.c.bf16 %v574, %v573
    %v629 = vpack.c.bf16 %v576, %v575
    %v630 = vpack.c.bf16 %v578, %v577
    %v631 = vpack.c.bf16 %v580, %v579
    %v632 = vpack.c.bf16 %v582, %v581
    %v633 = vpack.c.bf16 %v584, %v583
    %v634 = vpack.c.bf16 %v586, %v585
    %v635 = vpack.c.bf16 %v588, %v587
    %v636 = vpack.c.bf16 %v590, %v589
    %v637 = vpack.c.bf16 %v592, %v591
    %v638 = vpack.c.bf16 %v594, %v593
    %v639 = vpack.c.bf16 %v596, %v595
    %v640 = vpack.c.bf16 %v598, %v597
    %v641 = vpack.c.bf16 %v600, %v599
    %v642 = vpack.c.bf16 %v602, %v601
    %v643 = vpack.c.bf16 %v604, %v603
    %v644 = vpack.c.bf16 %v606, %v605
    %v645 = vpack.c.bf16 %v608, %v607
    %v646 = vpack.c.bf16 %v610, %v609
    %v647 = vpack.c.bf16 %v612, %v611
    %v648 = vpack.c.bf16 %v614, %v613
    %v649 = vpack.c.bf16 %v616, %v615
    %v650 = vpack.c.bf16 %v618, %v617
    %v651 = vld [vmem:[%s202 + $0x1] sm:$0xff]
    %v652 = vld [vmem:[%s202 + $0x9] sm:$0xff]
    %v653 = vld [vmem:[%s202 + $0x19] sm:$0xff]
    %v654 = vld [vmem:[%s202 + $0x21] sm:$0xff]
    %v655 = vld [vmem:[%s202 + $0x31] sm:$0xff]
    %v656 = vld [vmem:[%s202 + $0x39] sm:$0xff]
    %v657 = vld [vmem:[%s202 + $0x49] sm:$0xff]
    %v658 = vld [vmem:[%s202 + $0x51] sm:$0xff]
    %v659 = vld [vmem:[%s202 + $0x61] sm:$0xff]
    %v660 = vld [vmem:[%s202 + $0x69] sm:$0xff]
    %v661 = vld [vmem:[%s202 + $0x79] sm:$0xff]
    %v662 = vld [vmem:[%s202 + $0x81] sm:$0xff]
    %v663 = vld [vmem:[%s202 + $0x91] sm:$0xff]
    %v664 = vld [vmem:[%s202 + $0x99] sm:$0xff]
    %v665 = vld [vmem:[%s202 + $0xa9] sm:$0xff]
    %v666 = vld [vmem:[%s202 + $0xb1] sm:$0xff]
    %v667 = vld [vmem:[%s202 + $0xc1] sm:$0xff]
    %v668 = vld [vmem:[%s202 + $0xc9] sm:$0xff]
    %v669 = vld [vmem:[%s202 + $0xd9] sm:$0xff]
    %v670 = vld [vmem:[%s202 + $0xe1] sm:$0xff]
    %v671 = vld [vmem:[%s202 + $0xf1] sm:$0xff]
    %v672 = vld [vmem:[%s202 + $0xf9] sm:$0xff]
    %v673 = vld [vmem:[%s202 + $0x109] sm:$0xff]
    %v674 = vld [vmem:[%s202 + $0x111] sm:$0xff]
    %v675 = vld [vmem:[%s202 + $0x121] sm:$0xff]
    %v676 = vld [vmem:[%s202 + $0x129] sm:$0xff]
    %v677 = vld [vmem:[%s202 + $0x139] sm:$0xff]
    %v678 = vld [vmem:[%s202 + $0x141] sm:$0xff]
    %v679 = vld [vmem:[%s202 + $0x151] sm:$0xff]
    %v680 = vld [vmem:[%s202 + $0x159] sm:$0xff]
    %v681 = vld [vmem:[%s202 + $0x169] sm:$0xff]
    %v682 = vld [vmem:[%s202 + $0x171] sm:$0xff]
    %v683 = vld [vmem:[%s202 + $0x1b1] sm:$0xff]
    %v684 = vld [vmem:[%s202 + $0x1b9] sm:$0xff]
    %v685 = vld [vmem:[%s202 + $0x1c9] sm:$0xff]
    %v686 = vld [vmem:[%s202 + $0x1d1] sm:$0xff]
    %v687 = vld [vmem:[%s202 + $0x1e1] sm:$0xff]
    %v688 = vld [vmem:[%s202 + $0x1e9] sm:$0xff]
    %v689 = vld [vmem:[%s202 + $0x1f9] sm:$0xff]
    %v690 = vld [vmem:[%s202 + $0x201] sm:$0xff]
    %v691 = vld [vmem:[%s202 + $0x211] sm:$0xff]
    %v692 = vld [vmem:[%s202 + $0x219] sm:$0xff]
    %v693 = vld [vmem:[%s202 + $0x229] sm:$0xff]
    %v694 = vld [vmem:[%s202 + $0x231] sm:$0xff]
    %v695 = vld [vmem:[%s202 + $0x241] sm:$0xff]
    %v696 = vld [vmem:[%s202 + $0x249] sm:$0xff]
    %v697 = vld [vmem:[%s202 + $0x259] sm:$0xff]
    %v698 = vld [vmem:[%s202 + $0x261] sm:$0xff]
    %v699 = vld [vmem:[%s202 + $0x271] sm:$0xff]
    %v700 = vld [vmem:[%s202 + $0x279] sm:$0xff]
    %v701 = vld [vmem:[%s202 + $0x289] sm:$0xff]
    %v702 = vld [vmem:[%s202 + $0x291] sm:$0xff]
    %v703 = vld [vmem:[%s202 + $0x2a1] sm:$0xff]
    %v704 = vld [vmem:[%s202 + $0x2a9] sm:$0xff]
    %v705 = vld [vmem:[%s202 + $0x2b9] sm:$0xff]
    %v706 = vld [vmem:[%s202 + $0x2c1] sm:$0xff]
    %v707 = vld [vmem:[%s202 + $0x2d1] sm:$0xff]
    %v708 = vld [vmem:[%s202 + $0x2d9] sm:$0xff]
    %v709 = vld [vmem:[%s202 + $0x2e9] sm:$0xff]
    %v710 = vld [vmem:[%s202 + $0x2f1] sm:$0xff]
    %v711 = vld [vmem:[%s202 + $0x301] sm:$0xff]
    %v712 = vld [vmem:[%s202 + $0x309] sm:$0xff]
    %v713 = vld [vmem:[%s202 + $0x319] sm:$0xff]
    %v714 = vld [vmem:[%s202 + $0x321] sm:$0xff]
    %v715 = vpack.c.bf16 %v652, %v651
    %v716 = vpack.c.bf16 %v654, %v653
    %v717 = vpack.c.bf16 %v656, %v655
    %v718 = vpack.c.bf16 %v658, %v657
    %v719 = vpack.c.bf16 %v660, %v659
    %v720 = vpack.c.bf16 %v662, %v661
    %v721 = vpack.c.bf16 %v664, %v663
    %v722 = vpack.c.bf16 %v666, %v665
    %v723 = vpack.c.bf16 %v668, %v667
    %v724 = vpack.c.bf16 %v670, %v669
    %v725 = vpack.c.bf16 %v672, %v671
    %v726 = vpack.c.bf16 %v674, %v673
    %v727 = vpack.c.bf16 %v676, %v675
    %v728 = vpack.c.bf16 %v678, %v677
    %v729 = vpack.c.bf16 %v680, %v679
    %v730 = vpack.c.bf16 %v682, %v681
    %v731 = vpack.c.bf16 %v684, %v683
    %v732 = vpack.c.bf16 %v686, %v685
    %v733 = vpack.c.bf16 %v688, %v687
    %v734 = vpack.c.bf16 %v690, %v689
    %v735 = vpack.c.bf16 %v692, %v691
    %v736 = vpack.c.bf16 %v694, %v693
    %v737 = vpack.c.bf16 %v696, %v695
    %v738 = vpack.c.bf16 %v698, %v697
    %v739 = vpack.c.bf16 %v700, %v699
    %v740 = vpack.c.bf16 %v702, %v701
    %v741 = vpack.c.bf16 %v704, %v703
    %v742 = vpack.c.bf16 %v706, %v705
    %v743 = vpack.c.bf16 %v708, %v707
    %v744 = vpack.c.bf16 %v710, %v709
    %v745 = vpack.c.bf16 %v712, %v711
    %v746 = vpack.c.bf16 %v714, %v713
    %v747 = vld [vmem:[%s202 + $0x2] sm:$0xff]
    %v748 = vld [vmem:[%s202 + $0xa] sm:$0xff]
    %v749 = vld [vmem:[%s202 + $0x1a] sm:$0xff]
    %v750 = vld [vmem:[%s202 + $0x22] sm:$0xff]
    %v751 = vld [vmem:[%s202 + $0x32] sm:$0xff]
    %v752 = vld [vmem:[%s202 + $0x3a] sm:$0xff]
    %v753 = vld [vmem:[%s202 + $0x4a] sm:$0xff]
    %v754 = vld [vmem:[%s202 + $0x52] sm:$0xff]
    %v755 = vld [vmem:[%s202 + $0x62] sm:$0xff]
    %v756 = vld [vmem:[%s202 + $0x6a] sm:$0xff]
    %v757 = vld [vmem:[%s202 + $0x7a] sm:$0xff]
    %v758 = vld [vmem:[%s202 + $0x82] sm:$0xff]
    %v759 = vld [vmem:[%s202 + $0x92] sm:$0xff]
    %v760 = vld [vmem:[%s202 + $0x9a] sm:$0xff]
    %v761 = vld [vmem:[%s202 + $0xaa] sm:$0xff]
    %v762 = vld [vmem:[%s202 + $0xb2] sm:$0xff]
    %v763 = vld [vmem:[%s202 + $0xc2] sm:$0xff]
    %v764 = vld [vmem:[%s202 + $0xca] sm:$0xff]
    %v765 = vld [vmem:[%s202 + $0xda] sm:$0xff]
    %v766 = vld [vmem:[%s202 + $0xe2] sm:$0xff]
    %v767 = vld [vmem:[%s202 + $0xf2] sm:$0xff]
    %v768 = vld [vmem:[%s202 + $0xfa] sm:$0xff]
    %v769 = vld [vmem:[%s202 + $0x10a] sm:$0xff]
    %v770 = vld [vmem:[%s202 + $0x112] sm:$0xff]
    %v771 = vld [vmem:[%s202 + $0x122] sm:$0xff]
    %v772 = vld [vmem:[%s202 + $0x12a] sm:$0xff]
    %v773 = vld [vmem:[%s202 + $0x13a] sm:$0xff]
    %v774 = vld [vmem:[%s202 + $0x142] sm:$0xff]
    %v775 = vld [vmem:[%s202 + $0x152] sm:$0xff]
    %v776 = vld [vmem:[%s202 + $0x15a] sm:$0xff]
    %v777 = vld [vmem:[%s202 + $0x16a] sm:$0xff]
    %v778 = vld [vmem:[%s202 + $0x172] sm:$0xff]
    %v779 = vld [vmem:[%s202 + $0x1b2] sm:$0xff]
    %v780 = vld [vmem:[%s202 + $0x1ba] sm:$0xff]
    %v781 = vld [vmem:[%s202 + $0x1ca] sm:$0xff]
    %v782 = vld [vmem:[%s202 + $0x1d2] sm:$0xff]
    %v783 = vld [vmem:[%s202 + $0x1e2] sm:$0xff]
    %v784 = vld [vmem:[%s202 + $0x1ea] sm:$0xff]
    %v785 = vld [vmem:[%s202 + $0x1fa] sm:$0xff]
    %v786 = vld [vmem:[%s202 + $0x202] sm:$0xff]
    %v787 = vld [vmem:[%s202 + $0x212] sm:$0xff]
    %v788 = vld [vmem:[%s202 + $0x21a] sm:$0xff]
    %v789 = vld [vmem:[%s202 + $0x22a] sm:$0xff]
    %v790 = vld [vmem:[%s202 + $0x232] sm:$0xff]
    %v791 = vld [vmem:[%s202 + $0x242] sm:$0xff]
    %v792 = vld [vmem:[%s202 + $0x24a] sm:$0xff]
    %v793 = vld [vmem:[%s202 + $0x25a] sm:$0xff]
    %v794 = vld [vmem:[%s202 + $0x262] sm:$0xff]
    %v795 = vld [vmem:[%s202 + $0x272] sm:$0xff]
    %v796 = vld [vmem:[%s202 + $0x27a] sm:$0xff]
    %v797 = vld [vmem:[%s202 + $0x28a] sm:$0xff]
    %v798 = vld [vmem:[%s202 + $0x292] sm:$0xff]
    %v799 = vld [vmem:[%s202 + $0x2a2] sm:$0xff]
    %v800 = vld [vmem:[%s202 + $0x2aa] sm:$0xff]
    %v801 = vld [vmem:[%s202 + $0x2ba] sm:$0xff]
    %v802 = vld [vmem:[%s202 + $0x2c2] sm:$0xff]
    %v803 = vld [vmem:[%s202 + $0x2d2] sm:$0xff]
    %v804 = vld [vmem:[%s202 + $0x2da] sm:$0xff]
    %v805 = vld [vmem:[%s202 + $0x2ea] sm:$0xff]
    %v806 = vld [vmem:[%s202 + $0x2f2] sm:$0xff]
    %v807 = vld [vmem:[%s202 + $0x302] sm:$0xff]
    %v808 = vld [vmem:[%s202 + $0x30a] sm:$0xff]
    %v809 = vld [vmem:[%s202 + $0x31a] sm:$0xff]
    %v810 = vld [vmem:[%s202 + $0x322] sm:$0xff]
    %v811 = vpack.c.bf16 %v748, %v747
    %v812 = vpack.c.bf16 %v750, %v749
    %v813 = vpack.c.bf16 %v752, %v751
    %v814 = vpack.c.bf16 %v754, %v753
    %v815 = vpack.c.bf16 %v756, %v755
    %v816 = vpack.c.bf16 %v758, %v757
    %v817 = vpack.c.bf16 %v760, %v759
    %v818 = vpack.c.bf16 %v762, %v761
    %v819 = vpack.c.bf16 %v764, %v763
    %v820 = vpack.c.bf16 %v766, %v765
    %v821 = vpack.c.bf16 %v768, %v767
    %v822 = vpack.c.bf16 %v770, %v769
    %v823 = vpack.c.bf16 %v772, %v771
    %v824 = vpack.c.bf16 %v774, %v773
    %v825 = vpack.c.bf16 %v776, %v775
    %v826 = vpack.c.bf16 %v778, %v777
    %v827 = vpack.c.bf16 %v780, %v779
    %v828 = vpack.c.bf16 %v782, %v781
    %v829 = vpack.c.bf16 %v784, %v783
    %v830 = vpack.c.bf16 %v786, %v785
    %v831 = vpack.c.bf16 %v788, %v787
    %v832 = vpack.c.bf16 %v790, %v789
    %v833 = vpack.c.bf16 %v792, %v791
    %v834 = vpack.c.bf16 %v794, %v793
    %v835 = vpack.c.bf16 %v796, %v795
    %v836 = vpack.c.bf16 %v798, %v797
    %v837 = vpack.c.bf16 %v800, %v799
    %v838 = vpack.c.bf16 %v802, %v801
    %v839 = vpack.c.bf16 %v804, %v803
    %v840 = vpack.c.bf16 %v806, %v805
    %v841 = vpack.c.bf16 %v808, %v807
    %v842 = vpack.c.bf16 %v810, %v809
    %s843 = scalar_lea.vmem [#allocation2], 48
    %v844 = vld [vmem:[%s843] sm:$0xff]
    %v845 = vld [vmem:[%s843 + $0x8] sm:$0xff]
    %v846 = vld [vmem:[%s843 + $0x18] sm:$0xff]
    %v847 = vld [vmem:[%s843 + $0x20] sm:$0xff]
    %v848 = vld [vmem:[%s843 + $0x30] sm:$0xff]
    %v849 = vld [vmem:[%s843 + $0x38] sm:$0xff]
    %v850 = vld [vmem:[%s843 + $0x48] sm:$0xff]
    %v851 = vld [vmem:[%s843 + $0x50] sm:$0xff]
    %v852 = vld [vmem:[%s843 + $0x60] sm:$0xff]
    %v853 = vld [vmem:[%s843 + $0x68] sm:$0xff]
    %v854 = vld [vmem:[%s843 + $0x78] sm:$0xff]
    %v855 = vld [vmem:[%s843 + $0x80] sm:$0xff]
    %v856 = vld [vmem:[%s843 + $0x90] sm:$0xff]
    %v857 = vld [vmem:[%s843 + $0x98] sm:$0xff]
    %v858 = vld [vmem:[%s843 + $0xa8] sm:$0xff]
    %v859 = vld [vmem:[%s843 + $0xb0] sm:$0xff]
    %v860 = vld [vmem:[%s843 + $0xc0] sm:$0xff]
    %v861 = vld [vmem:[%s843 + $0xc8] sm:$0xff]
    %v862 = vld [vmem:[%s843 + $0xd8] sm:$0xff]
    %v863 = vld [vmem:[%s843 + $0xe0] sm:$0xff]
    %v864 = vld [vmem:[%s843 + $0xf0] sm:$0xff]
    %v865 = vld [vmem:[%s843 + $0xf8] sm:$0xff]
    %v866 = vld [vmem:[%s843 + $0x108] sm:$0xff]
    %v867 = vld [vmem:[%s843 + $0x110] sm:$0xff]
    %v868 = vld [vmem:[%s843 + $0x120] sm:$0xff]
    %v869 = vld [vmem:[%s843 + $0x128] sm:$0xff]
    %v870 = vld [vmem:[%s843 + $0x138] sm:$0xff]
    %v871 = vld [vmem:[%s843 + $0x140] sm:$0xff]
    %v872 = vld [vmem:[%s843 + $0x150] sm:$0xff]
    %v873 = vld [vmem:[%s843 + $0x158] sm:$0xff]
    %v874 = vld [vmem:[%s843 + $0x168] sm:$0xff]
    %v875 = vld [vmem:[%s843 + $0x170] sm:$0xff]
    %v876 = vld [vmem:[%s843 + $0x1b0] sm:$0xff]
    %v877 = vld [vmem:[%s843 + $0x1b8] sm:$0xff]
    %v878 = vld [vmem:[%s843 + $0x1c8] sm:$0xff]
    %v879 = vld [vmem:[%s843 + $0x1d0] sm:$0xff]
    %v880 = vld [vmem:[%s843 + $0x1e0] sm:$0xff]
    %v881 = vld [vmem:[%s843 + $0x1e8] sm:$0xff]
    %v882 = vld [vmem:[%s843 + $0x1f8] sm:$0xff]
    %v883 = vld [vmem:[%s843 + $0x200] sm:$0xff]
    %v884 = vld [vmem:[%s843 + $0x210] sm:$0xff]
    %v885 = vld [vmem:[%s843 + $0x218] sm:$0xff]
    %v886 = vld [vmem:[%s843 + $0x228] sm:$0xff]
    %v887 = vld [vmem:[%s843 + $0x230] sm:$0xff]
    %v888 = vld [vmem:[%s843 + $0x240] sm:$0xff]
    %v889 = vld [vmem:[%s843 + $0x248] sm:$0xff]
    %v890 = vld [vmem:[%s843 + $0x258] sm:$0xff]
    %v891 = vld [vmem:[%s843 + $0x260] sm:$0xff]
    %v892 = vld [vmem:[%s843 + $0x270] sm:$0xff]
    %v893 = vld [vmem:[%s843 + $0x278] sm:$0xff]
    %v894 = vld [vmem:[%s843 + $0x288] sm:$0xff]
    %v895 = vld [vmem:[%s843 + $0x290] sm:$0xff]
    %v896 = vld [vmem:[%s843 + $0x2a0] sm:$0xff]
    %v897 = vld [vmem:[%s843 + $0x2a8] sm:$0xff]
    %v898 = vld [vmem:[%s843 + $0x2b8] sm:$0xff]
    %v899 = vld [vmem:[%s843 + $0x2c0] sm:$0xff]
    %v900 = vld [vmem:[%s843 + $0x2d0] sm:$0xff]
    %v901 = vld [vmem:[%s843 + $0x2d8] sm:$0xff]
    %v902 = vld [vmem:[%s843 + $0x2e8] sm:$0xff]
    %v903 = vld [vmem:[%s843 + $0x2f0] sm:$0xff]
    %v904 = vld [vmem:[%s843 + $0x300] sm:$0xff]
    %v905 = vld [vmem:[%s843 + $0x308] sm:$0xff]
    %v906 = vld [vmem:[%s843 + $0x318] sm:$0xff]
    %v907 = vld [vmem:[%s843 + $0x320] sm:$0xff]
    %v908 = vpack.c.bf16 %v845, %v844
    %v909 = vpack.c.bf16 %v847, %v846
    %v910 = vpack.c.bf16 %v849, %v848
    %v911 = vpack.c.bf16 %v851, %v850
    %v912 = vpack.c.bf16 %v853, %v852
    %v913 = vpack.c.bf16 %v855, %v854
    %v914 = vpack.c.bf16 %v857, %v856
    %v915 = vpack.c.bf16 %v859, %v858
    %v916 = vpack.c.bf16 %v861, %v860
    %v917 = vpack.c.bf16 %v863, %v862
    %v918 = vpack.c.bf16 %v865, %v864
    %v919 = vpack.c.bf16 %v867, %v866
    %v920 = vpack.c.bf16 %v869, %v868
    %v921 = vpack.c.bf16 %v871, %v870
    %v922 = vpack.c.bf16 %v873, %v872
    %v923 = vpack.c.bf16 %v875, %v874
    %v924 = vpack.c.bf16 %v877, %v876
    %v925 = vpack.c.bf16 %v879, %v878
    %v926 = vpack.c.bf16 %v881, %v880
    %v927 = vpack.c.bf16 %v883, %v882
    %v928 = vpack.c.bf16 %v885, %v884
    %v929 = vpack.c.bf16 %v887, %v886
    %v930 = vpack.c.bf16 %v889, %v888
    %v931 = vpack.c.bf16 %v891, %v890
    %v932 = vpack.c.bf16 %v893, %v892
    %v933 = vpack.c.bf16 %v895, %v894
    %v934 = vpack.c.bf16 %v897, %v896
    %v935 = vpack.c.bf16 %v899, %v898
    %v936 = vpack.c.bf16 %v901, %v900
    %v937 = vpack.c.bf16 %v903, %v902
    %v938 = vpack.c.bf16 %v905, %v904
    %v939 = vpack.c.bf16 %v907, %v906
    %v940 = vld [vmem:[%s843 + $0x1] sm:$0xff]
    %v941 = vld [vmem:[%s843 + $0x9] sm:$0xff]
    %v942 = vld [vmem:[%s843 + $0x19] sm:$0xff]
    %v943 = vld [vmem:[%s843 + $0x21] sm:$0xff]
    %v944 = vld [vmem:[%s843 + $0x31] sm:$0xff]
    %v945 = vld [vmem:[%s843 + $0x39] sm:$0xff]
    %v946 = vld [vmem:[%s843 + $0x49] sm:$0xff]
    %v947 = vld [vmem:[%s843 + $0x51] sm:$0xff]
    %v948 = vld [vmem:[%s843 + $0x61] sm:$0xff]
    %v949 = vld [vmem:[%s843 + $0x69] sm:$0xff]
    %v950 = vld [vmem:[%s843 + $0x79] sm:$0xff]
    %v951 = vld [vmem:[%s843 + $0x81] sm:$0xff]
    %v952 = vld [vmem:[%s843 + $0x91] sm:$0xff]
    %v953 = vld [vmem:[%s843 + $0x99] sm:$0xff]
    %v954 = vld [vmem:[%s843 + $0xa9] sm:$0xff]
    %v955 = vld [vmem:[%s843 + $0xb1] sm:$0xff]
    %v956 = vld [vmem:[%s843 + $0xc1] sm:$0xff]
    %v957 = vld [vmem:[%s843 + $0xc9] sm:$0xff]
    %v958 = vld [vmem:[%s843 + $0xd9] sm:$0xff]
    %v959 = vld [vmem:[%s843 + $0xe1] sm:$0xff]
    %v960 = vld [vmem:[%s843 + $0xf1] sm:$0xff]
    %v961 = vld [vmem:[%s843 + $0xf9] sm:$0xff]
    %v962 = vld [vmem:[%s843 + $0x109] sm:$0xff]
    %v963 = vld [vmem:[%s843 + $0x111] sm:$0xff]
    %v964 = vld [vmem:[%s843 + $0x121] sm:$0xff]
    %v965 = vld [vmem:[%s843 + $0x129] sm:$0xff]
    %v966 = vld [vmem:[%s843 + $0x139] sm:$0xff]
    %v967 = vld [vmem:[%s843 + $0x141] sm:$0xff]
    %v968 = vld [vmem:[%s843 + $0x151] sm:$0xff]
    %v969 = vld [vmem:[%s843 + $0x159] sm:$0xff]
    %v970 = vld [vmem:[%s843 + $0x169] sm:$0xff]
    %v971 = vld [vmem:[%s843 + $0x171] sm:$0xff]
    %v972 = vld [vmem:[%s843 + $0x1b1] sm:$0xff]
    %v973 = vld [vmem:[%s843 + $0x1b9] sm:$0xff]
    %v974 = vld [vmem:[%s843 + $0x1c9] sm:$0xff]
    %v975 = vld [vmem:[%s843 + $0x1d1] sm:$0xff]
    %v976 = vld [vmem:[%s843 + $0x1e1] sm:$0xff]
    %v977 = vld [vmem:[%s843 + $0x1e9] sm:$0xff]
    %v978 = vld [vmem:[%s843 + $0x1f9] sm:$0xff]
    %v979 = vld [vmem:[%s843 + $0x201] sm:$0xff]
    %v980 = vld [vmem:[%s843 + $0x211] sm:$0xff]
    %v981 = vld [vmem:[%s843 + $0x219] sm:$0xff]
    %v982 = vld [vmem:[%s843 + $0x229] sm:$0xff]
    %v983 = vld [vmem:[%s843 + $0x231] sm:$0xff]
    %v984 = vld [vmem:[%s843 + $0x241] sm:$0xff]
    %v985 = vld [vmem:[%s843 + $0x249] sm:$0xff]
    %v986 = vld [vmem:[%s843 + $0x259] sm:$0xff]
    %v987 = vld [vmem:[%s843 + $0x261] sm:$0xff]
    %v988 = vld [vmem:[%s843 + $0x271] sm:$0xff]
    %v989 = vld [vmem:[%s843 + $0x279] sm:$0xff]
    %v990 = vld [vmem:[%s843 + $0x289] sm:$0xff]
    %v991 = vld [vmem:[%s843 + $0x291] sm:$0xff]
    %v992 = vld [vmem:[%s843 + $0x2a1] sm:$0xff]
    %v993 = vld [vmem:[%s843 + $0x2a9] sm:$0xff]
    %v994 = vld [vmem:[%s843 + $0x2b9] sm:$0xff]
    %v995 = vld [vmem:[%s843 + $0x2c1] sm:$0xff]
    %v996 = vld [vmem:[%s843 + $0x2d1] sm:$0xff]
    %v997 = vld [vmem:[%s843 + $0x2d9] sm:$0xff]
    %v998 = vld [vmem:[%s843 + $0x2e9] sm:$0xff]
    %v999 = vld [vmem:[%s843 + $0x2f1] sm:$0xff]
    %v1000 = vld [vmem:[%s843 + $0x301] sm:$0xff]
    %v1001 = vld [vmem:[%s843 + $0x309] sm:$0xff]
    %v1002 = vld [vmem:[%s843 + $0x319] sm:$0xff]
    %v1003 = vld [vmem:[%s843 + $0x321] sm:$0xff]
    %v1004 = vpack.c.bf16 %v941, %v940
    %v1005 = vpack.c.bf16 %v943, %v942
    %v1006 = vpack.c.bf16 %v945, %v944
    %v1007 = vpack.c.bf16 %v947, %v946
    %v1008 = vpack.c.bf16 %v949, %v948
    %v1009 = vpack.c.bf16 %v951, %v950
    %v1010 = vpack.c.bf16 %v953, %v952
    %v1011 = vpack.c.bf16 %v955, %v954
    %v1012 = vpack.c.bf16 %v957, %v956
    %v1013 = vpack.c.bf16 %v959, %v958
    %v1014 = vpack.c.bf16 %v961, %v960
    %v1015 = vpack.c.bf16 %v963, %v962
    %v1016 = vpack.c.bf16 %v965, %v964
    %v1017 = vpack.c.bf16 %v967, %v966
    %v1018 = vpack.c.bf16 %v969, %v968
    %v1019 = vpack.c.bf16 %v971, %v970
    %v1020 = vpack.c.bf16 %v973, %v972
    %v1021 = vpack.c.bf16 %v975, %v974
    %v1022 = vpack.c.bf16 %v977, %v976
    %v1023 = vpack.c.bf16 %v979, %v978
    %v1024 = vpack.c.bf16 %v981, %v980
    %v1025 = vpack.c.bf16 %v983, %v982
    %v1026 = vpack.c.bf16 %v985, %v984
    %v1027 = vpack.c.bf16 %v987, %v986
    %v1028 = vpack.c.bf16 %v989, %v988
    %v1029 = vpack.c.bf16 %v991, %v990
    %v1030 = vpack.c.bf16 %v993, %v992
    %v1031 = vpack.c.bf16 %v995, %v994
    %v1032 = vpack.c.bf16 %v997, %v996
    %v1033 = vpack.c.bf16 %v999, %v998
    %v1034 = vpack.c.bf16 %v1001, %v1000
    %v1035 = vpack.c.bf16 %v1003, %v1002
    %v1036 = vld [vmem:[%s843 + $0x2] sm:$0xff]
    %v1037 = vld [vmem:[%s843 + $0xa] sm:$0xff]
    %v1038 = vld [vmem:[%s843 + $0x1a] sm:$0xff]
    %v1039 = vld [vmem:[%s843 + $0x22] sm:$0xff]
    %v1040 = vld [vmem:[%s843 + $0x32] sm:$0xff]
    %v1041 = vld [vmem:[%s843 + $0x3a] sm:$0xff]
    %v1042 = vld [vmem:[%s843 + $0x4a] sm:$0xff]
    %v1043 = vld [vmem:[%s843 + $0x52] sm:$0xff]
    %v1044 = vld [vmem:[%s843 + $0x62] sm:$0xff]
    %v1045 = vld [vmem:[%s843 + $0x6a] sm:$0xff]
    %v1046 = vld [vmem:[%s843 + $0x7a] sm:$0xff]
    %v1047 = vld [vmem:[%s843 + $0x82] sm:$0xff]
    %v1048 = vld [vmem:[%s843 + $0x92] sm:$0xff]
    %v1049 = vld [vmem:[%s843 + $0x9a] sm:$0xff]
    %v1050 = vld [vmem:[%s843 + $0xaa] sm:$0xff]
    %v1051 = vld [vmem:[%s843 + $0xb2] sm:$0xff]
    %v1052 = vld [vmem:[%s843 + $0xc2] sm:$0xff]
    %v1053 = vld [vmem:[%s843 + $0xca] sm:$0xff]
    %v1054 = vld [vmem:[%s843 + $0xda] sm:$0xff]
    %v1055 = vld [vmem:[%s843 + $0xe2] sm:$0xff]
    %v1056 = vld [vmem:[%s843 + $0xf2] sm:$0xff]
    %v1057 = vld [vmem:[%s843 + $0xfa] sm:$0xff]
    %v1058 = vld [vmem:[%s843 + $0x10a] sm:$0xff]
    %v1059 = vld [vmem:[%s843 + $0x112] sm:$0xff]
    %v1060 = vld [vmem:[%s843 + $0x122] sm:$0xff]
    %v1061 = vld [vmem:[%s843 + $0x12a] sm:$0xff]
    %v1062 = vld [vmem:[%s843 + $0x13a] sm:$0xff]
    %v1063 = vld [vmem:[%s843 + $0x142] sm:$0xff]
    %v1064 = vld [vmem:[%s843 + $0x152] sm:$0xff]
    %v1065 = vld [vmem:[%s843 + $0x15a] sm:$0xff]
    %v1066 = vld [vmem:[%s843 + $0x16a] sm:$0xff]
    %v1067 = vld [vmem:[%s843 + $0x172] sm:$0xff]
    %v1068 = vld [vmem:[%s843 + $0x1b2] sm:$0xff]
    %v1069 = vld [vmem:[%s843 + $0x1ba] sm:$0xff]
    %v1070 = vld [vmem:[%s843 + $0x1ca] sm:$0xff]
    %v1071 = vld [vmem:[%s843 + $0x1d2] sm:$0xff]
    %v1072 = vld [vmem:[%s843 + $0x1e2] sm:$0xff]
    %v1073 = vld [vmem:[%s843 + $0x1ea] sm:$0xff]
    %v1074 = vld [vmem:[%s843 + $0x1fa] sm:$0xff]
    %v1075 = vld [vmem:[%s843 + $0x202] sm:$0xff]
    %v1076 = vld [vmem:[%s843 + $0x212] sm:$0xff]
    %v1077 = vld [vmem:[%s843 + $0x21a] sm:$0xff]
    %v1078 = vld [vmem:[%s843 + $0x22a] sm:$0xff]
    %v1079 = vld [vmem:[%s843 + $0x232] sm:$0xff]
    %v1080 = vld [vmem:[%s843 + $0x242] sm:$0xff]
    %v1081 = vld [vmem:[%s843 + $0x24a] sm:$0xff]
    %v1082 = vld [vmem:[%s843 + $0x25a] sm:$0xff]
    %v1083 = vld [vmem:[%s843 + $0x262] sm:$0xff]
    %v1084 = vld [vmem:[%s843 + $0x272] sm:$0xff]
    %v1085 = vld [vmem:[%s843 + $0x27a] sm:$0xff]
    %v1086 = vld [vmem:[%s843 + $0x28a] sm:$0xff]
    %v1087 = vld [vmem:[%s843 + $0x292] sm:$0xff]
    %v1088 = vld [vmem:[%s843 + $0x2a2] sm:$0xff]
    %v1089 = vld [vmem:[%s843 + $0x2aa] sm:$0xff]
    %v1090 = vld [vmem:[%s843 + $0x2ba] sm:$0xff]
    %v1091 = vld [vmem:[%s843 + $0x2c2] sm:$0xff]
    %v1092 = vld [vmem:[%s843 + $0x2d2] sm:$0xff]
    %v1093 = vld [vmem:[%s843 + $0x2da] sm:$0xff]
    %v1094 = vld [vmem:[%s843 + $0x2ea] sm:$0xff]
    %v1095 = vld [vmem:[%s843 + $0x2f2] sm:$0xff]
    %v1096 = vld [vmem:[%s843 + $0x302] sm:$0xff]
    %v1097 = vld [vmem:[%s843 + $0x30a] sm:$0xff]
    %v1098 = vld [vmem:[%s843 + $0x31a] sm:$0xff]
    %v1099 = vld [vmem:[%s843 + $0x322] sm:$0xff]
    %v1100 = vpack.c.bf16 %v1037, %v1036
    %v1101 = vpack.c.bf16 %v1039, %v1038
    %v1102 = vpack.c.bf16 %v1041, %v1040
    %v1103 = vpack.c.bf16 %v1043, %v1042
    %v1104 = vpack.c.bf16 %v1045, %v1044
    %v1105 = vpack.c.bf16 %v1047, %v1046
    %v1106 = vpack.c.bf16 %v1049, %v1048
    %v1107 = vpack.c.bf16 %v1051, %v1050
    %v1108 = vpack.c.bf16 %v1053, %v1052
    %v1109 = vpack.c.bf16 %v1055, %v1054
    %v1110 = vpack.c.bf16 %v1057, %v1056
    %v1111 = vpack.c.bf16 %v1059, %v1058
    %v1112 = vpack.c.bf16 %v1061, %v1060
    %v1113 = vpack.c.bf16 %v1063, %v1062
    %v1114 = vpack.c.bf16 %v1065, %v1064
    %v1115 = vpack.c.bf16 %v1067, %v1066
    %v1116 = vpack.c.bf16 %v1069, %v1068
    %v1117 = vpack.c.bf16 %v1071, %v1070
    %v1118 = vpack.c.bf16 %v1073, %v1072
    %v1119 = vpack.c.bf16 %v1075, %v1074
    %v1120 = vpack.c.bf16 %v1077, %v1076
    %v1121 = vpack.c.bf16 %v1079, %v1078
    %v1122 = vpack.c.bf16 %v1081, %v1080
    %v1123 = vpack.c.bf16 %v1083, %v1082
    %v1124 = vpack.c.bf16 %v1085, %v1084
    %v1125 = vpack.c.bf16 %v1087, %v1086
    %v1126 = vpack.c.bf16 %v1089, %v1088
    %v1127 = vpack.c.bf16 %v1091, %v1090
    %v1128 = vpack.c.bf16 %v1093, %v1092
    %v1129 = vpack.c.bf16 %v1095, %v1094
    %v1130 = vpack.c.bf16 %v1097, %v1096
    %v1131 = vpack.c.bf16 %v1099, %v1098
    %1164 = vrot.lane.b32.xlu0 %v427, 32
    %v1165 = vpop.permute.xlu0 %1164
    %1166 = vrot.lane.b32.xlu0 %v428, 32
    %v1167 = vpop.permute.xlu0 %1166
    %1168 = vrot.lane.b32.xlu0 %v429, 32
    %v1169 = vpop.permute.xlu0 %1168
    %1170 = vrot.lane.b32.xlu0 %v430, 32
    %v1171 = vpop.permute.xlu0 %1170
    %1172 = vrot.lane.b32.xlu0 %v431, 32
    %v1173 = vpop.permute.xlu0 %1172
    %1174 = vrot.lane.b32.xlu0 %v432, 32
    %v1175 = vpop.permute.xlu0 %1174
    %1176 = vrot.lane.b32.xlu0 %v433, 32
    %v1177 = vpop.permute.xlu0 %1176
    %1178 = vrot.lane.b32.xlu0 %v434, 32
    %v1179 = vpop.permute.xlu0 %1178
    %1180 = vrot.lane.b32.xlu0 %v435, 32
    %v1181 = vpop.permute.xlu0 %1180
    %1182 = vrot.lane.b32.xlu0 %v436, 32
    %v1183 = vpop.permute.xlu0 %1182
    %1184 = vrot.lane.b32.xlu0 %v437, 32
    %v1185 = vpop.permute.xlu0 %1184
    %1186 = vrot.lane.b32.xlu0 %v438, 32
    %v1187 = vpop.permute.xlu0 %1186
    %1188 = vrot.lane.b32.xlu0 %v439, 32
    %v1189 = vpop.permute.xlu0 %1188
    %1190 = vrot.lane.b32.xlu0 %v440, 32
    %v1191 = vpop.permute.xlu0 %1190
    %1192 = vrot.lane.b32.xlu0 %v441, 32
    %v1193 = vpop.permute.xlu0 %1192
    %1194 = vrot.lane.b32.xlu0 %v442, 32
    %v1195 = vpop.permute.xlu0 %1194
    %1196 = vrot.lane.b32.xlu0 %v443, 32
    %v1197 = vpop.permute.xlu0 %1196
    %1198 = vrot.lane.b32.xlu0 %v444, 32
    %v1199 = vpop.permute.xlu0 %1198
    %1200 = vrot.lane.b32.xlu0 %v445, 32
    %v1201 = vpop.permute.xlu0 %1200
    %1202 = vrot.lane.b32.xlu0 %v446, 32
    %v1203 = vpop.permute.xlu0 %1202
    %1204 = vrot.lane.b32.xlu0 %v447, 32
    %v1205 = vpop.permute.xlu0 %1204
    %1206 = vrot.lane.b32.xlu0 %v448, 32
    %v1207 = vpop.permute.xlu0 %1206
    %1208 = vrot.lane.b32.xlu0 %v449, 32
    %v1209 = vpop.permute.xlu0 %1208
    %1210 = vrot.lane.b32.xlu0 %v450, 32
    %v1211 = vpop.permute.xlu0 %1210
    %1212 = vrot.lane.b32.xlu0 %v451, 32
    %v1213 = vpop.permute.xlu0 %1212
    %1214 = vrot.lane.b32.xlu0 %v452, 32
    %v1215 = vpop.permute.xlu0 %1214
    %1216 = vrot.lane.b32.xlu0 %v453, 32
    %v1217 = vpop.permute.xlu0 %1216
    %1218 = vrot.lane.b32.xlu0 %v454, 32
    %v1219 = vpop.permute.xlu0 %1218
    %1220 = vrot.lane.b32.xlu0 %v455, 32
    %v1221 = vpop.permute.xlu0 %1220
    %1222 = vrot.lane.b32.xlu0 %v456, 32
    %v1223 = vpop.permute.xlu0 %1222
    %1224 = vrot.lane.b32.xlu0 %v457, 32
    %v1225 = vpop.permute.xlu0 %1224
    %1226 = vrot.lane.b32.xlu0 %v458, 32
    %v1227 = vpop.permute.xlu0 %1226
    %1260 = vrot.lane.b32.xlu0 %v523, 64
    %v1261 = vpop.permute.xlu0 %1260
    %1262 = vrot.lane.b32.xlu0 %v524, 64
    %v1263 = vpop.permute.xlu0 %1262
    %1264 = vrot.lane.b32.xlu0 %v525, 64
    %v1265 = vpop.permute.xlu0 %1264
    %1266 = vrot.lane.b32.xlu0 %v526, 64
    %v1267 = vpop.permute.xlu0 %1266
    %1268 = vrot.lane.b32.xlu0 %v527, 64
    %v1269 = vpop.permute.xlu0 %1268
    %1270 = vrot.lane.b32.xlu0 %v528, 64
    %v1271 = vpop.permute.xlu0 %1270
    %1272 = vrot.lane.b32.xlu0 %v529, 64
    %v1273 = vpop.permute.xlu0 %1272
    %1274 = vrot.lane.b32.xlu0 %v530, 64
    %v1275 = vpop.permute.xlu0 %1274
    %1276 = vrot.lane.b32.xlu0 %v531, 64
    %v1277 = vpop.permute.xlu0 %1276
    %1278 = vrot.lane.b32.xlu0 %v532, 64
    %v1279 = vpop.permute.xlu0 %1278
    %1280 = vrot.lane.b32.xlu0 %v533, 64
    %v1281 = vpop.permute.xlu0 %1280
    %1282 = vrot.lane.b32.xlu0 %v534, 64
    %v1283 = vpop.permute.xlu0 %1282
    %1284 = vrot.lane.b32.xlu0 %v535, 64
    %v1285 = vpop.permute.xlu0 %1284
    %1286 = vrot.lane.b32.xlu0 %v536, 64
    %v1287 = vpop.permute.xlu0 %1286
    %1288 = vrot.lane.b32.xlu0 %v537, 64
    %v1289 = vpop.permute.xlu0 %1288
    %1290 = vrot.lane.b32.xlu0 %v538, 64
    %v1291 = vpop.permute.xlu0 %1290
    %1292 = vrot.lane.b32.xlu0 %v539, 64
    %v1293 = vpop.permute.xlu0 %1292
    %1294 = vrot.lane.b32.xlu0 %v540, 64
    %v1295 = vpop.permute.xlu0 %1294
    %1296 = vrot.lane.b32.xlu0 %v541, 64
    %v1297 = vpop.permute.xlu0 %1296
    %1298 = vrot.lane.b32.xlu0 %v542, 64
    %v1299 = vpop.permute.xlu0 %1298
    %1300 = vrot.lane.b32.xlu0 %v543, 64
    %v1301 = vpop.permute.xlu0 %1300
    %1302 = vrot.lane.b32.xlu0 %v544, 64
    %v1303 = vpop.permute.xlu0 %1302
    %1304 = vrot.lane.b32.xlu0 %v545, 64
    %v1305 = vpop.permute.xlu0 %1304
    %1306 = vrot.lane.b32.xlu0 %v546, 64
    %v1307 = vpop.permute.xlu0 %1306
    %1308 = vrot.lane.b32.xlu0 %v547, 64
    %v1309 = vpop.permute.xlu0 %1308
    %1310 = vrot.lane.b32.xlu0 %v548, 64
    %v1311 = vpop.permute.xlu0 %1310
    %1312 = vrot.lane.b32.xlu0 %v549, 64
    %v1313 = vpop.permute.xlu0 %1312
    %1314 = vrot.lane.b32.xlu0 %v550, 64
    %v1315 = vpop.permute.xlu0 %1314
    %1316 = vrot.lane.b32.xlu0 %v551, 64
    %v1317 = vpop.permute.xlu0 %1316
    %1318 = vrot.lane.b32.xlu0 %v552, 64
    %v1319 = vpop.permute.xlu0 %1318
    %1320 = vrot.lane.b32.xlu0 %v553, 64
    %v1321 = vpop.permute.xlu0 %1320
    %1322 = vrot.lane.b32.xlu0 %v554, 64
    %v1323 = vpop.permute.xlu0 %1322
    %1356 = vrot.lane.b32.xlu0 %v619, 96
    %v1357 = vpop.permute.xlu0 %1356
    %1358 = vrot.lane.b32.xlu0 %v620, 96
    %v1359 = vpop.permute.xlu0 %1358
    %1360 = vrot.lane.b32.xlu0 %v621, 96
    %v1361 = vpop.permute.xlu0 %1360
    %1362 = vrot.lane.b32.xlu0 %v622, 96
    %v1363 = vpop.permute.xlu0 %1362
    %1364 = vrot.lane.b32.xlu0 %v623, 96
    %v1365 = vpop.permute.xlu0 %1364
    %1366 = vrot.lane.b32.xlu0 %v624, 96
    %v1367 = vpop.permute.xlu0 %1366
    %1368 = vrot.lane.b32.xlu0 %v625, 96
    %v1369 = vpop.permute.xlu0 %1368
    %1370 = vrot.lane.b32.xlu0 %v626, 96
    %v1371 = vpop.permute.xlu0 %1370
    %1372 = vrot.lane.b32.xlu0 %v627, 96
    %v1373 = vpop.permute.xlu0 %1372
    %1374 = vrot.lane.b32.xlu0 %v628, 96
    %v1375 = vpop.permute.xlu0 %1374
    %1376 = vrot.lane.b32.xlu0 %v629, 96
    %v1377 = vpop.permute.xlu0 %1376
    %1378 = vrot.lane.b32.xlu0 %v630, 96
    %v1379 = vpop.permute.xlu0 %1378
    %1380 = vrot.lane.b32.xlu0 %v631, 96
    %v1381 = vpop.permute.xlu0 %1380
    %1382 = vrot.lane.b32.xlu0 %v632, 96
    %v1383 = vpop.permute.xlu0 %1382
    %1384 = vrot.lane.b32.xlu0 %v633, 96
    %v1385 = vpop.permute.xlu0 %1384
    %1386 = vrot.lane.b32.xlu0 %v634, 96
    %v1387 = vpop.permute.xlu0 %1386
    %1388 = vrot.lane.b32.xlu0 %v635, 96
    %v1389 = vpop.permute.xlu0 %1388
    %1390 = vrot.lane.b32.xlu0 %v636, 96
    %v1391 = vpop.permute.xlu0 %1390
    %1392 = vrot.lane.b32.xlu0 %v637, 96
    %v1393 = vpop.permute.xlu0 %1392
    %1394 = vrot.lane.b32.xlu0 %v638, 96
    %v1395 = vpop.permute.xlu0 %1394
    %1396 = vrot.lane.b32.xlu0 %v639, 96
    %v1397 = vpop.permute.xlu0 %1396
    %1398 = vrot.lane.b32.xlu0 %v640, 96
    %v1399 = vpop.permute.xlu0 %1398
    %1400 = vrot.lane.b32.xlu0 %v641, 96
    %v1401 = vpop.permute.xlu0 %1400
    %1402 = vrot.lane.b32.xlu0 %v642, 96
    %v1403 = vpop.permute.xlu0 %1402
    %1404 = vrot.lane.b32.xlu0 %v643, 96
    %v1405 = vpop.permute.xlu0 %1404
    %1406 = vrot.lane.b32.xlu0 %v644, 96
    %v1407 = vpop.permute.xlu0 %1406
    %1408 = vrot.lane.b32.xlu0 %v645, 96
    %v1409 = vpop.permute.xlu0 %1408
    %1410 = vrot.lane.b32.xlu0 %v646, 96
    %v1411 = vpop.permute.xlu0 %1410
    %1412 = vrot.lane.b32.xlu0 %v647, 96
    %v1413 = vpop.permute.xlu0 %1412
    %1414 = vrot.lane.b32.xlu0 %v648, 96
    %v1415 = vpop.permute.xlu0 %1414
    %1416 = vrot.lane.b32.xlu0 %v649, 96
    %v1417 = vpop.permute.xlu0 %1416
    %1418 = vrot.lane.b32.xlu0 %v650, 96
    %v1419 = vpop.permute.xlu0 %1418
    %1452 = vrot.lane.b32.xlu0 %v811, 32
    %v1453 = vpop.permute.xlu0 %1452
    %1454 = vrot.lane.b32.xlu0 %v812, 32
    %v1455 = vpop.permute.xlu0 %1454
    %1456 = vrot.lane.b32.xlu0 %v813, 32
    %v1457 = vpop.permute.xlu0 %1456
    %1458 = vrot.lane.b32.xlu0 %v814, 32
    %v1459 = vpop.permute.xlu0 %1458
    %1460 = vrot.lane.b32.xlu0 %v815, 32
    %v1461 = vpop.permute.xlu0 %1460
    %1462 = vrot.lane.b32.xlu0 %v816, 32
    %v1463 = vpop.permute.xlu0 %1462
    %1464 = vrot.lane.b32.xlu0 %v817, 32
    %v1465 = vpop.permute.xlu0 %1464
    %1466 = vrot.lane.b32.xlu0 %v818, 32
    %v1467 = vpop.permute.xlu0 %1466
    %1468 = vrot.lane.b32.xlu0 %v819, 32
    %v1469 = vpop.permute.xlu0 %1468
    %1470 = vrot.lane.b32.xlu0 %v820, 32
    %v1471 = vpop.permute.xlu0 %1470
    %1472 = vrot.lane.b32.xlu0 %v821, 32
    %v1473 = vpop.permute.xlu0 %1472
    %1474 = vrot.lane.b32.xlu0 %v822, 32
    %v1475 = vpop.permute.xlu0 %1474
    %1476 = vrot.lane.b32.xlu0 %v823, 32
    %v1477 = vpop.permute.xlu0 %1476
    %1478 = vrot.lane.b32.xlu0 %v824, 32
    %v1479 = vpop.permute.xlu0 %1478
    %1480 = vrot.lane.b32.xlu0 %v825, 32
    %v1481 = vpop.permute.xlu0 %1480
    %1482 = vrot.lane.b32.xlu0 %v826, 32
    %v1483 = vpop.permute.xlu0 %1482
    %1484 = vrot.lane.b32.xlu0 %v827, 32
    %v1485 = vpop.permute.xlu0 %1484
    %1486 = vrot.lane.b32.xlu0 %v828, 32
    %v1487 = vpop.permute.xlu0 %1486
    %1488 = vrot.lane.b32.xlu0 %v829, 32
    %v1489 = vpop.permute.xlu0 %1488
    %1490 = vrot.lane.b32.xlu0 %v830, 32
    %v1491 = vpop.permute.xlu0 %1490
    %1492 = vrot.lane.b32.xlu0 %v831, 32
    %v1493 = vpop.permute.xlu0 %1492
    %1494 = vrot.lane.b32.xlu0 %v832, 32
    %v1495 = vpop.permute.xlu0 %1494
    %1496 = vrot.lane.b32.xlu0 %v833, 32
    %v1497 = vpop.permute.xlu0 %1496
    %1498 = vrot.lane.b32.xlu0 %v834, 32
    %v1499 = vpop.permute.xlu0 %1498
    %1500 = vrot.lane.b32.xlu0 %v835, 32
    %v1501 = vpop.permute.xlu0 %1500
    %1502 = vrot.lane.b32.xlu0 %v836, 32
    %v1503 = vpop.permute.xlu0 %1502
    %1504 = vrot.lane.b32.xlu0 %v837, 32
    %v1505 = vpop.permute.xlu0 %1504
    %1506 = vrot.lane.b32.xlu0 %v838, 32
    %v1507 = vpop.permute.xlu0 %1506
    %1508 = vrot.lane.b32.xlu0 %v839, 32
    %v1509 = vpop.permute.xlu0 %1508
    %1510 = vrot.lane.b32.xlu0 %v840, 32
    %v1511 = vpop.permute.xlu0 %1510
    %1512 = vrot.lane.b32.xlu0 %v841, 32
    %v1513 = vpop.permute.xlu0 %1512
    %1514 = vrot.lane.b32.xlu0 %v842, 32
    %v1515 = vpop.permute.xlu0 %1514
    %1548 = vrot.lane.b32.xlu0 %v908, 64
    %v1549 = vpop.permute.xlu0 %1548
    %1550 = vrot.lane.b32.xlu0 %v909, 64
    %v1551 = vpop.permute.xlu0 %1550
    %1552 = vrot.lane.b32.xlu0 %v910, 64
    %v1553 = vpop.permute.xlu0 %1552
    %1554 = vrot.lane.b32.xlu0 %v911, 64
    %v1555 = vpop.permute.xlu0 %1554
    %1556 = vrot.lane.b32.xlu0 %v912, 64
    %v1557 = vpop.permute.xlu0 %1556
    %1558 = vrot.lane.b32.xlu0 %v913, 64
    %v1559 = vpop.permute.xlu0 %1558
    %1560 = vrot.lane.b32.xlu0 %v914, 64
    %v1561 = vpop.permute.xlu0 %1560
    %1562 = vrot.lane.b32.xlu0 %v915, 64
    %v1563 = vpop.permute.xlu0 %1562
    %1564 = vrot.lane.b32.xlu0 %v916, 64
    %v1565 = vpop.permute.xlu0 %1564
    %1566 = vrot.lane.b32.xlu0 %v917, 64
    %v1567 = vpop.permute.xlu0 %1566
    %1568 = vrot.lane.b32.xlu0 %v918, 64
    %v1569 = vpop.permute.xlu0 %1568
    %1570 = vrot.lane.b32.xlu0 %v919, 64
    %v1571 = vpop.permute.xlu0 %1570
    %1572 = vrot.lane.b32.xlu0 %v920, 64
    %v1573 = vpop.permute.xlu0 %1572
    %1574 = vrot.lane.b32.xlu0 %v921, 64
    %v1575 = vpop.permute.xlu0 %1574
    %1576 = vrot.lane.b32.xlu0 %v922, 64
    %v1577 = vpop.permute.xlu0 %1576
    %1578 = vrot.lane.b32.xlu0 %v923, 64
    %v1579 = vpop.permute.xlu0 %1578
    %1580 = vrot.lane.b32.xlu0 %v924, 64
    %v1581 = vpop.permute.xlu0 %1580
    %1582 = vrot.lane.b32.xlu0 %v925, 64
    %v1583 = vpop.permute.xlu0 %1582
    %1584 = vrot.lane.b32.xlu0 %v926, 64
    %v1585 = vpop.permute.xlu0 %1584
    %1586 = vrot.lane.b32.xlu0 %v927, 64
    %v1587 = vpop.permute.xlu0 %1586
    %1588 = vrot.lane.b32.xlu0 %v928, 64
    %v1589 = vpop.permute.xlu0 %1588
    %1590 = vrot.lane.b32.xlu0 %v929, 64
    %v1591 = vpop.permute.xlu0 %1590
    %1592 = vrot.lane.b32.xlu0 %v930, 64
    %v1593 = vpop.permute.xlu0 %1592
    %1594 = vrot.lane.b32.xlu0 %v931, 64
    %v1595 = vpop.permute.xlu0 %1594
    %1596 = vrot.lane.b32.xlu0 %v932, 64
    %v1597 = vpop.permute.xlu0 %1596
    %1598 = vrot.lane.b32.xlu0 %v933, 64
    %v1599 = vpop.permute.xlu0 %1598
    %1600 = vrot.lane.b32.xlu0 %v934, 64
    %v1601 = vpop.permute.xlu0 %1600
    %1602 = vrot.lane.b32.xlu0 %v935, 64
    %v1603 = vpop.permute.xlu0 %1602
    %1604 = vrot.lane.b32.xlu0 %v936, 64
    %v1605 = vpop.permute.xlu0 %1604
    %1606 = vrot.lane.b32.xlu0 %v937, 64
    %v1607 = vpop.permute.xlu0 %1606
    %1608 = vrot.lane.b32.xlu0 %v938, 64
    %v1609 = vpop.permute.xlu0 %1608
    %1610 = vrot.lane.b32.xlu0 %v939, 64
    %v1611 = vpop.permute.xlu0 %1610
    %1644 = vrot.lane.b32.xlu0 %v1004, 96
    %v1645 = vpop.permute.xlu0 %1644
    %1646 = vrot.lane.b32.xlu0 %v1005, 96
    %v1647 = vpop.permute.xlu0 %1646
    %1648 = vrot.lane.b32.xlu0 %v1006, 96
    %v1649 = vpop.permute.xlu0 %1648
    %1650 = vrot.lane.b32.xlu0 %v1007, 96
    %v1651 = vpop.permute.xlu0 %1650
    %1652 = vrot.lane.b32.xlu0 %v1008, 96
    %v1653 = vpop.permute.xlu0 %1652
    %1654 = vrot.lane.b32.xlu0 %v1009, 96
    %v1655 = vpop.permute.xlu0 %1654
    %1656 = vrot.lane.b32.xlu0 %v1010, 96
    %v1657 = vpop.permute.xlu0 %1656
    %1658 = vrot.lane.b32.xlu0 %v1011, 96
    %v1659 = vpop.permute.xlu0 %1658
    %1660 = vrot.lane.b32.xlu0 %v1012, 96
    %v1661 = vpop.permute.xlu0 %1660
    %1662 = vrot.lane.b32.xlu0 %v1013, 96
    %v1663 = vpop.permute.xlu0 %1662
    %1664 = vrot.lane.b32.xlu0 %v1014, 96
    %v1665 = vpop.permute.xlu0 %1664
    %1666 = vrot.lane.b32.xlu0 %v1015, 96
    %v1667 = vpop.permute.xlu0 %1666
    %1668 = vrot.lane.b32.xlu0 %v1016, 96
    %v1669 = vpop.permute.xlu0 %1668
    %1670 = vrot.lane.b32.xlu0 %v1017, 96
    %v1671 = vpop.permute.xlu0 %1670
    %1672 = vrot.lane.b32.xlu0 %v1018, 96
    %v1673 = vpop.permute.xlu0 %1672
    %1674 = vrot.lane.b32.xlu0 %v1019, 96
    %v1675 = vpop.permute.xlu0 %1674
    %1676 = vrot.lane.b32.xlu0 %v1020, 96
    %v1677 = vpop.permute.xlu0 %1676
    %1678 = vrot.lane.b32.xlu0 %v1021, 96
    %v1679 = vpop.permute.xlu0 %1678
    %1680 = vrot.lane.b32.xlu0 %v1022, 96
    %v1681 = vpop.permute.xlu0 %1680
    %1682 = vrot.lane.b32.xlu0 %v1023, 96
    %v1683 = vpop.permute.xlu0 %1682
    %1684 = vrot.lane.b32.xlu0 %v1024, 96
    %v1685 = vpop.permute.xlu0 %1684
    %1686 = vrot.lane.b32.xlu0 %v1025, 96
    %v1687 = vpop.permute.xlu0 %1686
    %1688 = vrot.lane.b32.xlu0 %v1026, 96
    %v1689 = vpop.permute.xlu0 %1688
    %1690 = vrot.lane.b32.xlu0 %v1027, 96
    %v1691 = vpop.permute.xlu0 %1690
    %1692 = vrot.lane.b32.xlu0 %v1028, 96
    %v1693 = vpop.permute.xlu0 %1692
    %1694 = vrot.lane.b32.xlu0 %v1029, 96
    %v1695 = vpop.permute.xlu0 %1694
    %1696 = vrot.lane.b32.xlu0 %v1030, 96
    %v1697 = vpop.permute.xlu0 %1696
    %1698 = vrot.lane.b32.xlu0 %v1031, 96
    %v1699 = vpop.permute.xlu0 %1698
    %1700 = vrot.lane.b32.xlu0 %v1032, 96
    %v1701 = vpop.permute.xlu0 %1700
    %1702 = vrot.lane.b32.xlu0 %v1033, 96
    %v1703 = vpop.permute.xlu0 %1702
    %1704 = vrot.lane.b32.xlu0 %v1034, 96
    %v1705 = vpop.permute.xlu0 %1704
    %1706 = vrot.lane.b32.xlu0 %v1035, 96
    %v1707 = vpop.permute.xlu0 %1706
    %v1710 = vsel %vm92, %v331, %v1165
    %v1713 = vsel %vm92, %v332, %v1167
    %v1716 = vsel %vm92, %v333, %v1169
    %v1719 = vsel %vm92, %v334, %v1171
    %v1722 = vsel %vm92, %v335, %v1173
    %v1725 = vsel %vm92, %v336, %v1175
    %v1728 = vsel %vm92, %v337, %v1177
    %v1731 = vsel %vm92, %v338, %v1179
    %v1734 = vsel %vm92, %v339, %v1181
    %v1737 = vsel %vm92, %v340, %v1183
    %v1740 = vsel %vm92, %v341, %v1185
    %v1743 = vsel %vm92, %v342, %v1187
    %v1746 = vsel %vm92, %v343, %v1189
    %v1749 = vsel %vm92, %v344, %v1191
    %v1752 = vsel %vm92, %v345, %v1193
    %v1755 = vsel %vm92, %v346, %v1195
    %v1758 = vsel %vm92, %v347, %v1197
    %v1761 = vsel %vm92, %v348, %v1199
    %v1764 = vsel %vm92, %v349, %v1201
    %v1767 = vsel %vm92, %v350, %v1203
    %v1770 = vsel %vm92, %v351, %v1205
    %v1773 = vsel %vm92, %v352, %v1207
    %v1776 = vsel %vm92, %v353, %v1209
    %v1779 = vsel %vm92, %v354, %v1211
    %v1782 = vsel %vm92, %v355, %v1213
    %v1785 = vsel %vm92, %v356, %v1215
    %v1788 = vsel %vm92, %v357, %v1217
    %v1791 = vsel %vm92, %v358, %v1219
    %v1794 = vsel %vm92, %v359, %v1221
    %v1797 = vsel %vm92, %v360, %v1223
    %v1800 = vsel %vm92, %v361, %v1225
    %v1803 = vsel %vm92, %v362, %v1227
    %vm1804 = vcmask 523264
    %v1806 = vsel %vm1804, %v1710, %v1261
    %v1808 = vsel %vm1804, %v1713, %v1263
    %v1810 = vsel %vm1804, %v1716, %v1265
    %v1812 = vsel %vm1804, %v1719, %v1267
    %v1814 = vsel %vm1804, %v1722, %v1269
    %v1816 = vsel %vm1804, %v1725, %v1271
    %v1818 = vsel %vm1804, %v1728, %v1273
    %v1820 = vsel %vm1804, %v1731, %v1275
    %v1822 = vsel %vm1804, %v1734, %v1277
    %v1824 = vsel %vm1804, %v1737, %v1279
    %v1826 = vsel %vm1804, %v1740, %v1281
    %v1828 = vsel %vm1804, %v1743, %v1283
    %v1830 = vsel %vm1804, %v1746, %v1285
    %v1832 = vsel %vm1804, %v1749, %v1287
    %v1834 = vsel %vm1804, %v1752, %v1289
    %v1836 = vsel %vm1804, %v1755, %v1291
    %v1838 = vsel %vm1804, %v1758, %v1293
    %v1840 = vsel %vm1804, %v1761, %v1295
    %v1842 = vsel %vm1804, %v1764, %v1297
    %v1844 = vsel %vm1804, %v1767, %v1299
    %v1846 = vsel %vm1804, %v1770, %v1301
    %v1848 = vsel %vm1804, %v1773, %v1303
    %v1850 = vsel %vm1804, %v1776, %v1305
    %v1852 = vsel %vm1804, %v1779, %v1307
    %v1854 = vsel %vm1804, %v1782, %v1309
    %v1856 = vsel %vm1804, %v1785, %v1311
    %v1858 = vsel %vm1804, %v1788, %v1313
    %v1860 = vsel %vm1804, %v1791, %v1315
    %v1862 = vsel %vm1804, %v1794, %v1317
    %v1864 = vsel %vm1804, %v1797, %v1319
    %v1866 = vsel %vm1804, %v1800, %v1321
    %v1868 = vsel %vm1804, %v1803, %v1323
    %vm1869 = vcmask 785408
    %v1871 = vsel %vm1869, %v1806, %v1357
    %v1874 = vsel %vm1869, %v1808, %v1359
    %v1877 = vsel %vm1869, %v1810, %v1361
    %v1880 = vsel %vm1869, %v1812, %v1363
    %v1883 = vsel %vm1869, %v1814, %v1365
    %v1886 = vsel %vm1869, %v1816, %v1367
    %v1889 = vsel %vm1869, %v1818, %v1369
    %v1892 = vsel %vm1869, %v1820, %v1371
    %v1895 = vsel %vm1869, %v1822, %v1373
    %v1898 = vsel %vm1869, %v1824, %v1375
    %v1901 = vsel %vm1869, %v1826, %v1377
    %v1904 = vsel %vm1869, %v1828, %v1379
    %v1907 = vsel %vm1869, %v1830, %v1381
    %v1910 = vsel %vm1869, %v1832, %v1383
    %v1913 = vsel %vm1869, %v1834, %v1385
    %v1916 = vsel %vm1869, %v1836, %v1387
    %v1919 = vsel %vm1869, %v1838, %v1389
    %v1922 = vsel %vm1869, %v1840, %v1391
    %v1925 = vsel %vm1869, %v1842, %v1393
    %v1928 = vsel %vm1869, %v1844, %v1395
    %v1931 = vsel %vm1869, %v1846, %v1397
    %v1934 = vsel %vm1869, %v1848, %v1399
    %v1937 = vsel %vm1869, %v1850, %v1401
    %v1940 = vsel %vm1869, %v1852, %v1403
    %v1943 = vsel %vm1869, %v1854, %v1405
    %v1946 = vsel %vm1869, %v1856, %v1407
    %v1949 = vsel %vm1869, %v1858, %v1409
    %v1952 = vsel %vm1869, %v1860, %v1411
    %v1955 = vsel %vm1869, %v1862, %v1413
    %v1958 = vsel %vm1869, %v1864, %v1415
    %v1961 = vsel %vm1869, %v1866, %v1417
    %v1964 = vsel %vm1869, %v1868, %v1419
    %v1968 = vsel %vm92, %v715, %v1453
    %v1971 = vsel %vm92, %v716, %v1455
    %v1974 = vsel %vm92, %v717, %v1457
    %v1977 = vsel %vm92, %v718, %v1459
    %v1980 = vsel %vm92, %v719, %v1461
    %v1983 = vsel %vm92, %v720, %v1463
    %v1986 = vsel %vm92, %v721, %v1465
    %v1989 = vsel %vm92, %v722, %v1467
    %v1992 = vsel %vm92, %v723, %v1469
    %v1995 = vsel %vm92, %v724, %v1471
    %v1998 = vsel %vm92, %v725, %v1473
    %v2001 = vsel %vm92, %v726, %v1475
    %v2004 = vsel %vm92, %v727, %v1477
    %v2007 = vsel %vm92, %v728, %v1479
    %v2010 = vsel %vm92, %v729, %v1481
    %v2013 = vsel %vm92, %v730, %v1483
    %v2016 = vsel %vm92, %v731, %v1485
    %v2019 = vsel %vm92, %v732, %v1487
    %v2022 = vsel %vm92, %v733, %v1489
    %v2025 = vsel %vm92, %v734, %v1491
    %v2028 = vsel %vm92, %v735, %v1493
    %v2031 = vsel %vm92, %v736, %v1495
    %v2034 = vsel %vm92, %v737, %v1497
    %v2037 = vsel %vm92, %v738, %v1499
    %v2040 = vsel %vm92, %v739, %v1501
    %v2043 = vsel %vm92, %v740, %v1503
    %v2046 = vsel %vm92, %v741, %v1505
    %v2049 = vsel %vm92, %v742, %v1507
    %v2052 = vsel %vm92, %v743, %v1509
    %v2055 = vsel %vm92, %v744, %v1511
    %v2058 = vsel %vm92, %v745, %v1513
    %v2061 = vsel %vm92, %v746, %v1515
    %v2063 = vsel %vm1804, %v1968, %v1549
    %v2065 = vsel %vm1804, %v1971, %v1551
    %v2067 = vsel %vm1804, %v1974, %v1553
    %v2069 = vsel %vm1804, %v1977, %v1555
    %v2071 = vsel %vm1804, %v1980, %v1557
    %v2073 = vsel %vm1804, %v1983, %v1559
    %v2075 = vsel %vm1804, %v1986, %v1561
    %v2077 = vsel %vm1804, %v1989, %v1563
    %v2079 = vsel %vm1804, %v1992, %v1565
    %v2081 = vsel %vm1804, %v1995, %v1567
    %v2083 = vsel %vm1804, %v1998, %v1569
    %v2085 = vsel %vm1804, %v2001, %v1571
    %v2087 = vsel %vm1804, %v2004, %v1573
    %v2089 = vsel %vm1804, %v2007, %v1575
    %v2091 = vsel %vm1804, %v2010, %v1577
    %v2093 = vsel %vm1804, %v2013, %v1579
    %v2095 = vsel %vm1804, %v2016, %v1581
    %v2097 = vsel %vm1804, %v2019, %v1583
    %v2099 = vsel %vm1804, %v2022, %v1585
    %v2101 = vsel %vm1804, %v2025, %v1587
    %v2103 = vsel %vm1804, %v2028, %v1589
    %v2105 = vsel %vm1804, %v2031, %v1591
    %v2107 = vsel %vm1804, %v2034, %v1593
    %v2109 = vsel %vm1804, %v2037, %v1595
    %v2111 = vsel %vm1804, %v2040, %v1597
    %v2113 = vsel %vm1804, %v2043, %v1599
    %v2115 = vsel %vm1804, %v2046, %v1601
    %v2117 = vsel %vm1804, %v2049, %v1603
    %v2119 = vsel %vm1804, %v2052, %v1605
    %v2121 = vsel %vm1804, %v2055, %v1607
    %v2123 = vsel %vm1804, %v2058, %v1609
    %v2125 = vsel %vm1804, %v2061, %v1611
    %v2127 = vsel %vm1869, %v2063, %v1645
    %v2130 = vsel %vm1869, %v2065, %v1647
    %v2133 = vsel %vm1869, %v2067, %v1649
    %v2136 = vsel %vm1869, %v2069, %v1651
    %v2139 = vsel %vm1869, %v2071, %v1653
    %v2142 = vsel %vm1869, %v2073, %v1655
    %v2145 = vsel %vm1869, %v2075, %v1657
    %v2148 = vsel %vm1869, %v2077, %v1659
    %v2151 = vsel %vm1869, %v2079, %v1661
    %v2154 = vsel %vm1869, %v2081, %v1663
    %v2157 = vsel %vm1869, %v2083, %v1665
    %v2160 = vsel %vm1869, %v2085, %v1667
    %v2163 = vsel %vm1869, %v2087, %v1669
    %v2166 = vsel %vm1869, %v2089, %v1671
    %v2169 = vsel %vm1869, %v2091, %v1673
    %v2172 = vsel %vm1869, %v2093, %v1675
    %v2175 = vsel %vm1869, %v2095, %v1677
    %v2178 = vsel %vm1869, %v2097, %v1679
    %v2181 = vsel %vm1869, %v2099, %v1681
    %v2184 = vsel %vm1869, %v2101, %v1683
    %v2187 = vsel %vm1869, %v2103, %v1685
    %v2190 = vsel %vm1869, %v2105, %v1687
    %v2193 = vsel %vm1869, %v2107, %v1689
    %v2196 = vsel %vm1869, %v2109, %v1691
    %v2199 = vsel %vm1869, %v2111, %v1693
    %v2202 = vsel %vm1869, %v2113, %v1695
    %v2205 = vsel %vm1869, %v2115, %v1697
    %v2208 = vsel %vm1869, %v2117, %v1699
    %v2211 = vsel %vm1869, %v2119, %v1701
    %v2214 = vsel %vm1869, %v2121, %v1703
    %v2217 = vsel %vm1869, %v2123, %v1705
    %v2220 = vsel %vm1869, %v2125, %v1707
    %v2222 = vld [vmem:[%s1] sm:$0xf]
    %v2223 = vld [vmem:[%s1 + $0x4] sm:$0xf]
    %v2224 = vld [vmem:[%s1 + $0x8] sm:$0xf]
    %v2225 = vld [vmem:[%s1 + $0xc] sm:$0xf]
    %v2226 = vld [vmem:[%s1 + $0x10] sm:$0xf]
    %v2227 = vld [vmem:[%s1 + $0x14] sm:$0xf]
    %v2228 = vld [vmem:[%s1 + $0x18] sm:$0xf]
    %v2229 = vld [vmem:[%s1 + $0x1c] sm:$0xf]
    %v2230 = vld [vmem:[%s1 + $0x20] sm:$0xf]
    %v2231 = vld [vmem:[%s1 + $0x24] sm:$0xf]
    %v2232 = vld [vmem:[%s1 + $0x28] sm:$0xf]
    %v2233 = vld [vmem:[%s1 + $0x2c] sm:$0xf]
    %v2234 = vld [vmem:[%s1 + $0x30] sm:$0xf]
    %v2235 = vld [vmem:[%s1 + $0x34] sm:$0xf]
    %v2236 = vld [vmem:[%s1 + $0x38] sm:$0xf]
    %v2237 = vld [vmem:[%s1 + $0x3c] sm:$0xf]
    %v2238 = vld [vmem:[%s1 + $0x40] sm:$0xf]
    %v2239 = vld [vmem:[%s1 + $0x44] sm:$0xf]
    %v2240 = vld [vmem:[%s1 + $0x48] sm:$0xf]
    %v2241 = vld [vmem:[%s1 + $0x4c] sm:$0xf]
    %v2242 = vld [vmem:[%s1 + $0x50] sm:$0xf]
    %v2243 = vld [vmem:[%s1 + $0x54] sm:$0xf]
    %v2244 = vld [vmem:[%s1 + $0x58] sm:$0xf]
    %v2245 = vld [vmem:[%s1 + $0x5c] sm:$0xf]
    %v2246 = vld [vmem:[%s1 + $0x60] sm:$0xf]
    %v2247 = vld [vmem:[%s1 + $0x64] sm:$0xf]
    %v2248 = vld [vmem:[%s1 + $0x68] sm:$0xf]
    %v2249 = vld [vmem:[%s1 + $0x6c] sm:$0xf]
    %v2250 = vld [vmem:[%s1 + $0x70] sm:$0xf]
    %v2251 = vld [vmem:[%s1 + $0x74] sm:$0xf]
    %v2252 = vld [vmem:[%s1 + $0x78] sm:$0xf]
    %v2253 = vld [vmem:[%s1 + $0x7c] sm:$0xf]
    %v2254 = vld [vmem:[%s1 + $0x80] sm:$0xf]
    %v2255 = vld [vmem:[%s1 + $0x84] sm:$0xf]
    %v2256 = vld [vmem:[%s1 + $0x88] sm:$0xf]
    %v2257 = vld [vmem:[%s1 + $0x8c] sm:$0xf]
    %v2294 = vunpack.c.l.b16 %v2222
    %v2295 = vunpack.c.l.b16 %v2223
    %v2296 = vunpack.c.l.b16 %v2224
    %v2297 = vunpack.c.l.b16 %v2225
    %v2298 = vunpack.c.l.b16 %v2226
    %v2299 = vunpack.c.l.b16 %v2227
    %v2300 = vunpack.c.l.b16 %v2228
    %v2301 = vunpack.c.l.b16 %v2229
    %v2302 = vunpack.c.l.b16 %v2230
    %v2303 = vunpack.c.l.b16 %v2231
    %v2304 = vunpack.c.l.b16 %v2232
    %v2305 = vunpack.c.l.b16 %v2233
    %v2306 = vunpack.c.l.b16 %v2234
    %v2307 = vunpack.c.l.b16 %v2235
    %v2308 = vunpack.c.l.b16 %v2236
    %v2309 = vunpack.c.l.b16 %v2237
    %v2310 = vunpack.c.l.b16 %v2238
    %v2311 = vunpack.c.l.b16 %v2239
    %v2312 = vunpack.c.l.b16 %v2240
    %v2313 = vunpack.c.l.b16 %v2241
    %v2314 = vunpack.c.l.b16 %v2242
    %v2315 = vunpack.c.l.b16 %v2243
    %v2316 = vunpack.c.l.b16 %v2244
    %v2317 = vunpack.c.l.b16 %v2245
    %v2318 = vunpack.c.l.b16 %v2246
    %v2319 = vunpack.c.l.b16 %v2247
    %v2320 = vunpack.c.l.b16 %v2248
    %v2321 = vunpack.c.l.b16 %v2249
    %v2322 = vunpack.c.l.b16 %v2250
    %v2323 = vunpack.c.l.b16 %v2251
    %v2324 = vunpack.c.l.b16 %v2252
    %v2325 = vunpack.c.l.b16 %v2253
    %v2326 = vunpack.c.l.b16 %v2254
    %v2327 = vunpack.c.l.b16 %v2255
    %v2328 = vunpack.c.l.b16 %v2256
    %v2329 = vunpack.c.l.b16 %v2257
    %v2330 = vpack.c.b16 %v2295, %v2294
    %v2331 = vpack.c.b16 %v2297, %v2296
    %v2332 = vpack.c.b16 %v2299, %v2298
    %v2333 = vpack.c.b16 %v2301, %v2300
    %v2334 = vpack.c.b16 %v2303, %v2302
    %v2335 = vpack.c.b16 %v2305, %v2304
    %v2336 = vpack.c.b16 %v2307, %v2306
    %v2337 = vpack.c.b16 %v2309, %v2308
    %v2338 = vpack.c.b16 %v2311, %v2310
    %v2339 = vpack.c.b16 %v2313, %v2312
    %v2340 = vpack.c.b16 %v2315, %v2314
    %v2341 = vpack.c.b16 %v2317, %v2316
    %v2342 = vpack.c.b16 %v2319, %v2318
    %v2343 = vpack.c.b16 %v2321, %v2320
    %v2344 = vpack.c.b16 %v2323, %v2322
    %v2345 = vpack.c.b16 %v2325, %v2324
    %v2346 = vpack.c.b16 %v2327, %v2326
    %v2347 = vpack.c.b16 %v2329, %v2328
    %v2367 = vsel %vm92, %v1100, 0
    %v2370 = vsel %vm92, %v1101, 0
    %v2373 = vsel %vm92, %v1102, 0
    %v2376 = vsel %vm92, %v1103, 0
    %v2379 = vsel %vm92, %v1104, 0
    %v2382 = vsel %vm92, %v1105, 0
    %v2385 = vsel %vm92, %v1106, 0
    %v2388 = vsel %vm92, %v1107, 0
    %v2391 = vsel %vm92, %v1108, 0
    %v2394 = vsel %vm92, %v1109, 0
    %v2397 = vsel %vm92, %v1110, 0
    %v2400 = vsel %vm92, %v1111, 0
    %v2403 = vsel %vm92, %v1112, 0
    %v2406 = vsel %vm92, %v1113, 0
    %v2409 = vsel %vm92, %v1114, 0
    %v2412 = vsel %vm92, %v1115, 0
    %v2415 = vsel %vm92, %v1116, 0
    %v2418 = vsel %vm92, %v1117, 0
    %v2421 = vsel %vm92, %v1118, 0
    %v2424 = vsel %vm92, %v1119, 0
    %v2427 = vsel %vm92, %v1120, 0
    %v2430 = vsel %vm92, %v1121, 0
    %v2433 = vsel %vm92, %v1122, 0
    %v2436 = vsel %vm92, %v1123, 0
    %v2439 = vsel %vm92, %v1124, 0
    %v2442 = vsel %vm92, %v1125, 0
    %v2445 = vsel %vm92, %v1126, 0
    %v2448 = vsel %vm92, %v1127, 0
    %v2451 = vsel %vm92, %v1128, 0
    %v2454 = vsel %vm92, %v1129, 0
    %v2457 = vsel %vm92, %v1130, 0
    %v2460 = vsel %vm92, %v1131, 0
    %2462 = vmatprep.subr.bf16.mxu0 0
    %2463 = vmatpush1.bf16.msra.mxu0 %v2337
    %2464 = vmatprep.subr.bf16.mxu0 0
    %2465 = vmatpush1.bf16.msra.mxu0 %v2336
    %2466 = vmatprep.subr.bf16.mxu0 0
    %2467 = vmatpush1.bf16.msra.mxu0 %v2335
    %2468 = vmatprep.subr.bf16.mxu0 0
    %2469 = vmatpush1.bf16.msra.mxu0 %v2334
    %2470 = vmatprep.subr.bf16.mxu0 0
    %2471 = vmatpush1.bf16.msra.mxu0 %v2333
    %2472 = vmatprep.subr.bf16.mxu0 0
    %2473 = vmatpush1.bf16.msra.mxu0 %v2332
    %2474 = vmatprep.subr.bf16.mxu0 0
    %2475 = vmatpush1.bf16.msra.mxu0 %v2331
    %2476 = vmatprep.subr.bf16.mxu0 0
    %2477 = vmatpush1.bf16.msra.mxu0 %v2330
    %2478 = vmatprep.subr.bf16.mxu0 0
    %2479 = vmatpush2.bf16.msra.mxu0 %v2345
    %2480 = vmatprep.subr.bf16.mxu0 0
    %2481 = vmatpush2.bf16.msra.mxu0 %v2344
    %2482 = vmatprep.subr.bf16.mxu0 0
    %2483 = vmatpush2.bf16.msra.mxu0 %v2343
    %2484 = vmatprep.subr.bf16.mxu0 0
    %2485 = vmatpush2.bf16.msra.mxu0 %v2342
    %2486 = vmatprep.subr.bf16.mxu0 0
    %2487 = vmatpush2.bf16.msra.mxu0 %v2341
    %2488 = vmatprep.subr.bf16.mxu0 0
    %2489 = vmatpush2.bf16.msra.mxu0 %v2340
    %2490 = vmatprep.subr.bf16.mxu0 0
    %2491 = vmatpush2.bf16.msra.mxu0 %v2339
    %2492 = vmatprep.subr.bf16.mxu0 0
    %2493 = vmatpush2.bf16.msra.mxu0 %v2338
    %2494 = vmatprep.mubr.bf16.mxu0 %v2127
    %2495 = vmatmul.mubr.bf16.gmra.mxu0 %v1871
    %v2496 = vpop.f32.mrf.mxu0
    %v2497 = vadd.f32 0.0, %v2496
    %v2498 = vpop.f32.mrf.mxu0
    %v2499 = vpop.f32.mrf.mxu0
    %v2500 = vadd.f32 0.0, %v2499
    %v2501 = vpop.f32.mrf.mxu0
    %2502 = vmatprep.mubr.bf16.mxu0 %v2130
    %2503 = vmatmul.mubr.bf16.gmra.mxu0 %v1874
    %v2504 = vpop.f32.mrf.mxu0
    %v2505 = vadd.f32 0.0, %v2504
    %v2506 = vpop.f32.mrf.mxu0
    %v2507 = vpop.f32.mrf.mxu0
    %v2508 = vadd.f32 0.0, %v2507
    %v2509 = vpop.f32.mrf.mxu0
    %2510 = vmatprep.mubr.bf16.mxu0 %v2133
    %2511 = vmatmul.mubr.bf16.gmra.mxu0 %v1877
    %v2512 = vpop.f32.mrf.mxu0
    %v2513 = vadd.f32 0.0, %v2512
    %v2514 = vpop.f32.mrf.mxu0
    %v2515 = vpop.f32.mrf.mxu0
    %v2516 = vadd.f32 0.0, %v2515
    %v2517 = vpop.f32.mrf.mxu0
    %2518 = vmatprep.mubr.bf16.mxu0 %v2136
    %2519 = vmatmul.mubr.bf16.gmra.mxu0 %v1880
    %v2520 = vpop.f32.mrf.mxu0
    %v2521 = vadd.f32 0.0, %v2520
    %v2522 = vpop.f32.mrf.mxu0
    %v2523 = vpop.f32.mrf.mxu0
    %v2524 = vadd.f32 0.0, %v2523
    %v2525 = vpop.f32.mrf.mxu0
    %2526 = vmatprep.mubr.bf16.mxu0 %v2139
    %2527 = vmatmul.mubr.bf16.gmra.mxu0 %v1883
    %v2528 = vpop.f32.mrf.mxu0
    %v2529 = vadd.f32 0.0, %v2528
    %v2530 = vpop.f32.mrf.mxu0
    %v2531 = vpop.f32.mrf.mxu0
    %v2532 = vadd.f32 0.0, %v2531
    %v2533 = vpop.f32.mrf.mxu0
    %2534 = vmatprep.mubr.bf16.mxu0 %v2142
    %2535 = vmatmul.mubr.bf16.gmra.mxu0 %v1886
    %v2536 = vpop.f32.mrf.mxu0
    %v2537 = vadd.f32 0.0, %v2536
    %v2538 = vpop.f32.mrf.mxu0
    %v2539 = vpop.f32.mrf.mxu0
    %v2540 = vadd.f32 0.0, %v2539
    %v2541 = vpop.f32.mrf.mxu0
    %2542 = vmatprep.mubr.bf16.mxu0 %v2145
    %2543 = vmatmul.mubr.bf16.gmra.mxu0 %v1889
    %v2544 = vpop.f32.mrf.mxu0
    %v2545 = vadd.f32 0.0, %v2544
    %v2546 = vpop.f32.mrf.mxu0
    %v2547 = vpop.f32.mrf.mxu0
    %v2548 = vadd.f32 0.0, %v2547
    %v2549 = vpop.f32.mrf.mxu0
    %2550 = vmatprep.mubr.bf16.mxu0 %v2148
    %2551 = vmatmul.mubr.bf16.gmra.mxu0 %v1892
    %v2552 = vpop.f32.mrf.mxu0
    %v2553 = vadd.f32 0.0, %v2552
    %v2554 = vpop.f32.mrf.mxu0
    %v2555 = vpop.f32.mrf.mxu0
    %v2556 = vadd.f32 0.0, %v2555
    %v2557 = vpop.f32.mrf.mxu0
    %2558 = vmatprep.mubr.bf16.mxu0 %v2151
    %2559 = vmatmul.mubr.bf16.gmra.mxu0 %v1895
    %v2560 = vpop.f32.mrf.mxu0
    %v2561 = vadd.f32 0.0, %v2560
    %v2562 = vpop.f32.mrf.mxu0
    %v2563 = vpop.f32.mrf.mxu0
    %v2564 = vadd.f32 0.0, %v2563
    %v2565 = vpop.f32.mrf.mxu0
    %2566 = vmatprep.mubr.bf16.mxu0 %v2154
    %2567 = vmatmul.mubr.bf16.gmra.mxu0 %v1898
    %v2568 = vpop.f32.mrf.mxu0
    %v2569 = vadd.f32 0.0, %v2568
    %v2570 = vpop.f32.mrf.mxu0
    %v2571 = vpop.f32.mrf.mxu0
    %v2572 = vadd.f32 0.0, %v2571
    %v2573 = vpop.f32.mrf.mxu0
    %2574 = vmatprep.mubr.bf16.mxu0 %v2157
    %2575 = vmatmul.mubr.bf16.gmra.mxu0 %v1901
    %v2576 = vpop.f32.mrf.mxu0
    %v2577 = vadd.f32 0.0, %v2576
    %v2578 = vpop.f32.mrf.mxu0
    %v2579 = vpop.f32.mrf.mxu0
    %v2580 = vadd.f32 0.0, %v2579
    %v2581 = vpop.f32.mrf.mxu0
    %2582 = vmatprep.mubr.bf16.mxu0 %v2160
    %2583 = vmatmul.mubr.bf16.gmra.mxu0 %v1904
    %v2584 = vpop.f32.mrf.mxu0
    %v2585 = vadd.f32 0.0, %v2584
    %v2586 = vpop.f32.mrf.mxu0
    %v2587 = vpop.f32.mrf.mxu0
    %v2588 = vadd.f32 0.0, %v2587
    %v2589 = vpop.f32.mrf.mxu0
    %2590 = vmatprep.mubr.bf16.mxu0 %v2163
    %2591 = vmatmul.mubr.bf16.gmra.mxu0 %v1907
    %v2592 = vpop.f32.mrf.mxu0
    %v2593 = vadd.f32 0.0, %v2592
    %v2594 = vpop.f32.mrf.mxu0
    %v2595 = vpop.f32.mrf.mxu0
    %v2596 = vadd.f32 0.0, %v2595
    %v2597 = vpop.f32.mrf.mxu0
    %2598 = vmatprep.mubr.bf16.mxu0 %v2166
    %2599 = vmatmul.mubr.bf16.gmra.mxu0 %v1910
    %v2600 = vpop.f32.mrf.mxu0
    %v2601 = vadd.f32 0.0, %v2600
    %v2602 = vpop.f32.mrf.mxu0
    %v2603 = vpop.f32.mrf.mxu0
    %v2604 = vadd.f32 0.0, %v2603
    %v2605 = vpop.f32.mrf.mxu0
    %2606 = vmatprep.mubr.bf16.mxu0 %v2169
    %2607 = vmatmul.mubr.bf16.gmra.mxu0 %v1913
    %v2608 = vpop.f32.mrf.mxu0
    %v2609 = vadd.f32 0.0, %v2608
    %v2610 = vpop.f32.mrf.mxu0
    %v2611 = vpop.f32.mrf.mxu0
    %v2612 = vadd.f32 0.0, %v2611
    %v2613 = vpop.f32.mrf.mxu0
    %2614 = vmatprep.mubr.bf16.mxu0 %v2172
    %2615 = vmatmul.mubr.bf16.gmra.mxu0 %v1916
    %v2616 = vpop.f32.mrf.mxu0
    %v2617 = vadd.f32 0.0, %v2616
    %v2618 = vpop.f32.mrf.mxu0
    %v2619 = vpop.f32.mrf.mxu0
    %v2620 = vadd.f32 0.0, %v2619
    %v2621 = vpop.f32.mrf.mxu0
    %2622 = vmatprep.mubr.bf16.mxu0 %v2175
    %2623 = vmatmul.mubr.bf16.gmra.mxu0 %v1919
    %v2624 = vpop.f32.mrf.mxu0
    %v2625 = vadd.f32 0.0, %v2624
    %v2626 = vpop.f32.mrf.mxu0
    %v2627 = vpop.f32.mrf.mxu0
    %v2628 = vadd.f32 0.0, %v2627
    %v2629 = vpop.f32.mrf.mxu0
    %2630 = vmatprep.mubr.bf16.mxu0 %v2178
    %2631 = vmatmul.mubr.bf16.gmra.mxu0 %v1922
    %v2632 = vpop.f32.mrf.mxu0
    %v2633 = vadd.f32 0.0, %v2632
    %v2634 = vpop.f32.mrf.mxu0
    %v2635 = vpop.f32.mrf.mxu0
    %v2636 = vadd.f32 0.0, %v2635
    %v2637 = vpop.f32.mrf.mxu0
    %2638 = vmatprep.mubr.bf16.mxu0 %v2181
    %2639 = vmatmul.mubr.bf16.gmra.mxu0 %v1925
    %v2640 = vpop.f32.mrf.mxu0
    %v2641 = vadd.f32 0.0, %v2640
    %v2642 = vpop.f32.mrf.mxu0
    %v2643 = vpop.f32.mrf.mxu0
    %v2644 = vadd.f32 0.0, %v2643
    %v2645 = vpop.f32.mrf.mxu0
    %2646 = vmatprep.mubr.bf16.mxu0 %v2184
    %2647 = vmatmul.mubr.bf16.gmra.mxu0 %v1928
    %v2648 = vpop.f32.mrf.mxu0
    %v2649 = vadd.f32 0.0, %v2648
    %v2650 = vpop.f32.mrf.mxu0
    %v2651 = vpop.f32.mrf.mxu0
    %v2652 = vadd.f32 0.0, %v2651
    %v2653 = vpop.f32.mrf.mxu0
    %2654 = vmatprep.mubr.bf16.mxu0 %v2187
    %2655 = vmatmul.mubr.bf16.gmra.mxu0 %v1931
    %v2656 = vpop.f32.mrf.mxu0
    %v2657 = vadd.f32 0.0, %v2656
    %v2658 = vpop.f32.mrf.mxu0
    %v2659 = vpop.f32.mrf.mxu0
    %v2660 = vadd.f32 0.0, %v2659
    %v2661 = vpop.f32.mrf.mxu0
    %2662 = vmatprep.mubr.bf16.mxu0 %v2190
    %2663 = vmatmul.mubr.bf16.gmra.mxu0 %v1934
    %v2664 = vpop.f32.mrf.mxu0
    %v2665 = vadd.f32 0.0, %v2664
    %v2666 = vpop.f32.mrf.mxu0
    %v2667 = vpop.f32.mrf.mxu0
    %v2668 = vadd.f32 0.0, %v2667
    %v2669 = vpop.f32.mrf.mxu0
    %2670 = vmatprep.mubr.bf16.mxu0 %v2193
    %2671 = vmatmul.mubr.bf16.gmra.mxu0 %v1937
    %v2672 = vpop.f32.mrf.mxu0
    %v2673 = vadd.f32 0.0, %v2672
    %v2674 = vpop.f32.mrf.mxu0
    %v2675 = vpop.f32.mrf.mxu0
    %v2676 = vadd.f32 0.0, %v2675
    %v2677 = vpop.f32.mrf.mxu0
    %2678 = vmatprep.mubr.bf16.mxu0 %v2196
    %2679 = vmatmul.mubr.bf16.gmra.mxu0 %v1940
    %v2680 = vpop.f32.mrf.mxu0
    %v2681 = vadd.f32 0.0, %v2680
    %v2682 = vpop.f32.mrf.mxu0
    %v2683 = vpop.f32.mrf.mxu0
    %v2684 = vadd.f32 0.0, %v2683
    %v2685 = vpop.f32.mrf.mxu0
    %2686 = vmatprep.mubr.bf16.mxu0 %v2199
    %2687 = vmatmul.mubr.bf16.gmra.mxu0 %v1943
    %v2688 = vpop.f32.mrf.mxu0
    %v2689 = vadd.f32 0.0, %v2688
    %v2690 = vpop.f32.mrf.mxu0
    %v2691 = vpop.f32.mrf.mxu0
    %v2692 = vadd.f32 0.0, %v2691
    %v2693 = vpop.f32.mrf.mxu0
    %2694 = vmatprep.mubr.bf16.mxu0 %v2202
    %2695 = vmatmul.mubr.bf16.gmra.mxu0 %v1946
    %v2696 = vpop.f32.mrf.mxu0
    %v2697 = vadd.f32 0.0, %v2696
    %v2698 = vpop.f32.mrf.mxu0
    %v2699 = vpop.f32.mrf.mxu0
    %v2700 = vadd.f32 0.0, %v2699
    %v2701 = vpop.f32.mrf.mxu0
    %2702 = vmatprep.mubr.bf16.mxu0 %v2205
    %2703 = vmatmul.mubr.bf16.gmra.mxu0 %v1949
    %v2704 = vpop.f32.mrf.mxu0
    %v2705 = vadd.f32 0.0, %v2704
    %v2706 = vpop.f32.mrf.mxu0
    %v2707 = vpop.f32.mrf.mxu0
    %v2708 = vadd.f32 0.0, %v2707
    %v2709 = vpop.f32.mrf.mxu0
    %2710 = vmatprep.mubr.bf16.mxu0 %v2208
    %2711 = vmatmul.mubr.bf16.gmra.mxu0 %v1952
    %v2712 = vpop.f32.mrf.mxu0
    %v2713 = vadd.f32 0.0, %v2712
    %v2714 = vpop.f32.mrf.mxu0
    %v2715 = vpop.f32.mrf.mxu0
    %v2716 = vadd.f32 0.0, %v2715
    %v2717 = vpop.f32.mrf.mxu0
    %2718 = vmatprep.mubr.bf16.mxu0 %v2211
    %2719 = vmatmul.mubr.bf16.gmra.mxu0 %v1955
    %v2720 = vpop.f32.mrf.mxu0
    %v2721 = vadd.f32 0.0, %v2720
    %v2722 = vpop.f32.mrf.mxu0
    %v2723 = vpop.f32.mrf.mxu0
    %v2724 = vadd.f32 0.0, %v2723
    %v2725 = vpop.f32.mrf.mxu0
    %2726 = vmatprep.mubr.bf16.mxu0 %v2214
    %2727 = vmatmul.mubr.bf16.gmra.mxu0 %v1958
    %v2728 = vpop.f32.mrf.mxu0
    %v2729 = vadd.f32 0.0, %v2728
    %v2730 = vpop.f32.mrf.mxu0
    %v2731 = vpop.f32.mrf.mxu0
    %v2732 = vadd.f32 0.0, %v2731
    %v2733 = vpop.f32.mrf.mxu0
    %2734 = vmatprep.mubr.bf16.mxu0 %v2217
    %2735 = vmatmul.mubr.bf16.gmra.mxu0 %v1961
    %v2736 = vpop.f32.mrf.mxu0
    %v2737 = vadd.f32 0.0, %v2736
    %v2738 = vpop.f32.mrf.mxu0
    %v2739 = vpop.f32.mrf.mxu0
    %v2740 = vadd.f32 0.0, %v2739
    %v2741 = vpop.f32.mrf.mxu0
    %2742 = vmatprep.mubr.bf16.mxu0 %v2220
    %2743 = vmatmul.mubr.bf16.gmra.mxu0 %v1964
    %v2744 = vpop.f32.mrf.mxu0
    %v2745 = vadd.f32 0.0, %v2744
    %v2746 = vpop.f32.mrf.mxu0
    %v2747 = vpop.f32.mrf.mxu0
    %v2748 = vadd.f32 0.0, %v2747
    %v2749 = vpop.f32.mrf.mxu0
    %2750 = vdwg.mxu0
    %2751 = vmatprep.subr.bf16.mxu0 0
    %2752 = vmatpush1.bf16.msra.mxu0 0
    %2753 = vmatprep.subr.bf16.mxu0 0
    %2754 = vmatpush1.bf16.msra.mxu0 0
    %2755 = vmatprep.subr.bf16.mxu0 0
    %2756 = vmatpush1.bf16.msra.mxu0 0
    %2757 = vmatprep.subr.bf16.mxu0 0
    %2758 = vmatpush1.bf16.msra.mxu0 0
    %2759 = vmatprep.subr.bf16.mxu0 0
    %2760 = vmatpush1.bf16.msra.mxu0 0
    %2761 = vmatprep.subr.bf16.mxu0 0
    %2762 = vmatpush1.bf16.msra.mxu0 0
    %2763 = vmatprep.subr.bf16.mxu0 0
    %2764 = vmatpush1.bf16.msra.mxu0 %v2347
    %2765 = vmatprep.subr.bf16.mxu0 0
    %2766 = vmatpush1.bf16.msra.mxu0 %v2346
    %2767 = vmatprep.subr.bf16.mxu0 0
    %2768 = vmatpush2.bf16.msra.mxu0 0
    %2769 = vmatprep.subr.bf16.mxu0 0
    %2770 = vmatpush2.bf16.msra.mxu0 0
    %2771 = vmatprep.subr.bf16.mxu0 0
    %2772 = vmatpush2.bf16.msra.mxu0 0
    %2773 = vmatprep.subr.bf16.mxu0 0
    %2774 = vmatpush2.bf16.msra.mxu0 0
    %2775 = vmatprep.subr.bf16.mxu0 0
    %2776 = vmatpush2.bf16.msra.mxu0 0
    %2777 = vmatprep.subr.bf16.mxu0 0
    %2778 = vmatpush2.bf16.msra.mxu0 0
    %2779 = vmatprep.subr.bf16.mxu0 0
    %2780 = vmatpush2.bf16.msra.mxu0 0
    %2781 = vmatprep.subr.bf16.mxu0 0
    %2782 = vmatpush2.bf16.msra.mxu0 0
    %2783 = vmatprep.mubr.bf16.mxu0 0
    %2784 = vmatmul.mubr.bf16.gmra.mxu0 %v2367
    %v2785 = vpop.f32.mrf.mxu0
    %v2786 = vadd.f32 %v2497, %v2785
    %v2787 = vpop.f32.mrf.mxu0
    %v2788 = vpop.f32.mrf.mxu0
    %v2789 = vadd.f32 %v2500, %v2788
    %v2790 = vpop.f32.mrf.mxu0
    %2791 = vmatprep.mubr.bf16.mxu0 0
    %2792 = vmatmul.mubr.bf16.gmra.mxu0 %v2370
    %v2793 = vpop.f32.mrf.mxu0
    %v2794 = vadd.f32 %v2505, %v2793
    %v2795 = vpop.f32.mrf.mxu0
    %v2796 = vpop.f32.mrf.mxu0
    %v2797 = vadd.f32 %v2508, %v2796
    %v2798 = vpop.f32.mrf.mxu0
    %2799 = vmatprep.mubr.bf16.mxu0 0
    %2800 = vmatmul.mubr.bf16.gmra.mxu0 %v2373
    %v2801 = vpop.f32.mrf.mxu0
    %v2802 = vadd.f32 %v2513, %v2801
    %v2803 = vpop.f32.mrf.mxu0
    %v2804 = vpop.f32.mrf.mxu0
    %v2805 = vadd.f32 %v2516, %v2804
    %v2806 = vpop.f32.mrf.mxu0
    %2807 = vmatprep.mubr.bf16.mxu0 0
    %2808 = vmatmul.mubr.bf16.gmra.mxu0 %v2376
    %v2809 = vpop.f32.mrf.mxu0
    %v2810 = vadd.f32 %v2521, %v2809
    %v2811 = vpop.f32.mrf.mxu0
    %v2812 = vpop.f32.mrf.mxu0
    %v2813 = vadd.f32 %v2524, %v2812
    %v2814 = vpop.f32.mrf.mxu0
    %2815 = vmatprep.mubr.bf16.mxu0 0
    %2816 = vmatmul.mubr.bf16.gmra.mxu0 %v2379
    %v2817 = vpop.f32.mrf.mxu0
    %v2818 = vadd.f32 %v2529, %v2817
    %v2819 = vpop.f32.mrf.mxu0
    %v2820 = vpop.f32.mrf.mxu0
    %v2821 = vadd.f32 %v2532, %v2820
    %v2822 = vpop.f32.mrf.mxu0
    %2823 = vmatprep.mubr.bf16.mxu0 0
    %2824 = vmatmul.mubr.bf16.gmra.mxu0 %v2382
    %v2825 = vpop.f32.mrf.mxu0
    %v2826 = vadd.f32 %v2537, %v2825
    %v2827 = vpop.f32.mrf.mxu0
    %v2828 = vpop.f32.mrf.mxu0
    %v2829 = vadd.f32 %v2540, %v2828
    %v2830 = vpop.f32.mrf.mxu0
    %2831 = vmatprep.mubr.bf16.mxu0 0
    %2832 = vmatmul.mubr.bf16.gmra.mxu0 %v2385
    %v2833 = vpop.f32.mrf.mxu0
    %v2834 = vadd.f32 %v2545, %v2833
    %v2835 = vpop.f32.mrf.mxu0
    %v2836 = vpop.f32.mrf.mxu0
    %v2837 = vadd.f32 %v2548, %v2836
    %v2838 = vpop.f32.mrf.mxu0
    %2839 = vmatprep.mubr.bf16.mxu0 0
    %2840 = vmatmul.mubr.bf16.gmra.mxu0 %v2388
    %v2841 = vpop.f32.mrf.mxu0
    %v2842 = vadd.f32 %v2553, %v2841
    %v2843 = vpop.f32.mrf.mxu0
    %v2844 = vpop.f32.mrf.mxu0
    %v2845 = vadd.f32 %v2556, %v2844
    %v2846 = vpop.f32.mrf.mxu0
    %2847 = vmatprep.mubr.bf16.mxu0 0
    %2848 = vmatmul.mubr.bf16.gmra.mxu0 %v2391
    %v2849 = vpop.f32.mrf.mxu0
    %v2850 = vadd.f32 %v2561, %v2849
    %v2851 = vpop.f32.mrf.mxu0
    %v2852 = vpop.f32.mrf.mxu0
    %v2853 = vadd.f32 %v2564, %v2852
    %v2854 = vpop.f32.mrf.mxu0
    %2855 = vmatprep.mubr.bf16.mxu0 0
    %2856 = vmatmul.mubr.bf16.gmra.mxu0 %v2394
    %v2857 = vpop.f32.mrf.mxu0
    %v2858 = vadd.f32 %v2569, %v2857
    %v2859 = vpop.f32.mrf.mxu0
    %v2860 = vpop.f32.mrf.mxu0
    %v2861 = vadd.f32 %v2572, %v2860
    %v2862 = vpop.f32.mrf.mxu0
    %2863 = vmatprep.mubr.bf16.mxu0 0
    %2864 = vmatmul.mubr.bf16.gmra.mxu0 %v2397
    %v2865 = vpop.f32.mrf.mxu0
    %v2866 = vadd.f32 %v2577, %v2865
    %v2867 = vpop.f32.mrf.mxu0
    %v2868 = vpop.f32.mrf.mxu0
    %v2869 = vadd.f32 %v2580, %v2868
    %v2870 = vpop.f32.mrf.mxu0
    %2871 = vmatprep.mubr.bf16.mxu0 0
    %2872 = vmatmul.mubr.bf16.gmra.mxu0 %v2400
    %v2873 = vpop.f32.mrf.mxu0
    %v2874 = vadd.f32 %v2585, %v2873
    %v2875 = vpop.f32.mrf.mxu0
    %v2876 = vpop.f32.mrf.mxu0
    %v2877 = vadd.f32 %v2588, %v2876
    %v2878 = vpop.f32.mrf.mxu0
    %2879 = vmatprep.mubr.bf16.mxu0 0
    %2880 = vmatmul.mubr.bf16.gmra.mxu0 %v2403
    %v2881 = vpop.f32.mrf.mxu0
    %v2882 = vadd.f32 %v2593, %v2881
    %v2883 = vpop.f32.mrf.mxu0
    %v2884 = vpop.f32.mrf.mxu0
    %v2885 = vadd.f32 %v2596, %v2884
    %v2886 = vpop.f32.mrf.mxu0
    %2887 = vmatprep.mubr.bf16.mxu0 0
    %2888 = vmatmul.mubr.bf16.gmra.mxu0 %v2406
    %v2889 = vpop.f32.mrf.mxu0
    %v2890 = vadd.f32 %v2601, %v2889
    %v2891 = vpop.f32.mrf.mxu0
    %v2892 = vpop.f32.mrf.mxu0
    %v2893 = vadd.f32 %v2604, %v2892
    %v2894 = vpop.f32.mrf.mxu0
    %2895 = vmatprep.mubr.bf16.mxu0 0
    %2896 = vmatmul.mubr.bf16.gmra.mxu0 %v2409
    %v2897 = vpop.f32.mrf.mxu0
    %v2898 = vadd.f32 %v2609, %v2897
    %v2899 = vpop.f32.mrf.mxu0
    %v2900 = vpop.f32.mrf.mxu0
    %v2901 = vadd.f32 %v2612, %v2900
    %v2902 = vpop.f32.mrf.mxu0
    %2903 = vmatprep.mubr.bf16.mxu0 0
    %2904 = vmatmul.mubr.bf16.gmra.mxu0 %v2412
    %v2905 = vpop.f32.mrf.mxu0
    %v2906 = vadd.f32 %v2617, %v2905
    %v2907 = vpop.f32.mrf.mxu0
    %v2908 = vpop.f32.mrf.mxu0
    %v2909 = vadd.f32 %v2620, %v2908
    %v2910 = vpop.f32.mrf.mxu0
    %2911 = vmatprep.mubr.bf16.mxu0 0
    %2912 = vmatmul.mubr.bf16.gmra.mxu0 %v2415
    %v2913 = vpop.f32.mrf.mxu0
    %v2914 = vadd.f32 %v2625, %v2913
    %v2915 = vpop.f32.mrf.mxu0
    %v2916 = vpop.f32.mrf.mxu0
    %v2917 = vadd.f32 %v2628, %v2916
    %v2918 = vpop.f32.mrf.mxu0
    %2919 = vmatprep.mubr.bf16.mxu0 0
    %2920 = vmatmul.mubr.bf16.gmra.mxu0 %v2418
    %v2921 = vpop.f32.mrf.mxu0
    %v2922 = vadd.f32 %v2633, %v2921
    %v2923 = vpop.f32.mrf.mxu0
    %v2924 = vpop.f32.mrf.mxu0
    %v2925 = vadd.f32 %v2636, %v2924
    %v2926 = vpop.f32.mrf.mxu0
    %2927 = vmatprep.mubr.bf16.mxu0 0
    %2928 = vmatmul.mubr.bf16.gmra.mxu0 %v2421
    %v2929 = vpop.f32.mrf.mxu0
    %v2930 = vadd.f32 %v2641, %v2929
    %v2931 = vpop.f32.mrf.mxu0
    %v2932 = vpop.f32.mrf.mxu0
    %v2933 = vadd.f32 %v2644, %v2932
    %v2934 = vpop.f32.mrf.mxu0
    %2935 = vmatprep.mubr.bf16.mxu0 0
    %2936 = vmatmul.mubr.bf16.gmra.mxu0 %v2424
    %v2937 = vpop.f32.mrf.mxu0
    %v2938 = vadd.f32 %v2649, %v2937
    %v2939 = vpop.f32.mrf.mxu0
    %v2940 = vpop.f32.mrf.mxu0
    %v2941 = vadd.f32 %v2652, %v2940
    %v2942 = vpop.f32.mrf.mxu0
    %2943 = vmatprep.mubr.bf16.mxu0 0
    %2944 = vmatmul.mubr.bf16.gmra.mxu0 %v2427
    %v2945 = vpop.f32.mrf.mxu0
    %v2946 = vadd.f32 %v2657, %v2945
    %v2947 = vpop.f32.mrf.mxu0
    %v2948 = vpop.f32.mrf.mxu0
    %v2949 = vadd.f32 %v2660, %v2948
    %v2950 = vpop.f32.mrf.mxu0
    %2951 = vmatprep.mubr.bf16.mxu0 0
    %2952 = vmatmul.mubr.bf16.gmra.mxu0 %v2430
    %v2953 = vpop.f32.mrf.mxu0
    %v2954 = vadd.f32 %v2665, %v2953
    %v2955 = vpop.f32.mrf.mxu0
    %v2956 = vpop.f32.mrf.mxu0
    %v2957 = vadd.f32 %v2668, %v2956
    %v2958 = vpop.f32.mrf.mxu0
    %2959 = vmatprep.mubr.bf16.mxu0 0
    %2960 = vmatmul.mubr.bf16.gmra.mxu0 %v2433
    %v2961 = vpop.f32.mrf.mxu0
    %v2962 = vadd.f32 %v2673, %v2961
    %v2963 = vpop.f32.mrf.mxu0
    %v2964 = vpop.f32.mrf.mxu0
    %v2965 = vadd.f32 %v2676, %v2964
    %v2966 = vpop.f32.mrf.mxu0
    %2967 = vmatprep.mubr.bf16.mxu0 0
    %2968 = vmatmul.mubr.bf16.gmra.mxu0 %v2436
    %v2969 = vpop.f32.mrf.mxu0
    %v2970 = vadd.f32 %v2681, %v2969
    %v2971 = vpop.f32.mrf.mxu0
    %v2972 = vpop.f32.mrf.mxu0
    %v2973 = vadd.f32 %v2684, %v2972
    %v2974 = vpop.f32.mrf.mxu0
    %2975 = vmatprep.mubr.bf16.mxu0 0
    %2976 = vmatmul.mubr.bf16.gmra.mxu0 %v2439
    %v2977 = vpop.f32.mrf.mxu0
    %v2978 = vadd.f32 %v2689, %v2977
    %v2979 = vpop.f32.mrf.mxu0
    %v2980 = vpop.f32.mrf.mxu0
    %v2981 = vadd.f32 %v2692, %v2980
    %v2982 = vpop.f32.mrf.mxu0
    %2983 = vmatprep.mubr.bf16.mxu0 0
    %2984 = vmatmul.mubr.bf16.gmra.mxu0 %v2442
    %v2985 = vpop.f32.mrf.mxu0
    %v2986 = vadd.f32 %v2697, %v2985
    %v2987 = vpop.f32.mrf.mxu0
    %v2988 = vpop.f32.mrf.mxu0
    %v2989 = vadd.f32 %v2700, %v2988
    %v2990 = vpop.f32.mrf.mxu0
    %2991 = vmatprep.mubr.bf16.mxu0 0
    %2992 = vmatmul.mubr.bf16.gmra.mxu0 %v2445
    %v2993 = vpop.f32.mrf.mxu0
    %v2994 = vadd.f32 %v2705, %v2993
    %v2995 = vpop.f32.mrf.mxu0
    %v2996 = vpop.f32.mrf.mxu0
    %v2997 = vadd.f32 %v2708, %v2996
    %v2998 = vpop.f32.mrf.mxu0
    %2999 = vmatprep.mubr.bf16.mxu0 0
    %3000 = vmatmul.mubr.bf16.gmra.mxu0 %v2448
    %v3001 = vpop.f32.mrf.mxu0
    %v3002 = vadd.f32 %v2713, %v3001
    %v3003 = vpop.f32.mrf.mxu0
    %v3004 = vpop.f32.mrf.mxu0
    %v3005 = vadd.f32 %v2716, %v3004
    %v3006 = vpop.f32.mrf.mxu0
    %3007 = vmatprep.mubr.bf16.mxu0 0
    %3008 = vmatmul.mubr.bf16.gmra.mxu0 %v2451
    %v3009 = vpop.f32.mrf.mxu0
    %v3010 = vadd.f32 %v2721, %v3009
    %v3011 = vpop.f32.mrf.mxu0
    %v3012 = vpop.f32.mrf.mxu0
    %v3013 = vadd.f32 %v2724, %v3012
    %v3014 = vpop.f32.mrf.mxu0
    %3015 = vmatprep.mubr.bf16.mxu0 0
    %3016 = vmatmul.mubr.bf16.gmra.mxu0 %v2454
    %v3017 = vpop.f32.mrf.mxu0
    %v3018 = vadd.f32 %v2729, %v3017
    %v3019 = vpop.f32.mrf.mxu0
    %v3020 = vpop.f32.mrf.mxu0
    %v3021 = vadd.f32 %v2732, %v3020
    %v3022 = vpop.f32.mrf.mxu0
    %3023 = vmatprep.mubr.bf16.mxu0 0
    %3024 = vmatmul.mubr.bf16.gmra.mxu0 %v2457
    %v3025 = vpop.f32.mrf.mxu0
    %v3026 = vadd.f32 %v2737, %v3025
    %v3027 = vpop.f32.mrf.mxu0
    %v3028 = vpop.f32.mrf.mxu0
    %v3029 = vadd.f32 %v2740, %v3028
    %v3030 = vpop.f32.mrf.mxu0
    %3031 = vmatprep.mubr.bf16.mxu0 0
    %3032 = vmatmul.mubr.bf16.gmra.mxu0 %v2460
    %v3033 = vpop.f32.mrf.mxu0
    %v3034 = vadd.f32 %v2745, %v3033
    %v3035 = vpop.f32.mrf.mxu0
    %v3036 = vpop.f32.mrf.mxu0
    %v3037 = vadd.f32 %v2748, %v3036
    %v3038 = vpop.f32.mrf.mxu0
    %3039 = vdwg.mxu0
    %v3040 = vld [vmem:[%s2] sm:$0x1]
    %v3041 = vld [vmem:[%s3] sm:$0x1]
    %v3042 = vsel %vm92, %v2786, 0.0
    %v3043 = vsel %vm92, %v2789, 0.0
    %v3044 = vadd.f32 %v3042, %v3043
    %v3045 = vsel %vm92, %v2794, 0.0
    %v3046 = vadd.f32 %v3044, %v3045
    %v3047 = vsel %vm92, %v2797, 0.0
    %v3048 = vadd.f32 %v3046, %v3047
    %v3049 = vsel %vm92, %v2802, 0.0
    %v3050 = vadd.f32 %v3048, %v3049
    %v3051 = vsel %vm92, %v2805, 0.0
    %v3052 = vadd.f32 %v3050, %v3051
    %v3053 = vsel %vm92, %v2810, 0.0
    %v3054 = vadd.f32 %v3052, %v3053
    %v3055 = vsel %vm92, %v2813, 0.0
    %v3056 = vadd.f32 %v3054, %v3055
    %v3057 = vsel %vm92, %v2818, 0.0
    %v3058 = vadd.f32 %v3056, %v3057
    %v3059 = vsel %vm92, %v2821, 0.0
    %v3060 = vadd.f32 %v3058, %v3059
    %v3061 = vsel %vm92, %v2826, 0.0
    %v3062 = vadd.f32 %v3060, %v3061
    %v3063 = vsel %vm92, %v2829, 0.0
    %v3064 = vadd.f32 %v3062, %v3063
    %v3065 = vsel %vm92, %v2834, 0.0
    %v3066 = vadd.f32 %v3064, %v3065
    %v3067 = vsel %vm92, %v2837, 0.0
    %v3068 = vadd.f32 %v3066, %v3067
    %v3069 = vsel %vm92, %v2842, 0.0
    %v3070 = vadd.f32 %v3068, %v3069
    %v3071 = vsel %vm92, %v2845, 0.0
    %v3072 = vadd.f32 %v3070, %v3071
    %v3073 = vsel %vm92, %v2850, 0.0
    %v3074 = vadd.f32 %v3072, %v3073
    %v3075 = vsel %vm92, %v2853, 0.0
    %v3076 = vadd.f32 %v3074, %v3075
    %v3077 = vsel %vm92, %v2858, 0.0
    %v3078 = vadd.f32 %v3076, %v3077
    %v3079 = vsel %vm92, %v2861, 0.0
    %v3080 = vadd.f32 %v3078, %v3079
    %v3081 = vsel %vm92, %v2866, 0.0
    %v3082 = vadd.f32 %v3080, %v3081
    %v3083 = vsel %vm92, %v2869, 0.0
    %v3084 = vadd.f32 %v3082, %v3083
    %v3085 = vsel %vm92, %v2874, 0.0
    %v3086 = vadd.f32 %v3084, %v3085
    %v3087 = vsel %vm92, %v2877, 0.0
    %v3088 = vadd.f32 %v3086, %v3087
    %v3089 = vsel %vm92, %v2882, 0.0
    %v3090 = vadd.f32 %v3088, %v3089
    %v3091 = vsel %vm92, %v2885, 0.0
    %v3092 = vadd.f32 %v3090, %v3091
    %v3093 = vsel %vm92, %v2890, 0.0
    %v3094 = vadd.f32 %v3092, %v3093
    %v3095 = vsel %vm92, %v2893, 0.0
    %v3096 = vadd.f32 %v3094, %v3095
    %v3097 = vsel %vm92, %v2898, 0.0
    %v3098 = vadd.f32 %v3096, %v3097
    %v3099 = vsel %vm92, %v2901, 0.0
    %v3100 = vadd.f32 %v3098, %v3099
    %v3101 = vsel %vm92, %v2906, 0.0
    %v3102 = vadd.f32 %v3100, %v3101
    %v3103 = vsel %vm92, %v2909, 0.0
    %v3104 = vadd.f32 %v3102, %v3103
    %v3105 = vsel %vm92, %v2914, 0.0
    %v3106 = vadd.f32 %v3104, %v3105
    %v3107 = vsel %vm92, %v2917, 0.0
    %v3108 = vadd.f32 %v3106, %v3107
    %v3109 = vsel %vm92, %v2922, 0.0
    %v3110 = vadd.f32 %v3108, %v3109
    %v3111 = vsel %vm92, %v2925, 0.0
    %v3112 = vadd.f32 %v3110, %v3111
    %v3113 = vsel %vm92, %v2930, 0.0
    %v3114 = vadd.f32 %v3112, %v3113
    %v3115 = vsel %vm92, %v2933, 0.0
    %v3116 = vadd.f32 %v3114, %v3115
    %v3117 = vsel %vm92, %v2938, 0.0
    %v3118 = vadd.f32 %v3116, %v3117
    %v3119 = vsel %vm92, %v2941, 0.0
    %v3120 = vadd.f32 %v3118, %v3119
    %v3121 = vsel %vm92, %v2946, 0.0
    %v3122 = vadd.f32 %v3120, %v3121
    %v3123 = vsel %vm92, %v2949, 0.0
    %v3124 = vadd.f32 %v3122, %v3123
    %v3125 = vsel %vm92, %v2954, 0.0
    %v3126 = vadd.f32 %v3124, %v3125
    %v3127 = vsel %vm92, %v2957, 0.0
    %v3128 = vadd.f32 %v3126, %v3127
    %v3129 = vsel %vm92, %v2962, 0.0
    %v3130 = vadd.f32 %v3128, %v3129
    %v3131 = vsel %vm92, %v2965, 0.0
    %v3132 = vadd.f32 %v3130, %v3131
    %v3133 = vsel %vm92, %v2970, 0.0
    %v3134 = vadd.f32 %v3132, %v3133
    %v3135 = vsel %vm92, %v2973, 0.0
    %v3136 = vadd.f32 %v3134, %v3135
    %v3137 = vsel %vm92, %v2978, 0.0
    %v3138 = vadd.f32 %v3136, %v3137
    %v3139 = vsel %vm92, %v2981, 0.0
    %v3140 = vadd.f32 %v3138, %v3139
    %v3141 = vsel %vm92, %v2986, 0.0
    %v3142 = vadd.f32 %v3140, %v3141
    %v3143 = vsel %vm92, %v2989, 0.0
    %v3144 = vadd.f32 %v3142, %v3143
    %v3145 = vsel %vm92, %v2994, 0.0
    %v3146 = vadd.f32 %v3144, %v3145
    %v3147 = vsel %vm92, %v2997, 0.0
    %v3148 = vadd.f32 %v3146, %v3147
    %v3149 = vsel %vm92, %v3002, 0.0
    %v3150 = vadd.f32 %v3148, %v3149
    %v3151 = vsel %vm92, %v3005, 0.0
    %v3152 = vadd.f32 %v3150, %v3151
    %v3153 = vsel %vm92, %v3010, 0.0
    %v3154 = vadd.f32 %v3152, %v3153
    %v3155 = vsel %vm92, %v3013, 0.0
    %v3156 = vadd.f32 %v3154, %v3155
    %v3157 = vsel %vm92, %v3018, 0.0
    %v3158 = vadd.f32 %v3156, %v3157
    %v3159 = vsel %vm92, %v3021, 0.0
    %v3160 = vadd.f32 %v3158, %v3159
    %v3161 = vsel %vm92, %v3026, 0.0
    %v3162 = vadd.f32 %v3160, %v3161
    %v3163 = vsel %vm92, %v3029, 0.0
    %v3164 = vadd.f32 %v3162, %v3163
    %v3165 = vsel %vm92, %v3034, 0.0
    %v3166 = vadd.f32 %v3164, %v3165
    %v3167 = vsel %vm92, %v3037, 0.0
    %v3168 = vadd.f32 %v3166, %v3167
    %v3169 = vrot.slane %v3168, 4
    %v3170 = vadd.f32 %v3168, %v3169
    %v3171 = vrot.slane %v3170, 2
    %v3172 = vadd.f32 %v3170, %v3171
    %v3173 = vrot.slane %v3172, 1
    %v3174 = vadd.f32 %v3172, %v3173
    %v3175 = vmul.f32 %v3174, 0.001953125
    %v3176 = vsub.f32 %v2786, %v3175
    %v3177 = vsub.f32 %v2789, %v3175
    %v3178 = vsub.f32 %v2794, %v3175
    %v3179 = vsub.f32 %v2797, %v3175
    %v3180 = vsub.f32 %v2802, %v3175
    %v3181 = vsub.f32 %v2805, %v3175
    %v3182 = vsub.f32 %v2810, %v3175
    %v3183 = vsub.f32 %v2813, %v3175
    %v3184 = vsub.f32 %v2818, %v3175
    %v3185 = vsub.f32 %v2821, %v3175
    %v3186 = vsub.f32 %v2826, %v3175
    %v3187 = vsub.f32 %v2829, %v3175
    %v3188 = vsub.f32 %v2834, %v3175
    %v3189 = vsub.f32 %v2837, %v3175
    %v3190 = vsub.f32 %v2842, %v3175
    %v3191 = vsub.f32 %v2845, %v3175
    %v3192 = vsub.f32 %v2850, %v3175
    %v3193 = vsub.f32 %v2853, %v3175
    %v3194 = vsub.f32 %v2858, %v3175
    %v3195 = vsub.f32 %v2861, %v3175
    %v3196 = vsub.f32 %v2866, %v3175
    %v3197 = vsub.f32 %v2869, %v3175
    %v3198 = vsub.f32 %v2874, %v3175
    %v3199 = vsub.f32 %v2877, %v3175
    %v3200 = vsub.f32 %v2882, %v3175
    %v3201 = vsub.f32 %v2885, %v3175
    %v3202 = vsub.f32 %v2890, %v3175
    %v3203 = vsub.f32 %v2893, %v3175
    %v3204 = vsub.f32 %v2898, %v3175
    %v3205 = vsub.f32 %v2901, %v3175
    %v3206 = vsub.f32 %v2906, %v3175
    %v3207 = vsub.f32 %v2909, %v3175
    %v3208 = vsub.f32 %v2914, %v3175
    %v3209 = vsub.f32 %v2917, %v3175
    %v3210 = vsub.f32 %v2922, %v3175
    %v3211 = vsub.f32 %v2925, %v3175
    %v3212 = vsub.f32 %v2930, %v3175
    %v3213 = vsub.f32 %v2933, %v3175
    %v3214 = vsub.f32 %v2938, %v3175
    %v3215 = vsub.f32 %v2941, %v3175
    %v3216 = vsub.f32 %v2946, %v3175
    %v3217 = vsub.f32 %v2949, %v3175
    %v3218 = vsub.f32 %v2954, %v3175
    %v3219 = vsub.f32 %v2957, %v3175
    %v3220 = vsub.f32 %v2962, %v3175
    %v3221 = vsub.f32 %v2965, %v3175
    %v3222 = vsub.f32 %v2970, %v3175
    %v3223 = vsub.f32 %v2973, %v3175
    %v3224 = vsub.f32 %v2978, %v3175
    %v3225 = vsub.f32 %v2981, %v3175
    %v3226 = vsub.f32 %v2986, %v3175
    %v3227 = vsub.f32 %v2989, %v3175
    %v3228 = vsub.f32 %v2994, %v3175
    %v3229 = vsub.f32 %v2997, %v3175
    %v3230 = vsub.f32 %v3002, %v3175
    %v3231 = vsub.f32 %v3005, %v3175
    %v3232 = vsub.f32 %v3010, %v3175
    %v3233 = vsub.f32 %v3013, %v3175
    %v3234 = vsub.f32 %v3018, %v3175
    %v3235 = vsub.f32 %v3021, %v3175
    %v3236 = vsub.f32 %v3026, %v3175
    %v3237 = vsub.f32 %v3029, %v3175
    %v3238 = vsub.f32 %v3034, %v3175
    %v3239 = vsub.f32 %v3037, %v3175
    %v3240 = vmul.f32 %v3176, %v3176
    %v3241 = vmul.f32 %v3177, %v3177
    %v3242 = vmul.f32 %v3178, %v3178
    %v3243 = vmul.f32 %v3179, %v3179
    %v3244 = vmul.f32 %v3180, %v3180
    %v3245 = vmul.f32 %v3181, %v3181
    %v3246 = vmul.f32 %v3182, %v3182
    %v3247 = vmul.f32 %v3183, %v3183
    %v3248 = vmul.f32 %v3184, %v3184
    %v3249 = vmul.f32 %v3185, %v3185
    %v3250 = vmul.f32 %v3186, %v3186
    %v3251 = vmul.f32 %v3187, %v3187
    %v3252 = vmul.f32 %v3188, %v3188
    %v3253 = vmul.f32 %v3189, %v3189
    %v3254 = vmul.f32 %v3190, %v3190
    %v3255 = vmul.f32 %v3191, %v3191
    %v3256 = vmul.f32 %v3192, %v3192
    %v3257 = vmul.f32 %v3193, %v3193
    %v3258 = vmul.f32 %v3194, %v3194
    %v3259 = vmul.f32 %v3195, %v3195
    %v3260 = vmul.f32 %v3196, %v3196
    %v3261 = vmul.f32 %v3197, %v3197
    %v3262 = vmul.f32 %v3198, %v3198
    %v3263 = vmul.f32 %v3199, %v3199
    %v3264 = vmul.f32 %v3200, %v3200
    %v3265 = vmul.f32 %v3201, %v3201
    %v3266 = vmul.f32 %v3202, %v3202
    %v3267 = vmul.f32 %v3203, %v3203
    %v3268 = vmul.f32 %v3204, %v3204
    %v3269 = vmul.f32 %v3205, %v3205
    %v3270 = vmul.f32 %v3206, %v3206
    %v3271 = vmul.f32 %v3207, %v3207
    %v3272 = vmul.f32 %v3208, %v3208
    %v3273 = vmul.f32 %v3209, %v3209
    %v3274 = vmul.f32 %v3210, %v3210
    %v3275 = vmul.f32 %v3211, %v3211
    %v3276 = vmul.f32 %v3212, %v3212
    %v3277 = vmul.f32 %v3213, %v3213
    %v3278 = vmul.f32 %v3214, %v3214
    %v3279 = vmul.f32 %v3215, %v3215
    %v3280 = vmul.f32 %v3216, %v3216
    %v3281 = vmul.f32 %v3217, %v3217
    %v3282 = vmul.f32 %v3218, %v3218
    %v3283 = vmul.f32 %v3219, %v3219
    %v3284 = vmul.f32 %v3220, %v3220
    %v3285 = vmul.f32 %v3221, %v3221
    %v3286 = vmul.f32 %v3222, %v3222
    %v3287 = vmul.f32 %v3223, %v3223
    %v3288 = vmul.f32 %v3224, %v3224
    %v3289 = vmul.f32 %v3225, %v3225
    %v3290 = vmul.f32 %v3226, %v3226
    %v3291 = vmul.f32 %v3227, %v3227
    %v3292 = vmul.f32 %v3228, %v3228
    %v3293 = vmul.f32 %v3229, %v3229
    %v3294 = vmul.f32 %v3230, %v3230
    %v3295 = vmul.f32 %v3231, %v3231
    %v3296 = vmul.f32 %v3232, %v3232
    %v3297 = vmul.f32 %v3233, %v3233
    %v3298 = vmul.f32 %v3234, %v3234
    %v3299 = vmul.f32 %v3235, %v3235
    %v3300 = vmul.f32 %v3236, %v3236
    %v3301 = vmul.f32 %v3237, %v3237
    %v3302 = vmul.f32 %v3238, %v3238
    %v3303 = vmul.f32 %v3239, %v3239
    %v3304 = vsel %vm92, %v3240, 0.0
    %v3305 = vsel %vm92, %v3241, 0.0
    %v3306 = vadd.f32 %v3304, %v3305
    %v3307 = vsel %vm92, %v3242, 0.0
    %v3308 = vadd.f32 %v3306, %v3307
    %v3309 = vsel %vm92, %v3243, 0.0
    %v3310 = vadd.f32 %v3308, %v3309
    %v3311 = vsel %vm92, %v3244, 0.0
    %v3312 = vadd.f32 %v3310, %v3311
    %v3313 = vsel %vm92, %v3245, 0.0
    %v3314 = vadd.f32 %v3312, %v3313
    %v3315 = vsel %vm92, %v3246, 0.0
    %v3316 = vadd.f32 %v3314, %v3315
    %v3317 = vsel %vm92, %v3247, 0.0
    %v3318 = vadd.f32 %v3316, %v3317
    %v3319 = vsel %vm92, %v3248, 0.0
    %v3320 = vadd.f32 %v3318, %v3319
    %v3321 = vsel %vm92, %v3249, 0.0
    %v3322 = vadd.f32 %v3320, %v3321
    %v3323 = vsel %vm92, %v3250, 0.0
    %v3324 = vadd.f32 %v3322, %v3323
    %v3325 = vsel %vm92, %v3251, 0.0
    %v3326 = vadd.f32 %v3324, %v3325
    %v3327 = vsel %vm92, %v3252, 0.0
    %v3328 = vadd.f32 %v3326, %v3327
    %v3329 = vsel %vm92, %v3253, 0.0
    %v3330 = vadd.f32 %v3328, %v3329
    %v3331 = vsel %vm92, %v3254, 0.0
    %v3332 = vadd.f32 %v3330, %v3331
    %v3333 = vsel %vm92, %v3255, 0.0
    %v3334 = vadd.f32 %v3332, %v3333
    %v3335 = vsel %vm92, %v3256, 0.0
    %v3336 = vadd.f32 %v3334, %v3335
    %v3337 = vsel %vm92, %v3257, 0.0
    %v3338 = vadd.f32 %v3336, %v3337
    %v3339 = vsel %vm92, %v3258, 0.0
    %v3340 = vadd.f32 %v3338, %v3339
    %v3341 = vsel %vm92, %v3259, 0.0
    %v3342 = vadd.f32 %v3340, %v3341
    %v3343 = vsel %vm92, %v3260, 0.0
    %v3344 = vadd.f32 %v3342, %v3343
    %v3345 = vsel %vm92, %v3261, 0.0
    %v3346 = vadd.f32 %v3344, %v3345
    %v3347 = vsel %vm92, %v3262, 0.0
    %v3348 = vadd.f32 %v3346, %v3347
    %v3349 = vsel %vm92, %v3263, 0.0
    %v3350 = vadd.f32 %v3348, %v3349
    %v3351 = vsel %vm92, %v3264, 0.0
    %v3352 = vadd.f32 %v3350, %v3351
    %v3353 = vsel %vm92, %v3265, 0.0
    %v3354 = vadd.f32 %v3352, %v3353
    %v3355 = vsel %vm92, %v3266, 0.0
    %v3356 = vadd.f32 %v3354, %v3355
    %v3357 = vsel %vm92, %v3267, 0.0
    %v3358 = vadd.f32 %v3356, %v3357
    %v3359 = vsel %vm92, %v3268, 0.0
    %v3360 = vadd.f32 %v3358, %v3359
    %v3361 = vsel %vm92, %v3269, 0.0
    %v3362 = vadd.f32 %v3360, %v3361
    %v3363 = vsel %vm92, %v3270, 0.0
    %v3364 = vadd.f32 %v3362, %v3363
    %v3365 = vsel %vm92, %v3271, 0.0
    %v3366 = vadd.f32 %v3364, %v3365
    %v3367 = vsel %vm92, %v3272, 0.0
    %v3368 = vadd.f32 %v3366, %v3367
    %v3369 = vsel %vm92, %v3273, 0.0
    %v3370 = vadd.f32 %v3368, %v3369
    %v3371 = vsel %vm92, %v3274, 0.0
    %v3372 = vadd.f32 %v3370, %v3371
    %v3373 = vsel %vm92, %v3275, 0.0
    %v3374 = vadd.f32 %v3372, %v3373
    %v3375 = vsel %vm92, %v3276, 0.0
    %v3376 = vadd.f32 %v3374, %v3375
    %v3377 = vsel %vm92, %v3277, 0.0
    %v3378 = vadd.f32 %v3376, %v3377
    %v3379 = vsel %vm92, %v3278, 0.0
    %v3380 = vadd.f32 %v3378, %v3379
    %v3381 = vsel %vm92, %v3279, 0.0
    %v3382 = vadd.f32 %v3380, %v3381
    %v3383 = vsel %vm92, %v3280, 0.0
    %v3384 = vadd.f32 %v3382, %v3383
    %v3385 = vsel %vm92, %v3281, 0.0
    %v3386 = vadd.f32 %v3384, %v3385
    %v3387 = vsel %vm92, %v3282, 0.0
    %v3388 = vadd.f32 %v3386, %v3387
    %v3389 = vsel %vm92, %v3283, 0.0
    %v3390 = vadd.f32 %v3388, %v3389
    %v3391 = vsel %vm92, %v3284, 0.0
    %v3392 = vadd.f32 %v3390, %v3391
    %v3393 = vsel %vm92, %v3285, 0.0
    %v3394 = vadd.f32 %v3392, %v3393
    %v3395 = vsel %vm92, %v3286, 0.0
    %v3396 = vadd.f32 %v3394, %v3395
    %v3397 = vsel %vm92, %v3287, 0.0
    %v3398 = vadd.f32 %v3396, %v3397
    %v3399 = vsel %vm92, %v3288, 0.0
    %v3400 = vadd.f32 %v3398, %v3399
    %v3401 = vsel %vm92, %v3289, 0.0
    %v3402 = vadd.f32 %v3400, %v3401
    %v3403 = vsel %vm92, %v3290, 0.0
    %v3404 = vadd.f32 %v3402, %v3403
    %v3405 = vsel %vm92, %v3291, 0.0
    %v3406 = vadd.f32 %v3404, %v3405
    %v3407 = vsel %vm92, %v3292, 0.0
    %v3408 = vadd.f32 %v3406, %v3407
    %v3409 = vsel %vm92, %v3293, 0.0
    %v3410 = vadd.f32 %v3408, %v3409
    %v3411 = vsel %vm92, %v3294, 0.0
    %v3412 = vadd.f32 %v3410, %v3411
    %v3413 = vsel %vm92, %v3295, 0.0
    %v3414 = vadd.f32 %v3412, %v3413
    %v3415 = vsel %vm92, %v3296, 0.0
    %v3416 = vadd.f32 %v3414, %v3415
    %v3417 = vsel %vm92, %v3297, 0.0
    %v3418 = vadd.f32 %v3416, %v3417
    %v3419 = vsel %vm92, %v3298, 0.0
    %v3420 = vadd.f32 %v3418, %v3419
    %v3421 = vsel %vm92, %v3299, 0.0
    %v3422 = vadd.f32 %v3420, %v3421
    %v3423 = vsel %vm92, %v3300, 0.0
    %v3424 = vadd.f32 %v3422, %v3423
    %v3425 = vsel %vm92, %v3301, 0.0
    %v3426 = vadd.f32 %v3424, %v3425
    %v3427 = vsel %vm92, %v3302, 0.0
    %v3428 = vadd.f32 %v3426, %v3427
    %v3429 = vsel %vm92, %v3303, 0.0
    %v3430 = vadd.f32 %v3428, %v3429
    %v3431 = vrot.slane %v3430, 4
    %v3432 = vadd.f32 %v3430, %v3431
    %v3433 = vrot.slane %v3432, 2
    %v3434 = vadd.f32 %v3432, %v3433
    %v3435 = vrot.slane %v3434, 1
    %v3436 = vadd.f32 %v3434, %v3435
    %v3437 = vmul.f32 %v3436, 0.001953125
    %v3438 = vadd.f32 %v3437, 1e-05
    %v3439 = vrsqrt.pop %v3438
    %v3440 = vmul.f32 %v3040, %v3439
    %v3442 = vlaneseq
    %v3443 = vshrl.u32 %v3442, 7
    %v3444 = vsub.s32 0, %v3443
    %v3445 = vrot.slane %v3440, %v3444
    %v3447 = vmul.f32 %v2786, %v3445
    %v3448 = vmul.f32 %v2789, %v3445
    %v3449 = vmul.f32 %v2794, %v3445
    %v3450 = vmul.f32 %v2797, %v3445
    %v3451 = vmul.f32 %v2802, %v3445
    %v3452 = vmul.f32 %v2805, %v3445
    %v3453 = vmul.f32 %v2810, %v3445
    %v3454 = vmul.f32 %v2813, %v3445
    %v3455 = vmul.f32 %v2818, %v3445
    %v3456 = vmul.f32 %v2821, %v3445
    %v3457 = vmul.f32 %v2826, %v3445
    %v3458 = vmul.f32 %v2829, %v3445
    %v3459 = vmul.f32 %v2834, %v3445
    %v3460 = vmul.f32 %v2837, %v3445
    %v3461 = vmul.f32 %v2842, %v3445
    %v3462 = vmul.f32 %v2845, %v3445
    %v3463 = vmul.f32 %v2850, %v3445
    %v3464 = vmul.f32 %v2853, %v3445
    %v3465 = vmul.f32 %v2858, %v3445
    %v3466 = vmul.f32 %v2861, %v3445
    %v3467 = vmul.f32 %v2866, %v3445
    %v3468 = vmul.f32 %v2869, %v3445
    %v3469 = vmul.f32 %v2874, %v3445
    %v3470 = vmul.f32 %v2877, %v3445
    %v3471 = vmul.f32 %v2882, %v3445
    %v3472 = vmul.f32 %v2885, %v3445
    %v3473 = vmul.f32 %v2890, %v3445
    %v3474 = vmul.f32 %v2893, %v3445
    %v3475 = vmul.f32 %v2898, %v3445
    %v3476 = vmul.f32 %v2901, %v3445
    %v3477 = vmul.f32 %v2906, %v3445
    %v3478 = vmul.f32 %v2909, %v3445
    %v3479 = vmul.f32 %v2914, %v3445
    %v3480 = vmul.f32 %v2917, %v3445
    %v3481 = vmul.f32 %v2922, %v3445
    %v3482 = vmul.f32 %v2925, %v3445
    %v3483 = vmul.f32 %v2930, %v3445
    %v3484 = vmul.f32 %v2933, %v3445
    %v3485 = vmul.f32 %v2938, %v3445
    %v3486 = vmul.f32 %v2941, %v3445
    %v3487 = vmul.f32 %v2946, %v3445
    %v3488 = vmul.f32 %v2949, %v3445
    %v3489 = vmul.f32 %v2954, %v3445
    %v3490 = vmul.f32 %v2957, %v3445
    %v3491 = vmul.f32 %v2962, %v3445
    %v3492 = vmul.f32 %v2965, %v3445
    %v3493 = vmul.f32 %v2970, %v3445
    %v3494 = vmul.f32 %v2973, %v3445
    %v3495 = vmul.f32 %v2978, %v3445
    %v3496 = vmul.f32 %v2981, %v3445
    %v3497 = vmul.f32 %v2986, %v3445
    %v3498 = vmul.f32 %v2989, %v3445
    %v3499 = vmul.f32 %v2994, %v3445
    %v3500 = vmul.f32 %v2997, %v3445
    %v3501 = vmul.f32 %v3002, %v3445
    %v3502 = vmul.f32 %v3005, %v3445
    %v3503 = vmul.f32 %v3010, %v3445
    %v3504 = vmul.f32 %v3013, %v3445
    %v3505 = vmul.f32 %v3018, %v3445
    %v3506 = vmul.f32 %v3021, %v3445
    %v3507 = vmul.f32 %v3026, %v3445
    %v3508 = vmul.f32 %v3029, %v3445
    %v3509 = vmul.f32 %v3034, %v3445
    %v3510 = vmul.f32 %v3037, %v3445
    %v3511 = vmul.f32 %v3175, %v3440
    %v3512 = vsub.f32 %v3041, %v3511
    %v3514 = vlaneseq
    %v3515 = vshrl.u32 %v3514, 7
    %v3516 = vsub.s32 0, %v3515
    %v3517 = vrot.slane %v3512, %v3516
    %v3519 = vadd.f32 %v3447, %v3517
    %v3520 = vadd.f32 %v3448, %v3517
    %v3521 = vadd.f32 %v3449, %v3517
    %v3522 = vadd.f32 %v3450, %v3517
    %v3523 = vadd.f32 %v3451, %v3517
    %v3524 = vadd.f32 %v3452, %v3517
    %v3525 = vadd.f32 %v3453, %v3517
    %v3526 = vadd.f32 %v3454, %v3517
    %v3527 = vadd.f32 %v3455, %v3517
    %v3528 = vadd.f32 %v3456, %v3517
    %v3529 = vadd.f32 %v3457, %v3517
    %v3530 = vadd.f32 %v3458, %v3517
    %v3531 = vadd.f32 %v3459, %v3517
    %v3532 = vadd.f32 %v3460, %v3517
    %v3533 = vadd.f32 %v3461, %v3517
    %v3534 = vadd.f32 %v3462, %v3517
    %v3535 = vadd.f32 %v3463, %v3517
    %v3536 = vadd.f32 %v3464, %v3517
    %v3537 = vadd.f32 %v3465, %v3517
    %v3538 = vadd.f32 %v3466, %v3517
    %v3539 = vadd.f32 %v3467, %v3517
    %v3540 = vadd.f32 %v3468, %v3517
    %v3541 = vadd.f32 %v3469, %v3517
    %v3542 = vadd.f32 %v3470, %v3517
    %v3543 = vadd.f32 %v3471, %v3517
    %v3544 = vadd.f32 %v3472, %v3517
    %v3545 = vadd.f32 %v3473, %v3517
    %v3546 = vadd.f32 %v3474, %v3517
    %v3547 = vadd.f32 %v3475, %v3517
    %v3548 = vadd.f32 %v3476, %v3517
    %v3549 = vadd.f32 %v3477, %v3517
    %v3550 = vadd.f32 %v3478, %v3517
    %v3551 = vadd.f32 %v3479, %v3517
    %v3552 = vadd.f32 %v3480, %v3517
    %v3553 = vadd.f32 %v3481, %v3517
    %v3554 = vadd.f32 %v3482, %v3517
    %v3555 = vadd.f32 %v3483, %v3517
    %v3556 = vadd.f32 %v3484, %v3517
    %v3557 = vadd.f32 %v3485, %v3517
    %v3558 = vadd.f32 %v3486, %v3517
    %v3559 = vadd.f32 %v3487, %v3517
    %v3560 = vadd.f32 %v3488, %v3517
    %v3561 = vadd.f32 %v3489, %v3517
    %v3562 = vadd.f32 %v3490, %v3517
    %v3563 = vadd.f32 %v3491, %v3517
    %v3564 = vadd.f32 %v3492, %v3517
    %v3565 = vadd.f32 %v3493, %v3517
    %v3566 = vadd.f32 %v3494, %v3517
    %v3567 = vadd.f32 %v3495, %v3517
    %v3568 = vadd.f32 %v3496, %v3517
    %v3569 = vadd.f32 %v3497, %v3517
    %v3570 = vadd.f32 %v3498, %v3517
    %v3571 = vadd.f32 %v3499, %v3517
    %v3572 = vadd.f32 %v3500, %v3517
    %v3573 = vadd.f32 %v3501, %v3517
    %v3574 = vadd.f32 %v3502, %v3517
    %v3575 = vadd.f32 %v3503, %v3517
    %v3576 = vadd.f32 %v3504, %v3517
    %v3577 = vadd.f32 %v3505, %v3517
    %v3578 = vadd.f32 %v3506, %v3517
    %v3579 = vadd.f32 %v3507, %v3517
    %v3580 = vadd.f32 %v3508, %v3517
    %v3581 = vadd.f32 %v3509, %v3517
    %v3582 = vadd.f32 %v3510, %v3517
    %v3583 = vmax.f32 %v3519, 0.0
    %v3584 = vmax.f32 %v3520, 0.0
    %v3585 = vmax.f32 %v3521, 0.0
    %v3586 = vmax.f32 %v3522, 0.0
    %v3587 = vmax.f32 %v3523, 0.0
    %v3588 = vmax.f32 %v3524, 0.0
    %v3589 = vmax.f32 %v3525, 0.0
    %v3590 = vmax.f32 %v3526, 0.0
    %v3591 = vmax.f32 %v3527, 0.0
    %v3592 = vmax.f32 %v3528, 0.0
    %v3593 = vmax.f32 %v3529, 0.0
    %v3594 = vmax.f32 %v3530, 0.0
    %v3595 = vmax.f32 %v3531, 0.0
    %v3596 = vmax.f32 %v3532, 0.0
    %v3597 = vmax.f32 %v3533, 0.0
    %v3598 = vmax.f32 %v3534, 0.0
    %v3599 = vmax.f32 %v3535, 0.0
    %v3600 = vmax.f32 %v3536, 0.0
    %v3601 = vmax.f32 %v3537, 0.0
    %v3602 = vmax.f32 %v3538, 0.0
    %v3603 = vmax.f32 %v3539, 0.0
    %v3604 = vmax.f32 %v3540, 0.0
    %v3605 = vmax.f32 %v3541, 0.0
    %v3606 = vmax.f32 %v3542, 0.0
    %v3607 = vmax.f32 %v3543, 0.0
    %v3608 = vmax.f32 %v3544, 0.0
    %v3609 = vmax.f32 %v3545, 0.0
    %v3610 = vmax.f32 %v3546, 0.0
    %v3611 = vmax.f32 %v3547, 0.0
    %v3612 = vmax.f32 %v3548, 0.0
    %v3613 = vmax.f32 %v3549, 0.0
    %v3614 = vmax.f32 %v3550, 0.0
    %v3615 = vmax.f32 %v3551, 0.0
    %v3616 = vmax.f32 %v3552, 0.0
    %v3617 = vmax.f32 %v3553, 0.0
    %v3618 = vmax.f32 %v3554, 0.0
    %v3619 = vmax.f32 %v3555, 0.0
    %v3620 = vmax.f32 %v3556, 0.0
    %v3621 = vmax.f32 %v3557, 0.0
    %v3622 = vmax.f32 %v3558, 0.0
    %v3623 = vmax.f32 %v3559, 0.0
    %v3624 = vmax.f32 %v3560, 0.0
    %v3625 = vmax.f32 %v3561, 0.0
    %v3626 = vmax.f32 %v3562, 0.0
    %v3627 = vmax.f32 %v3563, 0.0
    %v3628 = vmax.f32 %v3564, 0.0
    %v3629 = vmax.f32 %v3565, 0.0
    %v3630 = vmax.f32 %v3566, 0.0
    %v3631 = vmax.f32 %v3567, 0.0
    %v3632 = vmax.f32 %v3568, 0.0
    %v3633 = vmax.f32 %v3569, 0.0
    %v3634 = vmax.f32 %v3570, 0.0
    %v3635 = vmax.f32 %v3571, 0.0
    %v3636 = vmax.f32 %v3572, 0.0
    %v3637 = vmax.f32 %v3573, 0.0
    %v3638 = vmax.f32 %v3574, 0.0
    %v3639 = vmax.f32 %v3575, 0.0
    %v3640 = vmax.f32 %v3576, 0.0
    %v3641 = vmax.f32 %v3577, 0.0
    %v3642 = vmax.f32 %v3578, 0.0
    %v3643 = vmax.f32 %v3579, 0.0
    %v3644 = vmax.f32 %v3580, 0.0
    %v3645 = vmax.f32 %v3581, 0.0
    %v3646 = vmax.f32 %v3582, 0.0
    %3647 = vst.msk [vmem:[%s202 + $0x1] sm:$0xff] %vm92, %v3583
    %3648 = vst.msk [vmem:[%s202 + $0x9] sm:$0xff] %vm92, %v3584
    %3649 = vst.msk [vmem:[%s202 + $0x19] sm:$0xff] %vm92, %v3585
    %3650 = vst.msk [vmem:[%s202 + $0x21] sm:$0xff] %vm92, %v3586
    %3651 = vst.msk [vmem:[%s202 + $0x31] sm:$0xff] %vm92, %v3587
    %3652 = vst.msk [vmem:[%s202 + $0x39] sm:$0xff] %vm92, %v3588
    %3653 = vst.msk [vmem:[%s202 + $0x49] sm:$0xff] %vm92, %v3589
    %3654 = vst.msk [vmem:[%s202 + $0x51] sm:$0xff] %vm92, %v3590
    %3655 = vst.msk [vmem:[%s202 + $0x61] sm:$0xff] %vm92, %v3591
    %3656 = vst.msk [vmem:[%s202 + $0x69] sm:$0xff] %vm92, %v3592
    %3657 = vst.msk [vmem:[%s202 + $0x79] sm:$0xff] %vm92, %v3593
    %3658 = vst.msk [vmem:[%s202 + $0x81] sm:$0xff] %vm92, %v3594
    %3659 = vst.msk [vmem:[%s202 + $0x91] sm:$0xff] %vm92, %v3595
    %3660 = vst.msk [vmem:[%s202 + $0x99] sm:$0xff] %vm92, %v3596
    %3661 = vst.msk [vmem:[%s202 + $0xa9] sm:$0xff] %vm92, %v3597
    %3662 = vst.msk [vmem:[%s202 + $0xb1] sm:$0xff] %vm92, %v3598
    %3663 = vst.msk [vmem:[%s202 + $0xc1] sm:$0xff] %vm92, %v3599
    %3664 = vst.msk [vmem:[%s202 + $0xc9] sm:$0xff] %vm92, %v3600
    %3665 = vst.msk [vmem:[%s202 + $0xd9] sm:$0xff] %vm92, %v3601
    %3666 = vst.msk [vmem:[%s202 + $0xe1] sm:$0xff] %vm92, %v3602
    %3667 = vst.msk [vmem:[%s202 + $0xf1] sm:$0xff] %vm92, %v3603
    %3668 = vst.msk [vmem:[%s202 + $0xf9] sm:$0xff] %vm92, %v3604
    %3669 = vst.msk [vmem:[%s202 + $0x109] sm:$0xff] %vm92, %v3605
    %3670 = vst.msk [vmem:[%s202 + $0x111] sm:$0xff] %vm92, %v3606
    %3671 = vst.msk [vmem:[%s202 + $0x121] sm:$0xff] %vm92, %v3607
    %3672 = vst.msk [vmem:[%s202 + $0x129] sm:$0xff] %vm92, %v3608
    %3673 = vst.msk [vmem:[%s202 + $0x139] sm:$0xff] %vm92, %v3609
    %3674 = vst.msk [vmem:[%s202 + $0x141] sm:$0xff] %vm92, %v3610
    %3675 = vst.msk [vmem:[%s202 + $0x151] sm:$0xff] %vm92, %v3611
    %3676 = vst.msk [vmem:[%s202 + $0x159] sm:$0xff] %vm92, %v3612
    %3677 = vst.msk [vmem:[%s202 + $0x169] sm:$0xff] %vm92, %v3613
    %3678 = vst.msk [vmem:[%s202 + $0x171] sm:$0xff] %vm92, %v3614
    %3679 = vst.msk [vmem:[%s202 + $0x1b1] sm:$0xff] %vm92, %v3615
    %3680 = vst.msk [vmem:[%s202 + $0x1b9] sm:$0xff] %vm92, %v3616
    %3681 = vst.msk [vmem:[%s202 + $0x1c9] sm:$0xff] %vm92, %v3617
    %3682 = vst.msk [vmem:[%s202 + $0x1d1] sm:$0xff] %vm92, %v3618
    %3683 = vst.msk [vmem:[%s202 + $0x1e1] sm:$0xff] %vm92, %v3619
    %3684 = vst.msk [vmem:[%s202 + $0x1e9] sm:$0xff] %vm92, %v3620
    %3685 = vst.msk [vmem:[%s202 + $0x1f9] sm:$0xff] %vm92, %v3621
    %3686 = vst.msk [vmem:[%s202 + $0x201] sm:$0xff] %vm92, %v3622
    %3687 = vst.msk [vmem:[%s202 + $0x211] sm:$0xff] %vm92, %v3623
    %3688 = vst.msk [vmem:[%s202 + $0x219] sm:$0xff] %vm92, %v3624
    %3689 = vst.msk [vmem:[%s202 + $0x229] sm:$0xff] %vm92, %v3625
    %3690 = vst.msk [vmem:[%s202 + $0x231] sm:$0xff] %vm92, %v3626
    %3691 = vst.msk [vmem:[%s202 + $0x241] sm:$0xff] %vm92, %v3627
    %3692 = vst.msk [vmem:[%s202 + $0x249] sm:$0xff] %vm92, %v3628
    %3693 = vst.msk [vmem:[%s202 + $0x259] sm:$0xff] %vm92, %v3629
    %3694 = vst.msk [vmem:[%s202 + $0x261] sm:$0xff] %vm92, %v3630
    %3695 = vst.msk [vmem:[%s202 + $0x271] sm:$0xff] %vm92, %v3631
    %3696 = vst.msk [vmem:[%s202 + $0x279] sm:$0xff] %vm92, %v3632
    %3697 = vst.msk [vmem:[%s202 + $0x289] sm:$0xff] %vm92, %v3633
    %3698 = vst.msk [vmem:[%s202 + $0x291] sm:$0xff] %vm92, %v3634
    %3699 = vst.msk [vmem:[%s202 + $0x2a1] sm:$0xff] %vm92, %v3635
    %3700 = vst.msk [vmem:[%s202 + $0x2a9] sm:$0xff] %vm92, %v3636
    %3701 = vst.msk [vmem:[%s202 + $0x2b9] sm:$0xff] %vm92, %v3637
    %3702 = vst.msk [vmem:[%s202 + $0x2c1] sm:$0xff] %vm92, %v3638
    %3703 = vst.msk [vmem:[%s202 + $0x2d1] sm:$0xff] %vm92, %v3639
    %3704 = vst.msk [vmem:[%s202 + $0x2d9] sm:$0xff] %vm92, %v3640
    %3705 = vst.msk [vmem:[%s202 + $0x2e9] sm:$0xff] %vm92, %v3641
    %3706 = vst.msk [vmem:[%s202 + $0x2f1] sm:$0xff] %vm92, %v3642
    %3707 = vst.msk [vmem:[%s202 + $0x301] sm:$0xff] %vm92, %v3643
    %3708 = vst.msk [vmem:[%s202 + $0x309] sm:$0xff] %vm92, %v3644
    %3709 = vst.msk [vmem:[%s202 + $0x319] sm:$0xff] %vm92, %v3645
    %3710 = vst.msk [vmem:[%s202 + $0x321] sm:$0xff] %vm92, %v3646
    %v3711 = vld [vmem:[#allocation2] sm:$0xff]
    %v3712 = vld [vmem:[#allocation2 + $0x8] sm:$0xff]
    %v3713 = vld [vmem:[#allocation2 + $0x18] sm:$0xff]
    %v3714 = vld [vmem:[#allocation2 + $0x20] sm:$0xff]
    %v3715 = vld [vmem:[#allocation2 + $0x30] sm:$0xff]
    %v3716 = vld [vmem:[#allocation2 + $0x38] sm:$0xff]
    %v3717 = vld [vmem:[#allocation2 + $0x48] sm:$0xff]
    %v3718 = vld [vmem:[#allocation2 + $0x50] sm:$0xff]
    %v3719 = vld [vmem:[#allocation2 + $0x60] sm:$0xff]
    %v3720 = vld [vmem:[#allocation2 + $0x68] sm:$0xff]
    %v3721 = vld [vmem:[#allocation2 + $0x78] sm:$0xff]
    %v3722 = vld [vmem:[#allocation2 + $0x80] sm:$0xff]
    %v3723 = vld [vmem:[#allocation2 + $0x90] sm:$0xff]
    %v3724 = vld [vmem:[#allocation2 + $0x98] sm:$0xff]
    %v3725 = vld [vmem:[#allocation2 + $0xa8] sm:$0xff]
    %v3726 = vld [vmem:[#allocation2 + $0xb0] sm:$0xff]
    %v3727 = vld [vmem:[#allocation2 + $0xc0] sm:$0xff]
    %v3728 = vld [vmem:[#allocation2 + $0xc8] sm:$0xff]
    %v3729 = vld [vmem:[#allocation2 + $0xd8] sm:$0xff]
    %v3730 = vld [vmem:[#allocation2 + $0xe0] sm:$0xff]
    %v3731 = vld [vmem:[#allocation2 + $0xf0] sm:$0xff]
    %v3732 = vld [vmem:[#allocation2 + $0xf8] sm:$0xff]
    %v3733 = vld [vmem:[#allocation2 + $0x108] sm:$0xff]
    %v3734 = vld [vmem:[#allocation2 + $0x110] sm:$0xff]
    %v3735 = vld [vmem:[#allocation2 + $0x120] sm:$0xff]
    %v3736 = vld [vmem:[#allocation2 + $0x128] sm:$0xff]
    %v3737 = vld [vmem:[#allocation2 + $0x138] sm:$0xff]
    %v3738 = vld [vmem:[#allocation2 + $0x140] sm:$0xff]
    %v3739 = vld [vmem:[#allocation2 + $0x150] sm:$0xff]
    %v3740 = vld [vmem:[#allocation2 + $0x158] sm:$0xff]
    %v3741 = vld [vmem:[#allocation2 + $0x168] sm:$0xff]
    %v3742 = vld [vmem:[#allocation2 + $0x170] sm:$0xff]
    %v3743 = vld [vmem:[#allocation2 + $0x1b0] sm:$0xff]
    %v3744 = vld [vmem:[#allocation2 + $0x1b8] sm:$0xff]
    %v3745 = vld [vmem:[#allocation2 + $0x1c8] sm:$0xff]
    %v3746 = vld [vmem:[#allocation2 + $0x1d0] sm:$0xff]
    %v3747 = vld [vmem:[#allocation2 + $0x1e0] sm:$0xff]
    %v3748 = vld [vmem:[#allocation2 + $0x1e8] sm:$0xff]
    %v3749 = vld [vmem:[#allocation2 + $0x1f8] sm:$0xff]
    %v3750 = vld [vmem:[#allocation2 + $0x200] sm:$0xff]
    %v3751 = vld [vmem:[#allocation2 + $0x210] sm:$0xff]
    %v3752 = vld [vmem:[#allocation2 + $0x218] sm:$0xff]
    %v3753 = vld [vmem:[#allocation2 + $0x228] sm:$0xff]
    %v3754 = vld [vmem:[#allocation2 + $0x230] sm:$0xff]
    %v3755 = vld [vmem:[#allocation2 + $0x240] sm:$0xff]
    %v3756 = vld [vmem:[#allocation2 + $0x248] sm:$0xff]
    %v3757 = vld [vmem:[#allocation2 + $0x258] sm:$0xff]
    %v3758 = vld [vmem:[#allocation2 + $0x260] sm:$0xff]
    %v3759 = vld [vmem:[#allocation2 + $0x270] sm:$0xff]
    %v3760 = vld [vmem:[#allocation2 + $0x278] sm:$0xff]
    %v3761 = vld [vmem:[#allocation2 + $0x288] sm:$0xff]
    %v3762 = vld [vmem:[#allocation2 + $0x290] sm:$0xff]
    %v3763 = vld [vmem:[#allocation2 + $0x2a0] sm:$0xff]
    %v3764 = vld [vmem:[#allocation2 + $0x2a8] sm:$0xff]
    %v3765 = vld [vmem:[#allocation2 + $0x2b8] sm:$0xff]
    %v3766 = vld [vmem:[#allocation2 + $0x2c0] sm:$0xff]
    %v3767 = vld [vmem:[#allocation2 + $0x2d0] sm:$0xff]
    %v3768 = vld [vmem:[#allocation2 + $0x2d8] sm:$0xff]
    %v3769 = vld [vmem:[#allocation2 + $0x2e8] sm:$0xff]
    %v3770 = vld [vmem:[#allocation2 + $0x2f0] sm:$0xff]
    %v3771 = vld [vmem:[#allocation2 + $0x300] sm:$0xff]
    %v3772 = vld [vmem:[#allocation2 + $0x308] sm:$0xff]
    %v3773 = vld [vmem:[#allocation2 + $0x318] sm:$0xff]
    %v3774 = vld [vmem:[#allocation2 + $0x320] sm:$0xff]
    %v3775 = vpack.c.bf16 %v3712, %v3711
    %v3776 = vpack.c.bf16 %v3714, %v3713
    %v3777 = vpack.c.bf16 %v3716, %v3715
    %v3778 = vpack.c.bf16 %v3718, %v3717
    %v3779 = vpack.c.bf16 %v3720, %v3719
    %v3780 = vpack.c.bf16 %v3722, %v3721
    %v3781 = vpack.c.bf16 %v3724, %v3723
    %v3782 = vpack.c.bf16 %v3726, %v3725
    %v3783 = vpack.c.bf16 %v3728, %v3727
    %v3784 = vpack.c.bf16 %v3730, %v3729
    %v3785 = vpack.c.bf16 %v3732, %v3731
    %v3786 = vpack.c.bf16 %v3734, %v3733
    %v3787 = vpack.c.bf16 %v3736, %v3735
    %v3788 = vpack.c.bf16 %v3738, %v3737
    %v3789 = vpack.c.bf16 %v3740, %v3739
    %v3790 = vpack.c.bf16 %v3742, %v3741
    %v3791 = vpack.c.bf16 %v3744, %v3743
    %v3792 = vpack.c.bf16 %v3746, %v3745
    %v3793 = vpack.c.bf16 %v3748, %v3747
    %v3794 = vpack.c.bf16 %v3750, %v3749
    %v3795 = vpack.c.bf16 %v3752, %v3751
    %v3796 = vpack.c.bf16 %v3754, %v3753
    %v3797 = vpack.c.bf16 %v3756, %v3755
    %v3798 = vpack.c.bf16 %v3758, %v3757
    %v3799 = vpack.c.bf16 %v3760, %v3759
    %v3800 = vpack.c.bf16 %v3762, %v3761
    %v3801 = vpack.c.bf16 %v3764, %v3763
    %v3802 = vpack.c.bf16 %v3766, %v3765
    %v3803 = vpack.c.bf16 %v3768, %v3767
    %v3804 = vpack.c.bf16 %v3770, %v3769
    %v3805 = vpack.c.bf16 %v3772, %v3771
    %v3806 = vpack.c.bf16 %v3774, %v3773
    %v3807 = vld [vmem:[#allocation2 + $0x1] sm:$0xff]
    %v3808 = vld [vmem:[#allocation2 + $0x9] sm:$0xff]
    %v3809 = vld [vmem:[#allocation2 + $0x19] sm:$0xff]
    %v3810 = vld [vmem:[#allocation2 + $0x21] sm:$0xff]
    %v3811 = vld [vmem:[#allocation2 + $0x31] sm:$0xff]
    %v3812 = vld [vmem:[#allocation2 + $0x39] sm:$0xff]
    %v3813 = vld [vmem:[#allocation2 + $0x49] sm:$0xff]
    %v3814 = vld [vmem:[#allocation2 + $0x51] sm:$0xff]
    %v3815 = vld [vmem:[#allocation2 + $0x61] sm:$0xff]
    %v3816 = vld [vmem:[#allocation2 + $0x69] sm:$0xff]
    %v3817 = vld [vmem:[#allocation2 + $0x79] sm:$0xff]
    %v3818 = vld [vmem:[#allocation2 + $0x81] sm:$0xff]
    %v3819 = vld [vmem:[#allocation2 + $0x91] sm:$0xff]
    %v3820 = vld [vmem:[#allocation2 + $0x99] sm:$0xff]
    %v3821 = vld [vmem:[#allocation2 + $0xa9] sm:$0xff]
    %v3822 = vld [vmem:[#allocation2 + $0xb1] sm:$0xff]
    %v3823 = vld [vmem:[#allocation2 + $0xc1] sm:$0xff]
    %v3824 = vld [vmem:[#allocation2 + $0xc9] sm:$0xff]
    %v3825 = vld [vmem:[#allocation2 + $0xd9] sm:$0xff]
    %v3826 = vld [vmem:[#allocation2 + $0xe1] sm:$0xff]
    %v3827 = vld [vmem:[#allocation2 + $0xf1] sm:$0xff]
    %v3828 = vld [vmem:[#allocation2 + $0xf9] sm:$0xff]
    %v3829 = vld [vmem:[#allocation2 + $0x109] sm:$0xff]
    %v3830 = vld [vmem:[#allocation2 + $0x111] sm:$0xff]
    %v3831 = vld [vmem:[#allocation2 + $0x121] sm:$0xff]
    %v3832 = vld [vmem:[#allocation2 + $0x129] sm:$0xff]
    %v3833 = vld [vmem:[#allocation2 + $0x139] sm:$0xff]
    %v3834 = vld [vmem:[#allocation2 + $0x141] sm:$0xff]
    %v3835 = vld [vmem:[#allocation2 + $0x151] sm:$0xff]
    %v3836 = vld [vmem:[#allocation2 + $0x159] sm:$0xff]
    %v3837 = vld [vmem:[#allocation2 + $0x169] sm:$0xff]
    %v3838 = vld [vmem:[#allocation2 + $0x171] sm:$0xff]
    %v3839 = vld [vmem:[#allocation2 + $0x1b1] sm:$0xff]
    %v3840 = vld [vmem:[#allocation2 + $0x1b9] sm:$0xff]
    %v3841 = vld [vmem:[#allocation2 + $0x1c9] sm:$0xff]
    %v3842 = vld [vmem:[#allocation2 + $0x1d1] sm:$0xff]
    %v3843 = vld [vmem:[#allocation2 + $0x1e1] sm:$0xff]
    %v3844 = vld [vmem:[#allocation2 + $0x1e9] sm:$0xff]
    %v3845 = vld [vmem:[#allocation2 + $0x1f9] sm:$0xff]
    %v3846 = vld [vmem:[#allocation2 + $0x201] sm:$0xff]
    %v3847 = vld [vmem:[#allocation2 + $0x211] sm:$0xff]
    %v3848 = vld [vmem:[#allocation2 + $0x219] sm:$0xff]
    %v3849 = vld [vmem:[#allocation2 + $0x229] sm:$0xff]
    %v3850 = vld [vmem:[#allocation2 + $0x231] sm:$0xff]
    %v3851 = vld [vmem:[#allocation2 + $0x241] sm:$0xff]
    %v3852 = vld [vmem:[#allocation2 + $0x249] sm:$0xff]
    %v3853 = vld [vmem:[#allocation2 + $0x259] sm:$0xff]
    %v3854 = vld [vmem:[#allocation2 + $0x261] sm:$0xff]
    %v3855 = vld [vmem:[#allocation2 + $0x271] sm:$0xff]
    %v3856 = vld [vmem:[#allocation2 + $0x279] sm:$0xff]
    %v3857 = vld [vmem:[#allocation2 + $0x289] sm:$0xff]
    %v3858 = vld [vmem:[#allocation2 + $0x291] sm:$0xff]
    %v3859 = vld [vmem:[#allocation2 + $0x2a1] sm:$0xff]
    %v3860 = vld [vmem:[#allocation2 + $0x2a9] sm:$0xff]
    %v3861 = vld [vmem:[#allocation2 + $0x2b9] sm:$0xff]
    %v3862 = vld [vmem:[#allocation2 + $0x2c1] sm:$0xff]
    %v3863 = vld [vmem:[#allocation2 + $0x2d1] sm:$0xff]
    %v3864 = vld [vmem:[#allocation2 + $0x2d9] sm:$0xff]
    %v3865 = vld [vmem:[#allocation2 + $0x2e9] sm:$0xff]
    %v3866 = vld [vmem:[#allocation2 + $0x2f1] sm:$0xff]
    %v3867 = vld [vmem:[#allocation2 + $0x301] sm:$0xff]
    %v3868 = vld [vmem:[#allocation2 + $0x309] sm:$0xff]
    %v3869 = vld [vmem:[#allocation2 + $0x319] sm:$0xff]
    %v3870 = vld [vmem:[#allocation2 + $0x321] sm:$0xff]
    %v3871 = vpack.c.bf16 %v3808, %v3807
    %v3872 = vpack.c.bf16 %v3810, %v3809
    %v3873 = vpack.c.bf16 %v3812, %v3811
    %v3874 = vpack.c.bf16 %v3814, %v3813
    %v3875 = vpack.c.bf16 %v3816, %v3815
    %v3876 = vpack.c.bf16 %v3818, %v3817
    %v3877 = vpack.c.bf16 %v3820, %v3819
    %v3878 = vpack.c.bf16 %v3822, %v3821
    %v3879 = vpack.c.bf16 %v3824, %v3823
    %v3880 = vpack.c.bf16 %v3826, %v3825
    %v3881 = vpack.c.bf16 %v3828, %v3827
    %v3882 = vpack.c.bf16 %v3830, %v3829
    %v3883 = vpack.c.bf16 %v3832, %v3831
    %v3884 = vpack.c.bf16 %v3834, %v3833
    %v3885 = vpack.c.bf16 %v3836, %v3835
    %v3886 = vpack.c.bf16 %v3838, %v3837
    %v3887 = vpack.c.bf16 %v3840, %v3839
    %v3888 = vpack.c.bf16 %v3842, %v3841
    %v3889 = vpack.c.bf16 %v3844, %v3843
    %v3890 = vpack.c.bf16 %v3846, %v3845
    %v3891 = vpack.c.bf16 %v3848, %v3847
    %v3892 = vpack.c.bf16 %v3850, %v3849
    %v3893 = vpack.c.bf16 %v3852, %v3851
    %v3894 = vpack.c.bf16 %v3854, %v3853
    %v3895 = vpack.c.bf16 %v3856, %v3855
    %v3896 = vpack.c.bf16 %v3858, %v3857
    %v3897 = vpack.c.bf16 %v3860, %v3859
    %v3898 = vpack.c.bf16 %v3862, %v3861
    %v3899 = vpack.c.bf16 %v3864, %v3863
    %v3900 = vpack.c.bf16 %v3866, %v3865
    %v3901 = vpack.c.bf16 %v3868, %v3867
    %v3902 = vpack.c.bf16 %v3870, %v3869
    %v3903 = vld [vmem:[#allocation2 + $0x2] sm:$0xff]
    %v3904 = vld [vmem:[#allocation2 + $0xa] sm:$0xff]
    %v3905 = vld [vmem:[#allocation2 + $0x1a] sm:$0xff]
    %v3906 = vld [vmem:[#allocation2 + $0x22] sm:$0xff]
    %v3907 = vld [vmem:[#allocation2 + $0x32] sm:$0xff]
    %v3908 = vld [vmem:[#allocation2 + $0x3a] sm:$0xff]
    %v3909 = vld [vmem:[#allocation2 + $0x4a] sm:$0xff]
    %v3910 = vld [vmem:[#allocation2 + $0x52] sm:$0xff]
    %v3911 = vld [vmem:[#allocation2 + $0x62] sm:$0xff]
    %v3912 = vld [vmem:[#allocation2 + $0x6a] sm:$0xff]
    %v3913 = vld [vmem:[#allocation2 + $0x7a] sm:$0xff]
    %v3914 = vld [vmem:[#allocation2 + $0x82] sm:$0xff]
    %v3915 = vld [vmem:[#allocation2 + $0x92] sm:$0xff]
    %v3916 = vld [vmem:[#allocation2 + $0x9a] sm:$0xff]
    %v3917 = vld [vmem:[#allocation2 + $0xaa] sm:$0xff]
    %v3918 = vld [vmem:[#allocation2 + $0xb2] sm:$0xff]
    %v3919 = vld [vmem:[#allocation2 + $0xc2] sm:$0xff]
    %v3920 = vld [vmem:[#allocation2 + $0xca] sm:$0xff]
    %v3921 = vld [vmem:[#allocation2 + $0xda] sm:$0xff]
    %v3922 = vld [vmem:[#allocation2 + $0xe2] sm:$0xff]
    %v3923 = vld [vmem:[#allocation2 + $0xf2] sm:$0xff]
    %v3924 = vld [vmem:[#allocation2 + $0xfa] sm:$0xff]
    %v3925 = vld [vmem:[#allocation2 + $0x10a] sm:$0xff]
    %v3926 = vld [vmem:[#allocation2 + $0x112] sm:$0xff]
    %v3927 = vld [vmem:[#allocation2 + $0x122] sm:$0xff]
    %v3928 = vld [vmem:[#allocation2 + $0x12a] sm:$0xff]
    %v3929 = vld [vmem:[#allocation2 + $0x13a] sm:$0xff]
    %v3930 = vld [vmem:[#allocation2 + $0x142] sm:$0xff]
    %v3931 = vld [vmem:[#allocation2 + $0x152] sm:$0xff]
    %v3932 = vld [vmem:[#allocation2 + $0x15a] sm:$0xff]
    %v3933 = vld [vmem:[#allocation2 + $0x16a] sm:$0xff]
    %v3934 = vld [vmem:[#allocation2 + $0x172] sm:$0xff]
    %v3935 = vld [vmem:[#allocation2 + $0x1b2] sm:$0xff]
    %v3936 = vld [vmem:[#allocation2 + $0x1ba] sm:$0xff]
    %v3937 = vld [vmem:[#allocation2 + $0x1ca] sm:$0xff]
    %v3938 = vld [vmem:[#allocation2 + $0x1d2] sm:$0xff]
    %v3939 = vld [vmem:[#allocation2 + $0x1e2] sm:$0xff]
    %v3940 = vld [vmem:[#allocation2 + $0x1ea] sm:$0xff]
    %v3941 = vld [vmem:[#allocation2 + $0x1fa] sm:$0xff]
    %v3942 = vld [vmem:[#allocation2 + $0x202] sm:$0xff]
    %v3943 = vld [vmem:[#allocation2 + $0x212] sm:$0xff]
    %v3944 = vld [vmem:[#allocation2 + $0x21a] sm:$0xff]
    %v3945 = vld [vmem:[#allocation2 + $0x22a] sm:$0xff]
    %v3946 = vld [vmem:[#allocation2 + $0x232] sm:$0xff]
    %v3947 = vld [vmem:[#allocation2 + $0x242] sm:$0xff]
    %v3948 = vld [vmem:[#allocation2 + $0x24a] sm:$0xff]
    %v3949 = vld [vmem:[#allocation2 + $0x25a] sm:$0xff]
    %v3950 = vld [vmem:[#allocation2 + $0x262] sm:$0xff]
    %v3951 = vld [vmem:[#allocation2 + $0x272] sm:$0xff]
    %v3952 = vld [vmem:[#allocation2 + $0x27a] sm:$0xff]
    %v3953 = vld [vmem:[#allocation2 + $0x28a] sm:$0xff]
    %v3954 = vld [vmem:[#allocation2 + $0x292] sm:$0xff]
    %v3955 = vld [vmem:[#allocation2 + $0x2a2] sm:$0xff]
    %v3956 = vld [vmem:[#allocation2 + $0x2aa] sm:$0xff]
    %v3957 = vld [vmem:[#allocation2 + $0x2ba] sm:$0xff]
    %v3958 = vld [vmem:[#allocation2 + $0x2c2] sm:$0xff]
    %v3959 = vld [vmem:[#allocation2 + $0x2d2] sm:$0xff]
    %v3960 = vld [vmem:[#allocation2 + $0x2da] sm:$0xff]
    %v3961 = vld [vmem:[#allocation2 + $0x2ea] sm:$0xff]
    %v3962 = vld [vmem:[#allocation2 + $0x2f2] sm:$0xff]
    %v3963 = vld [vmem:[#allocation2 + $0x302] sm:$0xff]
    %v3964 = vld [vmem:[#allocation2 + $0x30a] sm:$0xff]
    %v3965 = vld [vmem:[#allocation2 + $0x31a] sm:$0xff]
    %v3966 = vld [vmem:[#allocation2 + $0x322] sm:$0xff]
    %v3967 = vpack.c.bf16 %v3904, %v3903
    %v3968 = vpack.c.bf16 %v3906, %v3905
    %v3969 = vpack.c.bf16 %v3908, %v3907
    %v3970 = vpack.c.bf16 %v3910, %v3909
    %v3971 = vpack.c.bf16 %v3912, %v3911
    %v3972 = vpack.c.bf16 %v3914, %v3913
    %v3973 = vpack.c.bf16 %v3916, %v3915
    %v3974 = vpack.c.bf16 %v3918, %v3917
    %v3975 = vpack.c.bf16 %v3920, %v3919
    %v3976 = vpack.c.bf16 %v3922, %v3921
    %v3977 = vpack.c.bf16 %v3924, %v3923
    %v3978 = vpack.c.bf16 %v3926, %v3925
    %v3979 = vpack.c.bf16 %v3928, %v3927
    %v3980 = vpack.c.bf16 %v3930, %v3929
    %v3981 = vpack.c.bf16 %v3932, %v3931
    %v3982 = vpack.c.bf16 %v3934, %v3933
    %v3983 = vpack.c.bf16 %v3936, %v3935
    %v3984 = vpack.c.bf16 %v3938, %v3937
    %v3985 = vpack.c.bf16 %v3940, %v3939
    %v3986 = vpack.c.bf16 %v3942, %v3941
    %v3987 = vpack.c.bf16 %v3944, %v3943
    %v3988 = vpack.c.bf16 %v3946, %v3945
    %v3989 = vpack.c.bf16 %v3948, %v3947
    %v3990 = vpack.c.bf16 %v3950, %v3949
    %v3991 = vpack.c.bf16 %v3952, %v3951
    %v3992 = vpack.c.bf16 %v3954, %v3953
    %v3993 = vpack.c.bf16 %v3956, %v3955
    %v3994 = vpack.c.bf16 %v3958, %v3957
    %v3995 = vpack.c.bf16 %v3960, %v3959
    %v3996 = vpack.c.bf16 %v3962, %v3961
    %v3997 = vpack.c.bf16 %v3964, %v3963
    %v3998 = vpack.c.bf16 %v3966, %v3965
    %v3999 = vld [vmem:[%s202] sm:$0xff]
    %v4000 = vld [vmem:[%s202 + $0x8] sm:$0xff]
    %v4001 = vld [vmem:[%s202 + $0x18] sm:$0xff]
    %v4002 = vld [vmem:[%s202 + $0x20] sm:$0xff]
    %v4003 = vld [vmem:[%s202 + $0x30] sm:$0xff]
    %v4004 = vld [vmem:[%s202 + $0x38] sm:$0xff]
    %v4005 = vld [vmem:[%s202 + $0x48] sm:$0xff]
    %v4006 = vld [vmem:[%s202 + $0x50] sm:$0xff]
    %v4007 = vld [vmem:[%s202 + $0x60] sm:$0xff]
    %v4008 = vld [vmem:[%s202 + $0x68] sm:$0xff]
    %v4009 = vld [vmem:[%s202 + $0x78] sm:$0xff]
    %v4010 = vld [vmem:[%s202 + $0x80] sm:$0xff]
    %v4011 = vld [vmem:[%s202 + $0x90] sm:$0xff]
    %v4012 = vld [vmem:[%s202 + $0x98] sm:$0xff]
    %v4013 = vld [vmem:[%s202 + $0xa8] sm:$0xff]
    %v4014 = vld [vmem:[%s202 + $0xb0] sm:$0xff]
    %v4015 = vld [vmem:[%s202 + $0xc0] sm:$0xff]
    %v4016 = vld [vmem:[%s202 + $0xc8] sm:$0xff]
    %v4017 = vld [vmem:[%s202 + $0xd8] sm:$0xff]
    %v4018 = vld [vmem:[%s202 + $0xe0] sm:$0xff]
    %v4019 = vld [vmem:[%s202 + $0xf0] sm:$0xff]
    %v4020 = vld [vmem:[%s202 + $0xf8] sm:$0xff]
    %v4021 = vld [vmem:[%s202 + $0x108] sm:$0xff]
    %v4022 = vld [vmem:[%s202 + $0x110] sm:$0xff]
    %v4023 = vld [vmem:[%s202 + $0x120] sm:$0xff]
    %v4024 = vld [vmem:[%s202 + $0x128] sm:$0xff]
    %v4025 = vld [vmem:[%s202 + $0x138] sm:$0xff]
    %v4026 = vld [vmem:[%s202 + $0x140] sm:$0xff]
    %v4027 = vld [vmem:[%s202 + $0x150] sm:$0xff]
    %v4028 = vld [vmem:[%s202 + $0x158] sm:$0xff]
    %v4029 = vld [vmem:[%s202 + $0x168] sm:$0xff]
    %v4030 = vld [vmem:[%s202 + $0x170] sm:$0xff]
    %v4031 = vld [vmem:[%s202 + $0x1b0] sm:$0xff]
    %v4032 = vld [vmem:[%s202 + $0x1b8] sm:$0xff]
    %v4033 = vld [vmem:[%s202 + $0x1c8] sm:$0xff]
    %v4034 = vld [vmem:[%s202 + $0x1d0] sm:$0xff]
    %v4035 = vld [vmem:[%s202 + $0x1e0] sm:$0xff]
    %v4036 = vld [vmem:[%s202 + $0x1e8] sm:$0xff]
    %v4037 = vld [vmem:[%s202 + $0x1f8] sm:$0xff]
    %v4038 = vld [vmem:[%s202 + $0x200] sm:$0xff]
    %v4039 = vld [vmem:[%s202 + $0x210] sm:$0xff]
    %v4040 = vld [vmem:[%s202 + $0x218] sm:$0xff]
    %v4041 = vld [vmem:[%s202 + $0x228] sm:$0xff]
    %v4042 = vld [vmem:[%s202 + $0x230] sm:$0xff]
    %v4043 = vld [vmem:[%s202 + $0x240] sm:$0xff]
    %v4044 = vld [vmem:[%s202 + $0x248] sm:$0xff]
    %v4045 = vld [vmem:[%s202 + $0x258] sm:$0xff]
    %v4046 = vld [vmem:[%s202 + $0x260] sm:$0xff]
    %v4047 = vld [vmem:[%s202 + $0x270] sm:$0xff]
    %v4048 = vld [vmem:[%s202 + $0x278] sm:$0xff]
    %v4049 = vld [vmem:[%s202 + $0x288] sm:$0xff]
    %v4050 = vld [vmem:[%s202 + $0x290] sm:$0xff]
    %v4051 = vld [vmem:[%s202 + $0x2a0] sm:$0xff]
    %v4052 = vld [vmem:[%s202 + $0x2a8] sm:$0xff]
    %v4053 = vld [vmem:[%s202 + $0x2b8] sm:$0xff]
    %v4054 = vld [vmem:[%s202 + $0x2c0] sm:$0xff]
    %v4055 = vld [vmem:[%s202 + $0x2d0] sm:$0xff]
    %v4056 = vld [vmem:[%s202 + $0x2d8] sm:$0xff]
    %v4057 = vld [vmem:[%s202 + $0x2e8] sm:$0xff]
    %v4058 = vld [vmem:[%s202 + $0x2f0] sm:$0xff]
    %v4059 = vld [vmem:[%s202 + $0x300] sm:$0xff]
    %v4060 = vld [vmem:[%s202 + $0x308] sm:$0xff]
    %v4061 = vld [vmem:[%s202 + $0x318] sm:$0xff]
    %v4062 = vld [vmem:[%s202 + $0x320] sm:$0xff]
    %v4063 = vpack.c.bf16 %v4000, %v3999
    %v4064 = vpack.c.bf16 %v4002, %v4001
    %v4065 = vpack.c.bf16 %v4004, %v4003
    %v4066 = vpack.c.bf16 %v4006, %v4005
    %v4067 = vpack.c.bf16 %v4008, %v4007
    %v4068 = vpack.c.bf16 %v4010, %v4009
    %v4069 = vpack.c.bf16 %v4012, %v4011
    %v4070 = vpack.c.bf16 %v4014, %v4013
    %v4071 = vpack.c.bf16 %v4016, %v4015
    %v4072 = vpack.c.bf16 %v4018, %v4017
    %v4073 = vpack.c.bf16 %v4020, %v4019
    %v4074 = vpack.c.bf16 %v4022, %v4021
    %v4075 = vpack.c.bf16 %v4024, %v4023
    %v4076 = vpack.c.bf16 %v4026, %v4025
    %v4077 = vpack.c.bf16 %v4028, %v4027
    %v4078 = vpack.c.bf16 %v4030, %v4029
    %v4079 = vpack.c.bf16 %v4032, %v4031
    %v4080 = vpack.c.bf16 %v4034, %v4033
    %v4081 = vpack.c.bf16 %v4036, %v4035
    %v4082 = vpack.c.bf16 %v4038, %v4037
    %v4083 = vpack.c.bf16 %v4040, %v4039
    %v4084 = vpack.c.bf16 %v4042, %v4041
    %v4085 = vpack.c.bf16 %v4044, %v4043
    %v4086 = vpack.c.bf16 %v4046, %v4045
    %v4087 = vpack.c.bf16 %v4048, %v4047
    %v4088 = vpack.c.bf16 %v4050, %v4049
    %v4089 = vpack.c.bf16 %v4052, %v4051
    %v4090 = vpack.c.bf16 %v4054, %v4053
    %v4091 = vpack.c.bf16 %v4056, %v4055
    %v4092 = vpack.c.bf16 %v4058, %v4057
    %v4093 = vpack.c.bf16 %v4060, %v4059
    %v4094 = vpack.c.bf16 %v4062, %v4061
    %v4095 = vld [vmem:[%s202 + $0x1] sm:$0xff]
    %v4096 = vld [vmem:[%s202 + $0x9] sm:$0xff]
    %v4097 = vld [vmem:[%s202 + $0x19] sm:$0xff]
    %v4098 = vld [vmem:[%s202 + $0x21] sm:$0xff]
    %v4099 = vld [vmem:[%s202 + $0x31] sm:$0xff]
    %v4100 = vld [vmem:[%s202 + $0x39] sm:$0xff]
    %v4101 = vld [vmem:[%s202 + $0x49] sm:$0xff]
    %v4102 = vld [vmem:[%s202 + $0x51] sm:$0xff]
    %v4103 = vld [vmem:[%s202 + $0x61] sm:$0xff]
    %v4104 = vld [vmem:[%s202 + $0x69] sm:$0xff]
    %v4105 = vld [vmem:[%s202 + $0x79] sm:$0xff]
    %v4106 = vld [vmem:[%s202 + $0x81] sm:$0xff]
    %v4107 = vld [vmem:[%s202 + $0x91] sm:$0xff]
    %v4108 = vld [vmem:[%s202 + $0x99] sm:$0xff]
    %v4109 = vld [vmem:[%s202 + $0xa9] sm:$0xff]
    %v4110 = vld [vmem:[%s202 + $0xb1] sm:$0xff]
    %v4111 = vld [vmem:[%s202 + $0xc1] sm:$0xff]
    %v4112 = vld [vmem:[%s202 + $0xc9] sm:$0xff]
    %v4113 = vld [vmem:[%s202 + $0xd9] sm:$0xff]
    %v4114 = vld [vmem:[%s202 + $0xe1] sm:$0xff]
    %v4115 = vld [vmem:[%s202 + $0xf1] sm:$0xff]
    %v4116 = vld [vmem:[%s202 + $0xf9] sm:$0xff]
    %v4117 = vld [vmem:[%s202 + $0x109] sm:$0xff]
    %v4118 = vld [vmem:[%s202 + $0x111] sm:$0xff]
    %v4119 = vld [vmem:[%s202 + $0x121] sm:$0xff]
    %v4120 = vld [vmem:[%s202 + $0x129] sm:$0xff]
    %v4121 = vld [vmem:[%s202 + $0x139] sm:$0xff]
    %v4122 = vld [vmem:[%s202 + $0x141] sm:$0xff]
    %v4123 = vld [vmem:[%s202 + $0x151] sm:$0xff]
    %v4124 = vld [vmem:[%s202 + $0x159] sm:$0xff]
    %v4125 = vld [vmem:[%s202 + $0x169] sm:$0xff]
    %v4126 = vld [vmem:[%s202 + $0x171] sm:$0xff]
    %v4127 = vld [vmem:[%s202 + $0x1b1] sm:$0xff]
    %v4128 = vld [vmem:[%s202 + $0x1b9] sm:$0xff]
    %v4129 = vld [vmem:[%s202 + $0x1c9] sm:$0xff]
    %v4130 = vld [vmem:[%s202 + $0x1d1] sm:$0xff]
    %v4131 = vld [vmem:[%s202 + $0x1e1] sm:$0xff]
    %v4132 = vld [vmem:[%s202 + $0x1e9] sm:$0xff]
    %v4133 = vld [vmem:[%s202 + $0x1f9] sm:$0xff]
    %v4134 = vld [vmem:[%s202 + $0x201] sm:$0xff]
    %v4135 = vld [vmem:[%s202 + $0x211] sm:$0xff]
    %v4136 = vld [vmem:[%s202 + $0x219] sm:$0xff]
    %v4137 = vld [vmem:[%s202 + $0x229] sm:$0xff]
    %v4138 = vld [vmem:[%s202 + $0x231] sm:$0xff]
    %v4139 = vld [vmem:[%s202 + $0x241] sm:$0xff]
    %v4140 = vld [vmem:[%s202 + $0x249] sm:$0xff]
    %v4141 = vld [vmem:[%s202 + $0x259] sm:$0xff]
    %v4142 = vld [vmem:[%s202 + $0x261] sm:$0xff]
    %v4143 = vld [vmem:[%s202 + $0x271] sm:$0xff]
    %v4144 = vld [vmem:[%s202 + $0x279] sm:$0xff]
    %v4145 = vld [vmem:[%s202 + $0x289] sm:$0xff]
    %v4146 = vld [vmem:[%s202 + $0x291] sm:$0xff]
    %v4147 = vld [vmem:[%s202 + $0x2a1] sm:$0xff]
    %v4148 = vld [vmem:[%s202 + $0x2a9] sm:$0xff]
    %v4149 = vld [vmem:[%s202 + $0x2b9] sm:$0xff]
    %v4150 = vld [vmem:[%s202 + $0x2c1] sm:$0xff]
    %v4151 = vld [vmem:[%s202 + $0x2d1] sm:$0xff]
    %v4152 = vld [vmem:[%s202 + $0x2d9] sm:$0xff]
    %v4153 = vld [vmem:[%s202 + $0x2e9] sm:$0xff]
    %v4154 = vld [vmem:[%s202 + $0x2f1] sm:$0xff]
    %v4155 = vld [vmem:[%s202 + $0x301] sm:$0xff]
    %v4156 = vld [vmem:[%s202 + $0x309] sm:$0xff]
    %v4157 = vld [vmem:[%s202 + $0x319] sm:$0xff]
    %v4158 = vld [vmem:[%s202 + $0x321] sm:$0xff]
    %v4159 = vpack.c.bf16 %v4096, %v4095
    %v4160 = vpack.c.bf16 %v4098, %v4097
    %v4161 = vpack.c.bf16 %v4100, %v4099
    %v4162 = vpack.c.bf16 %v4102, %v4101
    %v4163 = vpack.c.bf16 %v4104, %v4103
    %v4164 = vpack.c.bf16 %v4106, %v4105
    %v4165 = vpack.c.bf16 %v4108, %v4107
    %v4166 = vpack.c.bf16 %v4110, %v4109
    %v4167 = vpack.c.bf16 %v4112, %v4111
    %v4168 = vpack.c.bf16 %v4114, %v4113
    %v4169 = vpack.c.bf16 %v4116, %v4115
    %v4170 = vpack.c.bf16 %v4118, %v4117
    %v4171 = vpack.c.bf16 %v4120, %v4119
    %v4172 = vpack.c.bf16 %v4122, %v4121
    %v4173 = vpack.c.bf16 %v4124, %v4123
    %v4174 = vpack.c.bf16 %v4126, %v4125
    %v4175 = vpack.c.bf16 %v4128, %v4127
    %v4176 = vpack.c.bf16 %v4130, %v4129
    %v4177 = vpack.c.bf16 %v4132, %v4131
    %v4178 = vpack.c.bf16 %v4134, %v4133
    %v4179 = vpack.c.bf16 %v4136, %v4135
    %v4180 = vpack.c.bf16 %v4138, %v4137
    %v4181 = vpack.c.bf16 %v4140, %v4139
    %v4182 = vpack.c.bf16 %v4142, %v4141
    %v4183 = vpack.c.bf16 %v4144, %v4143
    %v4184 = vpack.c.bf16 %v4146, %v4145
    %v4185 = vpack.c.bf16 %v4148, %v4147
    %v4186 = vpack.c.bf16 %v4150, %v4149
    %v4187 = vpack.c.bf16 %v4152, %v4151
    %v4188 = vpack.c.bf16 %v4154, %v4153
    %v4189 = vpack.c.bf16 %v4156, %v4155
    %v4190 = vpack.c.bf16 %v4158, %v4157
    %v4191 = vld [vmem:[%s202 + $0x2] sm:$0xff]
    %v4192 = vld [vmem:[%s202 + $0xa] sm:$0xff]
    %v4193 = vld [vmem:[%s202 + $0x1a] sm:$0xff]
    %v4194 = vld [vmem:[%s202 + $0x22] sm:$0xff]
    %v4195 = vld [vmem:[%s202 + $0x32] sm:$0xff]
    %v4196 = vld [vmem:[%s202 + $0x3a] sm:$0xff]
    %v4197 = vld [vmem:[%s202 + $0x4a] sm:$0xff]
    %v4198 = vld [vmem:[%s202 + $0x52] sm:$0xff]
    %v4199 = vld [vmem:[%s202 + $0x62] sm:$0xff]
    %v4200 = vld [vmem:[%s202 + $0x6a] sm:$0xff]
    %v4201 = vld [vmem:[%s202 + $0x7a] sm:$0xff]
    %v4202 = vld [vmem:[%s202 + $0x82] sm:$0xff]
    %v4203 = vld [vmem:[%s202 + $0x92] sm:$0xff]
    %v4204 = vld [vmem:[%s202 + $0x9a] sm:$0xff]
    %v4205 = vld [vmem:[%s202 + $0xaa] sm:$0xff]
    %v4206 = vld [vmem:[%s202 + $0xb2] sm:$0xff]
    %v4207 = vld [vmem:[%s202 + $0xc2] sm:$0xff]
    %v4208 = vld [vmem:[%s202 + $0xca] sm:$0xff]
    %v4209 = vld [vmem:[%s202 + $0xda] sm:$0xff]
    %v4210 = vld [vmem:[%s202 + $0xe2] sm:$0xff]
    %v4211 = vld [vmem:[%s202 + $0xf2] sm:$0xff]
    %v4212 = vld [vmem:[%s202 + $0xfa] sm:$0xff]
    %v4213 = vld [vmem:[%s202 + $0x10a] sm:$0xff]
    %v4214 = vld [vmem:[%s202 + $0x112] sm:$0xff]
    %v4215 = vld [vmem:[%s202 + $0x122] sm:$0xff]
    %v4216 = vld [vmem:[%s202 + $0x12a] sm:$0xff]
    %v4217 = vld [vmem:[%s202 + $0x13a] sm:$0xff]
    %v4218 = vld [vmem:[%s202 + $0x142] sm:$0xff]
    %v4219 = vld [vmem:[%s202 + $0x152] sm:$0xff]
    %v4220 = vld [vmem:[%s202 + $0x15a] sm:$0xff]
    %v4221 = vld [vmem:[%s202 + $0x16a] sm:$0xff]
    %v4222 = vld [vmem:[%s202 + $0x172] sm:$0xff]
    %v4223 = vld [vmem:[%s202 + $0x1b2] sm:$0xff]
    %v4224 = vld [vmem:[%s202 + $0x1ba] sm:$0xff]
    %v4225 = vld [vmem:[%s202 + $0x1ca] sm:$0xff]
    %v4226 = vld [vmem:[%s202 + $0x1d2] sm:$0xff]
    %v4227 = vld [vmem:[%s202 + $0x1e2] sm:$0xff]
    %v4228 = vld [vmem:[%s202 + $0x1ea] sm:$0xff]
    %v4229 = vld [vmem:[%s202 + $0x1fa] sm:$0xff]
    %v4230 = vld [vmem:[%s202 + $0x202] sm:$0xff]
    %v4231 = vld [vmem:[%s202 + $0x212] sm:$0xff]
    %v4232 = vld [vmem:[%s202 + $0x21a] sm:$0xff]
    %v4233 = vld [vmem:[%s202 + $0x22a] sm:$0xff]
    %v4234 = vld [vmem:[%s202 + $0x232] sm:$0xff]
    %v4235 = vld [vmem:[%s202 + $0x242] sm:$0xff]
    %v4236 = vld [vmem:[%s202 + $0x24a] sm:$0xff]
    %v4237 = vld [vmem:[%s202 + $0x25a] sm:$0xff]
    %v4238 = vld [vmem:[%s202 + $0x262] sm:$0xff]
    %v4239 = vld [vmem:[%s202 + $0x272] sm:$0xff]
    %v4240 = vld [vmem:[%s202 + $0x27a] sm:$0xff]
    %v4241 = vld [vmem:[%s202 + $0x28a] sm:$0xff]
    %v4242 = vld [vmem:[%s202 + $0x292] sm:$0xff]
    %v4243 = vld [vmem:[%s202 + $0x2a2] sm:$0xff]
    %v4244 = vld [vmem:[%s202 + $0x2aa] sm:$0xff]
    %v4245 = vld [vmem:[%s202 + $0x2ba] sm:$0xff]
    %v4246 = vld [vmem:[%s202 + $0x2c2] sm:$0xff]
    %v4247 = vld [vmem:[%s202 + $0x2d2] sm:$0xff]
    %v4248 = vld [vmem:[%s202 + $0x2da] sm:$0xff]
    %v4249 = vld [vmem:[%s202 + $0x2ea] sm:$0xff]
    %v4250 = vld [vmem:[%s202 + $0x2f2] sm:$0xff]
    %v4251 = vld [vmem:[%s202 + $0x302] sm:$0xff]
    %v4252 = vld [vmem:[%s202 + $0x30a] sm:$0xff]
    %v4253 = vld [vmem:[%s202 + $0x31a] sm:$0xff]
    %v4254 = vld [vmem:[%s202 + $0x322] sm:$0xff]
    %v4255 = vpack.c.bf16 %v4192, %v4191
    %v4256 = vpack.c.bf16 %v4194, %v4193
    %v4257 = vpack.c.bf16 %v4196, %v4195
    %v4258 = vpack.c.bf16 %v4198, %v4197
    %v4259 = vpack.c.bf16 %v4200, %v4199
    %v4260 = vpack.c.bf16 %v4202, %v4201
    %v4261 = vpack.c.bf16 %v4204, %v4203
    %v4262 = vpack.c.bf16 %v4206, %v4205
    %v4263 = vpack.c.bf16 %v4208, %v4207
    %v4264 = vpack.c.bf16 %v4210, %v4209
    %v4265 = vpack.c.bf16 %v4212, %v4211
    %v4266 = vpack.c.bf16 %v4214, %v4213
    %v4267 = vpack.c.bf16 %v4216, %v4215
    %v4268 = vpack.c.bf16 %v4218, %v4217
    %v4269 = vpack.c.bf16 %v4220, %v4219
    %v4270 = vpack.c.bf16 %v4222, %v4221
    %v4271 = vpack.c.bf16 %v4224, %v4223
    %v4272 = vpack.c.bf16 %v4226, %v4225
    %v4273 = vpack.c.bf16 %v4228, %v4227
    %v4274 = vpack.c.bf16 %v4230, %v4229
    %v4275 = vpack.c.bf16 %v4232, %v4231
    %v4276 = vpack.c.bf16 %v4234, %v4233
    %v4277 = vpack.c.bf16 %v4236, %v4235
    %v4278 = vpack.c.bf16 %v4238, %v4237
    %v4279 = vpack.c.bf16 %v4240, %v4239
    %v4280 = vpack.c.bf16 %v4242, %v4241
    %v4281 = vpack.c.bf16 %v4244, %v4243
    %v4282 = vpack.c.bf16 %v4246, %v4245
    %v4283 = vpack.c.bf16 %v4248, %v4247
    %v4284 = vpack.c.bf16 %v4250, %v4249
    %v4285 = vpack.c.bf16 %v4252, %v4251
    %v4286 = vpack.c.bf16 %v4254, %v4253
    %v4287 = vld [vmem:[%s843] sm:$0xff]
    %v4288 = vld [vmem:[%s843 + $0x8] sm:$0xff]
    %v4289 = vld [vmem:[%s843 + $0x18] sm:$0xff]
    %v4290 = vld [vmem:[%s843 + $0x20] sm:$0xff]
    %v4291 = vld [vmem:[%s843 + $0x30] sm:$0xff]
    %v4292 = vld [vmem:[%s843 + $0x38] sm:$0xff]
    %v4293 = vld [vmem:[%s843 + $0x48] sm:$0xff]
    %v4294 = vld [vmem:[%s843 + $0x50] sm:$0xff]
    %v4295 = vld [vmem:[%s843 + $0x60] sm:$0xff]
    %v4296 = vld [vmem:[%s843 + $0x68] sm:$0xff]
    %v4297 = vld [vmem:[%s843 + $0x78] sm:$0xff]
    %v4298 = vld [vmem:[%s843 + $0x80] sm:$0xff]
    %v4299 = vld [vmem:[%s843 + $0x90] sm:$0xff]
    %v4300 = vld [vmem:[%s843 + $0x98] sm:$0xff]
    %v4301 = vld [vmem:[%s843 + $0xa8] sm:$0xff]
    %v4302 = vld [vmem:[%s843 + $0xb0] sm:$0xff]
    %v4303 = vld [vmem:[%s843 + $0xc0] sm:$0xff]
    %v4304 = vld [vmem:[%s843 + $0xc8] sm:$0xff]
    %v4305 = vld [vmem:[%s843 + $0xd8] sm:$0xff]
    %v4306 = vld [vmem:[%s843 + $0xe0] sm:$0xff]
    %v4307 = vld [vmem:[%s843 + $0xf0] sm:$0xff]
    %v4308 = vld [vmem:[%s843 + $0xf8] sm:$0xff]
    %v4309 = vld [vmem:[%s843 + $0x108] sm:$0xff]
    %v4310 = vld [vmem:[%s843 + $0x110] sm:$0xff]
    %v4311 = vld [vmem:[%s843 + $0x120] sm:$0xff]
    %v4312 = vld [vmem:[%s843 + $0x128] sm:$0xff]
    %v4313 = vld [vmem:[%s843 + $0x138] sm:$0xff]
    %v4314 = vld [vmem:[%s843 + $0x140] sm:$0xff]
    %v4315 = vld [vmem:[%s843 + $0x150] sm:$0xff]
    %v4316 = vld [vmem:[%s843 + $0x158] sm:$0xff]
    %v4317 = vld [vmem:[%s843 + $0x168] sm:$0xff]
    %v4318 = vld [vmem:[%s843 + $0x170] sm:$0xff]
    %v4319 = vld [vmem:[%s843 + $0x1b0] sm:$0xff]
    %v4320 = vld [vmem:[%s843 + $0x1b8] sm:$0xff]
    %v4321 = vld [vmem:[%s843 + $0x1c8] sm:$0xff]
    %v4322 = vld [vmem:[%s843 + $0x1d0] sm:$0xff]
    %v4323 = vld [vmem:[%s843 + $0x1e0] sm:$0xff]
    %v4324 = vld [vmem:[%s843 + $0x1e8] sm:$0xff]
    %v4325 = vld [vmem:[%s843 + $0x1f8] sm:$0xff]
    %v4326 = vld [vmem:[%s843 + $0x200] sm:$0xff]
    %v4327 = vld [vmem:[%s843 + $0x210] sm:$0xff]
    %v4328 = vld [vmem:[%s843 + $0x218] sm:$0xff]
    %v4329 = vld [vmem:[%s843 + $0x228] sm:$0xff]
    %v4330 = vld [vmem:[%s843 + $0x230] sm:$0xff]
    %v4331 = vld [vmem:[%s843 + $0x240] sm:$0xff]
    %v4332 = vld [vmem:[%s843 + $0x248] sm:$0xff]
    %v4333 = vld [vmem:[%s843 + $0x258] sm:$0xff]
    %v4334 = vld [vmem:[%s843 + $0x260] sm:$0xff]
    %v4335 = vld [vmem:[%s843 + $0x270] sm:$0xff]
    %v4336 = vld [vmem:[%s843 + $0x278] sm:$0xff]
    %v4337 = vld [vmem:[%s843 + $0x288] sm:$0xff]
    %v4338 = vld [vmem:[%s843 + $0x290] sm:$0xff]
    %v4339 = vld [vmem:[%s843 + $0x2a0] sm:$0xff]
    %v4340 = vld [vmem:[%s843 + $0x2a8] sm:$0xff]
    %v4341 = vld [vmem:[%s843 + $0x2b8] sm:$0xff]
    %v4342 = vld [vmem:[%s843 + $0x2c0] sm:$0xff]
    %v4343 = vld [vmem:[%s843 + $0x2d0] sm:$0xff]
    %v4344 = vld [vmem:[%s843 + $0x2d8] sm:$0xff]
    %v4345 = vld [vmem:[%s843 + $0x2e8] sm:$0xff]
    %v4346 = vld [vmem:[%s843 + $0x2f0] sm:$0xff]
    %v4347 = vld [vmem:[%s843 + $0x300] sm:$0xff]
    %v4348 = vld [vmem:[%s843 + $0x308] sm:$0xff]
    %v4349 = vld [vmem:[%s843 + $0x318] sm:$0xff]
    %v4350 = vld [vmem:[%s843 + $0x320] sm:$0xff]
    %v4351 = vpack.c.bf16 %v4288, %v4287
    %v4352 = vpack.c.bf16 %v4290, %v4289
    %v4353 = vpack.c.bf16 %v4292, %v4291
    %v4354 = vpack.c.bf16 %v4294, %v4293
    %v4355 = vpack.c.bf16 %v4296, %v4295
    %v4356 = vpack.c.bf16 %v4298, %v4297
    %v4357 = vpack.c.bf16 %v4300, %v4299
    %v4358 = vpack.c.bf16 %v4302, %v4301
    %v4359 = vpack.c.bf16 %v4304, %v4303
    %v4360 = vpack.c.bf16 %v4306, %v4305
    %v4361 = vpack.c.bf16 %v4308, %v4307
    %v4362 = vpack.c.bf16 %v4310, %v4309
    %v4363 = vpack.c.bf16 %v4312, %v4311
    %v4364 = vpack.c.bf16 %v4314, %v4313
    %v4365 = vpack.c.bf16 %v4316, %v4315
    %v4366 = vpack.c.bf16 %v4318, %v4317
    %v4367 = vpack.c.bf16 %v4320, %v4319
    %v4368 = vpack.c.bf16 %v4322, %v4321
    %v4369 = vpack.c.bf16 %v4324, %v4323
    %v4370 = vpack.c.bf16 %v4326, %v4325
    %v4371 = vpack.c.bf16 %v4328, %v4327
    %v4372 = vpack.c.bf16 %v4330, %v4329
    %v4373 = vpack.c.bf16 %v4332, %v4331
    %v4374 = vpack.c.bf16 %v4334, %v4333
    %v4375 = vpack.c.bf16 %v4336, %v4335
    %v4376 = vpack.c.bf16 %v4338, %v4337
    %v4377 = vpack.c.bf16 %v4340, %v4339
    %v4378 = vpack.c.bf16 %v4342, %v4341
    %v4379 = vpack.c.bf16 %v4344, %v4343
    %v4380 = vpack.c.bf16 %v4346, %v4345
    %v4381 = vpack.c.bf16 %v4348, %v4347
    %v4382 = vpack.c.bf16 %v4350, %v4349
    %v4383 = vld [vmem:[%s843 + $0x1] sm:$0xff]
    %v4384 = vld [vmem:[%s843 + $0x9] sm:$0xff]
    %v4385 = vld [vmem:[%s843 + $0x19] sm:$0xff]
    %v4386 = vld [vmem:[%s843 + $0x21] sm:$0xff]
    %v4387 = vld [vmem:[%s843 + $0x31] sm:$0xff]
    %v4388 = vld [vmem:[%s843 + $0x39] sm:$0xff]
    %v4389 = vld [vmem:[%s843 + $0x49] sm:$0xff]
    %v4390 = vld [vmem:[%s843 + $0x51] sm:$0xff]
    %v4391 = vld [vmem:[%s843 + $0x61] sm:$0xff]
    %v4392 = vld [vmem:[%s843 + $0x69] sm:$0xff]
    %v4393 = vld [vmem:[%s843 + $0x79] sm:$0xff]
    %v4394 = vld [vmem:[%s843 + $0x81] sm:$0xff]
    %v4395 = vld [vmem:[%s843 + $0x91] sm:$0xff]
    %v4396 = vld [vmem:[%s843 + $0x99] sm:$0xff]
    %v4397 = vld [vmem:[%s843 + $0xa9] sm:$0xff]
    %v4398 = vld [vmem:[%s843 + $0xb1] sm:$0xff]
    %v4399 = vld [vmem:[%s843 + $0xc1] sm:$0xff]
    %v4400 = vld [vmem:[%s843 + $0xc9] sm:$0xff]
    %v4401 = vld [vmem:[%s843 + $0xd9] sm:$0xff]
    %v4402 = vld [vmem:[%s843 + $0xe1] sm:$0xff]
    %v4403 = vld [vmem:[%s843 + $0xf1] sm:$0xff]
    %v4404 = vld [vmem:[%s843 + $0xf9] sm:$0xff]
    %v4405 = vld [vmem:[%s843 + $0x109] sm:$0xff]
    %v4406 = vld [vmem:[%s843 + $0x111] sm:$0xff]
    %v4407 = vld [vmem:[%s843 + $0x121] sm:$0xff]
    %v4408 = vld [vmem:[%s843 + $0x129] sm:$0xff]
    %v4409 = vld [vmem:[%s843 + $0x139] sm:$0xff]
    %v4410 = vld [vmem:[%s843 + $0x141] sm:$0xff]
    %v4411 = vld [vmem:[%s843 + $0x151] sm:$0xff]
    %v4412 = vld [vmem:[%s843 + $0x159] sm:$0xff]
    %v4413 = vld [vmem:[%s843 + $0x169] sm:$0xff]
    %v4414 = vld [vmem:[%s843 + $0x171] sm:$0xff]
    %v4415 = vld [vmem:[%s843 + $0x1b1] sm:$0xff]
    %v4416 = vld [vmem:[%s843 + $0x1b9] sm:$0xff]
    %v4417 = vld [vmem:[%s843 + $0x1c9] sm:$0xff]
    %v4418 = vld [vmem:[%s843 + $0x1d1] sm:$0xff]
    %v4419 = vld [vmem:[%s843 + $0x1e1] sm:$0xff]
    %v4420 = vld [vmem:[%s843 + $0x1e9] sm:$0xff]
    %v4421 = vld [vmem:[%s843 + $0x1f9] sm:$0xff]
    %v4422 = vld [vmem:[%s843 + $0x201] sm:$0xff]
    %v4423 = vld [vmem:[%s843 + $0x211] sm:$0xff]
    %v4424 = vld [vmem:[%s843 + $0x219] sm:$0xff]
    %v4425 = vld [vmem:[%s843 + $0x229] sm:$0xff]
    %v4426 = vld [vmem:[%s843 + $0x231] sm:$0xff]
    %v4427 = vld [vmem:[%s843 + $0x241] sm:$0xff]
    %v4428 = vld [vmem:[%s843 + $0x249] sm:$0xff]
    %v4429 = vld [vmem:[%s843 + $0x259] sm:$0xff]
    %v4430 = vld [vmem:[%s843 + $0x261] sm:$0xff]
    %v4431 = vld [vmem:[%s843 + $0x271] sm:$0xff]
    %v4432 = vld [vmem:[%s843 + $0x279] sm:$0xff]
    %v4433 = vld [vmem:[%s843 + $0x289] sm:$0xff]
    %v4434 = vld [vmem:[%s843 + $0x291] sm:$0xff]
    %v4435 = vld [vmem:[%s843 + $0x2a1] sm:$0xff]
    %v4436 = vld [vmem:[%s843 + $0x2a9] sm:$0xff]
    %v4437 = vld [vmem:[%s843 + $0x2b9] sm:$0xff]
    %v4438 = vld [vmem:[%s843 + $0x2c1] sm:$0xff]
    %v4439 = vld [vmem:[%s843 + $0x2d1] sm:$0xff]
    %v4440 = vld [vmem:[%s843 + $0x2d9] sm:$0xff]
    %v4441 = vld [vmem:[%s843 + $0x2e9] sm:$0xff]
    %v4442 = vld [vmem:[%s843 + $0x2f1] sm:$0xff]
    %v4443 = vld [vmem:[%s843 + $0x301] sm:$0xff]
    %v4444 = vld [vmem:[%s843 + $0x309] sm:$0xff]
    %v4445 = vld [vmem:[%s843 + $0x319] sm:$0xff]
    %v4446 = vld [vmem:[%s843 + $0x321] sm:$0xff]
    %v4447 = vpack.c.bf16 %v4384, %v4383
    %v4448 = vpack.c.bf16 %v4386, %v4385
    %v4449 = vpack.c.bf16 %v4388, %v4387
    %v4450 = vpack.c.bf16 %v4390, %v4389
    %v4451 = vpack.c.bf16 %v4392, %v4391
    %v4452 = vpack.c.bf16 %v4394, %v4393
    %v4453 = vpack.c.bf16 %v4396, %v4395
    %v4454 = vpack.c.bf16 %v4398, %v4397
    %v4455 = vpack.c.bf16 %v4400, %v4399
    %v4456 = vpack.c.bf16 %v4402, %v4401
    %v4457 = vpack.c.bf16 %v4404, %v4403
    %v4458 = vpack.c.bf16 %v4406, %v4405
    %v4459 = vpack.c.bf16 %v4408, %v4407
    %v4460 = vpack.c.bf16 %v4410, %v4409
    %v4461 = vpack.c.bf16 %v4412, %v4411
    %v4462 = vpack.c.bf16 %v4414, %v4413
    %v4463 = vpack.c.bf16 %v4416, %v4415
    %v4464 = vpack.c.bf16 %v4418, %v4417
    %v4465 = vpack.c.bf16 %v4420, %v4419
    %v4466 = vpack.c.bf16 %v4422, %v4421
    %v4467 = vpack.c.bf16 %v4424, %v4423
    %v4468 = vpack.c.bf16 %v4426, %v4425
    %v4469 = vpack.c.bf16 %v4428, %v4427
    %v4470 = vpack.c.bf16 %v4430, %v4429
    %v4471 = vpack.c.bf16 %v4432, %v4431
    %v4472 = vpack.c.bf16 %v4434, %v4433
    %v4473 = vpack.c.bf16 %v4436, %v4435
    %v4474 = vpack.c.bf16 %v4438, %v4437
    %v4475 = vpack.c.bf16 %v4440, %v4439
    %v4476 = vpack.c.bf16 %v4442, %v4441
    %v4477 = vpack.c.bf16 %v4444, %v4443
    %v4478 = vpack.c.bf16 %v4446, %v4445
    %v4479 = vld [vmem:[%s843 + $0x2] sm:$0xff]
    %v4480 = vld [vmem:[%s843 + $0xa] sm:$0xff]
    %v4481 = vld [vmem:[%s843 + $0x1a] sm:$0xff]
    %v4482 = vld [vmem:[%s843 + $0x22] sm:$0xff]
    %v4483 = vld [vmem:[%s843 + $0x32] sm:$0xff]
    %v4484 = vld [vmem:[%s843 + $0x3a] sm:$0xff]
    %v4485 = vld [vmem:[%s843 + $0x4a] sm:$0xff]
    %v4486 = vld [vmem:[%s843 + $0x52] sm:$0xff]
    %v4487 = vld [vmem:[%s843 + $0x62] sm:$0xff]
    %v4488 = vld [vmem:[%s843 + $0x6a] sm:$0xff]
    %v4489 = vld [vmem:[%s843 + $0x7a] sm:$0xff]
    %v4490 = vld [vmem:[%s843 + $0x82] sm:$0xff]
    %v4491 = vld [vmem:[%s843 + $0x92] sm:$0xff]
    %v4492 = vld [vmem:[%s843 + $0x9a] sm:$0xff]
    %v4493 = vld [vmem:[%s843 + $0xaa] sm:$0xff]
    %v4494 = vld [vmem:[%s843 + $0xb2] sm:$0xff]
    %v4495 = vld [vmem:[%s843 + $0xc2] sm:$0xff]
    %v4496 = vld [vmem:[%s843 + $0xca] sm:$0xff]
    %v4497 = vld [vmem:[%s843 + $0xda] sm:$0xff]
    %v4498 = vld [vmem:[%s843 + $0xe2] sm:$0xff]
    %v4499 = vld [vmem:[%s843 + $0xf2] sm:$0xff]
    %v4500 = vld [vmem:[%s843 + $0xfa] sm:$0xff]
    %v4501 = vld [vmem:[%s843 + $0x10a] sm:$0xff]
    %v4502 = vld [vmem:[%s843 + $0x112] sm:$0xff]
    %v4503 = vld [vmem:[%s843 + $0x122] sm:$0xff]
    %v4504 = vld [vmem:[%s843 + $0x12a] sm:$0xff]
    %v4505 = vld [vmem:[%s843 + $0x13a] sm:$0xff]
    %v4506 = vld [vmem:[%s843 + $0x142] sm:$0xff]
    %v4507 = vld [vmem:[%s843 + $0x152] sm:$0xff]
    %v4508 = vld [vmem:[%s843 + $0x15a] sm:$0xff]
    %v4509 = vld [vmem:[%s843 + $0x16a] sm:$0xff]
    %v4510 = vld [vmem:[%s843 + $0x172] sm:$0xff]
    %v4511 = vld [vmem:[%s843 + $0x1b2] sm:$0xff]
    %v4512 = vld [vmem:[%s843 + $0x1ba] sm:$0xff]
    %v4513 = vld [vmem:[%s843 + $0x1ca] sm:$0xff]
    %v4514 = vld [vmem:[%s843 + $0x1d2] sm:$0xff]
    %v4515 = vld [vmem:[%s843 + $0x1e2] sm:$0xff]
    %v4516 = vld [vmem:[%s843 + $0x1ea] sm:$0xff]
    %v4517 = vld [vmem:[%s843 + $0x1fa] sm:$0xff]
    %v4518 = vld [vmem:[%s843 + $0x202] sm:$0xff]
    %v4519 = vld [vmem:[%s843 + $0x212] sm:$0xff]
    %v4520 = vld [vmem:[%s843 + $0x21a] sm:$0xff]
    %v4521 = vld [vmem:[%s843 + $0x22a] sm:$0xff]
    %v4522 = vld [vmem:[%s843 + $0x232] sm:$0xff]
    %v4523 = vld [vmem:[%s843 + $0x242] sm:$0xff]
    %v4524 = vld [vmem:[%s843 + $0x24a] sm:$0xff]
    %v4525 = vld [vmem:[%s843 + $0x25a] sm:$0xff]
    %v4526 = vld [vmem:[%s843 + $0x262] sm:$0xff]
    %v4527 = vld [vmem:[%s843 + $0x272] sm:$0xff]
    %v4528 = vld [vmem:[%s843 + $0x27a] sm:$0xff]
    %v4529 = vld [vmem:[%s843 + $0x28a] sm:$0xff]
    %v4530 = vld [vmem:[%s843 + $0x292] sm:$0xff]
    %v4531 = vld [vmem:[%s843 + $0x2a2] sm:$0xff]
    %v4532 = vld [vmem:[%s843 + $0x2aa] sm:$0xff]
    %v4533 = vld [vmem:[%s843 + $0x2ba] sm:$0xff]
    %v4534 = vld [vmem:[%s843 + $0x2c2] sm:$0xff]
    %v4535 = vld [vmem:[%s843 + $0x2d2] sm:$0xff]
    %v4536 = vld [vmem:[%s843 + $0x2da] sm:$0xff]
    %v4537 = vld [vmem:[%s843 + $0x2ea] sm:$0xff]
    %v4538 = vld [vmem:[%s843 + $0x2f2] sm:$0xff]
    %v4539 = vld [vmem:[%s843 + $0x302] sm:$0xff]
    %v4540 = vld [vmem:[%s843 + $0x30a] sm:$0xff]
    %v4541 = vld [vmem:[%s843 + $0x31a] sm:$0xff]
    %v4542 = vld [vmem:[%s843 + $0x322] sm:$0xff]
    %v4543 = vpack.c.bf16 %v4480, %v4479
    %v4544 = vpack.c.bf16 %v4482, %v4481
    %v4545 = vpack.c.bf16 %v4484, %v4483
    %v4546 = vpack.c.bf16 %v4486, %v4485
    %v4547 = vpack.c.bf16 %v4488, %v4487
    %v4548 = vpack.c.bf16 %v4490, %v4489
    %v4549 = vpack.c.bf16 %v4492, %v4491
    %v4550 = vpack.c.bf16 %v4494, %v4493
    %v4551 = vpack.c.bf16 %v4496, %v4495
    %v4552 = vpack.c.bf16 %v4498, %v4497
    %v4553 = vpack.c.bf16 %v4500, %v4499
    %v4554 = vpack.c.bf16 %v4502, %v4501
    %v4555 = vpack.c.bf16 %v4504, %v4503
    %v4556 = vpack.c.bf16 %v4506, %v4505
    %v4557 = vpack.c.bf16 %v4508, %v4507
    %v4558 = vpack.c.bf16 %v4510, %v4509
    %v4559 = vpack.c.bf16 %v4512, %v4511
    %v4560 = vpack.c.bf16 %v4514, %v4513
    %v4561 = vpack.c.bf16 %v4516, %v4515
    %v4562 = vpack.c.bf16 %v4518, %v4517
    %v4563 = vpack.c.bf16 %v4520, %v4519
    %v4564 = vpack.c.bf16 %v4522, %v4521
    %v4565 = vpack.c.bf16 %v4524, %v4523
    %v4566 = vpack.c.bf16 %v4526, %v4525
    %v4567 = vpack.c.bf16 %v4528, %v4527
    %v4568 = vpack.c.bf16 %v4530, %v4529
    %v4569 = vpack.c.bf16 %v4532, %v4531
    %v4570 = vpack.c.bf16 %v4534, %v4533
    %v4571 = vpack.c.bf16 %v4536, %v4535
    %v4572 = vpack.c.bf16 %v4538, %v4537
    %v4573 = vpack.c.bf16 %v4540, %v4539
    %v4574 = vpack.c.bf16 %v4542, %v4541
    %4607 = vrot.lane.b32.xlu0 %v3871, 32
    %v4608 = vpop.permute.xlu0 %4607
    %4609 = vrot.lane.b32.xlu0 %v3872, 32
    %v4610 = vpop.permute.xlu0 %4609
    %4611 = vrot.lane.b32.xlu0 %v3873, 32
    %v4612 = vpop.permute.xlu0 %4611
    %4613 = vrot.lane.b32.xlu0 %v3874, 32
    %v4614 = vpop.permute.xlu0 %4613
    %4615 = vrot.lane.b32.xlu0 %v3875, 32
    %v4616 = vpop.permute.xlu0 %4615
    %4617 = vrot.lane.b32.xlu0 %v3876, 32
    %v4618 = vpop.permute.xlu0 %4617
    %4619 = vrot.lane.b32.xlu0 %v3877, 32
    %v4620 = vpop.permute.xlu0 %4619
    %4621 = vrot.lane.b32.xlu0 %v3878, 32
    %v4622 = vpop.permute.xlu0 %4621
    %4623 = vrot.lane.b32.xlu0 %v3879, 32
    %v4624 = vpop.permute.xlu0 %4623
    %4625 = vrot.lane.b32.xlu0 %v3880, 32
    %v4626 = vpop.permute.xlu0 %4625
    %4627 = vrot.lane.b32.xlu0 %v3881, 32
    %v4628 = vpop.permute.xlu0 %4627
    %4629 = vrot.lane.b32.xlu0 %v3882, 32
    %v4630 = vpop.permute.xlu0 %4629
    %4631 = vrot.lane.b32.xlu0 %v3883, 32
    %v4632 = vpop.permute.xlu0 %4631
    %4633 = vrot.lane.b32.xlu0 %v3884, 32
    %v4634 = vpop.permute.xlu0 %4633
    %4635 = vrot.lane.b32.xlu0 %v3885, 32
    %v4636 = vpop.permute.xlu0 %4635
    %4637 = vrot.lane.b32.xlu0 %v3886, 32
    %v4638 = vpop.permute.xlu0 %4637
    %4639 = vrot.lane.b32.xlu0 %v3887, 32
    %v4640 = vpop.permute.xlu0 %4639
    %4641 = vrot.lane.b32.xlu0 %v3888, 32
    %v4642 = vpop.permute.xlu0 %4641
    %4643 = vrot.lane.b32.xlu0 %v3889, 32
    %v4644 = vpop.permute.xlu0 %4643
    %4645 = vrot.lane.b32.xlu0 %v3890, 32
    %v4646 = vpop.permute.xlu0 %4645
    %4647 = vrot.lane.b32.xlu0 %v3891, 32
    %v4648 = vpop.permute.xlu0 %4647
    %4649 = vrot.lane.b32.xlu0 %v3892, 32
    %v4650 = vpop.permute.xlu0 %4649
    %4651 = vrot.lane.b32.xlu0 %v3893, 32
    %v4652 = vpop.permute.xlu0 %4651
    %4653 = vrot.lane.b32.xlu0 %v3894, 32
    %v4654 = vpop.permute.xlu0 %4653
    %4655 = vrot.lane.b32.xlu0 %v3895, 32
    %v4656 = vpop.permute.xlu0 %4655
    %4657 = vrot.lane.b32.xlu0 %v3896, 32
    %v4658 = vpop.permute.xlu0 %4657
    %4659 = vrot.lane.b32.xlu0 %v3897, 32
    %v4660 = vpop.permute.xlu0 %4659
    %4661 = vrot.lane.b32.xlu0 %v3898, 32
    %v4662 = vpop.permute.xlu0 %4661
    %4663 = vrot.lane.b32.xlu0 %v3899, 32
    %v4664 = vpop.permute.xlu0 %4663
    %4665 = vrot.lane.b32.xlu0 %v3900, 32
    %v4666 = vpop.permute.xlu0 %4665
    %4667 = vrot.lane.b32.xlu0 %v3901, 32
    %v4668 = vpop.permute.xlu0 %4667
    %4669 = vrot.lane.b32.xlu0 %v3902, 32
    %v4670 = vpop.permute.xlu0 %4669
    %4703 = vrot.lane.b32.xlu0 %v3967, 64
    %v4704 = vpop.permute.xlu0 %4703
    %4705 = vrot.lane.b32.xlu0 %v3968, 64
    %v4706 = vpop.permute.xlu0 %4705
    %4707 = vrot.lane.b32.xlu0 %v3969, 64
    %v4708 = vpop.permute.xlu0 %4707
    %4709 = vrot.lane.b32.xlu0 %v3970, 64
    %v4710 = vpop.permute.xlu0 %4709
    %4711 = vrot.lane.b32.xlu0 %v3971, 64
    %v4712 = vpop.permute.xlu0 %4711
    %4713 = vrot.lane.b32.xlu0 %v3972, 64
    %v4714 = vpop.permute.xlu0 %4713
    %4715 = vrot.lane.b32.xlu0 %v3973, 64
    %v4716 = vpop.permute.xlu0 %4715
    %4717 = vrot.lane.b32.xlu0 %v3974, 64
    %v4718 = vpop.permute.xlu0 %4717
    %4719 = vrot.lane.b32.xlu0 %v3975, 64
    %v4720 = vpop.permute.xlu0 %4719
    %4721 = vrot.lane.b32.xlu0 %v3976, 64
    %v4722 = vpop.permute.xlu0 %4721
    %4723 = vrot.lane.b32.xlu0 %v3977, 64
    %v4724 = vpop.permute.xlu0 %4723
    %4725 = vrot.lane.b32.xlu0 %v3978, 64
    %v4726 = vpop.permute.xlu0 %4725
    %4727 = vrot.lane.b32.xlu0 %v3979, 64
    %v4728 = vpop.permute.xlu0 %4727
    %4729 = vrot.lane.b32.xlu0 %v3980, 64
    %v4730 = vpop.permute.xlu0 %4729
    %4731 = vrot.lane.b32.xlu0 %v3981, 64
    %v4732 = vpop.permute.xlu0 %4731
    %4733 = vrot.lane.b32.xlu0 %v3982, 64
    %v4734 = vpop.permute.xlu0 %4733
    %4735 = vrot.lane.b32.xlu0 %v3983, 64
    %v4736 = vpop.permute.xlu0 %4735
    %4737 = vrot.lane.b32.xlu0 %v3984, 64
    %v4738 = vpop.permute.xlu0 %4737
    %4739 = vrot.lane.b32.xlu0 %v3985, 64
    %v4740 = vpop.permute.xlu0 %4739
    %4741 = vrot.lane.b32.xlu0 %v3986, 64
    %v4742 = vpop.permute.xlu0 %4741
    %4743 = vrot.lane.b32.xlu0 %v3987, 64
    %v4744 = vpop.permute.xlu0 %4743
    %4745 = vrot.lane.b32.xlu0 %v3988, 64
    %v4746 = vpop.permute.xlu0 %4745
    %4747 = vrot.lane.b32.xlu0 %v3989, 64
    %v4748 = vpop.permute.xlu0 %4747
    %4749 = vrot.lane.b32.xlu0 %v3990, 64
    %v4750 = vpop.permute.xlu0 %4749
    %4751 = vrot.lane.b32.xlu0 %v3991, 64
    %v4752 = vpop.permute.xlu0 %4751
    %4753 = vrot.lane.b32.xlu0 %v3992, 64
    %v4754 = vpop.permute.xlu0 %4753
    %4755 = vrot.lane.b32.xlu0 %v3993, 64
    %v4756 = vpop.permute.xlu0 %4755
    %4757 = vrot.lane.b32.xlu0 %v3994, 64
    %v4758 = vpop.permute.xlu0 %4757
    %4759 = vrot.lane.b32.xlu0 %v3995, 64
    %v4760 = vpop.permute.xlu0 %4759
    %4761 = vrot.lane.b32.xlu0 %v3996, 64
    %v4762 = vpop.permute.xlu0 %4761
    %4763 = vrot.lane.b32.xlu0 %v3997, 64
    %v4764 = vpop.permute.xlu0 %4763
    %4765 = vrot.lane.b32.xlu0 %v3998, 64
    %v4766 = vpop.permute.xlu0 %4765
    %4799 = vrot.lane.b32.xlu0 %v4063, 96
    %v4800 = vpop.permute.xlu0 %4799
    %4801 = vrot.lane.b32.xlu0 %v4064, 96
    %v4802 = vpop.permute.xlu0 %4801
    %4803 = vrot.lane.b32.xlu0 %v4065, 96
    %v4804 = vpop.permute.xlu0 %4803
    %4805 = vrot.lane.b32.xlu0 %v4066, 96
    %v4806 = vpop.permute.xlu0 %4805
    %4807 = vrot.lane.b32.xlu0 %v4067, 96
    %v4808 = vpop.permute.xlu0 %4807
    %4809 = vrot.lane.b32.xlu0 %v4068, 96
    %v4810 = vpop.permute.xlu0 %4809
    %4811 = vrot.lane.b32.xlu0 %v4069, 96
    %v4812 = vpop.permute.xlu0 %4811
    %4813 = vrot.lane.b32.xlu0 %v4070, 96
    %v4814 = vpop.permute.xlu0 %4813
    %4815 = vrot.lane.b32.xlu0 %v4071, 96
    %v4816 = vpop.permute.xlu0 %4815
    %4817 = vrot.lane.b32.xlu0 %v4072, 96
    %v4818 = vpop.permute.xlu0 %4817
    %4819 = vrot.lane.b32.xlu0 %v4073, 96
    %v4820 = vpop.permute.xlu0 %4819
    %4821 = vrot.lane.b32.xlu0 %v4074, 96
    %v4822 = vpop.permute.xlu0 %4821
    %4823 = vrot.lane.b32.xlu0 %v4075, 96
    %v4824 = vpop.permute.xlu0 %4823
    %4825 = vrot.lane.b32.xlu0 %v4076, 96
    %v4826 = vpop.permute.xlu0 %4825
    %4827 = vrot.lane.b32.xlu0 %v4077, 96
    %v4828 = vpop.permute.xlu0 %4827
    %4829 = vrot.lane.b32.xlu0 %v4078, 96
    %v4830 = vpop.permute.xlu0 %4829
    %4831 = vrot.lane.b32.xlu0 %v4079, 96
    %v4832 = vpop.permute.xlu0 %4831
    %4833 = vrot.lane.b32.xlu0 %v4080, 96
    %v4834 = vpop.permute.xlu0 %4833
    %4835 = vrot.lane.b32.xlu0 %v4081, 96
    %v4836 = vpop.permute.xlu0 %4835
    %4837 = vrot.lane.b32.xlu0 %v4082, 96
    %v4838 = vpop.permute.xlu0 %4837
    %4839 = vrot.lane.b32.xlu0 %v4083, 96
    %v4840 = vpop.permute.xlu0 %4839
    %4841 = vrot.lane.b32.xlu0 %v4084, 96
    %v4842 = vpop.permute.xlu0 %4841
    %4843 = vrot.lane.b32.xlu0 %v4085, 96
    %v4844 = vpop.permute.xlu0 %4843
    %4845 = vrot.lane.b32.xlu0 %v4086, 96
    %v4846 = vpop.permute.xlu0 %4845
    %4847 = vrot.lane.b32.xlu0 %v4087, 96
    %v4848 = vpop.permute.xlu0 %4847
    %4849 = vrot.lane.b32.xlu0 %v4088, 96
    %v4850 = vpop.permute.xlu0 %4849
    %4851 = vrot.lane.b32.xlu0 %v4089, 96
    %v4852 = vpop.permute.xlu0 %4851
    %4853 = vrot.lane.b32.xlu0 %v4090, 96
    %v4854 = vpop.permute.xlu0 %4853
    %4855 = vrot.lane.b32.xlu0 %v4091, 96
    %v4856 = vpop.permute.xlu0 %4855
    %4857 = vrot.lane.b32.xlu0 %v4092, 96
    %v4858 = vpop.permute.xlu0 %4857
    %4859 = vrot.lane.b32.xlu0 %v4093, 96
    %v4860 = vpop.permute.xlu0 %4859
    %4861 = vrot.lane.b32.xlu0 %v4094, 96
    %v4862 = vpop.permute.xlu0 %4861
    %4895 = vrot.lane.b32.xlu0 %v4255, 32
    %v4896 = vpop.permute.xlu0 %4895
    %4897 = vrot.lane.b32.xlu0 %v4256, 32
    %v4898 = vpop.permute.xlu0 %4897
    %4899 = vrot.lane.b32.xlu0 %v4257, 32
    %v4900 = vpop.permute.xlu0 %4899
    %4901 = vrot.lane.b32.xlu0 %v4258, 32
    %v4902 = vpop.permute.xlu0 %4901
    %4903 = vrot.lane.b32.xlu0 %v4259, 32
    %v4904 = vpop.permute.xlu0 %4903
    %4905 = vrot.lane.b32.xlu0 %v4260, 32
    %v4906 = vpop.permute.xlu0 %4905
    %4907 = vrot.lane.b32.xlu0 %v4261, 32
    %v4908 = vpop.permute.xlu0 %4907
    %4909 = vrot.lane.b32.xlu0 %v4262, 32
    %v4910 = vpop.permute.xlu0 %4909
    %4911 = vrot.lane.b32.xlu0 %v4263, 32
    %v4912 = vpop.permute.xlu0 %4911
    %4913 = vrot.lane.b32.xlu0 %v4264, 32
    %v4914 = vpop.permute.xlu0 %4913
    %4915 = vrot.lane.b32.xlu0 %v4265, 32
    %v4916 = vpop.permute.xlu0 %4915
    %4917 = vrot.lane.b32.xlu0 %v4266, 32
    %v4918 = vpop.permute.xlu0 %4917
    %4919 = vrot.lane.b32.xlu0 %v4267, 32
    %v4920 = vpop.permute.xlu0 %4919
    %4921 = vrot.lane.b32.xlu0 %v4268, 32
    %v4922 = vpop.permute.xlu0 %4921
    %4923 = vrot.lane.b32.xlu0 %v4269, 32
    %v4924 = vpop.permute.xlu0 %4923
    %4925 = vrot.lane.b32.xlu0 %v4270, 32
    %v4926 = vpop.permute.xlu0 %4925
    %4927 = vrot.lane.b32.xlu0 %v4271, 32
    %v4928 = vpop.permute.xlu0 %4927
    %4929 = vrot.lane.b32.xlu0 %v4272, 32
    %v4930 = vpop.permute.xlu0 %4929
    %4931 = vrot.lane.b32.xlu0 %v4273, 32
    %v4932 = vpop.permute.xlu0 %4931
    %4933 = vrot.lane.b32.xlu0 %v4274, 32
    %v4934 = vpop.permute.xlu0 %4933
    %4935 = vrot.lane.b32.xlu0 %v4275, 32
    %v4936 = vpop.permute.xlu0 %4935
    %4937 = vrot.lane.b32.xlu0 %v4276, 32
    %v4938 = vpop.permute.xlu0 %4937
    %4939 = vrot.lane.b32.xlu0 %v4277, 32
    %v4940 = vpop.permute.xlu0 %4939
    %4941 = vrot.lane.b32.xlu0 %v4278, 32
    %v4942 = vpop.permute.xlu0 %4941
    %4943 = vrot.lane.b32.xlu0 %v4279, 32
    %v4944 = vpop.permute.xlu0 %4943
    %4945 = vrot.lane.b32.xlu0 %v4280, 32
    %v4946 = vpop.permute.xlu0 %4945
    %4947 = vrot.lane.b32.xlu0 %v4281, 32
    %v4948 = vpop.permute.xlu0 %4947
    %4949 = vrot.lane.b32.xlu0 %v4282, 32
    %v4950 = vpop.permute.xlu0 %4949
    %4951 = vrot.lane.b32.xlu0 %v4283, 32
    %v4952 = vpop.permute.xlu0 %4951
    %4953 = vrot.lane.b32.xlu0 %v4284, 32
    %v4954 = vpop.permute.xlu0 %4953
    %4955 = vrot.lane.b32.xlu0 %v4285, 32
    %v4956 = vpop.permute.xlu0 %4955
    %4957 = vrot.lane.b32.xlu0 %v4286, 32
    %v4958 = vpop.permute.xlu0 %4957
    %4991 = vrot.lane.b32.xlu0 %v4351, 64
    %v4992 = vpop.permute.xlu0 %4991
    %4993 = vrot.lane.b32.xlu0 %v4352, 64
    %v4994 = vpop.permute.xlu0 %4993
    %4995 = vrot.lane.b32.xlu0 %v4353, 64
    %v4996 = vpop.permute.xlu0 %4995
    %4997 = vrot.lane.b32.xlu0 %v4354, 64
    %v4998 = vpop.permute.xlu0 %4997
    %4999 = vrot.lane.b32.xlu0 %v4355, 64
    %v5000 = vpop.permute.xlu0 %4999
    %5001 = vrot.lane.b32.xlu0 %v4356, 64
    %v5002 = vpop.permute.xlu0 %5001
    %5003 = vrot.lane.b32.xlu0 %v4357, 64
    %v5004 = vpop.permute.xlu0 %5003
    %5005 = vrot.lane.b32.xlu0 %v4358, 64
    %v5006 = vpop.permute.xlu0 %5005
    %5007 = vrot.lane.b32.xlu0 %v4359, 64
    %v5008 = vpop.permute.xlu0 %5007
    %5009 = vrot.lane.b32.xlu0 %v4360, 64
    %v5010 = vpop.permute.xlu0 %5009
    %5011 = vrot.lane.b32.xlu0 %v4361, 64
    %v5012 = vpop.permute.xlu0 %5011
    %5013 = vrot.lane.b32.xlu0 %v4362, 64
    %v5014 = vpop.permute.xlu0 %5013
    %5015 = vrot.lane.b32.xlu0 %v4363, 64
    %v5016 = vpop.permute.xlu0 %5015
    %5017 = vrot.lane.b32.xlu0 %v4364, 64
    %v5018 = vpop.permute.xlu0 %5017
    %5019 = vrot.lane.b32.xlu0 %v4365, 64
    %v5020 = vpop.permute.xlu0 %5019
    %5021 = vrot.lane.b32.xlu0 %v4366, 64
    %v5022 = vpop.permute.xlu0 %5021
    %5023 = vrot.lane.b32.xlu0 %v4367, 64
    %v5024 = vpop.permute.xlu0 %5023
    %5025 = vrot.lane.b32.xlu0 %v4368, 64
    %v5026 = vpop.permute.xlu0 %5025
    %5027 = vrot.lane.b32.xlu0 %v4369, 64
    %v5028 = vpop.permute.xlu0 %5027
    %5029 = vrot.lane.b32.xlu0 %v4370, 64
    %v5030 = vpop.permute.xlu0 %5029
    %5031 = vrot.lane.b32.xlu0 %v4371, 64
    %v5032 = vpop.permute.xlu0 %5031
    %5033 = vrot.lane.b32.xlu0 %v4372, 64
    %v5034 = vpop.permute.xlu0 %5033
    %5035 = vrot.lane.b32.xlu0 %v4373, 64
    %v5036 = vpop.permute.xlu0 %5035
    %5037 = vrot.lane.b32.xlu0 %v4374, 64
    %v5038 = vpop.permute.xlu0 %5037
    %5039 = vrot.lane.b32.xlu0 %v4375, 64
    %v5040 = vpop.permute.xlu0 %5039
    %5041 = vrot.lane.b32.xlu0 %v4376, 64
    %v5042 = vpop.permute.xlu0 %5041
    %5043 = vrot.lane.b32.xlu0 %v4377, 64
    %v5044 = vpop.permute.xlu0 %5043
    %5045 = vrot.lane.b32.xlu0 %v4378, 64
    %v5046 = vpop.permute.xlu0 %5045
    %5047 = vrot.lane.b32.xlu0 %v4379, 64
    %v5048 = vpop.permute.xlu0 %5047
    %5049 = vrot.lane.b32.xlu0 %v4380, 64
    %v5050 = vpop.permute.xlu0 %5049
    %5051 = vrot.lane.b32.xlu0 %v4381, 64
    %v5052 = vpop.permute.xlu0 %5051
    %5053 = vrot.lane.b32.xlu0 %v4382, 64
    %v5054 = vpop.permute.xlu0 %5053
    %5087 = vrot.lane.b32.xlu0 %v4447, 96
    %v5088 = vpop.permute.xlu0 %5087
    %5089 = vrot.lane.b32.xlu0 %v4448, 96
    %v5090 = vpop.permute.xlu0 %5089
    %5091 = vrot.lane.b32.xlu0 %v4449, 96
    %v5092 = vpop.permute.xlu0 %5091
    %5093 = vrot.lane.b32.xlu0 %v4450, 96
    %v5094 = vpop.permute.xlu0 %5093
    %5095 = vrot.lane.b32.xlu0 %v4451, 96
    %v5096 = vpop.permute.xlu0 %5095
    %5097 = vrot.lane.b32.xlu0 %v4452, 96
    %v5098 = vpop.permute.xlu0 %5097
    %5099 = vrot.lane.b32.xlu0 %v4453, 96
    %v5100 = vpop.permute.xlu0 %5099
    %5101 = vrot.lane.b32.xlu0 %v4454, 96
    %v5102 = vpop.permute.xlu0 %5101
    %5103 = vrot.lane.b32.xlu0 %v4455, 96
    %v5104 = vpop.permute.xlu0 %5103
    %5105 = vrot.lane.b32.xlu0 %v4456, 96
    %v5106 = vpop.permute.xlu0 %5105
    %5107 = vrot.lane.b32.xlu0 %v4457, 96
    %v5108 = vpop.permute.xlu0 %5107
    %5109 = vrot.lane.b32.xlu0 %v4458, 96
    %v5110 = vpop.permute.xlu0 %5109
    %5111 = vrot.lane.b32.xlu0 %v4459, 96
    %v5112 = vpop.permute.xlu0 %5111
    %5113 = vrot.lane.b32.xlu0 %v4460, 96
    %v5114 = vpop.permute.xlu0 %5113
    %5115 = vrot.lane.b32.xlu0 %v4461, 96
    %v5116 = vpop.permute.xlu0 %5115
    %5117 = vrot.lane.b32.xlu0 %v4462, 96
    %v5118 = vpop.permute.xlu0 %5117
    %5119 = vrot.lane.b32.xlu0 %v4463, 96
    %v5120 = vpop.permute.xlu0 %5119
    %5121 = vrot.lane.b32.xlu0 %v4464, 96
    %v5122 = vpop.permute.xlu0 %5121
    %5123 = vrot.lane.b32.xlu0 %v4465, 96
    %v5124 = vpop.permute.xlu0 %5123
    %5125 = vrot.lane.b32.xlu0 %v4466, 96
    %v5126 = vpop.permute.xlu0 %5125
    %5127 = vrot.lane.b32.xlu0 %v4467, 96
    %v5128 = vpop.permute.xlu0 %5127
    %5129 = vrot.lane.b32.xlu0 %v4468, 96
    %v5130 = vpop.permute.xlu0 %5129
    %5131 = vrot.lane.b32.xlu0 %v4469, 96
    %v5132 = vpop.permute.xlu0 %5131
    %5133 = vrot.lane.b32.xlu0 %v4470, 96
    %v5134 = vpop.permute.xlu0 %5133
    %5135 = vrot.lane.b32.xlu0 %v4471, 96
    %v5136 = vpop.permute.xlu0 %5135
    %5137 = vrot.lane.b32.xlu0 %v4472, 96
    %v5138 = vpop.permute.xlu0 %5137
    %5139 = vrot.lane.b32.xlu0 %v4473, 96
    %v5140 = vpop.permute.xlu0 %5139
    %5141 = vrot.lane.b32.xlu0 %v4474, 96
    %v5142 = vpop.permute.xlu0 %5141
    %5143 = vrot.lane.b32.xlu0 %v4475, 96
    %v5144 = vpop.permute.xlu0 %5143
    %5145 = vrot.lane.b32.xlu0 %v4476, 96
    %v5146 = vpop.permute.xlu0 %5145
    %5147 = vrot.lane.b32.xlu0 %v4477, 96
    %v5148 = vpop.permute.xlu0 %5147
    %5149 = vrot.lane.b32.xlu0 %v4478, 96
    %v5150 = vpop.permute.xlu0 %5149
    %v5153 = vsel %vm92, %v3775, %v4608
    %v5156 = vsel %vm92, %v3776, %v4610
    %v5159 = vsel %vm92, %v3777, %v4612
    %v5162 = vsel %vm92, %v3778, %v4614
    %v5165 = vsel %vm92, %v3779, %v4616
    %v5168 = vsel %vm92, %v3780, %v4618
    %v5171 = vsel %vm92, %v3781, %v4620
    %v5174 = vsel %vm92, %v3782, %v4622
    %v5177 = vsel %vm92, %v3783, %v4624
    %v5180 = vsel %vm92, %v3784, %v4626
    %v5183 = vsel %vm92, %v3785, %v4628
    %v5186 = vsel %vm92, %v3786, %v4630
    %v5189 = vsel %vm92, %v3787, %v4632
    %v5192 = vsel %vm92, %v3788, %v4634
    %v5195 = vsel %vm92, %v3789, %v4636
    %v5198 = vsel %vm92, %v3790, %v4638
    %v5201 = vsel %vm92, %v3791, %v4640
    %v5204 = vsel %vm92, %v3792, %v4642
    %v5207 = vsel %vm92, %v3793, %v4644
    %v5210 = vsel %vm92, %v3794, %v4646
    %v5213 = vsel %vm92, %v3795, %v4648
    %v5216 = vsel %vm92, %v3796, %v4650
    %v5219 = vsel %vm92, %v3797, %v4652
    %v5222 = vsel %vm92, %v3798, %v4654
    %v5225 = vsel %vm92, %v3799, %v4656
    %v5228 = vsel %vm92, %v3800, %v4658
    %v5231 = vsel %vm92, %v3801, %v4660
    %v5234 = vsel %vm92, %v3802, %v4662
    %v5237 = vsel %vm92, %v3803, %v4664
    %v5240 = vsel %vm92, %v3804, %v4666
    %v5243 = vsel %vm92, %v3805, %v4668
    %v5246 = vsel %vm92, %v3806, %v4670
    %v5248 = vsel %vm1804, %v5153, %v4704
    %v5250 = vsel %vm1804, %v5156, %v4706
    %v5252 = vsel %vm1804, %v5159, %v4708
    %v5254 = vsel %vm1804, %v5162, %v4710
    %v5256 = vsel %vm1804, %v5165, %v4712
    %v5258 = vsel %vm1804, %v5168, %v4714
    %v5260 = vsel %vm1804, %v5171, %v4716
    %v5262 = vsel %vm1804, %v5174, %v4718
    %v5264 = vsel %vm1804, %v5177, %v4720
    %v5266 = vsel %vm1804, %v5180, %v4722
    %v5268 = vsel %vm1804, %v5183, %v4724
    %v5270 = vsel %vm1804, %v5186, %v4726
    %v5272 = vsel %vm1804, %v5189, %v4728
    %v5274 = vsel %vm1804, %v5192, %v4730
    %v5276 = vsel %vm1804, %v5195, %v4732
    %v5278 = vsel %vm1804, %v5198, %v4734
    %v5280 = vsel %vm1804, %v5201, %v4736
    %v5282 = vsel %vm1804, %v5204, %v4738
    %v5284 = vsel %vm1804, %v5207, %v4740
    %v5286 = vsel %vm1804, %v5210, %v4742
    %v5288 = vsel %vm1804, %v5213, %v4744
    %v5290 = vsel %vm1804, %v5216, %v4746
    %v5292 = vsel %vm1804, %v5219, %v4748
    %v5294 = vsel %vm1804, %v5222, %v4750
    %v5296 = vsel %vm1804, %v5225, %v4752
    %v5298 = vsel %vm1804, %v5228, %v4754
    %v5300 = vsel %vm1804, %v5231, %v4756
    %v5302 = vsel %vm1804, %v5234, %v4758
    %v5304 = vsel %vm1804, %v5237, %v4760
    %v5306 = vsel %vm1804, %v5240, %v4762
    %v5308 = vsel %vm1804, %v5243, %v4764
    %v5310 = vsel %vm1804, %v5246, %v4766
    %v5312 = vsel %vm1869, %v5248, %v4800
    %v5315 = vsel %vm1869, %v5250, %v4802
    %v5318 = vsel %vm1869, %v5252, %v4804
    %v5321 = vsel %vm1869, %v5254, %v4806
    %v5324 = vsel %vm1869, %v5256, %v4808
    %v5327 = vsel %vm1869, %v5258, %v4810
    %v5330 = vsel %vm1869, %v5260, %v4812
    %v5333 = vsel %vm1869, %v5262, %v4814
    %v5336 = vsel %vm1869, %v5264, %v4816
    %v5339 = vsel %vm1869, %v5266, %v4818
    %v5342 = vsel %vm1869, %v5268, %v4820
    %v5345 = vsel %vm1869, %v5270, %v4822
    %v5348 = vsel %vm1869, %v5272, %v4824
    %v5351 = vsel %vm1869, %v5274, %v4826
    %v5354 = vsel %vm1869, %v5276, %v4828
    %v5357 = vsel %vm1869, %v5278, %v4830
    %v5360 = vsel %vm1869, %v5280, %v4832
    %v5363 = vsel %vm1869, %v5282, %v4834
    %v5366 = vsel %vm1869, %v5284, %v4836
    %v5369 = vsel %vm1869, %v5286, %v4838
    %v5372 = vsel %vm1869, %v5288, %v4840
    %v5375 = vsel %vm1869, %v5290, %v4842
    %v5378 = vsel %vm1869, %v5292, %v4844
    %v5381 = vsel %vm1869, %v5294, %v4846
    %v5384 = vsel %vm1869, %v5296, %v4848
    %v5387 = vsel %vm1869, %v5298, %v4850
    %v5390 = vsel %vm1869, %v5300, %v4852
    %v5393 = vsel %vm1869, %v5302, %v4854
    %v5396 = vsel %vm1869, %v5304, %v4856
    %v5399 = vsel %vm1869, %v5306, %v4858
    %v5402 = vsel %vm1869, %v5308, %v4860
    %v5405 = vsel %vm1869, %v5310, %v4862
    %v5409 = vsel %vm92, %v4159, %v4896
    %v5412 = vsel %vm92, %v4160, %v4898
    %v5415 = vsel %vm92, %v4161, %v4900
    %v5418 = vsel %vm92, %v4162, %v4902
    %v5421 = vsel %vm92, %v4163, %v4904
    %v5424 = vsel %vm92, %v4164, %v4906
    %v5427 = vsel %vm92, %v4165, %v4908
    %v5430 = vsel %vm92, %v4166, %v4910
    %v5433 = vsel %vm92, %v4167, %v4912
    %v5436 = vsel %vm92, %v4168, %v4914
    %v5439 = vsel %vm92, %v4169, %v4916
    %v5442 = vsel %vm92, %v4170, %v4918
    %v5445 = vsel %vm92, %v4171, %v4920
    %v5448 = vsel %vm92, %v4172, %v4922
    %v5451 = vsel %vm92, %v4173, %v4924
    %v5454 = vsel %vm92, %v4174, %v4926
    %v5457 = vsel %vm92, %v4175, %v4928
    %v5460 = vsel %vm92, %v4176, %v4930
    %v5463 = vsel %vm92, %v4177, %v4932
    %v5466 = vsel %vm92, %v4178, %v4934
    %v5469 = vsel %vm92, %v4179, %v4936
    %v5472 = vsel %vm92, %v4180, %v4938
    %v5475 = vsel %vm92, %v4181, %v4940
    %v5478 = vsel %vm92, %v4182, %v4942
    %v5481 = vsel %vm92, %v4183, %v4944
    %v5484 = vsel %vm92, %v4184, %v4946
    %v5487 = vsel %vm92, %v4185, %v4948
    %v5490 = vsel %vm92, %v4186, %v4950
    %v5493 = vsel %vm92, %v4187, %v4952
    %v5496 = vsel %vm92, %v4188, %v4954
    %v5499 = vsel %vm92, %v4189, %v4956
    %v5502 = vsel %vm92, %v4190, %v4958
    %v5504 = vsel %vm1804, %v5409, %v4992
    %v5506 = vsel %vm1804, %v5412, %v4994
    %v5508 = vsel %vm1804, %v5415, %v4996
    %v5510 = vsel %vm1804, %v5418, %v4998
    %v5512 = vsel %vm1804, %v5421, %v5000
    %v5514 = vsel %vm1804, %v5424, %v5002
    %v5516 = vsel %vm1804, %v5427, %v5004
    %v5518 = vsel %vm1804, %v5430, %v5006
    %v5520 = vsel %vm1804, %v5433, %v5008
    %v5522 = vsel %vm1804, %v5436, %v5010
    %v5524 = vsel %vm1804, %v5439, %v5012
    %v5526 = vsel %vm1804, %v5442, %v5014
    %v5528 = vsel %vm1804, %v5445, %v5016
    %v5530 = vsel %vm1804, %v5448, %v5018
    %v5532 = vsel %vm1804, %v5451, %v5020
    %v5534 = vsel %vm1804, %v5454, %v5022
    %v5536 = vsel %vm1804, %v5457, %v5024
    %v5538 = vsel %vm1804, %v5460, %v5026
    %v5540 = vsel %vm1804, %v5463, %v5028
    %v5542 = vsel %vm1804, %v5466, %v5030
    %v5544 = vsel %vm1804, %v5469, %v5032
    %v5546 = vsel %vm1804, %v5472, %v5034
    %v5548 = vsel %vm1804, %v5475, %v5036
    %v5550 = vsel %vm1804, %v5478, %v5038
    %v5552 = vsel %vm1804, %v5481, %v5040
    %v5554 = vsel %vm1804, %v5484, %v5042
    %v5556 = vsel %vm1804, %v5487, %v5044
    %v5558 = vsel %vm1804, %v5490, %v5046
    %v5560 = vsel %vm1804, %v5493, %v5048
    %v5562 = vsel %vm1804, %v5496, %v5050
    %v5564 = vsel %vm1804, %v5499, %v5052
    %v5566 = vsel %vm1804, %v5502, %v5054
    %v5568 = vsel %vm1869, %v5504, %v5088
    %v5571 = vsel %vm1869, %v5506, %v5090
    %v5574 = vsel %vm1869, %v5508, %v5092
    %v5577 = vsel %vm1869, %v5510, %v5094
    %v5580 = vsel %vm1869, %v5512, %v5096
    %v5583 = vsel %vm1869, %v5514, %v5098
    %v5586 = vsel %vm1869, %v5516, %v5100
    %v5589 = vsel %vm1869, %v5518, %v5102
    %v5592 = vsel %vm1869, %v5520, %v5104
    %v5595 = vsel %vm1869, %v5522, %v5106
    %v5598 = vsel %vm1869, %v5524, %v5108
    %v5601 = vsel %vm1869, %v5526, %v5110
    %v5604 = vsel %vm1869, %v5528, %v5112
    %v5607 = vsel %vm1869, %v5530, %v5114
    %v5610 = vsel %vm1869, %v5532, %v5116
    %v5613 = vsel %vm1869, %v5534, %v5118
    %v5616 = vsel %vm1869, %v5536, %v5120
    %v5619 = vsel %vm1869, %v5538, %v5122
    %v5622 = vsel %vm1869, %v5540, %v5124
    %v5625 = vsel %vm1869, %v5542, %v5126
    %v5628 = vsel %vm1869, %v5544, %v5128
    %v5631 = vsel %vm1869, %v5546, %v5130
    %v5634 = vsel %vm1869, %v5548, %v5132
    %v5637 = vsel %vm1869, %v5550, %v5134
    %v5640 = vsel %vm1869, %v5552, %v5136
    %v5643 = vsel %vm1869, %v5554, %v5138
    %v5646 = vsel %vm1869, %v5556, %v5140
    %v5649 = vsel %vm1869, %v5558, %v5142
    %v5652 = vsel %vm1869, %v5560, %v5144
    %v5655 = vsel %vm1869, %v5562, %v5146
    %v5658 = vsel %vm1869, %v5564, %v5148
    %v5661 = vsel %vm1869, %v5566, %v5150
    %v5663 = vld [vmem:[%s4] sm:$0xf]
    %v5664 = vld [vmem:[%s4 + $0x4] sm:$0xf]
    %v5665 = vld [vmem:[%s4 + $0x8] sm:$0xf]
    %v5666 = vld [vmem:[%s4 + $0xc] sm:$0xf]
    %v5667 = vld [vmem:[%s4 + $0x10] sm:$0xf]
    %v5668 = vld [vmem:[%s4 + $0x14] sm:$0xf]
    %v5669 = vld [vmem:[%s4 + $0x18] sm:$0xf]
    %v5670 = vld [vmem:[%s4 + $0x1c] sm:$0xf]
    %v5671 = vld [vmem:[%s4 + $0x20] sm:$0xf]
    %v5672 = vld [vmem:[%s4 + $0x24] sm:$0xf]
    %v5673 = vld [vmem:[%s4 + $0x28] sm:$0xf]
    %v5674 = vld [vmem:[%s4 + $0x2c] sm:$0xf]
    %v5675 = vld [vmem:[%s4 + $0x30] sm:$0xf]
    %v5676 = vld [vmem:[%s4 + $0x34] sm:$0xf]
    %v5677 = vld [vmem:[%s4 + $0x38] sm:$0xf]
    %v5678 = vld [vmem:[%s4 + $0x3c] sm:$0xf]
    %v5679 = vld [vmem:[%s4 + $0x40] sm:$0xf]
    %v5680 = vld [vmem:[%s4 + $0x44] sm:$0xf]
    %v5681 = vld [vmem:[%s4 + $0x48] sm:$0xf]
    %v5682 = vld [vmem:[%s4 + $0x4c] sm:$0xf]
    %v5683 = vld [vmem:[%s4 + $0x50] sm:$0xf]
    %v5684 = vld [vmem:[%s4 + $0x54] sm:$0xf]
    %v5685 = vld [vmem:[%s4 + $0x58] sm:$0xf]
    %v5686 = vld [vmem:[%s4 + $0x5c] sm:$0xf]
    %v5687 = vld [vmem:[%s4 + $0x60] sm:$0xf]
    %v5688 = vld [vmem:[%s4 + $0x64] sm:$0xf]
    %v5689 = vld [vmem:[%s4 + $0x68] sm:$0xf]
    %v5690 = vld [vmem:[%s4 + $0x6c] sm:$0xf]
    %v5691 = vld [vmem:[%s4 + $0x70] sm:$0xf]
    %v5692 = vld [vmem:[%s4 + $0x74] sm:$0xf]
    %v5693 = vld [vmem:[%s4 + $0x78] sm:$0xf]
    %v5694 = vld [vmem:[%s4 + $0x7c] sm:$0xf]
    %v5695 = vld [vmem:[%s4 + $0x80] sm:$0xf]
    %v5696 = vld [vmem:[%s4 + $0x84] sm:$0xf]
    %v5697 = vld [vmem:[%s4 + $0x88] sm:$0xf]
    %v5698 = vld [vmem:[%s4 + $0x8c] sm:$0xf]
    %v5735 = vunpack.c.l.b16 %v5663
    %v5736 = vunpack.c.l.b16 %v5664
    %v5737 = vunpack.c.l.b16 %v5665
    %v5738 = vunpack.c.l.b16 %v5666
    %v5739 = vunpack.c.l.b16 %v5667
    %v5740 = vunpack.c.l.b16 %v5668
    %v5741 = vunpack.c.l.b16 %v5669
    %v5742 = vunpack.c.l.b16 %v5670
    %v5743 = vunpack.c.l.b16 %v5671
    %v5744 = vunpack.c.l.b16 %v5672
    %v5745 = vunpack.c.l.b16 %v5673
    %v5746 = vunpack.c.l.b16 %v5674
    %v5747 = vunpack.c.l.b16 %v5675
    %v5748 = vunpack.c.l.b16 %v5676
    %v5749 = vunpack.c.l.b16 %v5677
    %v5750 = vunpack.c.l.b16 %v5678
    %v5751 = vunpack.c.l.b16 %v5679
    %v5752 = vunpack.c.l.b16 %v5680
    %v5753 = vunpack.c.l.b16 %v5681
    %v5754 = vunpack.c.l.b16 %v5682
    %v5755 = vunpack.c.l.b16 %v5683
    %v5756 = vunpack.c.l.b16 %v5684
    %v5757 = vunpack.c.l.b16 %v5685
    %v5758 = vunpack.c.l.b16 %v5686
    %v5759 = vunpack.c.l.b16 %v5687
    %v5760 = vunpack.c.l.b16 %v5688
    %v5761 = vunpack.c.l.b16 %v5689
    %v5762 = vunpack.c.l.b16 %v5690
    %v5763 = vunpack.c.l.b16 %v5691
    %v5764 = vunpack.c.l.b16 %v5692
    %v5765 = vunpack.c.l.b16 %v5693
    %v5766 = vunpack.c.l.b16 %v5694
    %v5767 = vunpack.c.l.b16 %v5695
    %v5768 = vunpack.c.l.b16 %v5696
    %v5769 = vunpack.c.l.b16 %v5697
    %v5770 = vunpack.c.l.b16 %v5698
    %v5771 = vpack.c.b16 %v5736, %v5735
    %v5772 = vpack.c.b16 %v5738, %v5737
    %v5773 = vpack.c.b16 %v5740, %v5739
    %v5774 = vpack.c.b16 %v5742, %v5741
    %v5775 = vpack.c.b16 %v5744, %v5743
    %v5776 = vpack.c.b16 %v5746, %v5745
    %v5777 = vpack.c.b16 %v5748, %v5747
    %v5778 = vpack.c.b16 %v5750, %v5749
    %v5779 = vpack.c.b16 %v5752, %v5751
    %v5780 = vpack.c.b16 %v5754, %v5753
    %v5781 = vpack.c.b16 %v5756, %v5755
    %v5782 = vpack.c.b16 %v5758, %v5757
    %v5783 = vpack.c.b16 %v5760, %v5759
    %v5784 = vpack.c.b16 %v5762, %v5761
    %v5785 = vpack.c.b16 %v5764, %v5763
    %v5786 = vpack.c.b16 %v5766, %v5765
    %v5787 = vpack.c.b16 %v5768, %v5767
    %v5788 = vpack.c.b16 %v5770, %v5769
    %v5808 = vsel %vm92, %v4543, 0
    %v5811 = vsel %vm92, %v4544, 0
    %v5814 = vsel %vm92, %v4545, 0
    %v5817 = vsel %vm92, %v4546, 0
    %v5820 = vsel %vm92, %v4547, 0
    %v5823 = vsel %vm92, %v4548, 0
    %v5826 = vsel %vm92, %v4549, 0
    %v5829 = vsel %vm92, %v4550, 0
    %v5832 = vsel %vm92, %v4551, 0
    %v5835 = vsel %vm92, %v4552, 0
    %v5838 = vsel %vm92, %v4553, 0
    %v5841 = vsel %vm92, %v4554, 0
    %v5844 = vsel %vm92, %v4555, 0
    %v5847 = vsel %vm92, %v4556, 0
    %v5850 = vsel %vm92, %v4557, 0
    %v5853 = vsel %vm92, %v4558, 0
    %v5856 = vsel %vm92, %v4559, 0
    %v5859 = vsel %vm92, %v4560, 0
    %v5862 = vsel %vm92, %v4561, 0
    %v5865 = vsel %vm92, %v4562, 0
    %v5868 = vsel %vm92, %v4563, 0
    %v5871 = vsel %vm92, %v4564, 0
    %v5874 = vsel %vm92, %v4565, 0
    %v5877 = vsel %vm92, %v4566, 0
    %v5880 = vsel %vm92, %v4567, 0
    %v5883 = vsel %vm92, %v4568, 0
    %v5886 = vsel %vm92, %v4569, 0
    %v5889 = vsel %vm92, %v4570, 0
    %v5892 = vsel %vm92, %v4571, 0
    %v5895 = vsel %vm92, %v4572, 0
    %v5898 = vsel %vm92, %v4573, 0
    %v5901 = vsel %vm92, %v4574, 0
    %5903 = vmatprep.subr.bf16.mxu0 0
    %5904 = vmatpush1.bf16.msra.mxu0 %v5778
    %5905 = vmatprep.subr.bf16.mxu0 0
    %5906 = vmatpush1.bf16.msra.mxu0 %v5777
    %5907 = vmatprep.subr.bf16.mxu0 0
    %5908 = vmatpush1.bf16.msra.mxu0 %v5776
    %5909 = vmatprep.subr.bf16.mxu0 0
    %5910 = vmatpush1.bf16.msra.mxu0 %v5775
    %5911 = vmatprep.subr.bf16.mxu0 0
    %5912 = vmatpush1.bf16.msra.mxu0 %v5774
    %5913 = vmatprep.subr.bf16.mxu0 0
    %5914 = vmatpush1.bf16.msra.mxu0 %v5773
    %5915 = vmatprep.subr.bf16.mxu0 0
    %5916 = vmatpush1.bf16.msra.mxu0 %v5772
    %5917 = vmatprep.subr.bf16.mxu0 0
    %5918 = vmatpush1.bf16.msra.mxu0 %v5771
    %5919 = vmatprep.subr.bf16.mxu0 0
    %5920 = vmatpush2.bf16.msra.mxu0 %v5786
    %5921 = vmatprep.subr.bf16.mxu0 0
    %5922 = vmatpush2.bf16.msra.mxu0 %v5785
    %5923 = vmatprep.subr.bf16.mxu0 0
    %5924 = vmatpush2.bf16.msra.mxu0 %v5784
    %5925 = vmatprep.subr.bf16.mxu0 0
    %5926 = vmatpush2.bf16.msra.mxu0 %v5783
    %5927 = vmatprep.subr.bf16.mxu0 0
    %5928 = vmatpush2.bf16.msra.mxu0 %v5782
    %5929 = vmatprep.subr.bf16.mxu0 0
    %5930 = vmatpush2.bf16.msra.mxu0 %v5781
    %5931 = vmatprep.subr.bf16.mxu0 0
    %5932 = vmatpush2.bf16.msra.mxu0 %v5780
    %5933 = vmatprep.subr.bf16.mxu0 0
    %5934 = vmatpush2.bf16.msra.mxu0 %v5779
    %5935 = vmatprep.mubr.bf16.mxu0 %v5568
    %5936 = vmatmul.mubr.bf16.gmra.mxu0 %v5312
    %v5937 = vpop.f32.mrf.mxu0
    %v5938 = vadd.f32 0.0, %v5937
    %v5939 = vpop.f32.mrf.mxu0
    %v5940 = vpop.f32.mrf.mxu0
    %v5941 = vadd.f32 0.0, %v5940
    %v5942 = vpop.f32.mrf.mxu0
    %5943 = vmatprep.mubr.bf16.mxu0 %v5571
    %5944 = vmatmul.mubr.bf16.gmra.mxu0 %v5315
    %v5945 = vpop.f32.mrf.mxu0
    %v5946 = vadd.f32 0.0, %v5945
    %v5947 = vpop.f32.mrf.mxu0
    %v5948 = vpop.f32.mrf.mxu0
    %v5949 = vadd.f32 0.0, %v5948
    %v5950 = vpop.f32.mrf.mxu0
    %5951 = vmatprep.mubr.bf16.mxu0 %v5574
    %5952 = vmatmul.mubr.bf16.gmra.mxu0 %v5318
    %v5953 = vpop.f32.mrf.mxu0
    %v5954 = vadd.f32 0.0, %v5953
    %v5955 = vpop.f32.mrf.mxu0
    %v5956 = vpop.f32.mrf.mxu0
    %v5957 = vadd.f32 0.0, %v5956
    %v5958 = vpop.f32.mrf.mxu0
    %5959 = vmatprep.mubr.bf16.mxu0 %v5577
    %5960 = vmatmul.mubr.bf16.gmra.mxu0 %v5321
    %v5961 = vpop.f32.mrf.mxu0
    %v5962 = vadd.f32 0.0, %v5961
    %v5963 = vpop.f32.mrf.mxu0
    %v5964 = vpop.f32.mrf.mxu0
    %v5965 = vadd.f32 0.0, %v5964
    %v5966 = vpop.f32.mrf.mxu0
    %5967 = vmatprep.mubr.bf16.mxu0 %v5580
    %5968 = vmatmul.mubr.bf16.gmra.mxu0 %v5324
    %v5969 = vpop.f32.mrf.mxu0
    %v5970 = vadd.f32 0.0, %v5969
    %v5971 = vpop.f32.mrf.mxu0
    %v5972 = vpop.f32.mrf.mxu0
    %v5973 = vadd.f32 0.0, %v5972
    %v5974 = vpop.f32.mrf.mxu0
    %5975 = vmatprep.mubr.bf16.mxu0 %v5583
    %5976 = vmatmul.mubr.bf16.gmra.mxu0 %v5327
    %v5977 = vpop.f32.mrf.mxu0
    %v5978 = vadd.f32 0.0, %v5977
    %v5979 = vpop.f32.mrf.mxu0
    %v5980 = vpop.f32.mrf.mxu0
    %v5981 = vadd.f32 0.0, %v5980
    %v5982 = vpop.f32.mrf.mxu0
    %5983 = vmatprep.mubr.bf16.mxu0 %v5586
    %5984 = vmatmul.mubr.bf16.gmra.mxu0 %v5330
    %v5985 = vpop.f32.mrf.mxu0
    %v5986 = vadd.f32 0.0, %v5985
    %v5987 = vpop.f32.mrf.mxu0
    %v5988 = vpop.f32.mrf.mxu0
    %v5989 = vadd.f32 0.0, %v5988
    %v5990 = vpop.f32.mrf.mxu0
    %5991 = vmatprep.mubr.bf16.mxu0 %v5589
    %5992 = vmatmul.mubr.bf16.gmra.mxu0 %v5333
    %v5993 = vpop.f32.mrf.mxu0
    %v5994 = vadd.f32 0.0, %v5993
    %v5995 = vpop.f32.mrf.mxu0
    %v5996 = vpop.f32.mrf.mxu0
    %v5997 = vadd.f32 0.0, %v5996
    %v5998 = vpop.f32.mrf.mxu0
    %5999 = vmatprep.mubr.bf16.mxu0 %v5592
    %6000 = vmatmul.mubr.bf16.gmra.mxu0 %v5336
    %v6001 = vpop.f32.mrf.mxu0
    %v6002 = vadd.f32 0.0, %v6001
    %v6003 = vpop.f32.mrf.mxu0
    %v6004 = vpop.f32.mrf.mxu0
    %v6005 = vadd.f32 0.0, %v6004
    %v6006 = vpop.f32.mrf.mxu0
    %6007 = vmatprep.mubr.bf16.mxu0 %v5595
    %6008 = vmatmul.mubr.bf16.gmra.mxu0 %v5339
    %v6009 = vpop.f32.mrf.mxu0
    %v6010 = vadd.f32 0.0, %v6009
    %v6011 = vpop.f32.mrf.mxu0
    %v6012 = vpop.f32.mrf.mxu0
    %v6013 = vadd.f32 0.0, %v6012
    %v6014 = vpop.f32.mrf.mxu0
    %6015 = vmatprep.mubr.bf16.mxu0 %v5598
    %6016 = vmatmul.mubr.bf16.gmra.mxu0 %v5342
    %v6017 = vpop.f32.mrf.mxu0
    %v6018 = vadd.f32 0.0, %v6017
    %v6019 = vpop.f32.mrf.mxu0
    %v6020 = vpop.f32.mrf.mxu0
    %v6021 = vadd.f32 0.0, %v6020
    %v6022 = vpop.f32.mrf.mxu0
    %6023 = vmatprep.mubr.bf16.mxu0 %v5601
    %6024 = vmatmul.mubr.bf16.gmra.mxu0 %v5345
    %v6025 = vpop.f32.mrf.mxu0
    %v6026 = vadd.f32 0.0, %v6025
    %v6027 = vpop.f32.mrf.mxu0
    %v6028 = vpop.f32.mrf.mxu0
    %v6029 = vadd.f32 0.0, %v6028
    %v6030 = vpop.f32.mrf.mxu0
    %6031 = vmatprep.mubr.bf16.mxu0 %v5604
    %6032 = vmatmul.mubr.bf16.gmra.mxu0 %v5348
    %v6033 = vpop.f32.mrf.mxu0
    %v6034 = vadd.f32 0.0, %v6033
    %v6035 = vpop.f32.mrf.mxu0
    %v6036 = vpop.f32.mrf.mxu0
    %v6037 = vadd.f32 0.0, %v6036
    %v6038 = vpop.f32.mrf.mxu0
    %6039 = vmatprep.mubr.bf16.mxu0 %v5607
    %6040 = vmatmul.mubr.bf16.gmra.mxu0 %v5351
    %v6041 = vpop.f32.mrf.mxu0
    %v6042 = vadd.f32 0.0, %v6041
    %v6043 = vpop.f32.mrf.mxu0
    %v6044 = vpop.f32.mrf.mxu0
    %v6045 = vadd.f32 0.0, %v6044
    %v6046 = vpop.f32.mrf.mxu0
    %6047 = vmatprep.mubr.bf16.mxu0 %v5610
    %6048 = vmatmul.mubr.bf16.gmra.mxu0 %v5354
    %v6049 = vpop.f32.mrf.mxu0
    %v6050 = vadd.f32 0.0, %v6049
    %v6051 = vpop.f32.mrf.mxu0
    %v6052 = vpop.f32.mrf.mxu0
    %v6053 = vadd.f32 0.0, %v6052
    %v6054 = vpop.f32.mrf.mxu0
    %6055 = vmatprep.mubr.bf16.mxu0 %v5613
    %6056 = vmatmul.mubr.bf16.gmra.mxu0 %v5357
    %v6057 = vpop.f32.mrf.mxu0
    %v6058 = vadd.f32 0.0, %v6057
    %v6059 = vpop.f32.mrf.mxu0
    %v6060 = vpop.f32.mrf.mxu0
    %v6061 = vadd.f32 0.0, %v6060
    %v6062 = vpop.f32.mrf.mxu0
    %6063 = vmatprep.mubr.bf16.mxu0 %v5616
    %6064 = vmatmul.mubr.bf16.gmra.mxu0 %v5360
    %v6065 = vpop.f32.mrf.mxu0
    %v6066 = vadd.f32 0.0, %v6065
    %v6067 = vpop.f32.mrf.mxu0
    %v6068 = vpop.f32.mrf.mxu0
    %v6069 = vadd.f32 0.0, %v6068
    %v6070 = vpop.f32.mrf.mxu0
    %6071 = vmatprep.mubr.bf16.mxu0 %v5619
    %6072 = vmatmul.mubr.bf16.gmra.mxu0 %v5363
    %v6073 = vpop.f32.mrf.mxu0
    %v6074 = vadd.f32 0.0, %v6073
    %v6075 = vpop.f32.mrf.mxu0
    %v6076 = vpop.f32.mrf.mxu0
    %v6077 = vadd.f32 0.0, %v6076
    %v6078 = vpop.f32.mrf.mxu0
    %6079 = vmatprep.mubr.bf16.mxu0 %v5622
    %6080 = vmatmul.mubr.bf16.gmra.mxu0 %v5366
    %v6081 = vpop.f32.mrf.mxu0
    %v6082 = vadd.f32 0.0, %v6081
    %v6083 = vpop.f32.mrf.mxu0
    %v6084 = vpop.f32.mrf.mxu0
    %v6085 = vadd.f32 0.0, %v6084
    %v6086 = vpop.f32.mrf.mxu0
    %6087 = vmatprep.mubr.bf16.mxu0 %v5625
    %6088 = vmatmul.mubr.bf16.gmra.mxu0 %v5369
    %v6089 = vpop.f32.mrf.mxu0
    %v6090 = vadd.f32 0.0, %v6089
    %v6091 = vpop.f32.mrf.mxu0
    %v6092 = vpop.f32.mrf.mxu0
    %v6093 = vadd.f32 0.0, %v6092
    %v6094 = vpop.f32.mrf.mxu0
    %6095 = vmatprep.mubr.bf16.mxu0 %v5628
    %6096 = vmatmul.mubr.bf16.gmra.mxu0 %v5372
    %v6097 = vpop.f32.mrf.mxu0
    %v6098 = vadd.f32 0.0, %v6097
    %v6099 = vpop.f32.mrf.mxu0
    %v6100 = vpop.f32.mrf.mxu0
    %v6101 = vadd.f32 0.0, %v6100
    %v6102 = vpop.f32.mrf.mxu0
    %6103 = vmatprep.mubr.bf16.mxu0 %v5631
    %6104 = vmatmul.mubr.bf16.gmra.mxu0 %v5375
    %v6105 = vpop.f32.mrf.mxu0
    %v6106 = vadd.f32 0.0, %v6105
    %v6107 = vpop.f32.mrf.mxu0
    %v6108 = vpop.f32.mrf.mxu0
    %v6109 = vadd.f32 0.0, %v6108
    %v6110 = vpop.f32.mrf.mxu0
    %6111 = vmatprep.mubr.bf16.mxu0 %v5634
    %6112 = vmatmul.mubr.bf16.gmra.mxu0 %v5378
    %v6113 = vpop.f32.mrf.mxu0
    %v6114 = vadd.f32 0.0, %v6113
    %v6115 = vpop.f32.mrf.mxu0
    %v6116 = vpop.f32.mrf.mxu0
    %v6117 = vadd.f32 0.0, %v6116
    %v6118 = vpop.f32.mrf.mxu0
    %6119 = vmatprep.mubr.bf16.mxu0 %v5637
    %6120 = vmatmul.mubr.bf16.gmra.mxu0 %v5381
    %v6121 = vpop.f32.mrf.mxu0
    %v6122 = vadd.f32 0.0, %v6121
    %v6123 = vpop.f32.mrf.mxu0
    %v6124 = vpop.f32.mrf.mxu0
    %v6125 = vadd.f32 0.0, %v6124
    %v6126 = vpop.f32.mrf.mxu0
    %6127 = vmatprep.mubr.bf16.mxu0 %v5640
    %6128 = vmatmul.mubr.bf16.gmra.mxu0 %v5384
    %v6129 = vpop.f32.mrf.mxu0
    %v6130 = vadd.f32 0.0, %v6129
    %v6131 = vpop.f32.mrf.mxu0
    %v6132 = vpop.f32.mrf.mxu0
    %v6133 = vadd.f32 0.0, %v6132
    %v6134 = vpop.f32.mrf.mxu0
    %6135 = vmatprep.mubr.bf16.mxu0 %v5643
    %6136 = vmatmul.mubr.bf16.gmra.mxu0 %v5387
    %v6137 = vpop.f32.mrf.mxu0
    %v6138 = vadd.f32 0.0, %v6137
    %v6139 = vpop.f32.mrf.mxu0
    %v6140 = vpop.f32.mrf.mxu0
    %v6141 = vadd.f32 0.0, %v6140
    %v6142 = vpop.f32.mrf.mxu0
    %6143 = vmatprep.mubr.bf16.mxu0 %v5646
    %6144 = vmatmul.mubr.bf16.gmra.mxu0 %v5390
    %v6145 = vpop.f32.mrf.mxu0
    %v6146 = vadd.f32 0.0, %v6145
    %v6147 = vpop.f32.mrf.mxu0
    %v6148 = vpop.f32.mrf.mxu0
    %v6149 = vadd.f32 0.0, %v6148
    %v6150 = vpop.f32.mrf.mxu0
    %6151 = vmatprep.mubr.bf16.mxu0 %v5649
    %6152 = vmatmul.mubr.bf16.gmra.mxu0 %v5393
    %v6153 = vpop.f32.mrf.mxu0
    %v6154 = vadd.f32 0.0, %v6153
    %v6155 = vpop.f32.mrf.mxu0
    %v6156 = vpop.f32.mrf.mxu0
    %v6157 = vadd.f32 0.0, %v6156
    %v6158 = vpop.f32.mrf.mxu0
    %6159 = vmatprep.mubr.bf16.mxu0 %v5652
    %6160 = vmatmul.mubr.bf16.gmra.mxu0 %v5396
    %v6161 = vpop.f32.mrf.mxu0
    %v6162 = vadd.f32 0.0, %v6161
    %v6163 = vpop.f32.mrf.mxu0
    %v6164 = vpop.f32.mrf.mxu0
    %v6165 = vadd.f32 0.0, %v6164
    %v6166 = vpop.f32.mrf.mxu0
    %6167 = vmatprep.mubr.bf16.mxu0 %v5655
    %6168 = vmatmul.mubr.bf16.gmra.mxu0 %v5399
    %v6169 = vpop.f32.mrf.mxu0
    %v6170 = vadd.f32 0.0, %v6169
    %v6171 = vpop.f32.mrf.mxu0
    %v6172 = vpop.f32.mrf.mxu0
    %v6173 = vadd.f32 0.0, %v6172
    %v6174 = vpop.f32.mrf.mxu0
    %6175 = vmatprep.mubr.bf16.mxu0 %v5658
    %6176 = vmatmul.mubr.bf16.gmra.mxu0 %v5402
    %v6177 = vpop.f32.mrf.mxu0
    %v6178 = vadd.f32 0.0, %v6177
    %v6179 = vpop.f32.mrf.mxu0
    %v6180 = vpop.f32.mrf.mxu0
    %v6181 = vadd.f32 0.0, %v6180
    %v6182 = vpop.f32.mrf.mxu0
    %6183 = vmatprep.mubr.bf16.mxu0 %v5661
    %6184 = vmatmul.mubr.bf16.gmra.mxu0 %v5405
    %v6185 = vpop.f32.mrf.mxu0
    %v6186 = vadd.f32 0.0, %v6185
    %v6187 = vpop.f32.mrf.mxu0
    %v6188 = vpop.f32.mrf.mxu0
    %v6189 = vadd.f32 0.0, %v6188
    %v6190 = vpop.f32.mrf.mxu0
    %6191 = vdwg.mxu0
    %6192 = vmatprep.subr.bf16.mxu0 0
    %6193 = vmatpush1.bf16.msra.mxu0 0
    %6194 = vmatprep.subr.bf16.mxu0 0
    %6195 = vmatpush1.bf16.msra.mxu0 0
    %6196 = vmatprep.subr.bf16.mxu0 0
    %6197 = vmatpush1.bf16.msra.mxu0 0
    %6198 = vmatprep.subr.bf16.mxu0 0
    %6199 = vmatpush1.bf16.msra.mxu0 0
    %6200 = vmatprep.subr.bf16.mxu0 0
    %6201 = vmatpush1.bf16.msra.mxu0 0
    %6202 = vmatprep.subr.bf16.mxu0 0
    %6203 = vmatpush1.bf16.msra.mxu0 0
    %6204 = vmatprep.subr.bf16.mxu0 0
    %6205 = vmatpush1.bf16.msra.mxu0 %v5788
    %6206 = vmatprep.subr.bf16.mxu0 0
    %6207 = vmatpush1.bf16.msra.mxu0 %v5787
    %6208 = vmatprep.subr.bf16.mxu0 0
    %6209 = vmatpush2.bf16.msra.mxu0 0
    %6210 = vmatprep.subr.bf16.mxu0 0
    %6211 = vmatpush2.bf16.msra.mxu0 0
    %6212 = vmatprep.subr.bf16.mxu0 0
    %6213 = vmatpush2.bf16.msra.mxu0 0
    %6214 = vmatprep.subr.bf16.mxu0 0
    %6215 = vmatpush2.bf16.msra.mxu0 0
    %6216 = vmatprep.subr.bf16.mxu0 0
    %6217 = vmatpush2.bf16.msra.mxu0 0
    %6218 = vmatprep.subr.bf16.mxu0 0
    %6219 = vmatpush2.bf16.msra.mxu0 0
    %6220 = vmatprep.subr.bf16.mxu0 0
    %6221 = vmatpush2.bf16.msra.mxu0 0
    %6222 = vmatprep.subr.bf16.mxu0 0
    %6223 = vmatpush2.bf16.msra.mxu0 0
    %6224 = vmatprep.mubr.bf16.mxu0 0
    %6225 = vmatmul.mubr.bf16.gmra.mxu0 %v5808
    %v6226 = vpop.f32.mrf.mxu0
    %v6227 = vadd.f32 %v5938, %v6226
    %v6228 = vpop.f32.mrf.mxu0
    %v6229 = vpop.f32.mrf.mxu0
    %v6230 = vadd.f32 %v5941, %v6229
    %v6231 = vpop.f32.mrf.mxu0
    %6232 = vmatprep.mubr.bf16.mxu0 0
    %6233 = vmatmul.mubr.bf16.gmra.mxu0 %v5811
    %v6234 = vpop.f32.mrf.mxu0
    %v6235 = vadd.f32 %v5946, %v6234
    %v6236 = vpop.f32.mrf.mxu0
    %v6237 = vpop.f32.mrf.mxu0
    %v6238 = vadd.f32 %v5949, %v6237
    %v6239 = vpop.f32.mrf.mxu0
    %6240 = vmatprep.mubr.bf16.mxu0 0
    %6241 = vmatmul.mubr.bf16.gmra.mxu0 %v5814
    %v6242 = vpop.f32.mrf.mxu0
    %v6243 = vadd.f32 %v5954, %v6242
    %v6244 = vpop.f32.mrf.mxu0
    %v6245 = vpop.f32.mrf.mxu0
    %v6246 = vadd.f32 %v5957, %v6245
    %v6247 = vpop.f32.mrf.mxu0
    %6248 = vmatprep.mubr.bf16.mxu0 0
    %6249 = vmatmul.mubr.bf16.gmra.mxu0 %v5817
    %v6250 = vpop.f32.mrf.mxu0
    %v6251 = vadd.f32 %v5962, %v6250
    %v6252 = vpop.f32.mrf.mxu0
    %v6253 = vpop.f32.mrf.mxu0
    %v6254 = vadd.f32 %v5965, %v6253
    %v6255 = vpop.f32.mrf.mxu0
    %6256 = vmatprep.mubr.bf16.mxu0 0
    %6257 = vmatmul.mubr.bf16.gmra.mxu0 %v5820
    %v6258 = vpop.f32.mrf.mxu0
    %v6259 = vadd.f32 %v5970, %v6258
    %v6260 = vpop.f32.mrf.mxu0
    %v6261 = vpop.f32.mrf.mxu0
    %v6262 = vadd.f32 %v5973, %v6261
    %v6263 = vpop.f32.mrf.mxu0
    %6264 = vmatprep.mubr.bf16.mxu0 0
    %6265 = vmatmul.mubr.bf16.gmra.mxu0 %v5823
    %v6266 = vpop.f32.mrf.mxu0
    %v6267 = vadd.f32 %v5978, %v6266
    %v6268 = vpop.f32.mrf.mxu0
    %v6269 = vpop.f32.mrf.mxu0
    %v6270 = vadd.f32 %v5981, %v6269
    %v6271 = vpop.f32.mrf.mxu0
    %6272 = vmatprep.mubr.bf16.mxu0 0
    %6273 = vmatmul.mubr.bf16.gmra.mxu0 %v5826
    %v6274 = vpop.f32.mrf.mxu0
    %v6275 = vadd.f32 %v5986, %v6274
    %v6276 = vpop.f32.mrf.mxu0
    %v6277 = vpop.f32.mrf.mxu0
    %v6278 = vadd.f32 %v5989, %v6277
    %v6279 = vpop.f32.mrf.mxu0
    %6280 = vmatprep.mubr.bf16.mxu0 0
    %6281 = vmatmul.mubr.bf16.gmra.mxu0 %v5829
    %v6282 = vpop.f32.mrf.mxu0
    %v6283 = vadd.f32 %v5994, %v6282
    %v6284 = vpop.f32.mrf.mxu0
    %v6285 = vpop.f32.mrf.mxu0
    %v6286 = vadd.f32 %v5997, %v6285
    %v6287 = vpop.f32.mrf.mxu0
    %6288 = vmatprep.mubr.bf16.mxu0 0
    %6289 = vmatmul.mubr.bf16.gmra.mxu0 %v5832
    %v6290 = vpop.f32.mrf.mxu0
    %v6291 = vadd.f32 %v6002, %v6290
    %v6292 = vpop.f32.mrf.mxu0
    %v6293 = vpop.f32.mrf.mxu0
    %v6294 = vadd.f32 %v6005, %v6293
    %v6295 = vpop.f32.mrf.mxu0
    %6296 = vmatprep.mubr.bf16.mxu0 0
    %6297 = vmatmul.mubr.bf16.gmra.mxu0 %v5835
    %v6298 = vpop.f32.mrf.mxu0
    %v6299 = vadd.f32 %v6010, %v6298
    %v6300 = vpop.f32.mrf.mxu0
    %v6301 = vpop.f32.mrf.mxu0
    %v6302 = vadd.f32 %v6013, %v6301
    %v6303 = vpop.f32.mrf.mxu0
    %6304 = vmatprep.mubr.bf16.mxu0 0
    %6305 = vmatmul.mubr.bf16.gmra.mxu0 %v5838
    %v6306 = vpop.f32.mrf.mxu0
    %v6307 = vadd.f32 %v6018, %v6306
    %v6308 = vpop.f32.mrf.mxu0
    %v6309 = vpop.f32.mrf.mxu0
    %v6310 = vadd.f32 %v6021, %v6309
    %v6311 = vpop.f32.mrf.mxu0
    %6312 = vmatprep.mubr.bf16.mxu0 0
    %6313 = vmatmul.mubr.bf16.gmra.mxu0 %v5841
    %v6314 = vpop.f32.mrf.mxu0
    %v6315 = vadd.f32 %v6026, %v6314
    %v6316 = vpop.f32.mrf.mxu0
    %v6317 = vpop.f32.mrf.mxu0
    %v6318 = vadd.f32 %v6029, %v6317
    %v6319 = vpop.f32.mrf.mxu0
    %6320 = vmatprep.mubr.bf16.mxu0 0
    %6321 = vmatmul.mubr.bf16.gmra.mxu0 %v5844
    %v6322 = vpop.f32.mrf.mxu0
    %v6323 = vadd.f32 %v6034, %v6322
    %v6324 = vpop.f32.mrf.mxu0
    %v6325 = vpop.f32.mrf.mxu0
    %v6326 = vadd.f32 %v6037, %v6325
    %v6327 = vpop.f32.mrf.mxu0
    %6328 = vmatprep.mubr.bf16.mxu0 0
    %6329 = vmatmul.mubr.bf16.gmra.mxu0 %v5847
    %v6330 = vpop.f32.mrf.mxu0
    %v6331 = vadd.f32 %v6042, %v6330
    %v6332 = vpop.f32.mrf.mxu0
    %v6333 = vpop.f32.mrf.mxu0
    %v6334 = vadd.f32 %v6045, %v6333
    %v6335 = vpop.f32.mrf.mxu0
    %6336 = vmatprep.mubr.bf16.mxu0 0
    %6337 = vmatmul.mubr.bf16.gmra.mxu0 %v5850
    %v6338 = vpop.f32.mrf.mxu0
    %v6339 = vadd.f32 %v6050, %v6338
    %v6340 = vpop.f32.mrf.mxu0
    %v6341 = vpop.f32.mrf.mxu0
    %v6342 = vadd.f32 %v6053, %v6341
    %v6343 = vpop.f32.mrf.mxu0
    %6344 = vmatprep.mubr.bf16.mxu0 0
    %6345 = vmatmul.mubr.bf16.gmra.mxu0 %v5853
    %v6346 = vpop.f32.mrf.mxu0
    %v6347 = vadd.f32 %v6058, %v6346
    %v6348 = vpop.f32.mrf.mxu0
    %v6349 = vpop.f32.mrf.mxu0
    %v6350 = vadd.f32 %v6061, %v6349
    %v6351 = vpop.f32.mrf.mxu0
    %6352 = vmatprep.mubr.bf16.mxu0 0
    %6353 = vmatmul.mubr.bf16.gmra.mxu0 %v5856
    %v6354 = vpop.f32.mrf.mxu0
    %v6355 = vadd.f32 %v6066, %v6354
    %v6356 = vpop.f32.mrf.mxu0
    %v6357 = vpop.f32.mrf.mxu0
    %v6358 = vadd.f32 %v6069, %v6357
    %v6359 = vpop.f32.mrf.mxu0
    %6360 = vmatprep.mubr.bf16.mxu0 0
    %6361 = vmatmul.mubr.bf16.gmra.mxu0 %v5859
    %v6362 = vpop.f32.mrf.mxu0
    %v6363 = vadd.f32 %v6074, %v6362
    %v6364 = vpop.f32.mrf.mxu0
    %v6365 = vpop.f32.mrf.mxu0
    %v6366 = vadd.f32 %v6077, %v6365
    %v6367 = vpop.f32.mrf.mxu0
    %6368 = vmatprep.mubr.bf16.mxu0 0
    %6369 = vmatmul.mubr.bf16.gmra.mxu0 %v5862
    %v6370 = vpop.f32.mrf.mxu0
    %v6371 = vadd.f32 %v6082, %v6370
    %v6372 = vpop.f32.mrf.mxu0
    %v6373 = vpop.f32.mrf.mxu0
    %v6374 = vadd.f32 %v6085, %v6373
    %v6375 = vpop.f32.mrf.mxu0
    %6376 = vmatprep.mubr.bf16.mxu0 0
    %6377 = vmatmul.mubr.bf16.gmra.mxu0 %v5865
    %v6378 = vpop.f32.mrf.mxu0
    %v6379 = vadd.f32 %v6090, %v6378
    %v6380 = vpop.f32.mrf.mxu0
    %v6381 = vpop.f32.mrf.mxu0
    %v6382 = vadd.f32 %v6093, %v6381
    %v6383 = vpop.f32.mrf.mxu0
    %6384 = vmatprep.mubr.bf16.mxu0 0
    %6385 = vmatmul.mubr.bf16.gmra.mxu0 %v5868
    %v6386 = vpop.f32.mrf.mxu0
    %v6387 = vadd.f32 %v6098, %v6386
    %v6388 = vpop.f32.mrf.mxu0
    %v6389 = vpop.f32.mrf.mxu0
    %v6390 = vadd.f32 %v6101, %v6389
    %v6391 = vpop.f32.mrf.mxu0
    %6392 = vmatprep.mubr.bf16.mxu0 0
    %6393 = vmatmul.mubr.bf16.gmra.mxu0 %v5871
    %v6394 = vpop.f32.mrf.mxu0
    %v6395 = vadd.f32 %v6106, %v6394
    %v6396 = vpop.f32.mrf.mxu0
    %v6397 = vpop.f32.mrf.mxu0
    %v6398 = vadd.f32 %v6109, %v6397
    %v6399 = vpop.f32.mrf.mxu0
    %6400 = vmatprep.mubr.bf16.mxu0 0
    %6401 = vmatmul.mubr.bf16.gmra.mxu0 %v5874
    %v6402 = vpop.f32.mrf.mxu0
    %v6403 = vadd.f32 %v6114, %v6402
    %v6404 = vpop.f32.mrf.mxu0
    %v6405 = vpop.f32.mrf.mxu0
    %v6406 = vadd.f32 %v6117, %v6405
    %v6407 = vpop.f32.mrf.mxu0
    %6408 = vmatprep.mubr.bf16.mxu0 0
    %6409 = vmatmul.mubr.bf16.gmra.mxu0 %v5877
    %v6410 = vpop.f32.mrf.mxu0
    %v6411 = vadd.f32 %v6122, %v6410
    %v6412 = vpop.f32.mrf.mxu0
    %v6413 = vpop.f32.mrf.mxu0
    %v6414 = vadd.f32 %v6125, %v6413
    %v6415 = vpop.f32.mrf.mxu0
    %6416 = vmatprep.mubr.bf16.mxu0 0
    %6417 = vmatmul.mubr.bf16.gmra.mxu0 %v5880
    %v6418 = vpop.f32.mrf.mxu0
    %v6419 = vadd.f32 %v6130, %v6418
    %v6420 = vpop.f32.mrf.mxu0
    %v6421 = vpop.f32.mrf.mxu0
    %v6422 = vadd.f32 %v6133, %v6421
    %v6423 = vpop.f32.mrf.mxu0
    %6424 = vmatprep.mubr.bf16.mxu0 0
    %6425 = vmatmul.mubr.bf16.gmra.mxu0 %v5883
    %v6426 = vpop.f32.mrf.mxu0
    %v6427 = vadd.f32 %v6138, %v6426
    %v6428 = vpop.f32.mrf.mxu0
    %v6429 = vpop.f32.mrf.mxu0
    %v6430 = vadd.f32 %v6141, %v6429
    %v6431 = vpop.f32.mrf.mxu0
    %6432 = vmatprep.mubr.bf16.mxu0 0
    %6433 = vmatmul.mubr.bf16.gmra.mxu0 %v5886
    %v6434 = vpop.f32.mrf.mxu0
    %v6435 = vadd.f32 %v6146, %v6434
    %v6436 = vpop.f32.mrf.mxu0
    %v6437 = vpop.f32.mrf.mxu0
    %v6438 = vadd.f32 %v6149, %v6437
    %v6439 = vpop.f32.mrf.mxu0
    %6440 = vmatprep.mubr.bf16.mxu0 0
    %6441 = vmatmul.mubr.bf16.gmra.mxu0 %v5889
    %v6442 = vpop.f32.mrf.mxu0
    %v6443 = vadd.f32 %v6154, %v6442
    %v6444 = vpop.f32.mrf.mxu0
    %v6445 = vpop.f32.mrf.mxu0
    %v6446 = vadd.f32 %v6157, %v6445
    %v6447 = vpop.f32.mrf.mxu0
    %6448 = vmatprep.mubr.bf16.mxu0 0
    %6449 = vmatmul.mubr.bf16.gmra.mxu0 %v5892
    %v6450 = vpop.f32.mrf.mxu0
    %v6451 = vadd.f32 %v6162, %v6450
    %v6452 = vpop.f32.mrf.mxu0
    %v6453 = vpop.f32.mrf.mxu0
    %v6454 = vadd.f32 %v6165, %v6453
    %v6455 = vpop.f32.mrf.mxu0
    %6456 = vmatprep.mubr.bf16.mxu0 0
    %6457 = vmatmul.mubr.bf16.gmra.mxu0 %v5895
    %v6458 = vpop.f32.mrf.mxu0
    %v6459 = vadd.f32 %v6170, %v6458
    %v6460 = vpop.f32.mrf.mxu0
    %v6461 = vpop.f32.mrf.mxu0
    %v6462 = vadd.f32 %v6173, %v6461
    %v6463 = vpop.f32.mrf.mxu0
    %6464 = vmatprep.mubr.bf16.mxu0 0
    %6465 = vmatmul.mubr.bf16.gmra.mxu0 %v5898
    %v6466 = vpop.f32.mrf.mxu0
    %v6467 = vadd.f32 %v6178, %v6466
    %v6468 = vpop.f32.mrf.mxu0
    %v6469 = vpop.f32.mrf.mxu0
    %v6470 = vadd.f32 %v6181, %v6469
    %v6471 = vpop.f32.mrf.mxu0
    %6472 = vmatprep.mubr.bf16.mxu0 0
    %6473 = vmatmul.mubr.bf16.gmra.mxu0 %v5901
    %v6474 = vpop.f32.mrf.mxu0
    %v6475 = vadd.f32 %v6186, %v6474
    %v6476 = vpop.f32.mrf.mxu0
    %v6477 = vpop.f32.mrf.mxu0
    %v6478 = vadd.f32 %v6189, %v6477
    %v6479 = vpop.f32.mrf.mxu0
    %6480 = vdwg.mxu0
    %v6481 = vld [vmem:[%s5] sm:$0x1]
    %v6482 = vld [vmem:[%s6] sm:$0x1]
    %v6483 = vsel %vm92, %v6227, 0.0
    %v6484 = vsel %vm92, %v6230, 0.0
    %v6485 = vadd.f32 %v6483, %v6484
    %v6486 = vsel %vm92, %v6235, 0.0
    %v6487 = vadd.f32 %v6485, %v6486
    %v6488 = vsel %vm92, %v6238, 0.0
    %v6489 = vadd.f32 %v6487, %v6488
    %v6490 = vsel %vm92, %v6243, 0.0
    %v6491 = vadd.f32 %v6489, %v6490
    %v6492 = vsel %vm92, %v6246, 0.0
    %v6493 = vadd.f32 %v6491, %v6492
    %v6494 = vsel %vm92, %v6251, 0.0
    %v6495 = vadd.f32 %v6493, %v6494
    %v6496 = vsel %vm92, %v6254, 0.0
    %v6497 = vadd.f32 %v6495, %v6496
    %v6498 = vsel %vm92, %v6259, 0.0
    %v6499 = vadd.f32 %v6497, %v6498
    %v6500 = vsel %vm92, %v6262, 0.0
    %v6501 = vadd.f32 %v6499, %v6500
    %v6502 = vsel %vm92, %v6267, 0.0
    %v6503 = vadd.f32 %v6501, %v6502
    %v6504 = vsel %vm92, %v6270, 0.0
    %v6505 = vadd.f32 %v6503, %v6504
    %v6506 = vsel %vm92, %v6275, 0.0
    %v6507 = vadd.f32 %v6505, %v6506
    %v6508 = vsel %vm92, %v6278, 0.0
    %v6509 = vadd.f32 %v6507, %v6508
    %v6510 = vsel %vm92, %v6283, 0.0
    %v6511 = vadd.f32 %v6509, %v6510
    %v6512 = vsel %vm92, %v6286, 0.0
    %v6513 = vadd.f32 %v6511, %v6512
    %v6514 = vsel %vm92, %v6291, 0.0
    %v6515 = vadd.f32 %v6513, %v6514
    %v6516 = vsel %vm92, %v6294, 0.0
    %v6517 = vadd.f32 %v6515, %v6516
    %v6518 = vsel %vm92, %v6299, 0.0
    %v6519 = vadd.f32 %v6517, %v6518
    %v6520 = vsel %vm92, %v6302, 0.0
    %v6521 = vadd.f32 %v6519, %v6520
    %v6522 = vsel %vm92, %v6307, 0.0
    %v6523 = vadd.f32 %v6521, %v6522
    %v6524 = vsel %vm92, %v6310, 0.0
    %v6525 = vadd.f32 %v6523, %v6524
    %v6526 = vsel %vm92, %v6315, 0.0
    %v6527 = vadd.f32 %v6525, %v6526
    %v6528 = vsel %vm92, %v6318, 0.0
    %v6529 = vadd.f32 %v6527, %v6528
    %v6530 = vsel %vm92, %v6323, 0.0
    %v6531 = vadd.f32 %v6529, %v6530
    %v6532 = vsel %vm92, %v6326, 0.0
    %v6533 = vadd.f32 %v6531, %v6532
    %v6534 = vsel %vm92, %v6331, 0.0
    %v6535 = vadd.f32 %v6533, %v6534
    %v6536 = vsel %vm92, %v6334, 0.0
    %v6537 = vadd.f32 %v6535, %v6536
    %v6538 = vsel %vm92, %v6339, 0.0
    %v6539 = vadd.f32 %v6537, %v6538
    %v6540 = vsel %vm92, %v6342, 0.0
    %v6541 = vadd.f32 %v6539, %v6540
    %v6542 = vsel %vm92, %v6347, 0.0
    %v6543 = vadd.f32 %v6541, %v6542
    %v6544 = vsel %vm92, %v6350, 0.0
    %v6545 = vadd.f32 %v6543, %v6544
    %v6546 = vsel %vm92, %v6355, 0.0
    %v6547 = vadd.f32 %v6545, %v6546
    %v6548 = vsel %vm92, %v6358, 0.0
    %v6549 = vadd.f32 %v6547, %v6548
    %v6550 = vsel %vm92, %v6363, 0.0
    %v6551 = vadd.f32 %v6549, %v6550
    %v6552 = vsel %vm92, %v6366, 0.0
    %v6553 = vadd.f32 %v6551, %v6552
    %v6554 = vsel %vm92, %v6371, 0.0
    %v6555 = vadd.f32 %v6553, %v6554
    %v6556 = vsel %vm92, %v6374, 0.0
    %v6557 = vadd.f32 %v6555, %v6556
    %v6558 = vsel %vm92, %v6379, 0.0
    %v6559 = vadd.f32 %v6557, %v6558
    %v6560 = vsel %vm92, %v6382, 0.0
    %v6561 = vadd.f32 %v6559, %v6560
    %v6562 = vsel %vm92, %v6387, 0.0
    %v6563 = vadd.f32 %v6561, %v6562
    %v6564 = vsel %vm92, %v6390, 0.0
    %v6565 = vadd.f32 %v6563, %v6564
    %v6566 = vsel %vm92, %v6395, 0.0
    %v6567 = vadd.f32 %v6565, %v6566
    %v6568 = vsel %vm92, %v6398, 0.0
    %v6569 = vadd.f32 %v6567, %v6568
    %v6570 = vsel %vm92, %v6403, 0.0
    %v6571 = vadd.f32 %v6569, %v6570
    %v6572 = vsel %vm92, %v6406, 0.0
    %v6573 = vadd.f32 %v6571, %v6572
    %v6574 = vsel %vm92, %v6411, 0.0
    %v6575 = vadd.f32 %v6573, %v6574
    %v6576 = vsel %vm92, %v6414, 0.0
    %v6577 = vadd.f32 %v6575, %v6576
    %v6578 = vsel %vm92, %v6419, 0.0
    %v6579 = vadd.f32 %v6577, %v6578
    %v6580 = vsel %vm92, %v6422, 0.0
    %v6581 = vadd.f32 %v6579, %v6580
    %v6582 = vsel %vm92, %v6427, 0.0
    %v6583 = vadd.f32 %v6581, %v6582
    %v6584 = vsel %vm92, %v6430, 0.0
    %v6585 = vadd.f32 %v6583, %v6584
    %v6586 = vsel %vm92, %v6435, 0.0
    %v6587 = vadd.f32 %v6585, %v6586
    %v6588 = vsel %vm92, %v6438, 0.0
    %v6589 = vadd.f32 %v6587, %v6588
    %v6590 = vsel %vm92, %v6443, 0.0
    %v6591 = vadd.f32 %v6589, %v6590
    %v6592 = vsel %vm92, %v6446, 0.0
    %v6593 = vadd.f32 %v6591, %v6592
    %v6594 = vsel %vm92, %v6451, 0.0
    %v6595 = vadd.f32 %v6593, %v6594
    %v6596 = vsel %vm92, %v6454, 0.0
    %v6597 = vadd.f32 %v6595, %v6596
    %v6598 = vsel %vm92, %v6459, 0.0
    %v6599 = vadd.f32 %v6597, %v6598
    %v6600 = vsel %vm92, %v6462, 0.0
    %v6601 = vadd.f32 %v6599, %v6600
    %v6602 = vsel %vm92, %v6467, 0.0
    %v6603 = vadd.f32 %v6601, %v6602
    %v6604 = vsel %vm92, %v6470, 0.0
    %v6605 = vadd.f32 %v6603, %v6604
    %v6606 = vsel %vm92, %v6475, 0.0
    %v6607 = vadd.f32 %v6605, %v6606
    %v6608 = vsel %vm92, %v6478, 0.0
    %v6609 = vadd.f32 %v6607, %v6608
    %v6610 = vrot.slane %v6609, 4
    %v6611 = vadd.f32 %v6609, %v6610
    %v6612 = vrot.slane %v6611, 2
    %v6613 = vadd.f32 %v6611, %v6612
    %v6614 = vrot.slane %v6613, 1
    %v6615 = vadd.f32 %v6613, %v6614
    %v6616 = vmul.f32 %v6615, 0.001953125
    %v6617 = vsub.f32 %v6227, %v6616
    %v6618 = vsub.f32 %v6230, %v6616
    %v6619 = vsub.f32 %v6235, %v6616
    %v6620 = vsub.f32 %v6238, %v6616
    %v6621 = vsub.f32 %v6243, %v6616
    %v6622 = vsub.f32 %v6246, %v6616
    %v6623 = vsub.f32 %v6251, %v6616
    %v6624 = vsub.f32 %v6254, %v6616
    %v6625 = vsub.f32 %v6259, %v6616
    %v6626 = vsub.f32 %v6262, %v6616
    %v6627 = vsub.f32 %v6267, %v6616
    %v6628 = vsub.f32 %v6270, %v6616
    %v6629 = vsub.f32 %v6275, %v6616
    %v6630 = vsub.f32 %v6278, %v6616
    %v6631 = vsub.f32 %v6283, %v6616
    %v6632 = vsub.f32 %v6286, %v6616
    %v6633 = vsub.f32 %v6291, %v6616
    %v6634 = vsub.f32 %v6294, %v6616
    %v6635 = vsub.f32 %v6299, %v6616
    %v6636 = vsub.f32 %v6302, %v6616
    %v6637 = vsub.f32 %v6307, %v6616
    %v6638 = vsub.f32 %v6310, %v6616
    %v6639 = vsub.f32 %v6315, %v6616
    %v6640 = vsub.f32 %v6318, %v6616
    %v6641 = vsub.f32 %v6323, %v6616
    %v6642 = vsub.f32 %v6326, %v6616
    %v6643 = vsub.f32 %v6331, %v6616
    %v6644 = vsub.f32 %v6334, %v6616
    %v6645 = vsub.f32 %v6339, %v6616
    %v6646 = vsub.f32 %v6342, %v6616
    %v6647 = vsub.f32 %v6347, %v6616
    %v6648 = vsub.f32 %v6350, %v6616
    %v6649 = vsub.f32 %v6355, %v6616
    %v6650 = vsub.f32 %v6358, %v6616
    %v6651 = vsub.f32 %v6363, %v6616
    %v6652 = vsub.f32 %v6366, %v6616
    %v6653 = vsub.f32 %v6371, %v6616
    %v6654 = vsub.f32 %v6374, %v6616
    %v6655 = vsub.f32 %v6379, %v6616
    %v6656 = vsub.f32 %v6382, %v6616
    %v6657 = vsub.f32 %v6387, %v6616
    %v6658 = vsub.f32 %v6390, %v6616
    %v6659 = vsub.f32 %v6395, %v6616
    %v6660 = vsub.f32 %v6398, %v6616
    %v6661 = vsub.f32 %v6403, %v6616
    %v6662 = vsub.f32 %v6406, %v6616
    %v6663 = vsub.f32 %v6411, %v6616
    %v6664 = vsub.f32 %v6414, %v6616
    %v6665 = vsub.f32 %v6419, %v6616
    %v6666 = vsub.f32 %v6422, %v6616
    %v6667 = vsub.f32 %v6427, %v6616
    %v6668 = vsub.f32 %v6430, %v6616
    %v6669 = vsub.f32 %v6435, %v6616
    %v6670 = vsub.f32 %v6438, %v6616
    %v6671 = vsub.f32 %v6443, %v6616
    %v6672 = vsub.f32 %v6446, %v6616
    %v6673 = vsub.f32 %v6451, %v6616
    %v6674 = vsub.f32 %v6454, %v6616
    %v6675 = vsub.f32 %v6459, %v6616
    %v6676 = vsub.f32 %v6462, %v6616
    %v6677 = vsub.f32 %v6467, %v6616
    %v6678 = vsub.f32 %v6470, %v6616
    %v6679 = vsub.f32 %v6475, %v6616
    %v6680 = vsub.f32 %v6478, %v6616
    %v6681 = vmul.f32 %v6617, %v6617
    %v6682 = vmul.f32 %v6618, %v6618
    %v6683 = vmul.f32 %v6619, %v6619
    %v6684 = vmul.f32 %v6620, %v6620
    %v6685 = vmul.f32 %v6621, %v6621
    %v6686 = vmul.f32 %v6622, %v6622
    %v6687 = vmul.f32 %v6623, %v6623
    %v6688 = vmul.f32 %v6624, %v6624
    %v6689 = vmul.f32 %v6625, %v6625
    %v6690 = vmul.f32 %v6626, %v6626
    %v6691 = vmul.f32 %v6627, %v6627
    %v6692 = vmul.f32 %v6628, %v6628
    %v6693 = vmul.f32 %v6629, %v6629
    %v6694 = vmul.f32 %v6630, %v6630
    %v6695 = vmul.f32 %v6631, %v6631
    %v6696 = vmul.f32 %v6632, %v6632
    %v6697 = vmul.f32 %v6633, %v6633
    %v6698 = vmul.f32 %v6634, %v6634
    %v6699 = vmul.f32 %v6635, %v6635
    %v6700 = vmul.f32 %v6636, %v6636
    %v6701 = vmul.f32 %v6637, %v6637
    %v6702 = vmul.f32 %v6638, %v6638
    %v6703 = vmul.f32 %v6639, %v6639
    %v6704 = vmul.f32 %v6640, %v6640
    %v6705 = vmul.f32 %v6641, %v6641
    %v6706 = vmul.f32 %v6642, %v6642
    %v6707 = vmul.f32 %v6643, %v6643
    %v6708 = vmul.f32 %v6644, %v6644
    %v6709 = vmul.f32 %v6645, %v6645
    %v6710 = vmul.f32 %v6646, %v6646
    %v6711 = vmul.f32 %v6647, %v6647
    %v6712 = vmul.f32 %v6648, %v6648
    %v6713 = vmul.f32 %v6649, %v6649
    %v6714 = vmul.f32 %v6650, %v6650
    %v6715 = vmul.f32 %v6651, %v6651
    %v6716 = vmul.f32 %v6652, %v6652
    %v6717 = vmul.f32 %v6653, %v6653
    %v6718 = vmul.f32 %v6654, %v6654
    %v6719 = vmul.f32 %v6655, %v6655
    %v6720 = vmul.f32 %v6656, %v6656
    %v6721 = vmul.f32 %v6657, %v6657
    %v6722 = vmul.f32 %v6658, %v6658
    %v6723 = vmul.f32 %v6659, %v6659
    %v6724 = vmul.f32 %v6660, %v6660
    %v6725 = vmul.f32 %v6661, %v6661
    %v6726 = vmul.f32 %v6662, %v6662
    %v6727 = vmul.f32 %v6663, %v6663
    %v6728 = vmul.f32 %v6664, %v6664
    %v6729 = vmul.f32 %v6665, %v6665
    %v6730 = vmul.f32 %v6666, %v6666
    %v6731 = vmul.f32 %v6667, %v6667
    %v6732 = vmul.f32 %v6668, %v6668
    %v6733 = vmul.f32 %v6669, %v6669
    %v6734 = vmul.f32 %v6670, %v6670
    %v6735 = vmul.f32 %v6671, %v6671
    %v6736 = vmul.f32 %v6672, %v6672
    %v6737 = vmul.f32 %v6673, %v6673
    %v6738 = vmul.f32 %v6674, %v6674
    %v6739 = vmul.f32 %v6675, %v6675
    %v6740 = vmul.f32 %v6676, %v6676
    %v6741 = vmul.f32 %v6677, %v6677
    %v6742 = vmul.f32 %v6678, %v6678
    %v6743 = vmul.f32 %v6679, %v6679
    %v6744 = vmul.f32 %v6680, %v6680
    %v6745 = vsel %vm92, %v6681, 0.0
    %v6746 = vsel %vm92, %v6682, 0.0
    %v6747 = vadd.f32 %v6745, %v6746
    %v6748 = vsel %vm92, %v6683, 0.0
    %v6749 = vadd.f32 %v6747, %v6748
    %v6750 = vsel %vm92, %v6684, 0.0
    %v6751 = vadd.f32 %v6749, %v6750
    %v6752 = vsel %vm92, %v6685, 0.0
    %v6753 = vadd.f32 %v6751, %v6752
    %v6754 = vsel %vm92, %v6686, 0.0
    %v6755 = vadd.f32 %v6753, %v6754
    %v6756 = vsel %vm92, %v6687, 0.0
    %v6757 = vadd.f32 %v6755, %v6756
    %v6758 = vsel %vm92, %v6688, 0.0
    %v6759 = vadd.f32 %v6757, %v6758
    %v6760 = vsel %vm92, %v6689, 0.0
    %v6761 = vadd.f32 %v6759, %v6760
    %v6762 = vsel %vm92, %v6690, 0.0
    %v6763 = vadd.f32 %v6761, %v6762
    %v6764 = vsel %vm92, %v6691, 0.0
    %v6765 = vadd.f32 %v6763, %v6764
    %v6766 = vsel %vm92, %v6692, 0.0
    %v6767 = vadd.f32 %v6765, %v6766
    %v6768 = vsel %vm92, %v6693, 0.0
    %v6769 = vadd.f32 %v6767, %v6768
    %v6770 = vsel %vm92, %v6694, 0.0
    %v6771 = vadd.f32 %v6769, %v6770
    %v6772 = vsel %vm92, %v6695, 0.0
    %v6773 = vadd.f32 %v6771, %v6772
    %v6774 = vsel %vm92, %v6696, 0.0
    %v6775 = vadd.f32 %v6773, %v6774
    %v6776 = vsel %vm92, %v6697, 0.0
    %v6777 = vadd.f32 %v6775, %v6776
    %v6778 = vsel %vm92, %v6698, 0.0
    %v6779 = vadd.f32 %v6777, %v6778
    %v6780 = vsel %vm92, %v6699, 0.0
    %v6781 = vadd.f32 %v6779, %v6780
    %v6782 = vsel %vm92, %v6700, 0.0
    %v6783 = vadd.f32 %v6781, %v6782
    %v6784 = vsel %vm92, %v6701, 0.0
    %v6785 = vadd.f32 %v6783, %v6784
    %v6786 = vsel %vm92, %v6702, 0.0
    %v6787 = vadd.f32 %v6785, %v6786
    %v6788 = vsel %vm92, %v6703, 0.0
    %v6789 = vadd.f32 %v6787, %v6788
    %v6790 = vsel %vm92, %v6704, 0.0
    %v6791 = vadd.f32 %v6789, %v6790
    %v6792 = vsel %vm92, %v6705, 0.0
    %v6793 = vadd.f32 %v6791, %v6792
    %v6794 = vsel %vm92, %v6706, 0.0
    %v6795 = vadd.f32 %v6793, %v6794
    %v6796 = vsel %vm92, %v6707, 0.0
    %v6797 = vadd.f32 %v6795, %v6796
    %v6798 = vsel %vm92, %v6708, 0.0
    %v6799 = vadd.f32 %v6797, %v6798
    %v6800 = vsel %vm92, %v6709, 0.0
    %v6801 = vadd.f32 %v6799, %v6800
    %v6802 = vsel %vm92, %v6710, 0.0
    %v6803 = vadd.f32 %v6801, %v6802
    %v6804 = vsel %vm92, %v6711, 0.0
    %v6805 = vadd.f32 %v6803, %v6804
    %v6806 = vsel %vm92, %v6712, 0.0
    %v6807 = vadd.f32 %v6805, %v6806
    %v6808 = vsel %vm92, %v6713, 0.0
    %v6809 = vadd.f32 %v6807, %v6808
    %v6810 = vsel %vm92, %v6714, 0.0
    %v6811 = vadd.f32 %v6809, %v6810
    %v6812 = vsel %vm92, %v6715, 0.0
    %v6813 = vadd.f32 %v6811, %v6812
    %v6814 = vsel %vm92, %v6716, 0.0
    %v6815 = vadd.f32 %v6813, %v6814
    %v6816 = vsel %vm92, %v6717, 0.0
    %v6817 = vadd.f32 %v6815, %v6816
    %v6818 = vsel %vm92, %v6718, 0.0
    %v6819 = vadd.f32 %v6817, %v6818
    %v6820 = vsel %vm92, %v6719, 0.0
    %v6821 = vadd.f32 %v6819, %v6820
    %v6822 = vsel %vm92, %v6720, 0.0
    %v6823 = vadd.f32 %v6821, %v6822
    %v6824 = vsel %vm92, %v6721, 0.0
    %v6825 = vadd.f32 %v6823, %v6824
    %v6826 = vsel %vm92, %v6722, 0.0
    %v6827 = vadd.f32 %v6825, %v6826
    %v6828 = vsel %vm92, %v6723, 0.0
    %v6829 = vadd.f32 %v6827, %v6828
    %v6830 = vsel %vm92, %v6724, 0.0
    %v6831 = vadd.f32 %v6829, %v6830
    %v6832 = vsel %vm92, %v6725, 0.0
    %v6833 = vadd.f32 %v6831, %v6832
    %v6834 = vsel %vm92, %v6726, 0.0
    %v6835 = vadd.f32 %v6833, %v6834
    %v6836 = vsel %vm92, %v6727, 0.0
    %v6837 = vadd.f32 %v6835, %v6836
    %v6838 = vsel %vm92, %v6728, 0.0
    %v6839 = vadd.f32 %v6837, %v6838
    %v6840 = vsel %vm92, %v6729, 0.0
    %v6841 = vadd.f32 %v6839, %v6840
    %v6842 = vsel %vm92, %v6730, 0.0
    %v6843 = vadd.f32 %v6841, %v6842
    %v6844 = vsel %vm92, %v6731, 0.0
    %v6845 = vadd.f32 %v6843, %v6844
    %v6846 = vsel %vm92, %v6732, 0.0
    %v6847 = vadd.f32 %v6845, %v6846
    %v6848 = vsel %vm92, %v6733, 0.0
    %v6849 = vadd.f32 %v6847, %v6848
    %v6850 = vsel %vm92, %v6734, 0.0
    %v6851 = vadd.f32 %v6849, %v6850
    %v6852 = vsel %vm92, %v6735, 0.0
    %v6853 = vadd.f32 %v6851, %v6852
    %v6854 = vsel %vm92, %v6736, 0.0
    %v6855 = vadd.f32 %v6853, %v6854
    %v6856 = vsel %vm92, %v6737, 0.0
    %v6857 = vadd.f32 %v6855, %v6856
    %v6858 = vsel %vm92, %v6738, 0.0
    %v6859 = vadd.f32 %v6857, %v6858
    %v6860 = vsel %vm92, %v6739, 0.0
    %v6861 = vadd.f32 %v6859, %v6860
    %v6862 = vsel %vm92, %v6740, 0.0
    %v6863 = vadd.f32 %v6861, %v6862
    %v6864 = vsel %vm92, %v6741, 0.0
    %v6865 = vadd.f32 %v6863, %v6864
    %v6866 = vsel %vm92, %v6742, 0.0
    %v6867 = vadd.f32 %v6865, %v6866
    %v6868 = vsel %vm92, %v6743, 0.0
    %v6869 = vadd.f32 %v6867, %v6868
    %v6870 = vsel %vm92, %v6744, 0.0
    %v6871 = vadd.f32 %v6869, %v6870
    %v6872 = vrot.slane %v6871, 4
    %v6873 = vadd.f32 %v6871, %v6872
    %v6874 = vrot.slane %v6873, 2
    %v6875 = vadd.f32 %v6873, %v6874
    %v6876 = vrot.slane %v6875, 1
    %v6877 = vadd.f32 %v6875, %v6876
    %v6878 = vmul.f32 %v6877, 0.001953125
    %v6879 = vadd.f32 %v6878, 1e-05
    %v6880 = vrsqrt.pop %v6879
    %v6881 = vmul.f32 %v6481, %v6880
    %v6883 = vlaneseq
    %v6884 = vshrl.u32 %v6883, 7
    %v6885 = vsub.s32 0, %v6884
    %v6886 = vrot.slane %v6881, %v6885
    %v6888 = vmul.f32 %v6227, %v6886
    %v6889 = vmul.f32 %v6230, %v6886
    %v6890 = vmul.f32 %v6235, %v6886
    %v6891 = vmul.f32 %v6238, %v6886
    %v6892 = vmul.f32 %v6243, %v6886
    %v6893 = vmul.f32 %v6246, %v6886
    %v6894 = vmul.f32 %v6251, %v6886
    %v6895 = vmul.f32 %v6254, %v6886
    %v6896 = vmul.f32 %v6259, %v6886
    %v6897 = vmul.f32 %v6262, %v6886
    %v6898 = vmul.f32 %v6267, %v6886
    %v6899 = vmul.f32 %v6270, %v6886
    %v6900 = vmul.f32 %v6275, %v6886
    %v6901 = vmul.f32 %v6278, %v6886
    %v6902 = vmul.f32 %v6283, %v6886
    %v6903 = vmul.f32 %v6286, %v6886
    %v6904 = vmul.f32 %v6291, %v6886
    %v6905 = vmul.f32 %v6294, %v6886
    %v6906 = vmul.f32 %v6299, %v6886
    %v6907 = vmul.f32 %v6302, %v6886
    %v6908 = vmul.f32 %v6307, %v6886
    %v6909 = vmul.f32 %v6310, %v6886
    %v6910 = vmul.f32 %v6315, %v6886
    %v6911 = vmul.f32 %v6318, %v6886
    %v6912 = vmul.f32 %v6323, %v6886
    %v6913 = vmul.f32 %v6326, %v6886
    %v6914 = vmul.f32 %v6331, %v6886
    %v6915 = vmul.f32 %v6334, %v6886
    %v6916 = vmul.f32 %v6339, %v6886
    %v6917 = vmul.f32 %v6342, %v6886
    %v6918 = vmul.f32 %v6347, %v6886
    %v6919 = vmul.f32 %v6350, %v6886
    %v6920 = vmul.f32 %v6355, %v6886
    %v6921 = vmul.f32 %v6358, %v6886
    %v6922 = vmul.f32 %v6363, %v6886
    %v6923 = vmul.f32 %v6366, %v6886
    %v6924 = vmul.f32 %v6371, %v6886
    %v6925 = vmul.f32 %v6374, %v6886
    %v6926 = vmul.f32 %v6379, %v6886
    %v6927 = vmul.f32 %v6382, %v6886
    %v6928 = vmul.f32 %v6387, %v6886
    %v6929 = vmul.f32 %v6390, %v6886
    %v6930 = vmul.f32 %v6395, %v6886
    %v6931 = vmul.f32 %v6398, %v6886
    %v6932 = vmul.f32 %v6403, %v6886
    %v6933 = vmul.f32 %v6406, %v6886
    %v6934 = vmul.f32 %v6411, %v6886
    %v6935 = vmul.f32 %v6414, %v6886
    %v6936 = vmul.f32 %v6419, %v6886
    %v6937 = vmul.f32 %v6422, %v6886
    %v6938 = vmul.f32 %v6427, %v6886
    %v6939 = vmul.f32 %v6430, %v6886
    %v6940 = vmul.f32 %v6435, %v6886
    %v6941 = vmul.f32 %v6438, %v6886
    %v6942 = vmul.f32 %v6443, %v6886
    %v6943 = vmul.f32 %v6446, %v6886
    %v6944 = vmul.f32 %v6451, %v6886
    %v6945 = vmul.f32 %v6454, %v6886
    %v6946 = vmul.f32 %v6459, %v6886
    %v6947 = vmul.f32 %v6462, %v6886
    %v6948 = vmul.f32 %v6467, %v6886
    %v6949 = vmul.f32 %v6470, %v6886
    %v6950 = vmul.f32 %v6475, %v6886
    %v6951 = vmul.f32 %v6478, %v6886
    %v6952 = vmul.f32 %v6616, %v6881
    %v6953 = vsub.f32 %v6482, %v6952
    %v6955 = vlaneseq
    %v6956 = vshrl.u32 %v6955, 7
    %v6957 = vsub.s32 0, %v6956
    %v6958 = vrot.slane %v6953, %v6957
    %v6960 = vadd.f32 %v6888, %v6958
    %v6961 = vadd.f32 %v6889, %v6958
    %v6962 = vadd.f32 %v6890, %v6958
    %v6963 = vadd.f32 %v6891, %v6958
    %v6964 = vadd.f32 %v6892, %v6958
    %v6965 = vadd.f32 %v6893, %v6958
    %v6966 = vadd.f32 %v6894, %v6958
    %v6967 = vadd.f32 %v6895, %v6958
    %v6968 = vadd.f32 %v6896, %v6958
    %v6969 = vadd.f32 %v6897, %v6958
    %v6970 = vadd.f32 %v6898, %v6958
    %v6971 = vadd.f32 %v6899, %v6958
    %v6972 = vadd.f32 %v6900, %v6958
    %v6973 = vadd.f32 %v6901, %v6958
    %v6974 = vadd.f32 %v6902, %v6958
    %v6975 = vadd.f32 %v6903, %v6958
    %v6976 = vadd.f32 %v6904, %v6958
    %v6977 = vadd.f32 %v6905, %v6958
    %v6978 = vadd.f32 %v6906, %v6958
    %v6979 = vadd.f32 %v6907, %v6958
    %v6980 = vadd.f32 %v6908, %v6958
    %v6981 = vadd.f32 %v6909, %v6958
    %v6982 = vadd.f32 %v6910, %v6958
    %v6983 = vadd.f32 %v6911, %v6958
    %v6984 = vadd.f32 %v6912, %v6958
    %v6985 = vadd.f32 %v6913, %v6958
    %v6986 = vadd.f32 %v6914, %v6958
    %v6987 = vadd.f32 %v6915, %v6958
    %v6988 = vadd.f32 %v6916, %v6958
    %v6989 = vadd.f32 %v6917, %v6958
    %v6990 = vadd.f32 %v6918, %v6958
    %v6991 = vadd.f32 %v6919, %v6958
    %v6992 = vadd.f32 %v6920, %v6958
    %v6993 = vadd.f32 %v6921, %v6958
    %v6994 = vadd.f32 %v6922, %v6958
    %v6995 = vadd.f32 %v6923, %v6958
    %v6996 = vadd.f32 %v6924, %v6958
    %v6997 = vadd.f32 %v6925, %v6958
    %v6998 = vadd.f32 %v6926, %v6958
    %v6999 = vadd.f32 %v6927, %v6958
    %v7000 = vadd.f32 %v6928, %v6958
    %v7001 = vadd.f32 %v6929, %v6958
    %v7002 = vadd.f32 %v6930, %v6958
    %v7003 = vadd.f32 %v6931, %v6958
    %v7004 = vadd.f32 %v6932, %v6958
    %v7005 = vadd.f32 %v6933, %v6958
    %v7006 = vadd.f32 %v6934, %v6958
    %v7007 = vadd.f32 %v6935, %v6958
    %v7008 = vadd.f32 %v6936, %v6958
    %v7009 = vadd.f32 %v6937, %v6958
    %v7010 = vadd.f32 %v6938, %v6958
    %v7011 = vadd.f32 %v6939, %v6958
    %v7012 = vadd.f32 %v6940, %v6958
    %v7013 = vadd.f32 %v6941, %v6958
    %v7014 = vadd.f32 %v6942, %v6958
    %v7015 = vadd.f32 %v6943, %v6958
    %v7016 = vadd.f32 %v6944, %v6958
    %v7017 = vadd.f32 %v6945, %v6958
    %v7018 = vadd.f32 %v6946, %v6958
    %v7019 = vadd.f32 %v6947, %v6958
    %v7020 = vadd.f32 %v6948, %v6958
    %v7021 = vadd.f32 %v6949, %v6958
    %v7022 = vadd.f32 %v6950, %v6958
    %v7023 = vadd.f32 %v6951, %v6958
    %v7024 = vadd.f32 %v6960, %v28
    %v7025 = vadd.f32 %v6961, %v29
    %v7026 = vadd.f32 %v6962, %v30
    %v7027 = vadd.f32 %v6963, %v31
    %v7028 = vadd.f32 %v6964, %v32
    %v7029 = vadd.f32 %v6965, %v33
    %v7030 = vadd.f32 %v6966, %v34
    %v7031 = vadd.f32 %v6967, %v35
    %v7032 = vadd.f32 %v6968, %v36
    %v7033 = vadd.f32 %v6969, %v37
    %v7034 = vadd.f32 %v6970, %v38
    %v7035 = vadd.f32 %v6971, %v39
    %v7036 = vadd.f32 %v6972, %v40
    %v7037 = vadd.f32 %v6973, %v41
    %v7038 = vadd.f32 %v6974, %v42
    %v7039 = vadd.f32 %v6975, %v43
    %v7040 = vadd.f32 %v6976, %v44
    %v7041 = vadd.f32 %v6977, %v45
    %v7042 = vadd.f32 %v6978, %v46
    %v7043 = vadd.f32 %v6979, %v47
    %v7044 = vadd.f32 %v6980, %v48
    %v7045 = vadd.f32 %v6981, %v49
    %v7046 = vadd.f32 %v6982, %v50
    %v7047 = vadd.f32 %v6983, %v51
    %v7048 = vadd.f32 %v6984, %v52
    %v7049 = vadd.f32 %v6985, %v53
    %v7050 = vadd.f32 %v6986, %v54
    %v7051 = vadd.f32 %v6987, %v55
    %v7052 = vadd.f32 %v6988, %v56
    %v7053 = vadd.f32 %v6989, %v57
    %v7054 = vadd.f32 %v6990, %v58
    %v7055 = vadd.f32 %v6991, %v59
    %v7056 = vadd.f32 %v6992, %v60
    %v7057 = vadd.f32 %v6993, %v61
    %v7058 = vadd.f32 %v6994, %v62
    %v7059 = vadd.f32 %v6995, %v63
    %v7060 = vadd.f32 %v6996, %v64
    %v7061 = vadd.f32 %v6997, %v65
    %v7062 = vadd.f32 %v6998, %v66
    %v7063 = vadd.f32 %v6999, %v67
    %v7064 = vadd.f32 %v7000, %v68
    %v7065 = vadd.f32 %v7001, %v69
    %v7066 = vadd.f32 %v7002, %v70
    %v7067 = vadd.f32 %v7003, %v71
    %v7068 = vadd.f32 %v7004, %v72
    %v7069 = vadd.f32 %v7005, %v73
    %v7070 = vadd.f32 %v7006, %v74
    %v7071 = vadd.f32 %v7007, %v75
    %v7072 = vadd.f32 %v7008, %v76
    %v7073 = vadd.f32 %v7009, %v77
    %v7074 = vadd.f32 %v7010, %v78
    %v7075 = vadd.f32 %v7011, %v79
    %v7076 = vadd.f32 %v7012, %v80
    %v7077 = vadd.f32 %v7013, %v81
    %v7078 = vadd.f32 %v7014, %v82
    %v7079 = vadd.f32 %v7015, %v83
    %v7080 = vadd.f32 %v7016, %v84
    %v7081 = vadd.f32 %v7017, %v85
    %v7082 = vadd.f32 %v7018, %v86
    %v7083 = vadd.f32 %v7019, %v87
    %v7084 = vadd.f32 %v7020, %v88
    %v7085 = vadd.f32 %v7021, %v89
    %v7086 = vadd.f32 %v7022, %v90
    %v7087 = vadd.f32 %v7023, %v91
    %v7088 = vmax.f32 %v7024, 0.0
    %v7089 = vmax.f32 %v7025, 0.0
    %v7090 = vmax.f32 %v7026, 0.0
    %v7091 = vmax.f32 %v7027, 0.0
    %v7092 = vmax.f32 %v7028, 0.0
    %v7093 = vmax.f32 %v7029, 0.0
    %v7094 = vmax.f32 %v7030, 0.0
    %v7095 = vmax.f32 %v7031, 0.0
    %v7096 = vmax.f32 %v7032, 0.0
    %v7097 = vmax.f32 %v7033, 0.0
    %v7098 = vmax.f32 %v7034, 0.0
    %v7099 = vmax.f32 %v7035, 0.0
    %v7100 = vmax.f32 %v7036, 0.0
    %v7101 = vmax.f32 %v7037, 0.0
    %v7102 = vmax.f32 %v7038, 0.0
    %v7103 = vmax.f32 %v7039, 0.0
    %v7104 = vmax.f32 %v7040, 0.0
    %v7105 = vmax.f32 %v7041, 0.0
    %v7106 = vmax.f32 %v7042, 0.0
    %v7107 = vmax.f32 %v7043, 0.0
    %v7108 = vmax.f32 %v7044, 0.0
    %v7109 = vmax.f32 %v7045, 0.0
    %v7110 = vmax.f32 %v7046, 0.0
    %v7111 = vmax.f32 %v7047, 0.0
    %v7112 = vmax.f32 %v7048, 0.0
    %v7113 = vmax.f32 %v7049, 0.0
    %v7114 = vmax.f32 %v7050, 0.0
    %v7115 = vmax.f32 %v7051, 0.0
    %v7116 = vmax.f32 %v7052, 0.0
    %v7117 = vmax.f32 %v7053, 0.0
    %v7118 = vmax.f32 %v7054, 0.0
    %v7119 = vmax.f32 %v7055, 0.0
    %v7120 = vmax.f32 %v7056, 0.0
    %v7121 = vmax.f32 %v7057, 0.0
    %v7122 = vmax.f32 %v7058, 0.0
    %v7123 = vmax.f32 %v7059, 0.0
    %v7124 = vmax.f32 %v7060, 0.0
    %v7125 = vmax.f32 %v7061, 0.0
    %v7126 = vmax.f32 %v7062, 0.0
    %v7127 = vmax.f32 %v7063, 0.0
    %v7128 = vmax.f32 %v7064, 0.0
    %v7129 = vmax.f32 %v7065, 0.0
    %v7130 = vmax.f32 %v7066, 0.0
    %v7131 = vmax.f32 %v7067, 0.0
    %v7132 = vmax.f32 %v7068, 0.0
    %v7133 = vmax.f32 %v7069, 0.0
    %v7134 = vmax.f32 %v7070, 0.0
    %v7135 = vmax.f32 %v7071, 0.0
    %v7136 = vmax.f32 %v7072, 0.0
    %v7137 = vmax.f32 %v7073, 0.0
    %v7138 = vmax.f32 %v7074, 0.0
    %v7139 = vmax.f32 %v7075, 0.0
    %v7140 = vmax.f32 %v7076, 0.0
    %v7141 = vmax.f32 %v7077, 0.0
    %v7142 = vmax.f32 %v7078, 0.0
    %v7143 = vmax.f32 %v7079, 0.0
    %v7144 = vmax.f32 %v7080, 0.0
    %v7145 = vmax.f32 %v7081, 0.0
    %v7146 = vmax.f32 %v7082, 0.0
    %v7147 = vmax.f32 %v7083, 0.0
    %v7148 = vmax.f32 %v7084, 0.0
    %v7149 = vmax.f32 %v7085, 0.0
    %v7150 = vmax.f32 %v7086, 0.0
    %v7151 = vmax.f32 %v7087, 0.0
    %7152 = vst.msk [vmem:[#allocation3] sm:$0xff] %vm92, %v7088
    %7153 = vst.msk [vmem:[#allocation3 + $0x8] sm:$0xff] %vm92, %v7089
    %7154 = vst.msk [vmem:[#allocation3 + $0x10] sm:$0xff] %vm92, %v7090
    %7155 = vst.msk [vmem:[#allocation3 + $0x18] sm:$0xff] %vm92, %v7091
    %7156 = vst.msk [vmem:[#allocation3 + $0x20] sm:$0xff] %vm92, %v7092
    %7157 = vst.msk [vmem:[#allocation3 + $0x28] sm:$0xff] %vm92, %v7093
    %7158 = vst.msk [vmem:[#allocation3 + $0x30] sm:$0xff] %vm92, %v7094
    %7159 = vst.msk [vmem:[#allocation3 + $0x38] sm:$0xff] %vm92, %v7095
    %7160 = vst.msk [vmem:[#allocation3 + $0x40] sm:$0xff] %vm92, %v7096
    %7161 = vst.msk [vmem:[#allocation3 + $0x48] sm:$0xff] %vm92, %v7097
    %7162 = vst.msk [vmem:[#allocation3 + $0x50] sm:$0xff] %vm92, %v7098
    %7163 = vst.msk [vmem:[#allocation3 + $0x58] sm:$0xff] %vm92, %v7099
    %7164 = vst.msk [vmem:[#allocation3 + $0x60] sm:$0xff] %vm92, %v7100
    %7165 = vst.msk [vmem:[#allocation3 + $0x68] sm:$0xff] %vm92, %v7101
    %7166 = vst.msk [vmem:[#allocation3 + $0x70] sm:$0xff] %vm92, %v7102
    %7167 = vst.msk [vmem:[#allocation3 + $0x78] sm:$0xff] %vm92, %v7103
    %7168 = vst.msk [vmem:[#allocation3 + $0x80] sm:$0xff] %vm92, %v7104
    %7169 = vst.msk [vmem:[#allocation3 + $0x88] sm:$0xff] %vm92, %v7105
    %7170 = vst.msk [vmem:[#allocation3 + $0x90] sm:$0xff] %vm92, %v7106
    %7171 = vst.msk [vmem:[#allocation3 + $0x98] sm:$0xff] %vm92, %v7107
    %7172 = vst.msk [vmem:[#allocation3 + $0xa0] sm:$0xff] %vm92, %v7108
    %7173 = vst.msk [vmem:[#allocation3 + $0xa8] sm:$0xff] %vm92, %v7109
    %7174 = vst.msk [vmem:[#allocation3 + $0xb0] sm:$0xff] %vm92, %v7110
    %7175 = vst.msk [vmem:[#allocation3 + $0xb8] sm:$0xff] %vm92, %v7111
    %7176 = vst.msk [vmem:[#allocation3 + $0xc0] sm:$0xff] %vm92, %v7112
    %7177 = vst.msk [vmem:[#allocation3 + $0xc8] sm:$0xff] %vm92, %v7113
    %7178 = vst.msk [vmem:[#allocation3 + $0xd0] sm:$0xff] %vm92, %v7114
    %7179 = vst.msk [vmem:[#allocation3 + $0xd8] sm:$0xff] %vm92, %v7115
    %7180 = vst.msk [vmem:[#allocation3 + $0xe0] sm:$0xff] %vm92, %v7116
    %7181 = vst.msk [vmem:[#allocation3 + $0xe8] sm:$0xff] %vm92, %v7117
    %7182 = vst.msk [vmem:[#allocation3 + $0xf0] sm:$0xff] %vm92, %v7118
    %7183 = vst.msk [vmem:[#allocation3 + $0xf8] sm:$0xff] %vm92, %v7119
    %7184 = vst.msk [vmem:[#allocation3 + $0x100] sm:$0xff] %vm92, %v7120
    %7185 = vst.msk [vmem:[#allocation3 + $0x108] sm:$0xff] %vm92, %v7121
    %7186 = vst.msk [vmem:[#allocation3 + $0x110] sm:$0xff] %vm92, %v7122
    %7187 = vst.msk [vmem:[#allocation3 + $0x118] sm:$0xff] %vm92, %v7123
    %7188 = vst.msk [vmem:[#allocation3 + $0x120] sm:$0xff] %vm92, %v7124
    %7189 = vst.msk [vmem:[#allocation3 + $0x128] sm:$0xff] %vm92, %v7125
    %7190 = vst.msk [vmem:[#allocation3 + $0x130] sm:$0xff] %vm92, %v7126
    %7191 = vst.msk [vmem:[#allocation3 + $0x138] sm:$0xff] %vm92, %v7127
    %7192 = vst.msk [vmem:[#allocation3 + $0x140] sm:$0xff] %vm92, %v7128
    %7193 = vst.msk [vmem:[#allocation3 + $0x148] sm:$0xff] %vm92, %v7129
    %7194 = vst.msk [vmem:[#allocation3 + $0x150] sm:$0xff] %vm92, %v7130
    %7195 = vst.msk [vmem:[#allocation3 + $0x158] sm:$0xff] %vm92, %v7131
    %7196 = vst.msk [vmem:[#allocation3 + $0x160] sm:$0xff] %vm92, %v7132
    %7197 = vst.msk [vmem:[#allocation3 + $0x168] sm:$0xff] %vm92, %v7133
    %7198 = vst.msk [vmem:[#allocation3 + $0x170] sm:$0xff] %vm92, %v7134
    %7199 = vst.msk [vmem:[#allocation3 + $0x178] sm:$0xff] %vm92, %v7135
    %7200 = vst.msk [vmem:[#allocation3 + $0x180] sm:$0xff] %vm92, %v7136
    %7201 = vst.msk [vmem:[#allocation3 + $0x188] sm:$0xff] %vm92, %v7137
    %7202 = vst.msk [vmem:[#allocation3 + $0x190] sm:$0xff] %vm92, %v7138
    %7203 = vst.msk [vmem:[#allocation3 + $0x198] sm:$0xff] %vm92, %v7139
    %7204 = vst.msk [vmem:[#allocation3 + $0x1a0] sm:$0xff] %vm92, %v7140
    %7205 = vst.msk [vmem:[#allocation3 + $0x1a8] sm:$0xff] %vm92, %v7141
    %7206 = vst.msk [vmem:[#allocation3 + $0x1b0] sm:$0xff] %vm92, %v7142
    %7207 = vst.msk [vmem:[#allocation3 + $0x1b8] sm:$0xff] %vm92, %v7143
    %7208 = vst.msk [vmem:[#allocation3 + $0x1c0] sm:$0xff] %vm92, %v7144
    %7209 = vst.msk [vmem:[#allocation3 + $0x1c8] sm:$0xff] %vm92, %v7145
    %7210 = vst.msk [vmem:[#allocation3 + $0x1d0] sm:$0xff] %vm92, %v7146
    %7211 = vst.msk [vmem:[#allocation3 + $0x1d8] sm:$0xff] %vm92, %v7147
    %7212 = vst.msk [vmem:[#allocation3 + $0x1e0] sm:$0xff] %vm92, %v7148
    %7213 = vst.msk [vmem:[#allocation3 + $0x1e8] sm:$0xff] %vm92, %v7149
    %7214 = vst.msk [vmem:[#allocation3 + $0x1f0] sm:$0xff] %vm92, %v7150
    %7215 = vst.msk [vmem:[#allocation3 + $0x1f8] sm:$0xff] %vm92, %v7151
    // Predicated region
    $region30: #{basic_block_forward.1} parent=1 // pred_check
      _
    $region31: #{basic_block_forward.1} parent=1 // pred_check_branch
      %7217 = sbr.rel (0) target = $region33
    $region32: #{basic_block_forward.1} parent=1 // pred_region
      %s7219 = ssub.s32 8192, 8192
      %7220 = vsyncadd [#allocation4], %s7219
      %s7221 = sshll.u32 [#allocation3], 4
      %s7222 = int_to_ptr.vmem [resolvable:$true] %s7221
      %7227 = dma.vmem_to_hbm [thread:$0]  %s7222, 8192, %s7, [#allocation4], 128, 128, 8
    $region33: #{basic_block_forward.1} parent=1 // pred_fallthru
      _
    // Predicated region
    $region34: #{basic_block_forward.1} parent=1 // pred_check
      _
    $region35: #{basic_block_forward.1} parent=1 // pred_check_branch
      %7229 = sbr.rel (0) target = $region37
    $region36: #{basic_block_forward.1} parent=1 // pred_region
      %7230 = dma.done [#allocation4], 8192
    $region37: #{basic_block_forward.1} parent=1 // pred_fallthru
      _
    %7231 = vsyncpa [#allocation4], 1

</llo_original>
